<compile_context>
chip_gen: v7x
topology: tpu7x:2x2x1
jax: 0.10.0
libtpu: 0.0.40
codegen_flags: <defaults>
</compile_context>

<pallas_src>
import functools
import math

import jax
import jax.numpy as jnp
from jax.experimental import pallas as pl
from jax.experimental.pallas import tpu as pltpu


# ---------------------------------------------------------------------------
# Pallas kernels
# ---------------------------------------------------------------------------
def _gn_kernel(*refs, num_groups, eps, apply_silu, has_t):
    """GroupNorm (+optional fused time-embed add, +optional SiLU).

    Block: x (1, C, L) -- C on sublanes, L on lanes.  gamma/beta: (C, 1).
    Optional t: (1, C, 1) added to x before the statistics (time embedding).
    """
    if has_t:
        x_ref, g_ref, b_ref, t_ref, o_ref = refs
    else:
        x_ref, g_ref, b_ref, o_ref = refs
        t_ref = None

    x = x_ref[0].astype(jnp.float32)                      # (C, L)
    if has_t:
        x = x + t_ref[0].astype(jnp.float32)              # (C, 1) broadcast over lanes

    C = x.shape[0]
    cpg = C // num_groups
    gamma = g_ref[...].astype(jnp.float32)                # (C, 1)
    beta = b_ref[...].astype(jnp.float32)                 # (C, 1)

    for g in range(num_groups):                           # static unroll (num_groups small)
        lo, hi = g * cpg, (g + 1) * cpg
        xs = x[lo:hi, :]                                  # (cpg, L)
        m = jnp.mean(xs, keepdims=True)                   # (1, 1)
        v = jnp.mean(jnp.square(xs - m), keepdims=True)   # biased var (matches torch)
        y = (xs - m) * jax.lax.rsqrt(v + eps)
        y = y * gamma[lo:hi, :] + beta[lo:hi, :]
        if apply_silu:
            y = y * jax.nn.sigmoid(y)
        o_ref[0, lo:hi, :] = y.astype(o_ref.dtype)


def _conv_mm_kernel(w_ref, c_ref, bias_ref, o_ref, acc_ref):
    """out[b] = W @ cols[b] + bias ; lane-dense (Cout, TL) output tile."""
    k = pl.program_id(2)

    @pl.when(k == 0)
    def _():
        acc_ref[...] = jnp.zeros_like(acc_ref)

    acc_ref[...] += jnp.dot(w_ref[...], c_ref[0],
                            preferred_element_type=jnp.float32)

    @pl.when(k == pl.num_programs(2) - 1)
    def _():
        o_ref[0] = (acc_ref[...] + bias_ref[...]).astype(o_ref.dtype)


def _linear_kernel(a_ref, w_ref, bias_ref, o_ref, acc_ref, *, silu_a):
    """o = (SiLU(a) if silu_a else a) @ w + bias, tiled with f32 accumulator."""
    k = pl.program_id(2)

    @pl.when(k == 0)
    def _():
        acc_ref[...] = jnp.zeros_like(acc_ref)

    a = a_ref[...].astype(jnp.float32)
    if silu_a:                                            # fused SiLU (time embed)
        a = a * jax.nn.sigmoid(a)
    acc_ref[...] += jnp.dot(a, w_ref[...], preferred_element_type=jnp.float32)

    @pl.when(k == pl.num_programs(2) - 1)
    def _():
        o_ref[...] = (acc_ref[...] + bias_ref[...]).astype(o_ref.dtype)


def _attn_kernel(q_ref, k_ref, v_ref, o_ref, *, scale):
    """One batch element per grid step; all heads batched in one block."""
    q = q_ref[0].astype(jnp.float32) * scale              # (H, N, D), scale folded into q
    k = k_ref[0].astype(jnp.float32)
    v = v_ref[0].astype(jnp.float32)
    s = jnp.einsum('hnd,hmd->hnm', q, k,
                   preferred_element_type=jnp.float32)    # (H, N, N)
    m = jnp.max(s, axis=-1, keepdims=True)
    p = jnp.exp(s - m)
    denom = jnp.sum(p, axis=-1, keepdims=True)
    p = p * pl.reciprocal(denom, approx=True)
    o = jnp.einsum('hnm,hmd->hnd', p, v, preferred_element_type=jnp.float32)
    o_ref[0] = o.astype(o_ref.dtype)


# ---------------------------------------------------------------------------
# pallas_call wrappers
# ---------------------------------------------------------------------------
def group_norm(x, gamma, beta, num_groups, *, eps=1e-5, apply_silu=False,
               t_add=None):
    """x: (B, C, L). Optional t_add: (B, C) added before the normalization."""
    B, C, L = x.shape
    g2 = gamma.reshape(C, 1)
    b2 = beta.reshape(C, 1)
    has_t = t_add is not None

    in_specs = [
        pl.BlockSpec((1, C, L), lambda b: (b, 0, 0)),
        pl.BlockSpec((C, 1), lambda b: (0, 0)),
        pl.BlockSpec((C, 1), lambda b: (0, 0)),
    ]
    args = [x, g2, b2]
    if has_t:
        in_specs.append(pl.BlockSpec((1, C, 1), lambda b: (b, 0, 0)))
        args.append(t_add.reshape(B, C, 1))

    return pl.pallas_call(
        functools.partial(_gn_kernel, num_groups=num_groups, eps=eps,
                          apply_silu=apply_silu, has_t=has_t),
        out_shape=jax.ShapeDtypeStruct((B, C, L), x.dtype),
        grid=(B,),
        in_specs=in_specs,
        out_specs=pl.BlockSpec((1, C, L), lambda b: (b, 0, 0)),
        compiler_params=pltpu.CompilerParams(dimension_semantics=("parallel",)),
    )(*args)


def conv_matmul(wmat, cols, bias):
    """wmat: (Cout, K), cols: (B, K, L), bias: (Cout,) -> (B, Cout, L)."""
    Cout, K = wmat.shape
    B, K2, L = cols.shape
    assert K2 == K
    TL = 512 if (L > 512 and L % 512 == 0) else L         # lane-dense output tile
    TK = 512 if (K > 1024 and K % 512 == 0) else K
    grid = (B, L // TL, K // TK)
    bias2 = bias.reshape(Cout, 1)

    return pl.pallas_call(
        _conv_mm_kernel,
        out_shape=jax.ShapeDtypeStruct((B, Cout, L), cols.dtype),
        grid=grid,
        in_specs=[
            pl.BlockSpec((Cout, TK), lambda b, j, k: (0, k)),
            pl.BlockSpec((1, TK, TL), lambda b, j, k: (b, k, j)),
            pl.BlockSpec((Cout, 1), lambda b, j, k: (0, 0)),
        ],
        out_specs=pl.BlockSpec((1, Cout, TL), lambda b, j, k: (b, 0, j)),
        scratch_shapes=[pltpu.VMEM((Cout, TL), jnp.float32)],
        compiler_params=pltpu.CompilerParams(
            dimension_semantics=("parallel", "parallel", "arbitrary")),
    )(wmat, cols, bias2)


def linear(a, w, bias, *, silu_a=False, tm=256, tn=512, tk=512):
    """o = (SiLU(a) if silu_a else a) @ w + bias.  a: (M, K), w: (K, N)."""
    M, K = a.shape
    K2, N = w.shape
    assert K2 == K
    TM = tm if (M > tm and M % tm == 0) else M
    TN = tn if (N > tn and N % tn == 0) else N
    TK = tk if (K > tk and K % tk == 0) else K
    grid = (M // TM, N // TN, K // TK)
    bias2 = bias.reshape(1, N).astype(a.dtype)

    return pl.pallas_call(
        functools.partial(_linear_kernel, silu_a=silu_a),
        out_shape=jax.ShapeDtypeStruct((M, N), a.dtype),
        grid=grid,
        in_specs=[
            pl.BlockSpec((TM, TK), lambda i, j, k: (i, k)),
            pl.BlockSpec((TK, TN), lambda i, j, k: (k, j)),
            pl.BlockSpec((1, TN), lambda i, j, k: (0, j)),
        ],
        out_specs=pl.BlockSpec((TM, TN), lambda i, j, k: (i, j)),
        scratch_shapes=[pltpu.VMEM((TM, TN), jnp.float32)],
        compiler_params=pltpu.CompilerParams(
            dimension_semantics=("parallel", "parallel", "arbitrary")),
    )(a, w, bias2)


def sdpa(q, k, v, scale):
    """q/k/v: (B, NH, N, D) -> (B, NH, N, D); one batch element per grid step."""
    B, NH, N, D = q.shape
    return pl.pallas_call(
        functools.partial(_attn_kernel, scale=scale),
        out_shape=jax.ShapeDtypeStruct((B, NH, N, D), q.dtype),
        grid=(B,),
        in_specs=[pl.BlockSpec((1, NH, N, D), lambda b: (b, 0, 0, 0))
                  for _ in range(3)],
        out_specs=pl.BlockSpec((1, NH, N, D), lambda b: (b, 0, 0, 0)),
        compiler_params=pltpu.CompilerParams(dimension_semantics=("parallel",)),
    )(q, k, v)


# ---------------------------------------------------------------------------
# Glue: im2col conv, multi-head attention, MidBlock forward
# ---------------------------------------------------------------------------
def _im2col_nchw(x, H, W, ksize, stride, pad):
    """x: (B, C, H*W) -> cols: (B, C*ksize*ksize, Ho*Wo), features ordered (c,kh,kw)."""
    B, C, _ = x.shape
    xi = x.reshape(B, C, H, W)
    xp = jnp.pad(xi, ((0, 0), (0, 0), (pad, pad), (pad, pad)))
    Ho = (H + 2 * pad - ksize) // stride + 1
    Wo = (W + 2 * pad - ksize) // stride + 1
    cols = []
    for kh in range(ksize):
        for kw in range(ksize):
            cols.append(xp[:, :, kh:kh + stride * Ho:stride,
                              kw:kw + stride * Wo:stride])
    patches = jnp.stack(cols, axis=2)                     # (B, C, K*K, Ho, Wo)
    patches = patches.reshape(B, C * ksize * ksize, Ho * Wo)
    return patches


def conv2d_nchw(x, H, W, w, b, *, stride=1, pad=0, fuse_1x1=None):
    """NCHW-flat conv via im2col + lane-dense Pallas matmul.

    x: (B, Cin, H*W); w: (Cout, Cin, KH, KW); b: (Cout,).
    fuse_1x1 = (x2, w2, b2): fuses an additional 1x1 conv (the skip branch)
    into the same matmul by concatenating along K.  Returns (B, Cout, Ho*Wo).
    """
    Cout, _, KH, _ = w.shape
    cols = _im2col_nchw(x, H, W, KH, stride, pad)
    wmat = w.reshape(Cout, -1)
    bias = b
    if fuse_1x1 is not None:
        x2, w2, b2 = fuse_1x1                             # 1x1 conv: im2col == identity
        cols = jnp.concatenate([cols, x2], axis=1)
        wmat = jnp.concatenate([wmat, w2.reshape(Cout, -1)], axis=1)
        bias = b + b2
    return conv_matmul(wmat, cols, bias)


def multihead_attention(x_tok, in_w, in_b, out_w, out_b, num_heads):
    """torch.nn.MultiheadAttention(batch_first=True) self-attention forward."""
    B, N, E = x_tok.shape
    D = E // num_heads
    x2 = x_tok.reshape(B * N, E)
    qkv = linear(x2, in_w.T, in_b)                        # (B*N, 3E)
    qkv = qkv.reshape(B, N, 3, num_heads, D)
    q = qkv[:, :, 0].transpose(0, 2, 1, 3)                # (B, NH, N, D)
    k = qkv[:, :, 1].transpose(0, 2, 1, 3)
    v = qkv[:, :, 2].transpose(0, 2, 1, 3)
    o = sdpa(q, k, v, 1.0 / math.sqrt(D))                 # (B, NH, N, D)
    o = o.transpose(0, 2, 1, 3).reshape(B * N, E)
    o = linear(o, out_w.T, out_b)
    return o.reshape(B, N, E)


def mid_block_forward(x, t_emb, params, *, num_heads=4, num_groups=3,
                      patch_size=4):
    B, Cin, H, W = x.shape
    L = H * W
    num_layers = len(params["attn"])
    Cout = params["resnet"][0]["conv1_w"].shape[0]
    x_bcl = x.reshape(B, Cin, L)

    def resnet_block(inp, rp):
        # res_conv_block_one: GroupNorm -> SiLU -> Conv3x3
        h = group_norm(inp, rp["gn1_g"], rp["gn1_b"], num_groups, apply_silu=True)
        h = conv2d_nchw(h, H, W, rp["conv1_w"], rp["conv1_b"], stride=1, pad=1)
        # time embedding: SiLU -> Linear (fused), broadcast add fused into GN2
        t = linear(t_emb, rp["t_w"].T, rp["t_b"], silu_a=True)        # (B, Cout)
        # res_conv_blok_tow: GroupNorm(+t add) -> SiLU -> Conv3x3, skip 1x1 fused in K
        h = group_norm(h, rp["gn2_g"], rp["gn2_b"], num_groups,
                       apply_silu=True, t_add=t)
        out = conv2d_nchw(h, H, W, rp["conv2_w"], rp["conv2_b"], stride=1, pad=1,
                          fuse_1x1=(inp, rp["skip_w"], rp["skip_b"]))
        return out                                                    # (B, Cout, L)

    out_res = resnet_block(x_bcl, params["resnet"][0])
    for i in range(num_layers):
        ap = params["attn"][i]
        a = group_norm(out_res, ap["gn_g"], ap["gn_b"], num_groups,
                       apply_silu=False)
        n_tok = L // (patch_size * patch_size)
        E = Cout * patch_size * patch_size
        # matches torch exactly: raw transpose+reshape "patchify" and its
        # (non-inverse) transpose+reshape back -- intentional per the module.
        a_tok = a.transpose(0, 2, 1).reshape(B, n_tok, E)
        att = multihead_attention(a_tok, ap["in_proj_w"], ap["in_proj_b"],
                                  ap["out_proj_w"], ap["out_proj_b"], num_heads)
        in_att = att.transpose(0, 2, 1).reshape(B, Cout, L)
        in_res = out_res + in_att
        out_res = resnet_block(in_res, params["resnet"][i + 1])
    return out_res.reshape(B, Cout, H, W)


# ---------------------------------------------------------------------------
# Deterministic parameter init (synthetic; shapes match the torch module)
# ---------------------------------------------------------------------------
def init_params(key, in_ch, out_ch, t_dim, *, num_layers=1, patch=4):
    E = out_ch * patch * patch
    n_res = num_layers + 1
    keys = iter(jax.random.split(key, 12 * n_res + 6 * num_layers + 4))

    def nrm(shape, scale):
        return scale * jax.random.normal(next(keys), shape, jnp.float32)

    resnet = []
    for i in range(n_res):
        cin = in_ch if i == 0 else out_ch
        resnet.append(dict(
            gn1_g=1.0 + nrm((cin,), 0.1), gn1_b=nrm((cin,), 0.1),
            conv1_w=nrm((out_ch, cin, 3, 3), 0.1), conv1_b=nrm((out_ch,), 0.05),
            t_w=nrm((out_ch, t_dim), 0.1), t_b=nrm((out_ch,), 0.05),
            gn2_g=1.0 + nrm((out_ch,), 0.1), gn2_b=nrm((out_ch,), 0.1),
            conv2_w=nrm((out_ch, out_ch, 3, 3), 0.1), conv2_b=nrm((out_ch,), 0.05),
            skip_w=nrm((out_ch, cin, 1, 1), 0.1), skip_b=nrm((out_ch,), 0.05),
        ))
    attn = []
    for _ in range(num_layers):
        attn.append(dict(
            gn_g=1.0 + nrm((out_ch,), 0.1), gn_b=nrm((out_ch,), 0.1),
            in_proj_w=nrm((3 * E, E), 0.05), in_proj_b=nrm((3 * E,), 0.02),
            out_proj_w=nrm((E, E), 0.05), out_proj_b=nrm((E,), 0.02),
        ))
    return {"resnet": resnet, "attn": attn}


if __name__ == "__main__":
    # Small shapes consistent with the module: channels divisible by group_norm=3,
    # spatial divisible by patch_size=4, embed_dim divisible by num_heads=4.
    B, Cin, Cout, H, W, T = 2, 6, 12, 16, 16, 32
    key = jax.random.PRNGKey(0)
    kx, kt, kp = jax.random.split(key, 3)
    x = jax.random.normal(kx, (B, Cin, H, W), jnp.float32)
    t_emb = jax.random.normal(kt, (B, T), jnp.float32)
    params = init_params(kp, Cin, Cout, T, num_layers=1, patch=4)

    fwd = jax.jit(functools.partial(mid_block_forward, num_heads=4,
                                    num_groups=3, patch_size=4))
    out = fwd(x, t_emb, params)
    jax.block_until_ready(out)
    assert out.shape == (B, Cout, H, W), out.shape
    print("KERNEL_OK")
</pallas_src>

<mosaic_0001>
module attributes {stable_mosaic.version = 11 : i64} {
  func.func @_gn_kernel(%arg0: i32, %arg1: memref<1x6x256xf32, #tpu.memory_space<vmem>>, %arg2: memref<6x1xf32, #tpu.memory_space<vmem>>, %arg3: memref<6x1xf32, #tpu.memory_space<vmem>>, %arg4: memref<1x6x256xf32, #tpu.memory_space<vmem>>) attributes {dimension_semantics = [#tpu.dimension_semantics<parallel>], iteration_bounds = array<i64: 2>, scalar_prefetch = 0 : i64, scratch_operands = 0 : i64, tpu.core_type = #tpu.core_type<tc>, window_params = [{transform_indices = @transform_0, window_bounds = array<i64: 1, 6, 256>}, {pipeline_mode = #tpu.pipeline_mode<synchronous>, transform_indices = @transform_1, window_bounds = array<i64: 6, 1>}, {pipeline_mode = #tpu.pipeline_mode<synchronous>, transform_indices = @transform_2, window_bounds = array<i64: 6, 1>}, {transform_indices = @transform_3, window_bounds = array<i64: 1, 6, 256>}]} {
    %c0 = arith.constant 0 : index
    %c0_0 = arith.constant 0 : index
    %c0_1 = arith.constant 0 : index
    %0 = vector.load %arg1[%c0, %c0_0, %c0_1] : memref<1x6x256xf32, #tpu.memory_space<vmem>>, vector<1x6x256xf32>
    %1 = vector.shape_cast %0 : vector<1x6x256xf32> to vector<6x256xf32>
    %c0_2 = arith.constant 0 : index
    %c0_3 = arith.constant 0 : index
    %2 = vector.load %arg2[%c0_2, %c0_3] : memref<6x1xf32, #tpu.memory_space<vmem>>, vector<6x1xf32>
    %c0_4 = arith.constant 0 : index
    %c0_5 = arith.constant 0 : index
    %3 = vector.load %arg3[%c0_4, %c0_5] : memref<6x1xf32, #tpu.memory_space<vmem>>, vector<6x1xf32>
    %4 = vector.extract_strided_slice %1 {offsets = [0, 0], sizes = [2, 256], strides = [1, 1]} : vector<6x256xf32> to vector<2x256xf32>
    %5 = vector.shape_cast %4 : vector<2x256xf32> to vector<1x2x256xf32>
    %cst = arith.constant dense<0.000000e+00> : vector<1xf32>
    %6 = vector.multi_reduction <add>, %5, %cst [1, 2] : vector<1x2x256xf32> to vector<1xf32>
    %7 = vector.shape_cast %6 : vector<1xf32> to vector<1x1x1xf32>
    %8 = vector.extract %7[0, 0, 0] : f32 from vector<1x1x1xf32>
    %9 = vector.broadcast %8 : f32 to vector<1x1xf32>
    %cst_6 = arith.constant 5.120000e+02 : f32
    %10 = vector.broadcast %cst_6 : f32 to vector<1x1xf32>
    %11 = arith.divf %9, %10 : vector<1x1xf32>
    %12 = vector.broadcast %11 : vector<1x1xf32> to vector<2x256xf32>
    %13 = arith.subf %4, %12 : vector<2x256xf32>
    %14 = arith.mulf %13, %13 : vector<2x256xf32>
    %15 = vector.shape_cast %14 : vector<2x256xf32> to vector<1x2x256xf32>
    %cst_7 = arith.constant dense<0.000000e+00> : vector<1xf32>
    %16 = vector.multi_reduction <add>, %15, %cst_7 [1, 2] : vector<1x2x256xf32> to vector<1xf32>
    %17 = vector.shape_cast %16 : vector<1xf32> to vector<1x1x1xf32>
    %18 = vector.extract %17[0, 0, 0] : f32 from vector<1x1x1xf32>
    %19 = vector.broadcast %18 : f32 to vector<1x1xf32>
    %cst_8 = arith.constant 5.120000e+02 : f32
    %20 = vector.broadcast %cst_8 : f32 to vector<1x1xf32>
    %21 = arith.divf %19, %20 : vector<1x1xf32>
    %22 = vector.broadcast %11 : vector<1x1xf32> to vector<2x256xf32>
    %23 = arith.subf %4, %22 : vector<2x256xf32>
    %cst_9 = arith.constant 9.99999974E-6 : f32
    %24 = vector.broadcast %cst_9 : f32 to vector<1x1xf32>
    %25 = arith.addf %21, %24 : vector<1x1xf32>
    %26 = math.rsqrt %25 : vector<1x1xf32>
    %27 = vector.broadcast %26 : vector<1x1xf32> to vector<2x256xf32>
    %28 = arith.mulf %23, %27 : vector<2x256xf32>
    %29 = vector.extract_strided_slice %2 {offsets = [0, 0], sizes = [2, 1], strides = [1, 1]} : vector<6x1xf32> to vector<2x1xf32>
    %30 = vector.broadcast %29 : vector<2x1xf32> to vector<2x256xf32>
    %31 = arith.mulf %28, %30 : vector<2x256xf32>
    %32 = vector.extract_strided_slice %3 {offsets = [0, 0], sizes = [2, 1], strides = [1, 1]} : vector<6x1xf32> to vector<2x1xf32>
    %33 = vector.broadcast %32 : vector<2x1xf32> to vector<2x256xf32>
    %34 = arith.addf %31, %33 : vector<2x256xf32>
    %35 = arith.negf %34 : vector<2x256xf32>
    %36 = math.exp %35 : vector<2x256xf32>
    %cst_10 = arith.constant 1.000000e+00 : f32
    %37 = vector.broadcast %cst_10 : f32 to vector<2x256xf32>
    %38 = arith.addf %37, %36 : vector<2x256xf32>
    %39 = arith.divf %37, %38 : vector<2x256xf32>
    %40 = arith.mulf %34, %39 : vector<2x256xf32>
    %c0_11 = arith.constant 0 : index
    %c0_12 = arith.constant 0 : index
    %c0_13 = arith.constant 0 : index
    %41 = vector.load %arg4[%c0_11, %c0_12, %c0_13] : memref<1x6x256xf32, #tpu.memory_space<vmem>>, vector<1x2x256xf32>
    %42 = vector.shape_cast %41 : vector<1x2x256xf32> to vector<2x256xf32>
    %43 = vector.shape_cast %40 : vector<2x256xf32> to vector<1x2x256xf32>
    tpu.vector_store %arg4[%c0_11, %c0_12, %c0_13], %43 {strides = array<i32>} : memref<1x6x256xf32, #tpu.memory_space<vmem>>, vector<1x2x256xf32>,
    %44 = vector.extract_strided_slice %1 {offsets = [2, 0], sizes = [2, 256], strides = [1, 1]} : vector<6x256xf32> to vector<2x256xf32>
    %45 = vector.shape_cast %44 : vector<2x256xf32> to vector<1x2x256xf32>
    %cst_14 = arith.constant dense<0.000000e+00> : vector<1xf32>
    %46 = vector.multi_reduction <add>, %45, %cst_14 [1, 2] : vector<1x2x256xf32> to vector<1xf32>
    %47 = vector.shape_cast %46 : vector<1xf32> to vector<1x1x1xf32>
    %48 = vector.extract %47[0, 0, 0] : f32 from vector<1x1x1xf32>
    %49 = vector.broadcast %48 : f32 to vector<1x1xf32>
    %cst_15 = arith.constant 5.120000e+02 : f32
    %50 = vector.broadcast %cst_15 : f32 to vector<1x1xf32>
    %51 = arith.divf %49, %50 : vector<1x1xf32>
    %52 = vector.broadcast %51 : vector<1x1xf32> to vector<2x256xf32>
    %53 = arith.subf %44, %52 : vector<2x256xf32>
    %54 = arith.mulf %53, %53 : vector<2x256xf32>
    %55 = vector.shape_cast %54 : vector<2x256xf32> to vector<1x2x256xf32>
    %cst_16 = arith.constant dense<0.000000e+00> : vector<1xf32>
    %56 = vector.multi_reduction <add>, %55, %cst_16 [1, 2] : vector<1x2x256xf32> to vector<1xf32>
    %57 = vector.shape_cast %56 : vector<1xf32> to vector<1x1x1xf32>
    %58 = vector.extract %57[0, 0, 0] : f32 from vector<1x1x1xf32>
    %59 = vector.broadcast %58 : f32 to vector<1x1xf32>
    %cst_17 = arith.constant 5.120000e+02 : f32
    %60 = vector.broadcast %cst_17 : f32 to vector<1x1xf32>
    %61 = arith.divf %59, %60 : vector<1x1xf32>
    %62 = vector.broadcast %51 : vector<1x1xf32> to vector<2x256xf32>
    %63 = arith.subf %44, %62 : vector<2x256xf32>
    %cst_18 = arith.constant 9.99999974E-6 : f32
    %64 = vector.broadcast %cst_18 : f32 to vector<1x1xf32>
    %65 = arith.addf %61, %64 : vector<1x1xf32>
    %66 = math.rsqrt %65 : vector<1x1xf32>
    %67 = vector.broadcast %66 : vector<1x1xf32> to vector<2x256xf32>
    %68 = arith.mulf %63, %67 : vector<2x256xf32>
    %69 = vector.extract_strided_slice %2 {offsets = [2, 0], sizes = [2, 1], strides = [1, 1]} : vector<6x1xf32> to vector<2x1xf32>
    %70 = vector.broadcast %69 : vector<2x1xf32> to vector<2x256xf32>
    %71 = arith.mulf %68, %70 : vector<2x256xf32>
    %72 = vector.extract_strided_slice %3 {offsets = [2, 0], sizes = [2, 1], strides = [1, 1]} : vector<6x1xf32> to vector<2x1xf32>
    %73 = vector.broadcast %72 : vector<2x1xf32> to vector<2x256xf32>
    %74 = arith.addf %71, %73 : vector<2x256xf32>
    %75 = arith.negf %74 : vector<2x256xf32>
    %76 = math.exp %75 : vector<2x256xf32>
    %cst_19 = arith.constant 1.000000e+00 : f32
    %77 = vector.broadcast %cst_19 : f32 to vector<2x256xf32>
    %78 = arith.addf %77, %76 : vector<2x256xf32>
    %79 = arith.divf %77, %78 : vector<2x256xf32>
    %80 = arith.mulf %74, %79 : vector<2x256xf32>
    %c0_20 = arith.constant 0 : index
    %c2 = arith.constant 2 : index
    %c0_21 = arith.constant 0 : index
    %81 = vector.load %arg4[%c0_20, %c2, %c0_21] : memref<1x6x256xf32, #tpu.memory_space<vmem>>, vector<1x2x256xf32>
    %82 = vector.shape_cast %81 : vector<1x2x256xf32> to vector<2x256xf32>
    %83 = vector.shape_cast %80 : vector<2x256xf32> to vector<1x2x256xf32>
    tpu.vector_store %arg4[%c0_20, %c2, %c0_21], %83 {strides = array<i32>} : memref<1x6x256xf32, #tpu.memory_space<vmem>>, vector<1x2x256xf32>,
    %84 = vector.extract_strided_slice %1 {offsets = [4, 0], sizes = [2, 256], strides = [1, 1]} : vector<6x256xf32> to vector<2x256xf32>
    %85 = vector.shape_cast %84 : vector<2x256xf32> to vector<1x2x256xf32>
    %cst_22 = arith.constant dense<0.000000e+00> : vector<1xf32>
    %86 = vector.multi_reduction <add>, %85, %cst_22 [1, 2] : vector<1x2x256xf32> to vector<1xf32>
    %87 = vector.shape_cast %86 : vector<1xf32> to vector<1x1x1xf32>
    %88 = vector.extract %87[0, 0, 0] : f32 from vector<1x1x1xf32>
    %89 = vector.broadcast %88 : f32 to vector<1x1xf32>
    %cst_23 = arith.constant 5.120000e+02 : f32
    %90 = vector.broadcast %cst_23 : f32 to vector<1x1xf32>
    %91 = arith.divf %89, %90 : vector<1x1xf32>
    %92 = vector.broadcast %91 : vector<1x1xf32> to vector<2x256xf32>
    %93 = arith.subf %84, %92 : vector<2x256xf32>
    %94 = arith.mulf %93, %93 : vector<2x256xf32>
    %95 = vector.shape_cast %94 : vector<2x256xf32> to vector<1x2x256xf32>
    %cst_24 = arith.constant dense<0.000000e+00> : vector<1xf32>
    %96 = vector.multi_reduction <add>, %95, %cst_24 [1, 2] : vector<1x2x256xf32> to vector<1xf32>
    %97 = vector.shape_cast %96 : vector<1xf32> to vector<1x1x1xf32>
    %98 = vector.extract %97[0, 0, 0] : f32 from vector<1x1x1xf32>
    %99 = vector.broadcast %98 : f32 to vector<1x1xf32>
    %cst_25 = arith.constant 5.120000e+02 : f32
    %100 = vector.broadcast %cst_25 : f32 to vector<1x1xf32>
    %101 = arith.divf %99, %100 : vector<1x1xf32>
    %102 = vector.broadcast %91 : vector<1x1xf32> to vector<2x256xf32>
    %103 = arith.subf %84, %102 : vector<2x256xf32>
    %cst_26 = arith.constant 9.99999974E-6 : f32
    %104 = vector.broadcast %cst_26 : f32 to vector<1x1xf32>
    %105 = arith.addf %101, %104 : vector<1x1xf32>
    %106 = math.rsqrt %105 : vector<1x1xf32>
    %107 = vector.broadcast %106 : vector<1x1xf32> to vector<2x256xf32>
    %108 = arith.mulf %103, %107 : vector<2x256xf32>
    %109 = vector.extract_strided_slice %2 {offsets = [4, 0], sizes = [2, 1], strides = [1, 1]} : vector<6x1xf32> to vector<2x1xf32>
    %110 = vector.broadcast %109 : vector<2x1xf32> to vector<2x256xf32>
    %111 = arith.mulf %108, %110 : vector<2x256xf32>
    %112 = vector.extract_strided_slice %3 {offsets = [4, 0], sizes = [2, 1], strides = [1, 1]} : vector<6x1xf32> to vector<2x1xf32>
    %113 = vector.broadcast %112 : vector<2x1xf32> to vector<2x256xf32>
    %114 = arith.addf %111, %113 : vector<2x256xf32>
    %115 = arith.negf %114 : vector<2x256xf32>
    %116 = math.exp %115 : vector<2x256xf32>
    %cst_27 = arith.constant 1.000000e+00 : f32
    %117 = vector.broadcast %cst_27 : f32 to vector<2x256xf32>
    %118 = arith.addf %117, %116 : vector<2x256xf32>
    %119 = arith.divf %117, %118 : vector<2x256xf32>
    %120 = arith.mulf %114, %119 : vector<2x256xf32>
    %c0_28 = arith.constant 0 : index
    %c4 = arith.constant 4 : index
    %c0_29 = arith.constant 0 : index
    %121 = vector.load %arg4[%c0_28, %c4, %c0_29] : memref<1x6x256xf32, #tpu.memory_space<vmem>>, vector<1x2x256xf32>
    %122 = vector.shape_cast %121 : vector<1x2x256xf32> to vector<2x256xf32>
    %123 = vector.shape_cast %120 : vector<2x256xf32> to vector<1x2x256xf32>
    tpu.vector_store %arg4[%c0_28, %c4, %c0_29], %123 {strides = array<i32>} : memref<1x6x256xf32, #tpu.memory_space<vmem>>, vector<1x2x256xf32>,
    return
  }
  func.func @transform_0(%arg0: i32) -> (i32, i32, i32) {
    %c0_i32 = arith.constant 0 : i32
    %c0_i32_0 = arith.constant 0 : i32
    %c0_i32_1 = arith.constant 0 : i32
    return %arg0, %c0_i32, %c0_i32_0 : i32, i32, i32
  }
  func.func @transform_1(%arg0: i32) -> (i32, i32) {
    %c0_i32 = arith.constant 0 : i32
    %c0_i32_0 = arith.constant 0 : i32
    %c0_i32_1 = arith.constant 0 : i32
    return %c0_i32, %c0_i32_0 : i32, i32
  }
  func.func @transform_2(%arg0: i32) -> (i32, i32) {
    %c0_i32 = arith.constant 0 : i32
    %c0_i32_0 = arith.constant 0 : i32
    %c0_i32_1 = arith.constant 0 : i32
    return %c0_i32, %c0_i32_0 : i32, i32
  }
  func.func @transform_3(%arg0: i32) -> (i32, i32, i32) {
    %c0_i32 = arith.constant 0 : i32
    %c0_i32_0 = arith.constant 0 : i32
    %c0_i32_1 = arith.constant 0 : i32
    return %arg0, %c0_i32, %c0_i32_0 : i32, i32, i32
  }
}

module attributes {stable_mosaic.version = 11 : i64} {
  func.func @_linear_kernel(%arg0: i32, %arg1: i32, %arg2: i32, %arg3: memref<2x32xf32, #tpu.memory_space<vmem>>, %arg4: memref<32x12xf32, #tpu.memory_space<vmem>>, %arg5: memref<1x12xf32, #tpu.memory_space<vmem>>, %arg6: memref<2x12xf32, #tpu.memory_space<vmem>>, %arg7: memref<2x12xf32, #tpu.memory_space<vmem>>) attributes {dimension_semantics = [#tpu.dimension_semantics<parallel>, #tpu.dimension_semantics<parallel>, #tpu.dimension_semantics<arbitrary>], iteration_bounds = array<i64: 1, 1, 1>, scalar_prefetch = 0 : i64, scratch_operands = 1 : i64, tpu.core_type = #tpu.core_type<tc>, window_params = [{transform_indices = @transform_0, window_bounds = array<i64: 2, 32>}, {transform_indices = @transform_1, window_bounds = array<i64: 32, 12>}, {transform_indices = @transform_2, window_bounds = array<i64: 1, 12>}, {transform_indices = @transform_3, window_bounds = array<i64: 2, 12>}]} {
    %c0_i32 = arith.constant 0 : i32
    %0 = arith.cmpi eq, %arg2, %c0_i32 : i32
    %1 = arith.extui %0 : i1 to i32
    %c0_i32_0 = arith.constant 0 : i32
    %2 = arith.cmpi ne, %1, %c0_i32_0 : i32
    scf.if %2 {
      %cst_11 = arith.constant 0.000000e+00 : f32
      %18 = vector.broadcast %cst_11 : f32 to vector<2x12xf32>
      %c0_12 = arith.constant 0 : index
      %c0_13 = arith.constant 0 : index
      %19 = vector.load %arg7[%c0_12, %c0_13] : memref<2x12xf32, #tpu.memory_space<vmem>>, vector<2x12xf32>
      tpu.vector_store %arg7[%c0_12, %c0_13], %18 {strides = array<i32>} : memref<2x12xf32, #tpu.memory_space<vmem>>, vector<2x12xf32>,
    } else {
    }
    %c0 = arith.constant 0 : index
    %c0_1 = arith.constant 0 : index
    %3 = vector.load %arg3[%c0, %c0_1] : memref<2x32xf32, #tpu.memory_space<vmem>>, vector<2x32xf32>
    %4 = arith.negf %3 : vector<2x32xf32>
    %5 = math.exp %4 : vector<2x32xf32>
    %cst = arith.constant 1.000000e+00 : f32
    %6 = vector.broadcast %cst : f32 to vector<2x32xf32>
    %7 = arith.addf %6, %5 : vector<2x32xf32>
    %8 = arith.divf %6, %7 : vector<2x32xf32>
    %9 = arith.mulf %3, %8 : vector<2x32xf32>
    %c0_2 = arith.constant 0 : index
    %c0_3 = arith.constant 0 : index
    %10 = vector.load %arg7[%c0_2, %c0_3] : memref<2x12xf32, #tpu.memory_space<vmem>>, vector<2x12xf32>
    %c0_4 = arith.constant 0 : index
    %c0_5 = arith.constant 0 : index
    %11 = vector.load %arg4[%c0_4, %c0_5] : memref<32x12xf32, #tpu.memory_space<vmem>>, vector<32x12xf32>
    %cst_6 = arith.constant dense<0.000000e+00> : vector<2x12xf32>
    %12 = tpu.matmul %9, %11, %cst_6 {dimension_numbers = #tpu.dot_dimension_numbers<[1], [0], [0], [1], [0, 0, 1, 1], [], []>} : vector<2x32xf32>, vector<32x12xf32>, vector<2x12xf32> -> vector<2x12xf32>
    %13 = arith.addf %10, %12 : vector<2x12xf32>
    %c0_7 = arith.constant 0 : index
    %c0_8 = arith.constant 0 : index
    %14 = vector.load %arg7[%c0_7, %c0_8] : memref<2x12xf32, #tpu.memory_space<vmem>>, vector<2x12xf32>
    tpu.vector_store %arg7[%c0_7, %c0_8], %13 {strides = array<i32>} : memref<2x12xf32, #tpu.memory_space<vmem>>, vector<2x12xf32>,
    %c0_i32_9 = arith.constant 0 : i32
    %15 = arith.cmpi eq, %arg2, %c0_i32_9 : i32
    %16 = arith.extui %15 : i1 to i32
    %c0_i32_10 = arith.constant 0 : i32
    %17 = arith.cmpi ne, %16, %c0_i32_10 : i32
    scf.if %17 {
      %c0_11 = arith.constant 0 : index
      %c0_12 = arith.constant 0 : index
      %18 = vector.load %arg7[%c0_11, %c0_12] : memref<2x12xf32, #tpu.memory_space<vmem>>, vector<2x12xf32>
      %c0_13 = arith.constant 0 : index
      %c0_14 = arith.constant 0 : index
      %19 = vector.load %arg5[%c0_13, %c0_14] : memref<1x12xf32, #tpu.memory_space<vmem>>, vector<1x12xf32>
      %20 = vector.broadcast %19 : vector<1x12xf32> to vector<2x12xf32>
      %21 = arith.addf %18, %20 : vector<2x12xf32>
      %c0_15 = arith.constant 0 : index
      %c0_16 = arith.constant 0 : index
      %22 = vector.load %arg6[%c0_15, %c0_16] : memref<2x12xf32, #tpu.memory_space<vmem>>, vector<2x12xf32>
      tpu.vector_store %arg6[%c0_15, %c0_16], %21 {strides = array<i32>} : memref<2x12xf32, #tpu.memory_space<vmem>>, vector<2x12xf32>,
    } else {
    }
    return
  }
  func.func @transform_0(%arg0: i32, %arg1: i32, %arg2: i32) -> (i32, i32) {
    %c0_i32 = arith.constant 0 : i32
    return %arg0, %arg2 : i32, i32
  }
  func.func @transform_1(%arg0: i32, %arg1: i32, %arg2: i32) -> (i32, i32) {
    %c0_i32 = arith.constant 0 : i32
    return %arg2, %arg1 : i32, i32
  }
  func.func @transform_2(%arg0: i32, %arg1: i32, %arg2: i32) -> (i32, i32) {
    %c0_i32 = arith.constant 0 : i32
    %c0_i32_0 = arith.constant 0 : i32
    return %c0_i32, %arg1 : i32, i32
  }
  func.func @transform_3(%arg0: i32, %arg1: i32, %arg2: i32) -> (i32, i32) {
    %c0_i32 = arith.constant 0 : i32
    return %arg0, %arg1 : i32, i32
  }
}

module attributes {stable_mosaic.version = 11 : i64} {
  func.func @_conv_mm_kernel(%arg0: i32, %arg1: i32, %arg2: i32, %arg3: memref<12x54xf32, #tpu.memory_space<vmem>>, %arg4: memref<1x54x256xf32, #tpu.memory_space<vmem>>, %arg5: memref<12x1xf32, #tpu.memory_space<vmem>>, %arg6: memref<1x12x256xf32, #tpu.memory_space<vmem>>, %arg7: memref<12x256xf32, #tpu.memory_space<vmem>>) attributes {dimension_semantics = [#tpu.dimension_semantics<parallel>, #tpu.dimension_semantics<parallel>, #tpu.dimension_semantics<arbitrary>], iteration_bounds = array<i64: 2, 1, 1>, scalar_prefetch = 0 : i64, scratch_operands = 1 : i64, tpu.core_type = #tpu.core_type<tc>, window_params = [{transform_indices = @transform_0, window_bounds = array<i64: 12, 54>}, {transform_indices = @transform_1, window_bounds = array<i64: 1, 54, 256>}, {pipeline_mode = #tpu.pipeline_mode<synchronous>, transform_indices = @transform_2, window_bounds = array<i64: 12, 1>}, {transform_indices = @transform_3, window_bounds = array<i64: 1, 12, 256>}]} {
    %c0_i32 = arith.constant 0 : i32
    %0 = arith.cmpi eq, %arg2, %c0_i32 : i32
    %1 = arith.extui %0 : i1 to i32
    %c0_i32_0 = arith.constant 0 : i32
    %2 = arith.cmpi ne, %1, %c0_i32_0 : i32
    scf.if %2 {
      %cst_11 = arith.constant 0.000000e+00 : f32
      %13 = vector.broadcast %cst_11 : f32 to vector<12x256xf32>
      %c0_12 = arith.constant 0 : index
      %c0_13 = arith.constant 0 : index
      %14 = vector.load %arg7[%c0_12, %c0_13] : memref<12x256xf32, #tpu.memory_space<vmem>>, vector<12x256xf32>
      tpu.vector_store %arg7[%c0_12, %c0_13], %13 {strides = array<i32>} : memref<12x256xf32, #tpu.memory_space<vmem>>, vector<12x256xf32>,
    } else {
    }
    %c0 = arith.constant 0 : index
    %c0_1 = arith.constant 0 : index
    %3 = vector.load %arg7[%c0, %c0_1] : memref<12x256xf32, #tpu.memory_space<vmem>>, vector<12x256xf32>
    %c0_2 = arith.constant 0 : index
    %c0_3 = arith.constant 0 : index
    %4 = vector.load %arg3[%c0_2, %c0_3] : memref<12x54xf32, #tpu.memory_space<vmem>>, vector<12x54xf32>
    %c0_4 = arith.constant 0 : index
    %c0_5 = arith.constant 0 : index
    %c0_6 = arith.constant 0 : index
    %5 = vector.load %arg4[%c0_4, %c0_5, %c0_6] : memref<1x54x256xf32, #tpu.memory_space<vmem>>, vector<1x54x256xf32>
    %6 = vector.shape_cast %5 : vector<1x54x256xf32> to vector<54x256xf32>
    %cst = arith.constant dense<0.000000e+00> : vector<12x256xf32>
    %7 = tpu.matmul %4, %6, %cst {dimension_numbers = #tpu.dot_dimension_numbers<[1], [0], [0], [1], [0, 0, 1, 1], [], []>} : vector<12x54xf32>, vector<54x256xf32>, vector<12x256xf32> -> vector<12x256xf32>
    %8 = arith.addf %3, %7 : vector<12x256xf32>
    %c0_7 = arith.constant 0 : index
    %c0_8 = arith.constant 0 : index
    %9 = vector.load %arg7[%c0_7, %c0_8] : memref<12x256xf32, #tpu.memory_space<vmem>>, vector<12x256xf32>
    tpu.vector_store %arg7[%c0_7, %c0_8], %8 {strides = array<i32>} : memref<12x256xf32, #tpu.memory_space<vmem>>, vector<12x256xf32>,
    %c0_i32_9 = arith.constant 0 : i32
    %10 = arith.cmpi eq, %arg2, %c0_i32_9 : i32
    %11 = arith.extui %10 : i1 to i32
    %c0_i32_10 = arith.constant 0 : i32
    %12 = arith.cmpi ne, %11, %c0_i32_10 : i32
    scf.if %12 {
      %c0_11 = arith.constant 0 : index
      %c0_12 = arith.constant 0 : index
      %13 = vector.load %arg7[%c0_11, %c0_12] : memref<12x256xf32, #tpu.memory_space<vmem>>, vector<12x256xf32>
      %c0_13 = arith.constant 0 : index
      %c0_14 = arith.constant 0 : index
      %14 = vector.load %arg5[%c0_13, %c0_14] : memref<12x1xf32, #tpu.memory_space<vmem>>, vector<12x1xf32>
      %15 = vector.broadcast %14 : vector<12x1xf32> to vector<12x256xf32>
      %16 = arith.addf %13, %15 : vector<12x256xf32>
      %c0_15 = arith.constant 0 : index
      %c0_16 = arith.constant 0 : index
      %c0_17 = arith.constant 0 : index
      %17 = vector.load %arg6[%c0_15, %c0_16, %c0_17] : memref<1x12x256xf32, #tpu.memory_space<vmem>>, vector<1x12x256xf32>
      %18 = vector.shape_cast %17 : vector<1x12x256xf32> to vector<12x256xf32>
      %19 = vector.shape_cast %16 : vector<12x256xf32> to vector<1x12x256xf32>
      tpu.vector_store %arg6[%c0_15, %c0_16, %c0_17], %19 {strides = array<i32>} : memref<1x12x256xf32, #tpu.memory_space<vmem>>, vector<1x12x256xf32>,
    } else {
    }
    return
  }
  func.func @transform_0(%arg0: i32, %arg1: i32, %arg2: i32) -> (i32, i32) {
    %c0_i32 = arith.constant 0 : i32
    %c0_i32_0 = arith.constant 0 : i32
    return %c0_i32, %arg2 : i32, i32
  }
  func.func @transform_1(%arg0: i32, %arg1: i32, %arg2: i32) -> (i32, i32, i32) {
    %c0_i32 = arith.constant 0 : i32
    return %arg0, %arg2, %arg1 : i32, i32, i32
  }
  func.func @transform_2(%arg0: i32, %arg1: i32, %arg2: i32) -> (i32, i32) {
    %c0_i32 = arith.constant 0 : i32
    %c0_i32_0 = arith.constant 0 : i32
    %c0_i32_1 = arith.constant 0 : i32
    return %c0_i32, %c0_i32_0 : i32, i32
  }
  func.func @transform_3(%arg0: i32, %arg1: i32, %arg2: i32) -> (i32, i32, i32) {
    %c0_i32 = arith.constant 0 : i32
    %c0_i32_0 = arith.constant 0 : i32
    return %arg0, %c0_i32, %arg1 : i32, i32, i32
  }
}

module attributes {stable_mosaic.version = 11 : i64} {
  func.func @_gn_kernel(%arg0: i32, %arg1: memref<1x12x256xf32, #tpu.memory_space<vmem>>, %arg2: memref<12x1xf32, #tpu.memory_space<vmem>>, %arg3: memref<12x1xf32, #tpu.memory_space<vmem>>, %arg4: memref<1x12x1xf32, #tpu.memory_space<vmem>>, %arg5: memref<1x12x256xf32, #tpu.memory_space<vmem>>) attributes {dimension_semantics = [#tpu.dimension_semantics<parallel>], iteration_bounds = array<i64: 2>, scalar_prefetch = 0 : i64, scratch_operands = 0 : i64, tpu.core_type = #tpu.core_type<tc>, window_params = [{transform_indices = @transform_0, window_bounds = array<i64: 1, 12, 256>}, {pipeline_mode = #tpu.pipeline_mode<synchronous>, transform_indices = @transform_1, window_bounds = array<i64: 12, 1>}, {pipeline_mode = #tpu.pipeline_mode<synchronous>, transform_indices = @transform_2, window_bounds = array<i64: 12, 1>}, {transform_indices = @transform_3, window_bounds = array<i64: 1, 12, 1>}, {transform_indices = @transform_4, window_bounds = array<i64: 1, 12, 256>}]} {
    %c0 = arith.constant 0 : index
    %c0_0 = arith.constant 0 : index
    %c0_1 = arith.constant 0 : index
    %0 = vector.load %arg1[%c0, %c0_0, %c0_1] : memref<1x12x256xf32, #tpu.memory_space<vmem>>, vector<1x12x256xf32>
    %1 = vector.shape_cast %0 : vector<1x12x256xf32> to vector<12x256xf32>
    %c0_2 = arith.constant 0 : index
    %c0_3 = arith.constant 0 : index
    %c0_4 = arith.constant 0 : index
    %2 = vector.load %arg4[%c0_2, %c0_3, %c0_4] : memref<1x12x1xf32, #tpu.memory_space<vmem>>, vector<1x12x1xf32>
    %3 = vector.shape_cast %2 : vector<1x12x1xf32> to vector<12x1xf32>
    %4 = vector.broadcast %3 : vector<12x1xf32> to vector<12x256xf32>
    %5 = arith.addf %1, %4 : vector<12x256xf32>
    %c0_5 = arith.constant 0 : index
    %c0_6 = arith.constant 0 : index
    %6 = vector.load %arg2[%c0_5, %c0_6] : memref<12x1xf32, #tpu.memory_space<vmem>>, vector<12x1xf32>
    %c0_7 = arith.constant 0 : index
    %c0_8 = arith.constant 0 : index
    %7 = vector.load %arg3[%c0_7, %c0_8] : memref<12x1xf32, #tpu.memory_space<vmem>>, vector<12x1xf32>
    %8 = vector.extract_strided_slice %5 {offsets = [0, 0], sizes = [4, 256], strides = [1, 1]} : vector<12x256xf32> to vector<4x256xf32>
    %9 = vector.shape_cast %8 : vector<4x256xf32> to vector<1x4x256xf32>
    %cst = arith.constant dense<0.000000e+00> : vector<1xf32>
    %10 = vector.multi_reduction <add>, %9, %cst [1, 2] : vector<1x4x256xf32> to vector<1xf32>
    %11 = vector.shape_cast %10 : vector<1xf32> to vector<1x1x1xf32>
    %12 = vector.extract %11[0, 0, 0] : f32 from vector<1x1x1xf32>
    %13 = vector.broadcast %12 : f32 to vector<1x1xf32>
    %cst_9 = arith.constant 1.024000e+03 : f32
    %14 = vector.broadcast %cst_9 : f32 to vector<1x1xf32>
    %15 = arith.divf %13, %14 : vector<1x1xf32>
    %16 = vector.broadcast %15 : vector<1x1xf32> to vector<4x256xf32>
    %17 = arith.subf %8, %16 : vector<4x256xf32>
    %18 = arith.mulf %17, %17 : vector<4x256xf32>
    %19 = vector.shape_cast %18 : vector<4x256xf32> to vector<1x4x256xf32>
    %cst_10 = arith.constant dense<0.000000e+00> : vector<1xf32>
    %20 = vector.multi_reduction <add>, %19, %cst_10 [1, 2] : vector<1x4x256xf32> to vector<1xf32>
    %21 = vector.shape_cast %20 : vector<1xf32> to vector<1x1x1xf32>
    %22 = vector.extract %21[0, 0, 0] : f32 from vector<1x1x1xf32>
    %23 = vector.broadcast %22 : f32 to vector<1x1xf32>
    %cst_11 = arith.constant 1.024000e+03 : f32
    %24 = vector.broadcast %cst_11 : f32 to vector<1x1xf32>
    %25 = arith.divf %23, %24 : vector<1x1xf32>
    %26 = vector.broadcast %15 : vector<1x1xf32> to vector<4x256xf32>
    %27 = arith.subf %8, %26 : vector<4x256xf32>
    %cst_12 = arith.constant 9.99999974E-6 : f32
    %28 = vector.broadcast %cst_12 : f32 to vector<1x1xf32>
    %29 = arith.addf %25, %28 : vector<1x1xf32>
    %30 = math.rsqrt %29 : vector<1x1xf32>
    %31 = vector.broadcast %30 : vector<1x1xf32> to vector<4x256xf32>
    %32 = arith.mulf %27, %31 : vector<4x256xf32>
    %33 = vector.extract_strided_slice %6 {offsets = [0, 0], sizes = [4, 1], strides = [1, 1]} : vector<12x1xf32> to vector<4x1xf32>
    %34 = vector.broadcast %33 : vector<4x1xf32> to vector<4x256xf32>
    %35 = arith.mulf %32, %34 : vector<4x256xf32>
    %36 = vector.extract_strided_slice %7 {offsets = [0, 0], sizes = [4, 1], strides = [1, 1]} : vector<12x1xf32> to vector<4x1xf32>
    %37 = vector.broadcast %36 : vector<4x1xf32> to vector<4x256xf32>
    %38 = arith.addf %35, %37 : vector<4x256xf32>
    %39 = arith.negf %38 : vector<4x256xf32>
    %40 = math.exp %39 : vector<4x256xf32>
    %cst_13 = arith.constant 1.000000e+00 : f32
    %41 = vector.broadcast %cst_13 : f32 to vector<4x256xf32>
    %42 = arith.addf %41, %40 : vector<4x256xf32>
    %43 = arith.divf %41, %42 : vector<4x256xf32>
    %44 = arith.mulf %38, %43 : vector<4x256xf32>
    %c0_14 = arith.constant 0 : index
    %c0_15 = arith.constant 0 : index
    %c0_16 = arith.constant 0 : index
    %45 = vector.load %arg5[%c0_14, %c0_15, %c0_16] : memref<1x12x256xf32, #tpu.memory_space<vmem>>, vector<1x4x256xf32>
    %46 = vector.shape_cast %45 : vector<1x4x256xf32> to vector<4x256xf32>
    %47 = vector.shape_cast %44 : vector<4x256xf32> to vector<1x4x256xf32>
    tpu.vector_store %arg5[%c0_14, %c0_15, %c0_16], %47 {strides = array<i32>} : memref<1x12x256xf32, #tpu.memory_space<vmem>>, vector<1x4x256xf32>,
    %48 = vector.extract_strided_slice %5 {offsets = [4, 0], sizes = [4, 256], strides = [1, 1]} : vector<12x256xf32> to vector<4x256xf32>
    %49 = vector.shape_cast %48 : vector<4x256xf32> to vector<1x4x256xf32>
    %cst_17 = arith.constant dense<0.000000e+00> : vector<1xf32>
    %50 = vector.multi_reduction <add>, %49, %cst_17 [1, 2] : vector<1x4x256xf32> to vector<1xf32>
    %51 = vector.shape_cast %50 : vector<1xf32> to vector<1x1x1xf32>
    %52 = vector.extract %51[0, 0, 0] : f32 from vector<1x1x1xf32>
    %53 = vector.broadcast %52 : f32 to vector<1x1xf32>
    %cst_18 = arith.constant 1.024000e+03 : f32
    %54 = vector.broadcast %cst_18 : f32 to vector<1x1xf32>
    %55 = arith.divf %53, %54 : vector<1x1xf32>
    %56 = vector.broadcast %55 : vector<1x1xf32> to vector<4x256xf32>
    %57 = arith.subf %48, %56 : vector<4x256xf32>
    %58 = arith.mulf %57, %57 : vector<4x256xf32>
    %59 = vector.shape_cast %58 : vector<4x256xf32> to vector<1x4x256xf32>
    %cst_19 = arith.constant dense<0.000000e+00> : vector<1xf32>
    %60 = vector.multi_reduction <add>, %59, %cst_19 [1, 2] : vector<1x4x256xf32> to vector<1xf32>
    %61 = vector.shape_cast %60 : vector<1xf32> to vector<1x1x1xf32>
    %62 = vector.extract %61[0, 0, 0] : f32 from vector<1x1x1xf32>
    %63 = vector.broadcast %62 : f32 to vector<1x1xf32>
    %cst_20 = arith.constant 1.024000e+03 : f32
    %64 = vector.broadcast %cst_20 : f32 to vector<1x1xf32>
    %65 = arith.divf %63, %64 : vector<1x1xf32>
    %66 = vector.broadcast %55 : vector<1x1xf32> to vector<4x256xf32>
    %67 = arith.subf %48, %66 : vector<4x256xf32>
    %cst_21 = arith.constant 9.99999974E-6 : f32
    %68 = vector.broadcast %cst_21 : f32 to vector<1x1xf32>
    %69 = arith.addf %65, %68 : vector<1x1xf32>
    %70 = math.rsqrt %69 : vector<1x1xf32>
    %71 = vector.broadcast %70 : vector<1x1xf32> to vector<4x256xf32>
    %72 = arith.mulf %67, %71 : vector<4x256xf32>
    %73 = vector.extract_strided_slice %6 {offsets = [4, 0], sizes = [4, 1], strides = [1, 1]} : vector<12x1xf32> to vector<4x1xf32>
    %74 = vector.broadcast %73 : vector<4x1xf32> to vector<4x256xf32>
    %75 = arith.mulf %72, %74 : vector<4x256xf32>
    %76 = vector.extract_strided_slice %7 {offsets = [4, 0], sizes = [4, 1], strides = [1, 1]} : vector<12x1xf32> to vector<4x1xf32>
    %77 = vector.broadcast %76 : vector<4x1xf32> to vector<4x256xf32>
    %78 = arith.addf %75, %77 : vector<4x256xf32>
    %79 = arith.negf %78 : vector<4x256xf32>
    %80 = math.exp %79 : vector<4x256xf32>
    %cst_22 = arith.constant 1.000000e+00 : f32
    %81 = vector.broadcast %cst_22 : f32 to vector<4x256xf32>
    %82 = arith.addf %81, %80 : vector<4x256xf32>
    %83 = arith.divf %81, %82 : vector<4x256xf32>
    %84 = arith.mulf %78, %83 : vector<4x256xf32>
    %c0_23 = arith.constant 0 : index
    %c4 = arith.constant 4 : index
    %c0_24 = arith.constant 0 : index
    %85 = vector.load %arg5[%c0_23, %c4, %c0_24] : memref<1x12x256xf32, #tpu.memory_space<vmem>>, vector<1x4x256xf32>
    %86 = vector.shape_cast %85 : vector<1x4x256xf32> to vector<4x256xf32>
    %87 = vector.shape_cast %84 : vector<4x256xf32> to vector<1x4x256xf32>
    tpu.vector_store %arg5[%c0_23, %c4, %c0_24], %87 {strides = array<i32>} : memref<1x12x256xf32, #tpu.memory_space<vmem>>, vector<1x4x256xf32>,
    %88 = vector.extract_strided_slice %5 {offsets = [8, 0], sizes = [4, 256], strides = [1, 1]} : vector<12x256xf32> to vector<4x256xf32>
    %89 = vector.shape_cast %88 : vector<4x256xf32> to vector<1x4x256xf32>
    %cst_25 = arith.constant dense<0.000000e+00> : vector<1xf32>
    %90 = vector.multi_reduction <add>, %89, %cst_25 [1, 2] : vector<1x4x256xf32> to vector<1xf32>
    %91 = vector.shape_cast %90 : vector<1xf32> to vector<1x1x1xf32>
    %92 = vector.extract %91[0, 0, 0] : f32 from vector<1x1x1xf32>
    %93 = vector.broadcast %92 : f32 to vector<1x1xf32>
    %cst_26 = arith.constant 1.024000e+03 : f32
    %94 = vector.broadcast %cst_26 : f32 to vector<1x1xf32>
    %95 = arith.divf %93, %94 : vector<1x1xf32>
    %96 = vector.broadcast %95 : vector<1x1xf32> to vector<4x256xf32>
    %97 = arith.subf %88, %96 : vector<4x256xf32>
    %98 = arith.mulf %97, %97 : vector<4x256xf32>
    %99 = vector.shape_cast %98 : vector<4x256xf32> to vector<1x4x256xf32>
    %cst_27 = arith.constant dense<0.000000e+00> : vector<1xf32>
    %100 = vector.multi_reduction <add>, %99, %cst_27 [1, 2] : vector<1x4x256xf32> to vector<1xf32>
    %101 = vector.shape_cast %100 : vector<1xf32> to vector<1x1x1xf32>
    %102 = vector.extract %101[0, 0, 0] : f32 from vector<1x1x1xf32>
    %103 = vector.broadcast %102 : f32 to vector<1x1xf32>
    %cst_28 = arith.constant 1.024000e+03 : f32
    %104 = vector.broadcast %cst_28 : f32 to vector<1x1xf32>
    %105 = arith.divf %103, %104 : vector<1x1xf32>
    %106 = vector.broadcast %95 : vector<1x1xf32> to vector<4x256xf32>
    %107 = arith.subf %88, %106 : vector<4x256xf32>
    %cst_29 = arith.constant 9.99999974E-6 : f32
    %108 = vector.broadcast %cst_29 : f32 to vector<1x1xf32>
    %109 = arith.addf %105, %108 : vector<1x1xf32>
    %110 = math.rsqrt %109 : vector<1x1xf32>
    %111 = vector.broadcast %110 : vector<1x1xf32> to vector<4x256xf32>
    %112 = arith.mulf %107, %111 : vector<4x256xf32>
    %113 = vector.extract_strided_slice %6 {offsets = [8, 0], sizes = [4, 1], strides = [1, 1]} : vector<12x1xf32> to vector<4x1xf32>
    %114 = vector.broadcast %113 : vector<4x1xf32> to vector<4x256xf32>
    %115 = arith.mulf %112, %114 : vector<4x256xf32>
    %116 = vector.extract_strided_slice %7 {offsets = [8, 0], sizes = [4, 1], strides = [1, 1]} : vector<12x1xf32> to vector<4x1xf32>
    %117 = vector.broadcast %116 : vector<4x1xf32> to vector<4x256xf32>
    %118 = arith.addf %115, %117 : vector<4x256xf32>
    %119 = arith.negf %118 : vector<4x256xf32>
    %120 = math.exp %119 : vector<4x256xf32>
    %cst_30 = arith.constant 1.000000e+00 : f32
    %121 = vector.broadcast %cst_30 : f32 to vector<4x256xf32>
    %122 = arith.addf %121, %120 : vector<4x256xf32>
    %123 = arith.divf %121, %122 : vector<4x256xf32>
    %124 = arith.mulf %118, %123 : vector<4x256xf32>
    %c0_31 = arith.constant 0 : index
    %c8 = arith.constant 8 : index
    %c0_32 = arith.constant 0 : index
    %125 = vector.load %arg5[%c0_31, %c8, %c0_32] : memref<1x12x256xf32, #tpu.memory_space<vmem>>, vector<1x4x256xf32>
    %126 = vector.shape_cast %125 : vector<1x4x256xf32> to vector<4x256xf32>
    %127 = vector.shape_cast %124 : vector<4x256xf32> to vector<1x4x256xf32>
    tpu.vector_store %arg5[%c0_31, %c8, %c0_32], %127 {strides = array<i32>} : memref<1x12x256xf32, #tpu.memory_space<vmem>>, vector<1x4x256xf32>,
    return
  }
  func.func @transform_0(%arg0: i32) -> (i32, i32, i32) {
    %c0_i32 = arith.constant 0 : i32
    %c0_i32_0 = arith.constant 0 : i32
    %c0_i32_1 = arith.constant 0 : i32
    return %arg0, %c0_i32, %c0_i32_0 : i32, i32, i32
  }
  func.func @transform_1(%arg0: i32) -> (i32, i32) {
    %c0_i32 = arith.constant 0 : i32
    %c0_i32_0 = arith.constant 0 : i32
    %c0_i32_1 = arith.constant 0 : i32
    return %c0_i32, %c0_i32_0 : i32, i32
  }
  func.func @transform_2(%arg0: i32) -> (i32, i32) {
    %c0_i32 = arith.constant 0 : i32
    %c0_i32_0 = arith.constant 0 : i32
    %c0_i32_1 = arith.constant 0 : i32
    return %c0_i32, %c0_i32_0 : i32, i32
  }
  func.func @transform_3(%arg0: i32) -> (i32, i32, i32) {
    %c0_i32 = arith.constant 0 : i32
    %c0_i32_0 = arith.constant 0 : i32
    %c0_i32_1 = arith.constant 0 : i32
    return %arg0, %c0_i32, %c0_i32_0 : i32, i32, i32
  }
  func.func @transform_4(%arg0: i32) -> (i32, i32, i32) {
    %c0_i32 = arith.constant 0 : i32
    %c0_i32_0 = arith.constant 0 : i32
    %c0_i32_1 = arith.constant 0 : i32
    return %arg0, %c0_i32, %c0_i32_0 : i32, i32, i32
  }
}

module attributes {stable_mosaic.version = 11 : i64} {
  func.func @_conv_mm_kernel(%arg0: i32, %arg1: i32, %arg2: i32, %arg3: memref<12x114xf32, #tpu.memory_space<vmem>>, %arg4: memref<1x114x256xf32, #tpu.memory_space<vmem>>, %arg5: memref<12x1xf32, #tpu.memory_space<vmem>>, %arg6: memref<1x12x256xf32, #tpu.memory_space<vmem>>, %arg7: memref<12x256xf32, #tpu.memory_space<vmem>>) attributes {dimension_semantics = [#tpu.dimension_semantics<parallel>, #tpu.dimension_semantics<parallel>, #tpu.dimension_semantics<arbitrary>], iteration_bounds = array<i64: 2, 1, 1>, scalar_prefetch = 0 : i64, scratch_operands = 1 : i64, tpu.core_type = #tpu.core_type<tc>, window_params = [{transform_indices = @transform_0, window_bounds = array<i64: 12, 114>}, {transform_indices = @transform_1, window_bounds = array<i64: 1, 114, 256>}, {pipeline_mode = #tpu.pipeline_mode<synchronous>, transform_indices = @transform_2, window_bounds = array<i64: 12, 1>}, {transform_indices = @transform_3, window_bounds = array<i64: 1, 12, 256>}]} {
    %c0_i32 = arith.constant 0 : i32
    %0 = arith.cmpi eq, %arg2, %c0_i32 : i32
    %1 = arith.extui %0 : i1 to i32
    %c0_i32_0 = arith.constant 0 : i32
    %2 = arith.cmpi ne, %1, %c0_i32_0 : i32
    scf.if %2 {
      %cst_11 = arith.constant 0.000000e+00 : f32
      %13 = vector.broadcast %cst_11 : f32 to vector<12x256xf32>
      %c0_12 = arith.constant 0 : index
      %c0_13 = arith.constant 0 : index
      %14 = vector.load %arg7[%c0_12, %c0_13] : memref<12x256xf32, #tpu.memory_space<vmem>>, vector<12x256xf32>
      tpu.vector_store %arg7[%c0_12, %c0_13], %13 {strides = array<i32>} : memref<12x256xf32, #tpu.memory_space<vmem>>, vector<12x256xf32>,
    } else {
    }
    %c0 = arith.constant 0 : index
    %c0_1 = arith.constant 0 : index
    %3 = vector.load %arg7[%c0, %c0_1] : memref<12x256xf32, #tpu.memory_space<vmem>>, vector<12x256xf32>
    %c0_2 = arith.constant 0 : index
    %c0_3 = arith.constant 0 : index
    %4 = vector.load %arg3[%c0_2, %c0_3] : memref<12x114xf32, #tpu.memory_space<vmem>>, vector<12x114xf32>
    %c0_4 = arith.constant 0 : index
    %c0_5 = arith.constant 0 : index
    %c0_6 = arith.constant 0 : index
    %5 = vector.load %arg4[%c0_4, %c0_5, %c0_6] : memref<1x114x256xf32, #tpu.memory_space<vmem>>, vector<1x114x256xf32>
    %6 = vector.shape_cast %5 : vector<1x114x256xf32> to vector<114x256xf32>
    %cst = arith.constant dense<0.000000e+00> : vector<12x256xf32>
    %7 = tpu.matmul %4, %6, %cst {dimension_numbers = #tpu.dot_dimension_numbers<[1], [0], [0], [1], [0, 0, 1, 1], [], []>} : vector<12x114xf32>, vector<114x256xf32>, vector<12x256xf32> -> vector<12x256xf32>
    %8 = arith.addf %3, %7 : vector<12x256xf32>
    %c0_7 = arith.constant 0 : index
    %c0_8 = arith.constant 0 : index
    %9 = vector.load %arg7[%c0_7, %c0_8] : memref<12x256xf32, #tpu.memory_space<vmem>>, vector<12x256xf32>
    tpu.vector_store %arg7[%c0_7, %c0_8], %8 {strides = array<i32>} : memref<12x256xf32, #tpu.memory_space<vmem>>, vector<12x256xf32>,
    %c0_i32_9 = arith.constant 0 : i32
    %10 = arith.cmpi eq, %arg2, %c0_i32_9 : i32
    %11 = arith.extui %10 : i1 to i32
    %c0_i32_10 = arith.constant 0 : i32
    %12 = arith.cmpi ne, %11, %c0_i32_10 : i32
    scf.if %12 {
      %c0_11 = arith.constant 0 : index
      %c0_12 = arith.constant 0 : index
      %13 = vector.load %arg7[%c0_11, %c0_12] : memref<12x256xf32, #tpu.memory_space<vmem>>, vector<12x256xf32>
      %c0_13 = arith.constant 0 : index
      %c0_14 = arith.constant 0 : index
      %14 = vector.load %arg5[%c0_13, %c0_14] : memref<12x1xf32, #tpu.memory_space<vmem>>, vector<12x1xf32>
      %15 = vector.broadcast %14 : vector<12x1xf32> to vector<12x256xf32>
      %16 = arith.addf %13, %15 : vector<12x256xf32>
      %c0_15 = arith.constant 0 : index
      %c0_16 = arith.constant 0 : index
      %c0_17 = arith.constant 0 : index
      %17 = vector.load %arg6[%c0_15, %c0_16, %c0_17] : memref<1x12x256xf32, #tpu.memory_space<vmem>>, vector<1x12x256xf32>
      %18 = vector.shape_cast %17 : vector<1x12x256xf32> to vector<12x256xf32>
      %19 = vector.shape_cast %16 : vector<12x256xf32> to vector<1x12x256xf32>
      tpu.vector_store %arg6[%c0_15, %c0_16, %c0_17], %19 {strides = array<i32>} : memref<1x12x256xf32, #tpu.memory_space<vmem>>, vector<1x12x256xf32>,
    } else {
    }
    return
  }
  func.func @transform_0(%arg0: i32, %arg1: i32, %arg2: i32) -> (i32, i32) {
    %c0_i32 = arith.constant 0 : i32
    %c0_i32_0 = arith.constant 0 : i32
    return %c0_i32, %arg2 : i32, i32
  }
  func.func @transform_1(%arg0: i32, %arg1: i32, %arg2: i32) -> (i32, i32, i32) {
    %c0_i32 = arith.constant 0 : i32
    return %arg0, %arg2, %arg1 : i32, i32, i32
  }
  func.func @transform_2(%arg0: i32, %arg1: i32, %arg2: i32) -> (i32, i32) {
    %c0_i32 = arith.constant 0 : i32
    %c0_i32_0 = arith.constant 0 : i32
    %c0_i32_1 = arith.constant 0 : i32
    return %c0_i32, %c0_i32_0 : i32, i32
  }
  func.func @transform_3(%arg0: i32, %arg1: i32, %arg2: i32) -> (i32, i32, i32) {
    %c0_i32 = arith.constant 0 : i32
    %c0_i32_0 = arith.constant 0 : i32
    return %arg0, %c0_i32, %arg1 : i32, i32, i32
  }
}

module attributes {stable_mosaic.version = 11 : i64} {
  func.func @_gn_kernel(%arg0: i32, %arg1: memref<1x12x256xf32, #tpu.memory_space<vmem>>, %arg2: memref<12x1xf32, #tpu.memory_space<vmem>>, %arg3: memref<12x1xf32, #tpu.memory_space<vmem>>, %arg4: memref<1x12x256xf32, #tpu.memory_space<vmem>>) attributes {dimension_semantics = [#tpu.dimension_semantics<parallel>], iteration_bounds = array<i64: 2>, scalar_prefetch = 0 : i64, scratch_operands = 0 : i64, tpu.core_type = #tpu.core_type<tc>, window_params = [{transform_indices = @transform_0, window_bounds = array<i64: 1, 12, 256>}, {pipeline_mode = #tpu.pipeline_mode<synchronous>, transform_indices = @transform_1, window_bounds = array<i64: 12, 1>}, {pipeline_mode = #tpu.pipeline_mode<synchronous>, transform_indices = @transform_2, window_bounds = array<i64: 12, 1>}, {transform_indices = @transform_3, window_bounds = array<i64: 1, 12, 256>}]} {
    %c0 = arith.constant 0 : index
    %c0_0 = arith.constant 0 : index
    %c0_1 = arith.constant 0 : index
    %0 = vector.load %arg1[%c0, %c0_0, %c0_1] : memref<1x12x256xf32, #tpu.memory_space<vmem>>, vector<1x12x256xf32>
    %1 = vector.shape_cast %0 : vector<1x12x256xf32> to vector<12x256xf32>
    %c0_2 = arith.constant 0 : index
    %c0_3 = arith.constant 0 : index
    %2 = vector.load %arg2[%c0_2, %c0_3] : memref<12x1xf32, #tpu.memory_space<vmem>>, vector<12x1xf32>
    %c0_4 = arith.constant 0 : index
    %c0_5 = arith.constant 0 : index
    %3 = vector.load %arg3[%c0_4, %c0_5] : memref<12x1xf32, #tpu.memory_space<vmem>>, vector<12x1xf32>
    %4 = vector.extract_strided_slice %1 {offsets = [0, 0], sizes = [4, 256], strides = [1, 1]} : vector<12x256xf32> to vector<4x256xf32>
    %5 = vector.shape_cast %4 : vector<4x256xf32> to vector<1x4x256xf32>
    %cst = arith.constant dense<0.000000e+00> : vector<1xf32>
    %6 = vector.multi_reduction <add>, %5, %cst [1, 2] : vector<1x4x256xf32> to vector<1xf32>
    %7 = vector.shape_cast %6 : vector<1xf32> to vector<1x1x1xf32>
    %8 = vector.extract %7[0, 0, 0] : f32 from vector<1x1x1xf32>
    %9 = vector.broadcast %8 : f32 to vector<1x1xf32>
    %cst_6 = arith.constant 1.024000e+03 : f32
    %10 = vector.broadcast %cst_6 : f32 to vector<1x1xf32>
    %11 = arith.divf %9, %10 : vector<1x1xf32>
    %12 = vector.broadcast %11 : vector<1x1xf32> to vector<4x256xf32>
    %13 = arith.subf %4, %12 : vector<4x256xf32>
    %14 = arith.mulf %13, %13 : vector<4x256xf32>
    %15 = vector.shape_cast %14 : vector<4x256xf32> to vector<1x4x256xf32>
    %cst_7 = arith.constant dense<0.000000e+00> : vector<1xf32>
    %16 = vector.multi_reduction <add>, %15, %cst_7 [1, 2] : vector<1x4x256xf32> to vector<1xf32>
    %17 = vector.shape_cast %16 : vector<1xf32> to vector<1x1x1xf32>
    %18 = vector.extract %17[0, 0, 0] : f32 from vector<1x1x1xf32>
    %19 = vector.broadcast %18 : f32 to vector<1x1xf32>
    %cst_8 = arith.constant 1.024000e+03 : f32
    %20 = vector.broadcast %cst_8 : f32 to vector<1x1xf32>
    %21 = arith.divf %19, %20 : vector<1x1xf32>
    %22 = vector.broadcast %11 : vector<1x1xf32> to vector<4x256xf32>
    %23 = arith.subf %4, %22 : vector<4x256xf32>
    %cst_9 = arith.constant 9.99999974E-6 : f32
    %24 = vector.broadcast %cst_9 : f32 to vector<1x1xf32>
    %25 = arith.addf %21, %24 : vector<1x1xf32>
    %26 = math.rsqrt %25 : vector<1x1xf32>
    %27 = vector.broadcast %26 : vector<1x1xf32> to vector<4x256xf32>
    %28 = arith.mulf %23, %27 : vector<4x256xf32>
    %29 = vector.extract_strided_slice %2 {offsets = [0, 0], sizes = [4, 1], strides = [1, 1]} : vector<12x1xf32> to vector<4x1xf32>
    %30 = vector.broadcast %29 : vector<4x1xf32> to vector<4x256xf32>
    %31 = arith.mulf %28, %30 : vector<4x256xf32>
    %32 = vector.extract_strided_slice %3 {offsets = [0, 0], sizes = [4, 1], strides = [1, 1]} : vector<12x1xf32> to vector<4x1xf32>
    %33 = vector.broadcast %32 : vector<4x1xf32> to vector<4x256xf32>
    %34 = arith.addf %31, %33 : vector<4x256xf32>
    %c0_10 = arith.constant 0 : index
    %c0_11 = arith.constant 0 : index
    %c0_12 = arith.constant 0 : index
    %35 = vector.load %arg4[%c0_10, %c0_11, %c0_12] : memref<1x12x256xf32, #tpu.memory_space<vmem>>, vector<1x4x256xf32>
    %36 = vector.shape_cast %35 : vector<1x4x256xf32> to vector<4x256xf32>
    %37 = vector.shape_cast %34 : vector<4x256xf32> to vector<1x4x256xf32>
    tpu.vector_store %arg4[%c0_10, %c0_11, %c0_12], %37 {strides = array<i32>} : memref<1x12x256xf32, #tpu.memory_space<vmem>>, vector<1x4x256xf32>,
    %38 = vector.extract_strided_slice %1 {offsets = [4, 0], sizes = [4, 256], strides = [1, 1]} : vector<12x256xf32> to vector<4x256xf32>
    %39 = vector.shape_cast %38 : vector<4x256xf32> to vector<1x4x256xf32>
    %cst_13 = arith.constant dense<0.000000e+00> : vector<1xf32>
    %40 = vector.multi_reduction <add>, %39, %cst_13 [1, 2] : vector<1x4x256xf32> to vector<1xf32>
    %41 = vector.shape_cast %40 : vector<1xf32> to vector<1x1x1xf32>
    %42 = vector.extract %41[0, 0, 0] : f32 from vector<1x1x1xf32>
    %43 = vector.broadcast %42 : f32 to vector<1x1xf32>
    %cst_14 = arith.constant 1.024000e+03 : f32
    %44 = vector.broadcast %cst_14 : f32 to vector<1x1xf32>
    %45 = arith.divf %43, %44 : vector<1x1xf32>
    %46 = vector.broadcast %45 : vector<1x1xf32> to vector<4x256xf32>
    %47 = arith.subf %38, %46 : vector<4x256xf32>
    %48 = arith.mulf %47, %47 : vector<4x256xf32>
    %49 = vector.shape_cast %48 : vector<4x256xf32> to vector<1x4x256xf32>
    %cst_15 = arith.constant dense<0.000000e+00> : vector<1xf32>
    %50 = vector.multi_reduction <add>, %49, %cst_15 [1, 2] : vector<1x4x256xf32> to vector<1xf32>
    %51 = vector.shape_cast %50 : vector<1xf32> to vector<1x1x1xf32>
    %52 = vector.extract %51[0, 0, 0] : f32 from vector<1x1x1xf32>
    %53 = vector.broadcast %52 : f32 to vector<1x1xf32>
    %cst_16 = arith.constant 1.024000e+03 : f32
    %54 = vector.broadcast %cst_16 : f32 to vector<1x1xf32>
    %55 = arith.divf %53, %54 : vector<1x1xf32>
    %56 = vector.broadcast %45 : vector<1x1xf32> to vector<4x256xf32>
    %57 = arith.subf %38, %56 : vector<4x256xf32>
    %cst_17 = arith.constant 9.99999974E-6 : f32
    %58 = vector.broadcast %cst_17 : f32 to vector<1x1xf32>
    %59 = arith.addf %55, %58 : vector<1x1xf32>
    %60 = math.rsqrt %59 : vector<1x1xf32>
    %61 = vector.broadcast %60 : vector<1x1xf32> to vector<4x256xf32>
    %62 = arith.mulf %57, %61 : vector<4x256xf32>
    %63 = vector.extract_strided_slice %2 {offsets = [4, 0], sizes = [4, 1], strides = [1, 1]} : vector<12x1xf32> to vector<4x1xf32>
    %64 = vector.broadcast %63 : vector<4x1xf32> to vector<4x256xf32>
    %65 = arith.mulf %62, %64 : vector<4x256xf32>
    %66 = vector.extract_strided_slice %3 {offsets = [4, 0], sizes = [4, 1], strides = [1, 1]} : vector<12x1xf32> to vector<4x1xf32>
    %67 = vector.broadcast %66 : vector<4x1xf32> to vector<4x256xf32>
    %68 = arith.addf %65, %67 : vector<4x256xf32>
    %c0_18 = arith.constant 0 : index
    %c4 = arith.constant 4 : index
    %c0_19 = arith.constant 0 : index
    %69 = vector.load %arg4[%c0_18, %c4, %c0_19] : memref<1x12x256xf32, #tpu.memory_space<vmem>>, vector<1x4x256xf32>
    %70 = vector.shape_cast %69 : vector<1x4x256xf32> to vector<4x256xf32>
    %71 = vector.shape_cast %68 : vector<4x256xf32> to vector<1x4x256xf32>
    tpu.vector_store %arg4[%c0_18, %c4, %c0_19], %71 {strides = array<i32>} : memref<1x12x256xf32, #tpu.memory_space<vmem>>, vector<1x4x256xf32>,
    %72 = vector.extract_strided_slice %1 {offsets = [8, 0], sizes = [4, 256], strides = [1, 1]} : vector<12x256xf32> to vector<4x256xf32>
    %73 = vector.shape_cast %72 : vector<4x256xf32> to vector<1x4x256xf32>
    %cst_20 = arith.constant dense<0.000000e+00> : vector<1xf32>
    %74 = vector.multi_reduction <add>, %73, %cst_20 [1, 2] : vector<1x4x256xf32> to vector<1xf32>
    %75 = vector.shape_cast %74 : vector<1xf32> to vector<1x1x1xf32>
    %76 = vector.extract %75[0, 0, 0] : f32 from vector<1x1x1xf32>
    %77 = vector.broadcast %76 : f32 to vector<1x1xf32>
    %cst_21 = arith.constant 1.024000e+03 : f32
    %78 = vector.broadcast %cst_21 : f32 to vector<1x1xf32>
    %79 = arith.divf %77, %78 : vector<1x1xf32>
    %80 = vector.broadcast %79 : vector<1x1xf32> to vector<4x256xf32>
    %81 = arith.subf %72, %80 : vector<4x256xf32>
    %82 = arith.mulf %81, %81 : vector<4x256xf32>
    %83 = vector.shape_cast %82 : vector<4x256xf32> to vector<1x4x256xf32>
    %cst_22 = arith.constant dense<0.000000e+00> : vector<1xf32>
    %84 = vector.multi_reduction <add>, %83, %cst_22 [1, 2] : vector<1x4x256xf32> to vector<1xf32>
    %85 = vector.shape_cast %84 : vector<1xf32> to vector<1x1x1xf32>
    %86 = vector.extract %85[0, 0, 0] : f32 from vector<1x1x1xf32>
    %87 = vector.broadcast %86 : f32 to vector<1x1xf32>
    %cst_23 = arith.constant 1.024000e+03 : f32
    %88 = vector.broadcast %cst_23 : f32 to vector<1x1xf32>
    %89 = arith.divf %87, %88 : vector<1x1xf32>
    %90 = vector.broadcast %79 : vector<1x1xf32> to vector<4x256xf32>
    %91 = arith.subf %72, %90 : vector<4x256xf32>
    %cst_24 = arith.constant 9.99999974E-6 : f32
    %92 = vector.broadcast %cst_24 : f32 to vector<1x1xf32>
    %93 = arith.addf %89, %92 : vector<1x1xf32>
    %94 = math.rsqrt %93 : vector<1x1xf32>
    %95 = vector.broadcast %94 : vector<1x1xf32> to vector<4x256xf32>
    %96 = arith.mulf %91, %95 : vector<4x256xf32>
    %97 = vector.extract_strided_slice %2 {offsets = [8, 0], sizes = [4, 1], strides = [1, 1]} : vector<12x1xf32> to vector<4x1xf32>
    %98 = vector.broadcast %97 : vector<4x1xf32> to vector<4x256xf32>
    %99 = arith.mulf %96, %98 : vector<4x256xf32>
    %100 = vector.extract_strided_slice %3 {offsets = [8, 0], sizes = [4, 1], strides = [1, 1]} : vector<12x1xf32> to vector<4x1xf32>
    %101 = vector.broadcast %100 : vector<4x1xf32> to vector<4x256xf32>
    %102 = arith.addf %99, %101 : vector<4x256xf32>
    %c0_25 = arith.constant 0 : index
    %c8 = arith.constant 8 : index
    %c0_26 = arith.constant 0 : index
    %103 = vector.load %arg4[%c0_25, %c8, %c0_26] : memref<1x12x256xf32, #tpu.memory_space<vmem>>, vector<1x4x256xf32>
    %104 = vector.shape_cast %103 : vector<1x4x256xf32> to vector<4x256xf32>
    %105 = vector.shape_cast %102 : vector<4x256xf32> to vector<1x4x256xf32>
    tpu.vector_store %arg4[%c0_25, %c8, %c0_26], %105 {strides = array<i32>} : memref<1x12x256xf32, #tpu.memory_space<vmem>>, vector<1x4x256xf32>,
    return
  }
  func.func @transform_0(%arg0: i32) -> (i32, i32, i32) {
    %c0_i32 = arith.constant 0 : i32
    %c0_i32_0 = arith.constant 0 : i32
    %c0_i32_1 = arith.constant 0 : i32
    return %arg0, %c0_i32, %c0_i32_0 : i32, i32, i32
  }
  func.func @transform_1(%arg0: i32) -> (i32, i32) {
    %c0_i32 = arith.constant 0 : i32
    %c0_i32_0 = arith.constant 0 : i32
    %c0_i32_1 = arith.constant 0 : i32
    return %c0_i32, %c0_i32_0 : i32, i32
  }
  func.func @transform_2(%arg0: i32) -> (i32, i32) {
    %c0_i32 = arith.constant 0 : i32
    %c0_i32_0 = arith.constant 0 : i32
    %c0_i32_1 = arith.constant 0 : i32
    return %c0_i32, %c0_i32_0 : i32, i32
  }
  func.func @transform_3(%arg0: i32) -> (i32, i32, i32) {
    %c0_i32 = arith.constant 0 : i32
    %c0_i32_0 = arith.constant 0 : i32
    %c0_i32_1 = arith.constant 0 : i32
    return %arg0, %c0_i32, %c0_i32_0 : i32, i32, i32
  }
}

module attributes {stable_mosaic.version = 11 : i64} {
  func.func @_linear_kernel(%arg0: i32, %arg1: i32, %arg2: i32, %arg3: memref<32x192xf32, #tpu.memory_space<vmem>>, %arg4: memref<192x576xf32, #tpu.memory_space<vmem>>, %arg5: memref<1x576xf32, #tpu.memory_space<vmem>>, %arg6: memref<32x576xf32, #tpu.memory_space<vmem>>, %arg7: memref<32x576xf32, #tpu.memory_space<vmem>>) attributes {dimension_semantics = [#tpu.dimension_semantics<parallel>, #tpu.dimension_semantics<parallel>, #tpu.dimension_semantics<arbitrary>], iteration_bounds = array<i64: 1, 1, 1>, scalar_prefetch = 0 : i64, scratch_operands = 1 : i64, tpu.core_type = #tpu.core_type<tc>, window_params = [{transform_indices = @transform_0, window_bounds = array<i64: 32, 192>}, {transform_indices = @transform_1, window_bounds = array<i64: 192, 576>}, {transform_indices = @transform_2, window_bounds = array<i64: 1, 576>}, {transform_indices = @transform_3, window_bounds = array<i64: 32, 576>}]} {
    %c0_i32 = arith.constant 0 : i32
    %0 = arith.cmpi eq, %arg2, %c0_i32 : i32
    %1 = arith.extui %0 : i1 to i32
    %c0_i32_0 = arith.constant 0 : i32
    %2 = arith.cmpi ne, %1, %c0_i32_0 : i32
    scf.if %2 {
      %cst_10 = arith.constant 0.000000e+00 : f32
      %12 = vector.broadcast %cst_10 : f32 to vector<32x576xf32>
      %c0_11 = arith.constant 0 : index
      %c0_12 = arith.constant 0 : index
      %13 = vector.load %arg7[%c0_11, %c0_12] : memref<32x576xf32, #tpu.memory_space<vmem>>, vector<32x576xf32>
      tpu.vector_store %arg7[%c0_11, %c0_12], %12 {strides = array<i32>} : memref<32x576xf32, #tpu.memory_space<vmem>>, vector<32x576xf32>,
    } else {
    }
    %c0 = arith.constant 0 : index
    %c0_1 = arith.constant 0 : index
    %3 = vector.load %arg3[%c0, %c0_1] : memref<32x192xf32, #tpu.memory_space<vmem>>, vector<32x192xf32>
    %c0_2 = arith.constant 0 : index
    %c0_3 = arith.constant 0 : index
    %4 = vector.load %arg7[%c0_2, %c0_3] : memref<32x576xf32, #tpu.memory_space<vmem>>, vector<32x576xf32>
    %c0_4 = arith.constant 0 : index
    %c0_5 = arith.constant 0 : index
    %5 = vector.load %arg4[%c0_4, %c0_5] : memref<192x576xf32, #tpu.memory_space<vmem>>, vector<192x576xf32>
    %cst = arith.constant dense<0.000000e+00> : vector<32x576xf32>
    %6 = tpu.matmul %3, %5, %cst {dimension_numbers = #tpu.dot_dimension_numbers<[1], [0], [0], [1], [0, 0, 1, 1], [], []>} : vector<32x192xf32>, vector<192x576xf32>, vector<32x576xf32> -> vector<32x576xf32>
    %7 = arith.addf %4, %6 : vector<32x576xf32>
    %c0_6 = arith.constant 0 : index
    %c0_7 = arith.constant 0 : index
    %8 = vector.load %arg7[%c0_6, %c0_7] : memref<32x576xf32, #tpu.memory_space<vmem>>, vector<32x576xf32>
    tpu.vector_store %arg7[%c0_6, %c0_7], %7 {strides = array<i32>} : memref<32x576xf32, #tpu.memory_space<vmem>>, vector<32x576xf32>,
    %c0_i32_8 = arith.constant 0 : i32
    %9 = arith.cmpi eq, %arg2, %c0_i32_8 : i32
    %10 = arith.extui %9 : i1 to i32
    %c0_i32_9 = arith.constant 0 : i32
    %11 = arith.cmpi ne, %10, %c0_i32_9 : i32
    scf.if %11 {
      %c0_10 = arith.constant 0 : index
      %c0_11 = arith.constant 0 : index
      %12 = vector.load %arg7[%c0_10, %c0_11] : memref<32x576xf32, #tpu.memory_space<vmem>>, vector<32x576xf32>
      %c0_12 = arith.constant 0 : index
      %c0_13 = arith.constant 0 : index
      %13 = vector.load %arg5[%c0_12, %c0_13] : memref<1x576xf32, #tpu.memory_space<vmem>>, vector<1x576xf32>
      %14 = vector.broadcast %13 : vector<1x576xf32> to vector<32x576xf32>
      %15 = arith.addf %12, %14 : vector<32x576xf32>
      %c0_14 = arith.constant 0 : index
      %c0_15 = arith.constant 0 : index
      %16 = vector.load %arg6[%c0_14, %c0_15] : memref<32x576xf32, #tpu.memory_space<vmem>>, vector<32x576xf32>
      tpu.vector_store %arg6[%c0_14, %c0_15], %15 {strides = array<i32>} : memref<32x576xf32, #tpu.memory_space<vmem>>, vector<32x576xf32>,
    } else {
    }
    return
  }
  func.func @transform_0(%arg0: i32, %arg1: i32, %arg2: i32) -> (i32, i32) {
    %c0_i32 = arith.constant 0 : i32
    return %arg0, %arg2 : i32, i32
  }
  func.func @transform_1(%arg0: i32, %arg1: i32, %arg2: i32) -> (i32, i32) {
    %c0_i32 = arith.constant 0 : i32
    return %arg2, %arg1 : i32, i32
  }
  func.func @transform_2(%arg0: i32, %arg1: i32, %arg2: i32) -> (i32, i32) {
    %c0_i32 = arith.constant 0 : i32
    %c0_i32_0 = arith.constant 0 : i32
    return %c0_i32, %arg1 : i32, i32
  }
  func.func @transform_3(%arg0: i32, %arg1: i32, %arg2: i32) -> (i32, i32) {
    %c0_i32 = arith.constant 0 : i32
    return %arg0, %arg1 : i32, i32
  }
}

module attributes {stable_mosaic.version = 11 : i64} {
  func.func @_attn_kernel(%arg0: i32, %arg1: memref<1x4x16x48xf32, #tpu.memory_space<vmem>>, %arg2: memref<1x4x16x48xf32, #tpu.memory_space<vmem>>, %arg3: memref<1x4x16x48xf32, #tpu.memory_space<vmem>>, %arg4: memref<1x4x16x48xf32, #tpu.memory_space<vmem>>) attributes {dimension_semantics = [#tpu.dimension_semantics<parallel>], iteration_bounds = array<i64: 2>, scalar_prefetch = 0 : i64, scratch_operands = 0 : i64, tpu.core_type = #tpu.core_type<tc>, window_params = [{transform_indices = @transform_0, window_bounds = array<i64: 1, 4, 16, 48>}, {transform_indices = @transform_1, window_bounds = array<i64: 1, 4, 16, 48>}, {transform_indices = @transform_2, window_bounds = array<i64: 1, 4, 16, 48>}, {transform_indices = @transform_3, window_bounds = array<i64: 1, 4, 16, 48>}]} {
    %c0 = arith.constant 0 : index
    %c0_0 = arith.constant 0 : index
    %c0_1 = arith.constant 0 : index
    %c0_2 = arith.constant 0 : index
    %0 = vector.load %arg1[%c0, %c0_0, %c0_1, %c0_2] : memref<1x4x16x48xf32, #tpu.memory_space<vmem>>, vector<1x4x16x48xf32>
    %1 = vector.shape_cast %0 : vector<1x4x16x48xf32> to vector<4x16x48xf32>
    %cst = arith.constant 0.144337565 : f32
    %2 = vector.broadcast %cst : f32 to vector<4x16x48xf32>
    %3 = arith.mulf %1, %2 : vector<4x16x48xf32>
    %c0_3 = arith.constant 0 : index
    %c0_4 = arith.constant 0 : index
    %c0_5 = arith.constant 0 : index
    %c0_6 = arith.constant 0 : index
    %4 = vector.load %arg2[%c0_3, %c0_4, %c0_5, %c0_6] : memref<1x4x16x48xf32, #tpu.memory_space<vmem>>, vector<1x4x16x48xf32>
    %5 = vector.shape_cast %4 : vector<1x4x16x48xf32> to vector<4x16x48xf32>
    %c0_7 = arith.constant 0 : index
    %c0_8 = arith.constant 0 : index
    %c0_9 = arith.constant 0 : index
    %c0_10 = arith.constant 0 : index
    %6 = vector.load %arg3[%c0_7, %c0_8, %c0_9, %c0_10] : memref<1x4x16x48xf32, #tpu.memory_space<vmem>>, vector<1x4x16x48xf32>
    %7 = vector.shape_cast %6 : vector<1x4x16x48xf32> to vector<4x16x48xf32>
    "tpu.trace_start"() <{level = 10 : i32, message = "hnd,hmd->hnm"}> : () -> ()
    %cst_11 = arith.constant dense<0.000000e+00> : vector<4x16x16xf32>
    %8 = tpu.matmul %3, %5, %cst_11 {dimension_numbers = #tpu.dot_dimension_numbers<[2], [2], [1], [1], [0, 0, 0, 1, 1, 1], [0], [0]>} : vector<4x16x48xf32>, vector<4x16x48xf32>, vector<4x16x16xf32> -> vector<4x16x16xf32>
    "tpu.trace_stop"() : () -> ()
    %cst_12 = arith.constant dense<0xFF800000> : vector<4x16xf32>
    %9 = vector.multi_reduction <maximumf>, %8, %cst_12 [2] : vector<4x16x16xf32> to vector<4x16xf32>
    %10 = vector.shape_cast %9 : vector<4x16xf32> to vector<4x16x1xf32>
    %11 = vector.broadcast %10 : vector<4x16x1xf32> to vector<4x16x16xf32>
    %12 = arith.subf %8, %11 : vector<4x16x16xf32>
    %13 = math.exp %12 : vector<4x16x16xf32>
    %cst_13 = arith.constant dense<0.000000e+00> : vector<4x16xf32>
    %14 = vector.multi_reduction <add>, %13, %cst_13 [2] : vector<4x16x16xf32> to vector<4x16xf32>
    %15 = vector.shape_cast %14 : vector<4x16xf32> to vector<4x16x1xf32>
    %16 = tpu.reciprocal %15 {approx = true} : vector<4x16x1xf32> -> vector<4x16x1xf32>
    %17 = vector.broadcast %16 : vector<4x16x1xf32> to vector<4x16x16xf32>
    %18 = arith.mulf %13, %17 : vector<4x16x16xf32>
    "tpu.trace_start"() <{level = 10 : i32, message = "hnm,hmd->hnd"}> : () -> ()
    %cst_14 = arith.constant dense<0.000000e+00> : vector<4x16x48xf32>
    %19 = tpu.matmul %18, %7, %cst_14 {dimension_numbers = #tpu.dot_dimension_numbers<[2], [1], [1], [2], [0, 0, 0, 1, 1, 2], [0], [0]>} : vector<4x16x16xf32>, vector<4x16x48xf32>, vector<4x16x48xf32> -> vector<4x16x48xf32>
    "tpu.trace_stop"() : () -> ()
    %c0_15 = arith.constant 0 : index
    %c0_16 = arith.constant 0 : index
    %c0_17 = arith.constant 0 : index
    %c0_18 = arith.constant 0 : index
    %20 = vector.load %arg4[%c0_15, %c0_16, %c0_17, %c0_18] : memref<1x4x16x48xf32, #tpu.memory_space<vmem>>, vector<1x4x16x48xf32>
    %21 = vector.shape_cast %20 : vector<1x4x16x48xf32> to vector<4x16x48xf32>
    %22 = vector.shape_cast %19 : vector<4x16x48xf32> to vector<1x4x16x48xf32>
    tpu.vector_store %arg4[%c0_15, %c0_16, %c0_17, %c0_18], %22 {strides = array<i32>} : memref<1x4x16x48xf32, #tpu.memory_space<vmem>>, vector<1x4x16x48xf32>,
    return
  }
  func.func @transform_0(%arg0: i32) -> (i32, i32, i32, i32) {
    %c0_i32 = arith.constant 0 : i32
    %c0_i32_0 = arith.constant 0 : i32
    %c0_i32_1 = arith.constant 0 : i32
    %c0_i32_2 = arith.constant 0 : i32
    return %arg0, %c0_i32, %c0_i32_0, %c0_i32_1 : i32, i32, i32, i32
  }
  func.func @transform_1(%arg0: i32) -> (i32, i32, i32, i32) {
    %c0_i32 = arith.constant 0 : i32
    %c0_i32_0 = arith.constant 0 : i32
    %c0_i32_1 = arith.constant 0 : i32
    %c0_i32_2 = arith.constant 0 : i32
    return %arg0, %c0_i32, %c0_i32_0, %c0_i32_1 : i32, i32, i32, i32
  }
  func.func @transform_2(%arg0: i32) -> (i32, i32, i32, i32) {
    %c0_i32 = arith.constant 0 : i32
    %c0_i32_0 = arith.constant 0 : i32
    %c0_i32_1 = arith.constant 0 : i32
    %c0_i32_2 = arith.constant 0 : i32
    return %arg0, %c0_i32, %c0_i32_0, %c0_i32_1 : i32, i32, i32, i32
  }
  func.func @transform_3(%arg0: i32) -> (i32, i32, i32, i32) {
    %c0_i32 = arith.constant 0 : i32
    %c0_i32_0 = arith.constant 0 : i32
    %c0_i32_1 = arith.constant 0 : i32
    %c0_i32_2 = arith.constant 0 : i32
    return %arg0, %c0_i32, %c0_i32_0, %c0_i32_1 : i32, i32, i32, i32
  }
}

module attributes {stable_mosaic.version = 11 : i64} {
  func.func @_linear_kernel(%arg0: i32, %arg1: i32, %arg2: i32, %arg3: memref<32x192xf32, #tpu.memory_space<vmem>>, %arg4: memref<192x192xf32, #tpu.memory_space<vmem>>, %arg5: memref<1x192xf32, #tpu.memory_space<vmem>>, %arg6: memref<32x192xf32, #tpu.memory_space<vmem>>, %arg7: memref<32x192xf32, #tpu.memory_space<vmem>>) attributes {dimension_semantics = [#tpu.dimension_semantics<parallel>, #tpu.dimension_semantics<parallel>, #tpu.dimension_semantics<arbitrary>], iteration_bounds = array<i64: 1, 1, 1>, scalar_prefetch = 0 : i64, scratch_operands = 1 : i64, tpu.core_type = #tpu.core_type<tc>, window_params = [{transform_indices = @transform_0, window_bounds = array<i64: 32, 192>}, {transform_indices = @transform_1, window_bounds = array<i64: 192, 192>}, {transform_indices = @transform_2, window_bounds = array<i64: 1, 192>}, {transform_indices = @transform_3, window_bounds = array<i64: 32, 192>}]} {
    %c0_i32 = arith.constant 0 : i32
    %0 = arith.cmpi eq, %arg2, %c0_i32 : i32
    %1 = arith.extui %0 : i1 to i32
    %c0_i32_0 = arith.constant 0 : i32
    %2 = arith.cmpi ne, %1, %c0_i32_0 : i32
    scf.if %2 {
      %cst_10 = arith.constant 0.000000e+00 : f32
      %12 = vector.broadcast %cst_10 : f32 to vector<32x192xf32>
      %c0_11 = arith.constant 0 : index
      %c0_12 = arith.constant 0 : index
      %13 = vector.load %arg7[%c0_11, %c0_12] : memref<32x192xf32, #tpu.memory_space<vmem>>, vector<32x192xf32>
      tpu.vector_store %arg7[%c0_11, %c0_12], %12 {strides = array<i32>} : memref<32x192xf32, #tpu.memory_space<vmem>>, vector<32x192xf32>,
    } else {
    }
    %c0 = arith.constant 0 : index
    %c0_1 = arith.constant 0 : index
    %3 = vector.load %arg3[%c0, %c0_1] : memref<32x192xf32, #tpu.memory_space<vmem>>, vector<32x192xf32>
    %c0_2 = arith.constant 0 : index
    %c0_3 = arith.constant 0 : index
    %4 = vector.load %arg7[%c0_2, %c0_3] : memref<32x192xf32, #tpu.memory_space<vmem>>, vector<32x192xf32>
    %c0_4 = arith.constant 0 : index
    %c0_5 = arith.constant 0 : index
    %5 = vector.load %arg4[%c0_4, %c0_5] : memref<192x192xf32, #tpu.memory_space<vmem>>, vector<192x192xf32>
    %cst = arith.constant dense<0.000000e+00> : vector<32x192xf32>
    %6 = tpu.matmul %3, %5, %cst {dimension_numbers = #tpu.dot_dimension_numbers<[1], [0], [0], [1], [0, 0, 1, 1], [], []>} : vector<32x192xf32>, vector<192x192xf32>, vector<32x192xf32> -> vector<32x192xf32>
    %7 = arith.addf %4, %6 : vector<32x192xf32>
    %c0_6 = arith.constant 0 : index
    %c0_7 = arith.constant 0 : index
    %8 = vector.load %arg7[%c0_6, %c0_7] : memref<32x192xf32, #tpu.memory_space<vmem>>, vector<32x192xf32>
    tpu.vector_store %arg7[%c0_6, %c0_7], %7 {strides = array<i32>} : memref<32x192xf32, #tpu.memory_space<vmem>>, vector<32x192xf32>,
    %c0_i32_8 = arith.constant 0 : i32
    %9 = arith.cmpi eq, %arg2, %c0_i32_8 : i32
    %10 = arith.extui %9 : i1 to i32
    %c0_i32_9 = arith.constant 0 : i32
    %11 = arith.cmpi ne, %10, %c0_i32_9 : i32
    scf.if %11 {
      %c0_10 = arith.constant 0 : index
      %c0_11 = arith.constant 0 : index
      %12 = vector.load %arg7[%c0_10, %c0_11] : memref<32x192xf32, #tpu.memory_space<vmem>>, vector<32x192xf32>
      %c0_12 = arith.constant 0 : index
      %c0_13 = arith.constant 0 : index
      %13 = vector.load %arg5[%c0_12, %c0_13] : memref<1x192xf32, #tpu.memory_space<vmem>>, vector<1x192xf32>
      %14 = vector.broadcast %13 : vector<1x192xf32> to vector<32x192xf32>
      %15 = arith.addf %12, %14 : vector<32x192xf32>
      %c0_14 = arith.constant 0 : index
      %c0_15 = arith.constant 0 : index
      %16 = vector.load %arg6[%c0_14, %c0_15] : memref<32x192xf32, #tpu.memory_space<vmem>>, vector<32x192xf32>
      tpu.vector_store %arg6[%c0_14, %c0_15], %15 {strides = array<i32>} : memref<32x192xf32, #tpu.memory_space<vmem>>, vector<32x192xf32>,
    } else {
    }
    return
  }
  func.func @transform_0(%arg0: i32, %arg1: i32, %arg2: i32) -> (i32, i32) {
    %c0_i32 = arith.constant 0 : i32
    return %arg0, %arg2 : i32, i32
  }
  func.func @transform_1(%arg0: i32, %arg1: i32, %arg2: i32) -> (i32, i32) {
    %c0_i32 = arith.constant 0 : i32
    return %arg2, %arg1 : i32, i32
  }
  func.func @transform_2(%arg0: i32, %arg1: i32, %arg2: i32) -> (i32, i32) {
    %c0_i32 = arith.constant 0 : i32
    %c0_i32_0 = arith.constant 0 : i32
    return %c0_i32, %arg1 : i32, i32
  }
  func.func @transform_3(%arg0: i32, %arg1: i32, %arg2: i32) -> (i32, i32) {
    %c0_i32 = arith.constant 0 : i32
    return %arg0, %arg1 : i32, i32
  }
}

module attributes {stable_mosaic.version = 11 : i64} {
  func.func @_gn_kernel(%arg0: i32, %arg1: memref<1x12x256xf32, #tpu.memory_space<vmem>>, %arg2: memref<12x1xf32, #tpu.memory_space<vmem>>, %arg3: memref<12x1xf32, #tpu.memory_space<vmem>>, %arg4: memref<1x12x256xf32, #tpu.memory_space<vmem>>) attributes {dimension_semantics = [#tpu.dimension_semantics<parallel>], iteration_bounds = array<i64: 2>, scalar_prefetch = 0 : i64, scratch_operands = 0 : i64, tpu.core_type = #tpu.core_type<tc>, window_params = [{transform_indices = @transform_0, window_bounds = array<i64: 1, 12, 256>}, {pipeline_mode = #tpu.pipeline_mode<synchronous>, transform_indices = @transform_1, window_bounds = array<i64: 12, 1>}, {pipeline_mode = #tpu.pipeline_mode<synchronous>, transform_indices = @transform_2, window_bounds = array<i64: 12, 1>}, {transform_indices = @transform_3, window_bounds = array<i64: 1, 12, 256>}]} {
    %c0 = arith.constant 0 : index
    %c0_0 = arith.constant 0 : index
    %c0_1 = arith.constant 0 : index
    %0 = vector.load %arg1[%c0, %c0_0, %c0_1] : memref<1x12x256xf32, #tpu.memory_space<vmem>>, vector<1x12x256xf32>
    %1 = vector.shape_cast %0 : vector<1x12x256xf32> to vector<12x256xf32>
    %c0_2 = arith.constant 0 : index
    %c0_3 = arith.constant 0 : index
    %2 = vector.load %arg2[%c0_2, %c0_3] : memref<12x1xf32, #tpu.memory_space<vmem>>, vector<12x1xf32>
    %c0_4 = arith.constant 0 : index
    %c0_5 = arith.constant 0 : index
    %3 = vector.load %arg3[%c0_4, %c0_5] : memref<12x1xf32, #tpu.memory_space<vmem>>, vector<12x1xf32>
    %4 = vector.extract_strided_slice %1 {offsets = [0, 0], sizes = [4, 256], strides = [1, 1]} : vector<12x256xf32> to vector<4x256xf32>
    %5 = vector.shape_cast %4 : vector<4x256xf32> to vector<1x4x256xf32>
    %cst = arith.constant dense<0.000000e+00> : vector<1xf32>
    %6 = vector.multi_reduction <add>, %5, %cst [1, 2] : vector<1x4x256xf32> to vector<1xf32>
    %7 = vector.shape_cast %6 : vector<1xf32> to vector<1x1x1xf32>
    %8 = vector.extract %7[0, 0, 0] : f32 from vector<1x1x1xf32>
    %9 = vector.broadcast %8 : f32 to vector<1x1xf32>
    %cst_6 = arith.constant 1.024000e+03 : f32
    %10 = vector.broadcast %cst_6 : f32 to vector<1x1xf32>
    %11 = arith.divf %9, %10 : vector<1x1xf32>
    %12 = vector.broadcast %11 : vector<1x1xf32> to vector<4x256xf32>
    %13 = arith.subf %4, %12 : vector<4x256xf32>
    %14 = arith.mulf %13, %13 : vector<4x256xf32>
    %15 = vector.shape_cast %14 : vector<4x256xf32> to vector<1x4x256xf32>
    %cst_7 = arith.constant dense<0.000000e+00> : vector<1xf32>
    %16 = vector.multi_reduction <add>, %15, %cst_7 [1, 2] : vector<1x4x256xf32> to vector<1xf32>
    %17 = vector.shape_cast %16 : vector<1xf32> to vector<1x1x1xf32>
    %18 = vector.extract %17[0, 0, 0] : f32 from vector<1x1x1xf32>
    %19 = vector.broadcast %18 : f32 to vector<1x1xf32>
    %cst_8 = arith.constant 1.024000e+03 : f32
    %20 = vector.broadcast %cst_8 : f32 to vector<1x1xf32>
    %21 = arith.divf %19, %20 : vector<1x1xf32>
    %22 = vector.broadcast %11 : vector<1x1xf32> to vector<4x256xf32>
    %23 = arith.subf %4, %22 : vector<4x256xf32>
    %cst_9 = arith.constant 9.99999974E-6 : f32
    %24 = vector.broadcast %cst_9 : f32 to vector<1x1xf32>
    %25 = arith.addf %21, %24 : vector<1x1xf32>
    %26 = math.rsqrt %25 : vector<1x1xf32>
    %27 = vector.broadcast %26 : vector<1x1xf32> to vector<4x256xf32>
    %28 = arith.mulf %23, %27 : vector<4x256xf32>
    %29 = vector.extract_strided_slice %2 {offsets = [0, 0], sizes = [4, 1], strides = [1, 1]} : vector<12x1xf32> to vector<4x1xf32>
    %30 = vector.broadcast %29 : vector<4x1xf32> to vector<4x256xf32>
    %31 = arith.mulf %28, %30 : vector<4x256xf32>
    %32 = vector.extract_strided_slice %3 {offsets = [0, 0], sizes = [4, 1], strides = [1, 1]} : vector<12x1xf32> to vector<4x1xf32>
    %33 = vector.broadcast %32 : vector<4x1xf32> to vector<4x256xf32>
    %34 = arith.addf %31, %33 : vector<4x256xf32>
    %35 = arith.negf %34 : vector<4x256xf32>
    %36 = math.exp %35 : vector<4x256xf32>
    %cst_10 = arith.constant 1.000000e+00 : f32
    %37 = vector.broadcast %cst_10 : f32 to vector<4x256xf32>
    %38 = arith.addf %37, %36 : vector<4x256xf32>
    %39 = arith.divf %37, %38 : vector<4x256xf32>
    %40 = arith.mulf %34, %39 : vector<4x256xf32>
    %c0_11 = arith.constant 0 : index
    %c0_12 = arith.constant 0 : index
    %c0_13 = arith.constant 0 : index
    %41 = vector.load %arg4[%c0_11, %c0_12, %c0_13] : memref<1x12x256xf32, #tpu.memory_space<vmem>>, vector<1x4x256xf32>
    %42 = vector.shape_cast %41 : vector<1x4x256xf32> to vector<4x256xf32>
    %43 = vector.shape_cast %40 : vector<4x256xf32> to vector<1x4x256xf32>
    tpu.vector_store %arg4[%c0_11, %c0_12, %c0_13], %43 {strides = array<i32>} : memref<1x12x256xf32, #tpu.memory_space<vmem>>, vector<1x4x256xf32>,
    %44 = vector.extract_strided_slice %1 {offsets = [4, 0], sizes = [4, 256], strides = [1, 1]} : vector<12x256xf32> to vector<4x256xf32>
    %45 = vector.shape_cast %44 : vector<4x256xf32> to vector<1x4x256xf32>
    %cst_14 = arith.constant dense<0.000000e+00> : vector<1xf32>
    %46 = vector.multi_reduction <add>, %45, %cst_14 [1, 2] : vector<1x4x256xf32> to vector<1xf32>
    %47 = vector.shape_cast %46 : vector<1xf32> to vector<1x1x1xf32>
    %48 = vector.extract %47[0, 0, 0] : f32 from vector<1x1x1xf32>
    %49 = vector.broadcast %48 : f32 to vector<1x1xf32>
    %cst_15 = arith.constant 1.024000e+03 : f32
    %50 = vector.broadcast %cst_15 : f32 to vector<1x1xf32>
    %51 = arith.divf %49, %50 : vector<1x1xf32>
    %52 = vector.broadcast %51 : vector<1x1xf32> to vector<4x256xf32>
    %53 = arith.subf %44, %52 : vector<4x256xf32>
    %54 = arith.mulf %53, %53 : vector<4x256xf32>
    %55 = vector.shape_cast %54 : vector<4x256xf32> to vector<1x4x256xf32>
    %cst_16 = arith.constant dense<0.000000e+00> : vector<1xf32>
    %56 = vector.multi_reduction <add>, %55, %cst_16 [1, 2] : vector<1x4x256xf32> to vector<1xf32>
    %57 = vector.shape_cast %56 : vector<1xf32> to vector<1x1x1xf32>
    %58 = vector.extract %57[0, 0, 0] : f32 from vector<1x1x1xf32>
    %59 = vector.broadcast %58 : f32 to vector<1x1xf32>
    %cst_17 = arith.constant 1.024000e+03 : f32
    %60 = vector.broadcast %cst_17 : f32 to vector<1x1xf32>
    %61 = arith.divf %59, %60 : vector<1x1xf32>
    %62 = vector.broadcast %51 : vector<1x1xf32> to vector<4x256xf32>
    %63 = arith.subf %44, %62 : vector<4x256xf32>
    %cst_18 = arith.constant 9.99999974E-6 : f32
    %64 = vector.broadcast %cst_18 : f32 to vector<1x1xf32>
    %65 = arith.addf %61, %64 : vector<1x1xf32>
    %66 = math.rsqrt %65 : vector<1x1xf32>
    %67 = vector.broadcast %66 : vector<1x1xf32> to vector<4x256xf32>
    %68 = arith.mulf %63, %67 : vector<4x256xf32>
    %69 = vector.extract_strided_slice %2 {offsets = [4, 0], sizes = [4, 1], strides = [1, 1]} : vector<12x1xf32> to vector<4x1xf32>
    %70 = vector.broadcast %69 : vector<4x1xf32> to vector<4x256xf32>
    %71 = arith.mulf %68, %70 : vector<4x256xf32>
    %72 = vector.extract_strided_slice %3 {offsets = [4, 0], sizes = [4, 1], strides = [1, 1]} : vector<12x1xf32> to vector<4x1xf32>
    %73 = vector.broadcast %72 : vector<4x1xf32> to vector<4x256xf32>
    %74 = arith.addf %71, %73 : vector<4x256xf32>
    %75 = arith.negf %74 : vector<4x256xf32>
    %76 = math.exp %75 : vector<4x256xf32>
    %cst_19 = arith.constant 1.000000e+00 : f32
    %77 = vector.broadcast %cst_19 : f32 to vector<4x256xf32>
    %78 = arith.addf %77, %76 : vector<4x256xf32>
    %79 = arith.divf %77, %78 : vector<4x256xf32>
    %80 = arith.mulf %74, %79 : vector<4x256xf32>
    %c0_20 = arith.constant 0 : index
    %c4 = arith.constant 4 : index
    %c0_21 = arith.constant 0 : index
    %81 = vector.load %arg4[%c0_20, %c4, %c0_21] : memref<1x12x256xf32, #tpu.memory_space<vmem>>, vector<1x4x256xf32>
    %82 = vector.shape_cast %81 : vector<1x4x256xf32> to vector<4x256xf32>
    %83 = vector.shape_cast %80 : vector<4x256xf32> to vector<1x4x256xf32>
    tpu.vector_store %arg4[%c0_20, %c4, %c0_21], %83 {strides = array<i32>} : memref<1x12x256xf32, #tpu.memory_space<vmem>>, vector<1x4x256xf32>,
    %84 = vector.extract_strided_slice %1 {offsets = [8, 0], sizes = [4, 256], strides = [1, 1]} : vector<12x256xf32> to vector<4x256xf32>
    %85 = vector.shape_cast %84 : vector<4x256xf32> to vector<1x4x256xf32>
    %cst_22 = arith.constant dense<0.000000e+00> : vector<1xf32>
    %86 = vector.multi_reduction <add>, %85, %cst_22 [1, 2] : vector<1x4x256xf32> to vector<1xf32>
    %87 = vector.shape_cast %86 : vector<1xf32> to vector<1x1x1xf32>
    %88 = vector.extract %87[0, 0, 0] : f32 from vector<1x1x1xf32>
    %89 = vector.broadcast %88 : f32 to vector<1x1xf32>
    %cst_23 = arith.constant 1.024000e+03 : f32
    %90 = vector.broadcast %cst_23 : f32 to vector<1x1xf32>
    %91 = arith.divf %89, %90 : vector<1x1xf32>
    %92 = vector.broadcast %91 : vector<1x1xf32> to vector<4x256xf32>
    %93 = arith.subf %84, %92 : vector<4x256xf32>
    %94 = arith.mulf %93, %93 : vector<4x256xf32>
    %95 = vector.shape_cast %94 : vector<4x256xf32> to vector<1x4x256xf32>
    %cst_24 = arith.constant dense<0.000000e+00> : vector<1xf32>
    %96 = vector.multi_reduction <add>, %95, %cst_24 [1, 2] : vector<1x4x256xf32> to vector<1xf32>
    %97 = vector.shape_cast %96 : vector<1xf32> to vector<1x1x1xf32>
    %98 = vector.extract %97[0, 0, 0] : f32 from vector<1x1x1xf32>
    %99 = vector.broadcast %98 : f32 to vector<1x1xf32>
    %cst_25 = arith.constant 1.024000e+03 : f32
    %100 = vector.broadcast %cst_25 : f32 to vector<1x1xf32>
    %101 = arith.divf %99, %100 : vector<1x1xf32>
    %102 = vector.broadcast %91 : vector<1x1xf32> to vector<4x256xf32>
    %103 = arith.subf %84, %102 : vector<4x256xf32>
    %cst_26 = arith.constant 9.99999974E-6 : f32
    %104 = vector.broadcast %cst_26 : f32 to vector<1x1xf32>
    %105 = arith.addf %101, %104 : vector<1x1xf32>
    %106 = math.rsqrt %105 : vector<1x1xf32>
    %107 = vector.broadcast %106 : vector<1x1xf32> to vector<4x256xf32>
    %108 = arith.mulf %103, %107 : vector<4x256xf32>
    %109 = vector.extract_strided_slice %2 {offsets = [8, 0], sizes = [4, 1], strides = [1, 1]} : vector<12x1xf32> to vector<4x1xf32>
    %110 = vector.broadcast %109 : vector<4x1xf32> to vector<4x256xf32>
    %111 = arith.mulf %108, %110 : vector<4x256xf32>
    %112 = vector.extract_strided_slice %3 {offsets = [8, 0], sizes = [4, 1], strides = [1, 1]} : vector<12x1xf32> to vector<4x1xf32>
    %113 = vector.broadcast %112 : vector<4x1xf32> to vector<4x256xf32>
    %114 = arith.addf %111, %113 : vector<4x256xf32>
    %115 = arith.negf %114 : vector<4x256xf32>
    %116 = math.exp %115 : vector<4x256xf32>
    %cst_27 = arith.constant 1.000000e+00 : f32
    %117 = vector.broadcast %cst_27 : f32 to vector<4x256xf32>
    %118 = arith.addf %117, %116 : vector<4x256xf32>
    %119 = arith.divf %117, %118 : vector<4x256xf32>
    %120 = arith.mulf %114, %119 : vector<4x256xf32>
    %c0_28 = arith.constant 0 : index
    %c8 = arith.constant 8 : index
    %c0_29 = arith.constant 0 : index
    %121 = vector.load %arg4[%c0_28, %c8, %c0_29] : memref<1x12x256xf32, #tpu.memory_space<vmem>>, vector<1x4x256xf32>
    %122 = vector.shape_cast %121 : vector<1x4x256xf32> to vector<4x256xf32>
    %123 = vector.shape_cast %120 : vector<4x256xf32> to vector<1x4x256xf32>
    tpu.vector_store %arg4[%c0_28, %c8, %c0_29], %123 {strides = array<i32>} : memref<1x12x256xf32, #tpu.memory_space<vmem>>, vector<1x4x256xf32>,
    return
  }
  func.func @transform_0(%arg0: i32) -> (i32, i32, i32) {
    %c0_i32 = arith.constant 0 : i32
    %c0_i32_0 = arith.constant 0 : i32
    %c0_i32_1 = arith.constant 0 : i32
    return %arg0, %c0_i32, %c0_i32_0 : i32, i32, i32
  }
  func.func @transform_1(%arg0: i32) -> (i32, i32) {
    %c0_i32 = arith.constant 0 : i32
    %c0_i32_0 = arith.constant 0 : i32
    %c0_i32_1 = arith.constant 0 : i32
    return %c0_i32, %c0_i32_0 : i32, i32
  }
  func.func @transform_2(%arg0: i32) -> (i32, i32) {
    %c0_i32 = arith.constant 0 : i32
    %c0_i32_0 = arith.constant 0 : i32
    %c0_i32_1 = arith.constant 0 : i32
    return %c0_i32, %c0_i32_0 : i32, i32
  }
  func.func @transform_3(%arg0: i32) -> (i32, i32, i32) {
    %c0_i32 = arith.constant 0 : i32
    %c0_i32_0 = arith.constant 0 : i32
    %c0_i32_1 = arith.constant 0 : i32
    return %arg0, %c0_i32, %c0_i32_0 : i32, i32, i32
  }
}

module attributes {stable_mosaic.version = 11 : i64} {
  func.func @_conv_mm_kernel(%arg0: i32, %arg1: i32, %arg2: i32, %arg3: memref<12x108xf32, #tpu.memory_space<vmem>>, %arg4: memref<1x108x256xf32, #tpu.memory_space<vmem>>, %arg5: memref<12x1xf32, #tpu.memory_space<vmem>>, %arg6: memref<1x12x256xf32, #tpu.memory_space<vmem>>, %arg7: memref<12x256xf32, #tpu.memory_space<vmem>>) attributes {dimension_semantics = [#tpu.dimension_semantics<parallel>, #tpu.dimension_semantics<parallel>, #tpu.dimension_semantics<arbitrary>], iteration_bounds = array<i64: 2, 1, 1>, scalar_prefetch = 0 : i64, scratch_operands = 1 : i64, tpu.core_type = #tpu.core_type<tc>, window_params = [{transform_indices = @transform_0, window_bounds = array<i64: 12, 108>}, {transform_indices = @transform_1, window_bounds = array<i64: 1, 108, 256>}, {pipeline_mode = #tpu.pipeline_mode<synchronous>, transform_indices = @transform_2, window_bounds = array<i64: 12, 1>}, {transform_indices = @transform_3, window_bounds = array<i64: 1, 12, 256>}]} {
    %c0_i32 = arith.constant 0 : i32
    %0 = arith.cmpi eq, %arg2, %c0_i32 : i32
    %1 = arith.extui %0 : i1 to i32
    %c0_i32_0 = arith.constant 0 : i32
    %2 = arith.cmpi ne, %1, %c0_i32_0 : i32
    scf.if %2 {
      %cst_11 = arith.constant 0.000000e+00 : f32
      %13 = vector.broadcast %cst_11 : f32 to vector<12x256xf32>
      %c0_12 = arith.constant 0 : index
      %c0_13 = arith.constant 0 : index
      %14 = vector.load %arg7[%c0_12, %c0_13] : memref<12x256xf32, #tpu.memory_space<vmem>>, vector<12x256xf32>
      tpu.vector_store %arg7[%c0_12, %c0_13], %13 {strides = array<i32>} : memref<12x256xf32, #tpu.memory_space<vmem>>, vector<12x256xf32>,
    } else {
    }
    %c0 = arith.constant 0 : index
    %c0_1 = arith.constant 0 : index
    %3 = vector.load %arg7[%c0, %c0_1] : memref<12x256xf32, #tpu.memory_space<vmem>>, vector<12x256xf32>
    %c0_2 = arith.constant 0 : index
    %c0_3 = arith.constant 0 : index
    %4 = vector.load %arg3[%c0_2, %c0_3] : memref<12x108xf32, #tpu.memory_space<vmem>>, vector<12x108xf32>
    %c0_4 = arith.constant 0 : index
    %c0_5 = arith.constant 0 : index
    %c0_6 = arith.constant 0 : index
    %5 = vector.load %arg4[%c0_4, %c0_5, %c0_6] : memref<1x108x256xf32, #tpu.memory_space<vmem>>, vector<1x108x256xf32>
    %6 = vector.shape_cast %5 : vector<1x108x256xf32> to vector<108x256xf32>
    %cst = arith.constant dense<0.000000e+00> : vector<12x256xf32>
    %7 = tpu.matmul %4, %6, %cst {dimension_numbers = #tpu.dot_dimension_numbers<[1], [0], [0], [1], [0, 0, 1, 1], [], []>} : vector<12x108xf32>, vector<108x256xf32>, vector<12x256xf32> -> vector<12x256xf32>
    %8 = arith.addf %3, %7 : vector<12x256xf32>
    %c0_7 = arith.constant 0 : index
    %c0_8 = arith.constant 0 : index
    %9 = vector.load %arg7[%c0_7, %c0_8] : memref<12x256xf32, #tpu.memory_space<vmem>>, vector<12x256xf32>
    tpu.vector_store %arg7[%c0_7, %c0_8], %8 {strides = array<i32>} : memref<12x256xf32, #tpu.memory_space<vmem>>, vector<12x256xf32>,
    %c0_i32_9 = arith.constant 0 : i32
    %10 = arith.cmpi eq, %arg2, %c0_i32_9 : i32
    %11 = arith.extui %10 : i1 to i32
    %c0_i32_10 = arith.constant 0 : i32
    %12 = arith.cmpi ne, %11, %c0_i32_10 : i32
    scf.if %12 {
      %c0_11 = arith.constant 0 : index
      %c0_12 = arith.constant 0 : index
      %13 = vector.load %arg7[%c0_11, %c0_12] : memref<12x256xf32, #tpu.memory_space<vmem>>, vector<12x256xf32>
      %c0_13 = arith.constant 0 : index
      %c0_14 = arith.constant 0 : index
      %14 = vector.load %arg5[%c0_13, %c0_14] : memref<12x1xf32, #tpu.memory_space<vmem>>, vector<12x1xf32>
      %15 = vector.broadcast %14 : vector<12x1xf32> to vector<12x256xf32>
      %16 = arith.addf %13, %15 : vector<12x256xf32>
      %c0_15 = arith.constant 0 : index
      %c0_16 = arith.constant 0 : index
      %c0_17 = arith.constant 0 : index
      %17 = vector.load %arg6[%c0_15, %c0_16, %c0_17] : memref<1x12x256xf32, #tpu.memory_space<vmem>>, vector<1x12x256xf32>
      %18 = vector.shape_cast %17 : vector<1x12x256xf32> to vector<12x256xf32>
      %19 = vector.shape_cast %16 : vector<12x256xf32> to vector<1x12x256xf32>
      tpu.vector_store %arg6[%c0_15, %c0_16, %c0_17], %19 {strides = array<i32>} : memref<1x12x256xf32, #tpu.memory_space<vmem>>, vector<1x12x256xf32>,
    } else {
    }
    return
  }
  func.func @transform_0(%arg0: i32, %arg1: i32, %arg2: i32) -> (i32, i32) {
    %c0_i32 = arith.constant 0 : i32
    %c0_i32_0 = arith.constant 0 : i32
    return %c0_i32, %arg2 : i32, i32
  }
  func.func @transform_1(%arg0: i32, %arg1: i32, %arg2: i32) -> (i32, i32, i32) {
    %c0_i32 = arith.constant 0 : i32
    return %arg0, %arg2, %arg1 : i32, i32, i32
  }
  func.func @transform_2(%arg0: i32, %arg1: i32, %arg2: i32) -> (i32, i32) {
    %c0_i32 = arith.constant 0 : i32
    %c0_i32_0 = arith.constant 0 : i32
    %c0_i32_1 = arith.constant 0 : i32
    return %c0_i32, %c0_i32_0 : i32, i32
  }
  func.func @transform_3(%arg0: i32, %arg1: i32, %arg2: i32) -> (i32, i32, i32) {
    %c0_i32 = arith.constant 0 : i32
    %c0_i32_0 = arith.constant 0 : i32
    return %arg0, %c0_i32, %arg1 : i32, i32, i32
  }
}

module attributes {stable_mosaic.version = 11 : i64} {
  func.func @_conv_mm_kernel(%arg0: i32, %arg1: i32, %arg2: i32, %arg3: memref<12x120xf32, #tpu.memory_space<vmem>>, %arg4: memref<1x120x256xf32, #tpu.memory_space<vmem>>, %arg5: memref<12x1xf32, #tpu.memory_space<vmem>>, %arg6: memref<1x12x256xf32, #tpu.memory_space<vmem>>, %arg7: memref<12x256xf32, #tpu.memory_space<vmem>>) attributes {dimension_semantics = [#tpu.dimension_semantics<parallel>, #tpu.dimension_semantics<parallel>, #tpu.dimension_semantics<arbitrary>], iteration_bounds = array<i64: 2, 1, 1>, scalar_prefetch = 0 : i64, scratch_operands = 1 : i64, tpu.core_type = #tpu.core_type<tc>, window_params = [{transform_indices = @transform_0, window_bounds = array<i64: 12, 120>}, {transform_indices = @transform_1, window_bounds = array<i64: 1, 120, 256>}, {pipeline_mode = #tpu.pipeline_mode<synchronous>, transform_indices = @transform_2, window_bounds = array<i64: 12, 1>}, {transform_indices = @transform_3, window_bounds = array<i64: 1, 12, 256>}]} {
    %c0_i32 = arith.constant 0 : i32
    %0 = arith.cmpi eq, %arg2, %c0_i32 : i32
    %1 = arith.extui %0 : i1 to i32
    %c0_i32_0 = arith.constant 0 : i32
    %2 = arith.cmpi ne, %1, %c0_i32_0 : i32
    scf.if %2 {
      %cst_11 = arith.constant 0.000000e+00 : f32
      %13 = vector.broadcast %cst_11 : f32 to vector<12x256xf32>
      %c0_12 = arith.constant 0 : index
      %c0_13 = arith.constant 0 : index
      %14 = vector.load %arg7[%c0_12, %c0_13] : memref<12x256xf32, #tpu.memory_space<vmem>>, vector<12x256xf32>
      tpu.vector_store %arg7[%c0_12, %c0_13], %13 {strides = array<i32>} : memref<12x256xf32, #tpu.memory_space<vmem>>, vector<12x256xf32>,
    } else {
    }
    %c0 = arith.constant 0 : index
    %c0_1 = arith.constant 0 : index
    %3 = vector.load %arg7[%c0, %c0_1] : memref<12x256xf32, #tpu.memory_space<vmem>>, vector<12x256xf32>
    %c0_2 = arith.constant 0 : index
    %c0_3 = arith.constant 0 : index
    %4 = vector.load %arg3[%c0_2, %c0_3] : memref<12x120xf32, #tpu.memory_space<vmem>>, vector<12x120xf32>
    %c0_4 = arith.constant 0 : index
    %c0_5 = arith.constant 0 : index
    %c0_6 = arith.constant 0 : index
    %5 = vector.load %arg4[%c0_4, %c0_5, %c0_6] : memref<1x120x256xf32, #tpu.memory_space<vmem>>, vector<1x120x256xf32>
    %6 = vector.shape_cast %5 : vector<1x120x256xf32> to vector<120x256xf32>
    %cst = arith.constant dense<0.000000e+00> : vector<12x256xf32>
    %7 = tpu.matmul %4, %6, %cst {dimension_numbers = #tpu.dot_dimension_numbers<[1], [0], [0], [1], [0, 0, 1, 1], [], []>} : vector<12x120xf32>, vector<120x256xf32>, vector<12x256xf32> -> vector<12x256xf32>
    %8 = arith.addf %3, %7 : vector<12x256xf32>
    %c0_7 = arith.constant 0 : index
    %c0_8 = arith.constant 0 : index
    %9 = vector.load %arg7[%c0_7, %c0_8] : memref<12x256xf32, #tpu.memory_space<vmem>>, vector<12x256xf32>
    tpu.vector_store %arg7[%c0_7, %c0_8], %8 {strides = array<i32>} : memref<12x256xf32, #tpu.memory_space<vmem>>, vector<12x256xf32>,
    %c0_i32_9 = arith.constant 0 : i32
    %10 = arith.cmpi eq, %arg2, %c0_i32_9 : i32
    %11 = arith.extui %10 : i1 to i32
    %c0_i32_10 = arith.constant 0 : i32
    %12 = arith.cmpi ne, %11, %c0_i32_10 : i32
    scf.if %12 {
      %c0_11 = arith.constant 0 : index
      %c0_12 = arith.constant 0 : index
      %13 = vector.load %arg7[%c0_11, %c0_12] : memref<12x256xf32, #tpu.memory_space<vmem>>, vector<12x256xf32>
      %c0_13 = arith.constant 0 : index
      %c0_14 = arith.constant 0 : index
      %14 = vector.load %arg5[%c0_13, %c0_14] : memref<12x1xf32, #tpu.memory_space<vmem>>, vector<12x1xf32>
      %15 = vector.broadcast %14 : vector<12x1xf32> to vector<12x256xf32>
      %16 = arith.addf %13, %15 : vector<12x256xf32>
      %c0_15 = arith.constant 0 : index
      %c0_16 = arith.constant 0 : index
      %c0_17 = arith.constant 0 : index
      %17 = vector.load %arg6[%c0_15, %c0_16, %c0_17] : memref<1x12x256xf32, #tpu.memory_space<vmem>>, vector<1x12x256xf32>
      %18 = vector.shape_cast %17 : vector<1x12x256xf32> to vector<12x256xf32>
      %19 = vector.shape_cast %16 : vector<12x256xf32> to vector<1x12x256xf32>
      tpu.vector_store %arg6[%c0_15, %c0_16, %c0_17], %19 {strides = array<i32>} : memref<1x12x256xf32, #tpu.memory_space<vmem>>, vector<1x12x256xf32>,
    } else {
    }
    return
  }
  func.func @transform_0(%arg0: i32, %arg1: i32, %arg2: i32) -> (i32, i32) {
    %c0_i32 = arith.constant 0 : i32
    %c0_i32_0 = arith.constant 0 : i32
    return %c0_i32, %arg2 : i32, i32
  }
  func.func @transform_1(%arg0: i32, %arg1: i32, %arg2: i32) -> (i32, i32, i32) {
    %c0_i32 = arith.constant 0 : i32
    return %arg0, %arg2, %arg1 : i32, i32, i32
  }
  func.func @transform_2(%arg0: i32, %arg1: i32, %arg2: i32) -> (i32, i32) {
    %c0_i32 = arith.constant 0 : i32
    %c0_i32_0 = arith.constant 0 : i32
    %c0_i32_1 = arith.constant 0 : i32
    return %c0_i32, %c0_i32_0 : i32, i32
  }
  func.func @transform_3(%arg0: i32, %arg1: i32, %arg2: i32) -> (i32, i32, i32) {
    %c0_i32 = arith.constant 0 : i32
    %c0_i32_0 = arith.constant 0 : i32
    return %arg0, %c0_i32, %arg1 : i32, i32, i32
  }
}

</mosaic_0001>

<llo_original>
// kernel: mid_block_forward.14
$region0: #{mid_block_forward.14}
  #allocation0 [shape = 'u32[]', space=smem, size = 0x4, offset = 0x4, fixed_abs, tag = 'smem constant byte address 0x4 - core index']
  #allocation1 [shape = 'u32[144,128]{1,0:T(1,128)}', space=vmem, size = 0x12000, scoped, tag = 'internal scratch']
  %s0 = inlined_call_operand.vmem [shape: f32[2,6,256], index: 0, kind: input, shape index: {}]
  %s1 = inlined_call_operand.vmem [shape: f32[6,1], index: 1, kind: input, shape index: {}]
  %s2 = inlined_call_operand.vmem [shape: f32[6,1], index: 2, kind: input, shape index: {}]
  %s3 = inlined_call_operand.vmem [shape: f32[2,6,256], index: 3, kind: output, shape index: {}]
  %s4 = sld [smem:[#allocation0]]
  $region45: #{mid_block_forward.14} parent=0
    _
  %s6 = ssub.s32 1, %s4
  %s7 = scalar_select 0, %s6, %s4
  loop: start=0, step=1, limit=4
  $region2: #{mid_block_forward.14} parent=0 // loop_pre_header
    _
  $region3: #{mid_block_forward.14} parent=0 // loop_header
    %s9 = sphi 0, %s13
    %p10 = scmp.ge.s32.totalorder %s9, 4
    %s19 = sphi 0, %s21
    %s22 = sphi 0, %s19
    %s23 = sphi 0, %s22
    %s39 = sphi 0, %s23
    %s43 = sphi 0, %s43
    %s45 = sphi 0, %s43
    %s46 = sphi 0, %s45
    %s60 = sphi 0, %s46
    %s64 = sphi 0, %s64
    %s66 = sphi 0, %s64
    %s67 = sphi 0, %s66
    %s81 = sphi 0, %s67
    %s87 = sphi 0, %s89
    %s90 = sphi 0, %s87
    %s91 = sphi 0, %s90
    %s107 = sphi 0, %s91
  $region4: #{mid_block_forward.14} parent=0 // loop_header_branch
    %12 = sbr.rel (%p10) target = $region8
  $region5: #{mid_block_forward.14} parent=0 // loop_body
    %s14 = ssub.s32 %s9, 1
    %s15 = ssub.s32 %s9, 2
    %s16 = sadd.s32 %s9, 1
    %s17 = ssub.s32 %s9, %s16
    %p18 = scmp.eq.s32.totalorder %s17, 0
    %s20 = sadd.s32 %s19, 1
    %s21 = scalar_select %p18, %s19, %s20
    %p24 = pneg %p18
    %p25 = scmp.eq.s32.totalorder %s9, 1
    %p26 = por %p24, %p25
    %p27 = scmp.ne.s32.totalorder %s19, %s22
    %p28 = scmp.eq.s32.totalorder %s9, 0
    %p29 = por %p27, %p28
    %p30 = scmp.ne.s32.totalorder %s19, %s22
    %p31 = scmp.eq.s32.totalorder %s14, 1
    %p32 = por %p30, %p31
    %p33 = scmp.ne.s32.totalorder %s22, %s23
    %p34 = scmp.eq.s32.totalorder %s14, 0
    %p35 = por %p33, %p34
    %p36 = scmp.ne.s32.totalorder %s22, %s23
    %p37 = scmp.eq.s32.totalorder %s15, 1
    %p38 = por %p36, %p37
    %p40 = scmp.ne.s32.totalorder %s23, %s39
    %p41 = scmp.eq.s32.totalorder %s15, 0
    %p42 = por %p40, %p41
    %s44 = sadd.s32 %s43, 1
    %p47 = scmp.eq.s32.totalorder %s9, 1
    %p48 = scmp.ne.s32.totalorder %s43, %s45
    %p49 = scmp.eq.s32.totalorder %s9, 0
    %p50 = por %p48, %p49
    %p51 = scmp.ne.s32.totalorder %s43, %s45
    %p52 = scmp.eq.s32.totalorder %s14, 1
    %p53 = por %p51, %p52
    %p54 = scmp.ne.s32.totalorder %s45, %s46
    %p55 = scmp.eq.s32.totalorder %s14, 0
    %p56 = por %p54, %p55
    %p57 = scmp.ne.s32.totalorder %s45, %s46
    %p58 = scmp.eq.s32.totalorder %s15, 1
    %p59 = por %p57, %p58
    %p61 = scmp.ne.s32.totalorder %s46, %s60
    %p62 = scmp.eq.s32.totalorder %s15, 0
    %p63 = por %p61, %p62
    %s65 = sadd.s32 %s64, 1
    %p68 = scmp.eq.s32.totalorder %s9, 1
    %p69 = scmp.ne.s32.totalorder %s64, %s66
    %p70 = scmp.eq.s32.totalorder %s9, 0
    %p71 = por %p69, %p70
    %p72 = scmp.ne.s32.totalorder %s64, %s66
    %p73 = scmp.eq.s32.totalorder %s14, 1
    %p74 = por %p72, %p73
    %p75 = scmp.ne.s32.totalorder %s66, %s67
    %p76 = scmp.eq.s32.totalorder %s14, 0
    %p77 = por %p75, %p76
    %p78 = scmp.ne.s32.totalorder %s66, %s67
    %p79 = scmp.eq.s32.totalorder %s15, 1
    %p80 = por %p78, %p79
    %p82 = scmp.ne.s32.totalorder %s67, %s81
    %p83 = scmp.eq.s32.totalorder %s15, 0
    %p84 = por %p82, %p83
    %s85 = ssub.s32 %s9, %s16
    %p86 = scmp.eq.s32.totalorder %s85, 0
    %s88 = sadd.s32 %s87, 1
    %s89 = scalar_select %p86, %s87, %s88
    %p92 = pneg %p86
    %p93 = scmp.eq.s32.totalorder %s9, 1
    %p94 = por %p92, %p93
    %p95 = scmp.ne.s32.totalorder %s87, %s90
    %p96 = scmp.eq.s32.totalorder %s9, 0
    %p97 = por %p95, %p96
    %p98 = scmp.ne.s32.totalorder %s87, %s90
    %p99 = scmp.eq.s32.totalorder %s14, 1
    %p100 = por %p98, %p99
    %p101 = scmp.ne.s32.totalorder %s90, %s91
    %p102 = scmp.eq.s32.totalorder %s14, 0
    %p103 = por %p101, %p102
    %p104 = scmp.ne.s32.totalorder %s90, %s91
    %p105 = scmp.eq.s32.totalorder %s15, 1
    %p106 = por %p104, %p105
    %p108 = scmp.ne.s32.totalorder %s91, %s107
    %p109 = scmp.eq.s32.totalorder %s15, 0
    %p110 = por %p108, %p109
    %p111 = scmp.le.s32.totalorder 1, %s9
    %p112 = scmp.lt.s32.totalorder %s9, 3
    %p113 = pnand %p111, %p112
    %p114 = pneg %p113
    // Predicated region
    $region9: #{mid_block_forward.14} parent=5 // pred_check
      _
    $region10: #{mid_block_forward.14} parent=5 // pred_check_branch
      %116 = sbr.rel (%p113) target = $region12
    $region11: #{mid_block_forward.14} parent=5 // pred_region
      %s117 = ssub.s32 %s9, 1
      // Predicated region
      $region13: #{mid_block_forward.14} parent=11 // pred_check
        %p118 = pneg %p56
      $region14: #{mid_block_forward.14} parent=11 // pred_check_branch
        %120 = sbr.rel (%p118) target = $region16
      $region15: #{mid_block_forward.14} parent=11 // pred_region
        _
      $region16: #{mid_block_forward.14} parent=11 // pred_fallthru
        _
      // Predicated region
      $region17: #{mid_block_forward.14} parent=11 // pred_check
        %p121 = pneg %p77
      $region18: #{mid_block_forward.14} parent=11 // pred_check_branch
        %123 = sbr.rel (%p121) target = $region20
      $region19: #{mid_block_forward.14} parent=11 // pred_region
        _
      $region20: #{mid_block_forward.14} parent=11 // pred_fallthru
        _
    $region12: #{mid_block_forward.14} parent=5 // pred_fallthru
      _
    %p124 = scmp.lt.s32.totalorder %s9, 2
    // Predicated region
    $region21: #{mid_block_forward.14} parent=5 // pred_check
      %p125 = pneg %p124
    $region22: #{mid_block_forward.14} parent=5 // pred_check_branch
      %127 = sbr.rel (%p125) target = $region24
    $region23: #{mid_block_forward.14} parent=5 // pred_region
      // Predicated region
      $region25: #{mid_block_forward.14} parent=23 // pred_check
        %p128 = pneg %p29
      $region26: #{mid_block_forward.14} parent=23 // pred_check_branch
        %130 = sbr.rel (%p128) target = $region28
      $region27: #{mid_block_forward.14} parent=23 // pred_region
        %p131 = scmp.lt.s32.totalorder %s9, 1
        %s132 = scalar_select %p131, %s9, 1
        %s133 = smul.addr %s132, 2
        %s134 = smul.addr %s133, 8
        %s135 = scalar_lea.vmem %s0, %s134
      $region28: #{mid_block_forward.14} parent=23 // pred_fallthru
        _
    $region24: #{mid_block_forward.14} parent=5 // pred_fallthru
      _
    %p136 = scmp.le.s32.totalorder 1, %s9
    %p137 = scmp.lt.s32.totalorder %s9, 3
    %p138 = pnand %p136, %p137
    %p139 = pneg %p138
    // Predicated region
    $region29: #{mid_block_forward.14} parent=5 // pred_check
      _
    $region30: #{mid_block_forward.14} parent=5 // pred_check_branch
      %141 = sbr.rel (%p138) target = $region32
    $region31: #{mid_block_forward.14} parent=5 // pred_region
      %s142 = ssub.s32 %s9, 1
      %p143 = scmp.lt.s32.totalorder %s14, 1
      %s144 = scalar_select %p143, %s14, 1
      %s145 = smul.addr %s144, 2
      %s146 = smul.addr %s145, 8
      %s147 = scalar_lea.vmem %s0, %s146
      %p148 = pneg %p35
      %p149 = pneg %p32
      %p150 = pneg %p56
      %p151 = pneg %p53
      %p152 = pneg %p77
      %p153 = pneg %p74
      %p154 = pneg %p103
      %p155 = pneg %p100
      %p156 = scmp.lt.s32.totalorder %s14, 1
      %s157 = scalar_select %p156, %s14, 1
      %s158 = smul.addr %s157, 2
      %s159 = smul.addr %s158, 8
      %s160 = scalar_lea.vmem %s3, %s159
      %p161 = scmp.lt.s32.totalorder %s14, 1
      %s162 = scalar_select %p161, %s14, 1
      %s163 = smul.addr %s162, 2
      %s164 = smul.addr %s163, 8
      %s165 = scalar_lea.vmem %s0, %s164
      %p166 = scmp.lt.s32.totalorder %s14, 1
      %s167 = scalar_select %p166, %s14, 1
      %s168 = smul.addr %s167, 2
      %s169 = smul.addr %s168, 8
      %s170 = scalar_lea.vmem %s3, %s169
      %v171 = vld [vmem:[%s165] sm:$0x3f]
      %v172 = vld [vmem:[%s165 + $0x8] sm:$0x3f]
      %v173 = vld [vmem:[%s1] sm:$0x3f]
      %v174 = vld [vmem:[%s2] sm:$0x3f]
      %vm175 = vcmask 1041408
      %v176 = vsel %vm175, %v171, 0.0
      %v177 = vsel %vm175, %v172, 0.0
      %v178 = vadd.f32 %v176, %v177
      %179 = vadd.xlane.f32.xlu0 %v178
      %v180 = vpop.xlane.xlu0 %179
      %v181 = vrot.slane %v180, 4
      %v182 = vadd.f32 %v180, %v181
      %v183 = vrot.slane %v182, 2
      %v184 = vadd.f32 %v182, %v183
      %v185 = vrot.slane %v184, 1
      %v186 = vadd.f32 %v184, %v185
      %s187 = vtos %v186
      %v188 = vstv %s187
      %v189 = vrcp.pop 512.0
      %v190 = vmul.f32 %v188, %v189
      %v191 = vsub.f32 %v171, %v190
      %v192 = vsub.f32 %v172, %v190
      %v193 = vmul.f32 %v191, %v191
      %v194 = vmul.f32 %v192, %v192
      %v195 = vsel %vm175, %v193, 0.0
      %v196 = vsel %vm175, %v194, 0.0
      %v197 = vadd.f32 %v195, %v196
      %198 = vadd.xlane.f32.xlu0 %v197
      %v199 = vpop.xlane.xlu0 %198
      %v200 = vrot.slane %v199, 4
      %v201 = vadd.f32 %v199, %v200
      %v202 = vrot.slane %v201, 2
      %v203 = vadd.f32 %v201, %v202
      %v204 = vrot.slane %v203, 1
      %v205 = vadd.f32 %v203, %v204
      %s206 = vtos %v205
      %v207 = vstv %s206
      %v208 = vmul.f32 %v207, %v189
      %v209 = vadd.f32 %v208, 1e-05
      %v210 = vrsqrt.pop %v209
      %v211 = vmul.f32 %v191, %v210
      %v212 = vmul.f32 %v192, %v210
      %214 = vset.pattern.permute.xlu0 0
      %215 = vperm.xlu0 %214, %v173
      %v216 = vpop.permute.xlu0 %215
      %v218 = vmul.f32 %v211, %v216
      %v219 = vmul.f32 %v212, %v216
      %221 = vset.pattern.permute.xlu0 0
      %222 = vperm.xlu0 %221, %v174
      %v223 = vpop.permute.xlu0 %222
      %v225 = vadd.f32 %v218, %v223
      %v226 = vadd.f32 %v219, %v223
      %v227 = vxor.u32 %v225, 2147483648
      %v228 = vxor.u32 %v226, 2147483648
      %v229 = vmul.f32 %v227, 1.442695
      %v230 = vpow.pop %v229
      %v231 = vmul.f32 %v228, 1.442695
      %v232 = vpow.pop %v231
      %v233 = vadd.f32 %v230, 1.0
      %v234 = vadd.f32 %v232, 1.0
      %v235 = vrcp.pop %v233
      %v236 = vmul.f32 1.0, %v235
      %v237 = vrcp.pop %v234
      %v238 = vmul.f32 1.0, %v237
      %v239 = vmul.f32 %v225, %v236
      %v240 = vmul.f32 %v226, %v238
      %241 = vst [vmem:[%s170] sm:$0x3] %v239
      %242 = vst [vmem:[%s170 + $0x8] sm:$0x3] %v240
      %v245 = vrot.slane %v171, 2
      %v246 = vrot.slane %v172, 2
      %v249 = vsel %vm175, %v245, 0.0
      %v250 = vsel %vm175, %v246, 0.0
      %v251 = vadd.f32 %v249, %v250
      %252 = vadd.xlane.f32.xlu0 %v251
      %v253 = vpop.xlane.xlu0 %252
      %v254 = vrot.slane %v253, 4
      %v255 = vadd.f32 %v253, %v254
      %v256 = vrot.slane %v255, 2
      %v257 = vadd.f32 %v255, %v256
      %v258 = vrot.slane %v257, 1
      %v259 = vadd.f32 %v257, %v258
      %s260 = vtos %v259
      %v261 = vstv %s260
      %v262 = vmul.f32 %v261, %v189
      %v263 = vsub.f32 %v171, %v262
      %v264 = vsub.f32 %v172, %v262
      %v265 = vmul.f32 %v263, %v263
      %v266 = vmul.f32 %v264, %v264
      %v269 = vrot.slane %v265, 2
      %v270 = vrot.slane %v266, 2
      %v273 = vsel %vm175, %v269, 0.0
      %v274 = vsel %vm175, %v270, 0.0
      %v275 = vadd.f32 %v273, %v274
      %276 = vadd.xlane.f32.xlu0 %v275
      %v277 = vpop.xlane.xlu0 %276
      %v278 = vrot.slane %v277, 4
      %v279 = vadd.f32 %v277, %v278
      %v280 = vrot.slane %v279, 2
      %v281 = vadd.f32 %v279, %v280
      %v282 = vrot.slane %v281, 1
      %v283 = vadd.f32 %v281, %v282
      %s284 = vtos %v283
      %v285 = vstv %s284
      %v286 = vmul.f32 %v285, %v189
      %v287 = vadd.f32 %v286, 1e-05
      %v288 = vrsqrt.pop %v287
      %v289 = vmul.f32 %v263, %v288
      %v290 = vmul.f32 %v264, %v288
      %v291 = vmul.f32 %v289, %v216
      %v292 = vmul.f32 %v290, %v216
      %v293 = vadd.f32 %v291, %v223
      %v294 = vadd.f32 %v292, %v223
      %v295 = vxor.u32 %v293, 2147483648
      %v296 = vxor.u32 %v294, 2147483648
      %v297 = vmul.f32 %v295, 1.442695
      %v298 = vpow.pop %v297
      %v299 = vmul.f32 %v296, 1.442695
      %v300 = vpow.pop %v299
      %v301 = vadd.f32 %v298, 1.0
      %v302 = vadd.f32 %v300, 1.0
      %v303 = vrcp.pop %v301
      %v304 = vmul.f32 1.0, %v303
      %v305 = vrcp.pop %v302
      %v306 = vmul.f32 1.0, %v305
      %v307 = vmul.f32 %v293, %v304
      %v308 = vmul.f32 %v294, %v306
      %309 = vst [vmem:[%s170] sm:$0xc] %v307
      %310 = vst [vmem:[%s170 + $0x8] sm:$0xc] %v308
      %v311 = vrot.slane %v171, 4
      %v312 = vrot.slane %v172, 4
      %v315 = vsel %vm175, %v311, 0.0
      %v316 = vsel %vm175, %v312, 0.0
      %v317 = vadd.f32 %v315, %v316
      %318 = vadd.xlane.f32.xlu0 %v317
      %v319 = vpop.xlane.xlu0 %318
      %v320 = vrot.slane %v319, 4
      %v321 = vadd.f32 %v319, %v320
      %v322 = vrot.slane %v321, 2
      %v323 = vadd.f32 %v321, %v322
      %v324 = vrot.slane %v323, 1
      %v325 = vadd.f32 %v323, %v324
      %s326 = vtos %v325
      %v327 = vstv %s326
      %v328 = vmul.f32 %v327, %v189
      %v329 = vsub.f32 %v171, %v328
      %v330 = vsub.f32 %v172, %v328
      %v331 = vmul.f32 %v329, %v329
      %v332 = vmul.f32 %v330, %v330
      %v335 = vrot.slane %v331, 4
      %v336 = vrot.slane %v332, 4
      %v339 = vsel %vm175, %v335, 0.0
      %v340 = vsel %vm175, %v336, 0.0
      %v341 = vadd.f32 %v339, %v340
      %342 = vadd.xlane.f32.xlu0 %v341
      %v343 = vpop.xlane.xlu0 %342
      %v344 = vrot.slane %v343, 4
      %v345 = vadd.f32 %v343, %v344
      %v346 = vrot.slane %v345, 2
      %v347 = vadd.f32 %v345, %v346
      %v348 = vrot.slane %v347, 1
      %v349 = vadd.f32 %v347, %v348
      %s350 = vtos %v349
      %v351 = vstv %s350
      %v352 = vmul.f32 %v351, %v189
      %v353 = vadd.f32 %v352, 1e-05
      %v354 = vrsqrt.pop %v353
      %v355 = vmul.f32 %v329, %v354
      %v356 = vmul.f32 %v330, %v354
      %v357 = vmul.f32 %v355, %v216
      %v358 = vmul.f32 %v356, %v216
      %v359 = vadd.f32 %v357, %v223
      %v360 = vadd.f32 %v358, %v223
      %v361 = vxor.u32 %v359, 2147483648
      %v362 = vxor.u32 %v360, 2147483648
      %v363 = vmul.f32 %v361, 1.442695
      %v364 = vpow.pop %v363
      %v365 = vmul.f32 %v362, 1.442695
      %v366 = vpow.pop %v365
      %v367 = vadd.f32 %v364, 1.0
      %v368 = vadd.f32 %v366, 1.0
      %v369 = vrcp.pop %v367
      %v370 = vmul.f32 1.0, %v369
      %v371 = vrcp.pop %v368
      %v372 = vmul.f32 1.0, %v371
      %v373 = vmul.f32 %v359, %v370
      %v374 = vmul.f32 %v360, %v372
      %375 = vst [vmem:[%s170] sm:$0x30] %v373
      %376 = vst [vmem:[%s170 + $0x8] sm:$0x30] %v374
      %p377 = scmp.lt.s32.totalorder %s14, 1
      %s378 = scalar_select %p377, %s14, 1
      %s379 = smul.addr %s378, 2
      %s380 = smul.addr %s379, 8
      %s381 = scalar_lea.vmem %s3, %s380
      // Predicated region
      $region33: #{mid_block_forward.14} parent=31 // pred_check
        %p382 = pneg %p100
      $region34: #{mid_block_forward.14} parent=31 // pred_check_branch
        %384 = sbr.rel (%p382) target = $region36
      $region35: #{mid_block_forward.14} parent=31 // pred_region
        _
      $region36: #{mid_block_forward.14} parent=31 // pred_fallthru
        _
    $region32: #{mid_block_forward.14} parent=5 // pred_fallthru
      _
    %p385 = scmp.le.s32.totalorder 2, %s9
    // Predicated region
    $region37: #{mid_block_forward.14} parent=5 // pred_check
      %p386 = pneg %p385
    $region38: #{mid_block_forward.14} parent=5 // pred_check_branch
      %388 = sbr.rel (%p386) target = $region40
    $region39: #{mid_block_forward.14} parent=5 // pred_region
      %s389 = ssub.s32 %s9, 2
      // Predicated region
      $region41: #{mid_block_forward.14} parent=39 // pred_check
        %p390 = pneg %p106
      $region42: #{mid_block_forward.14} parent=39 // pred_check_branch
        %392 = sbr.rel (%p390) target = $region44
      $region43: #{mid_block_forward.14} parent=39 // pred_region
        %p393 = scmp.lt.s32.totalorder %s15, 1
        %s394 = scalar_select %p393, %s15, 1
        %s395 = smul.addr %s394, 2
        %s396 = smul.addr %s395, 8
        %s397 = scalar_lea.vmem %s3, %s396
      $region44: #{mid_block_forward.14} parent=39 // pred_fallthru
        _
    $region40: #{mid_block_forward.14} parent=5 // pred_fallthru
      _
  $region6: #{mid_block_forward.14} parent=0 // loop_footer
    %s13 = sadd.s32 1, %s9
  $region7: #{mid_block_forward.14} parent=0 // loop_footer_branch
    %8 = sbr.rel target = $region3
  $region8: #{mid_block_forward.14} parent=0 // loop_exit
    _

// kernel: mid_block_forward.16
$region0: #{mid_block_forward.16}
  #allocation0 [shape = 'u32[]', space=smem, size = 0x4, offset = 0x4, fixed_abs, tag = 'smem constant byte address 0x4 - core index']
  #allocation1 [shape = 'u32[144,128]{1,0:T(1,128)}', space=vmem, size = 0x12000, scoped, tag = 'internal scratch']
  #allocation2 [shape = 'f32[2,12]{1,0:T(2,128)}', space=vmem, size = 0x400, scoped, tag = 'scratch operand']
  %s0 = inlined_call_operand.vmem [shape: f32[2,32], index: 0, kind: input, shape index: {}]
  %s1 = inlined_call_operand.vmem [shape: f32[32,12], index: 1, kind: input, shape index: {}]
  %s2 = inlined_call_operand.vmem [shape: f32[1,12], index: 2, kind: input, shape index: {}]
  %s3 = inlined_call_operand.vmem [shape: f32[2,12], index: 3, kind: output, shape index: {}]
  %s4 = sld [smem:[#allocation0]]
  $region30: #{mid_block_forward.16} parent=0
    _
  %s6 = ssub.s32 1, %s4
  %s7 = scalar_select 0, %s6, %s4
  // Predicated region
  $region2: #{mid_block_forward.16} parent=0 // pred_check
    _
  $region3: #{mid_block_forward.16} parent=0 // pred_check_branch
    %9 = sbr.rel (0) target = $region5
  $region4: #{mid_block_forward.16} parent=0 // pred_region
    _
  $region5: #{mid_block_forward.16} parent=0 // pred_fallthru
    _
  // Predicated region
  $region6: #{mid_block_forward.16} parent=0 // pred_check
    _
  $region7: #{mid_block_forward.16} parent=0 // pred_check_branch
    %11 = sbr.rel (0) target = $region9
  $region8: #{mid_block_forward.16} parent=0 // pred_region
    _
  $region9: #{mid_block_forward.16} parent=0 // pred_fallthru
    _
  // Predicated region
  $region10: #{mid_block_forward.16} parent=0 // pred_check
    _
  $region11: #{mid_block_forward.16} parent=0 // pred_check_branch
    %13 = sbr.rel (0) target = $region13
  $region12: #{mid_block_forward.16} parent=0 // pred_region
    _
  $region13: #{mid_block_forward.16} parent=0 // pred_fallthru
    _
  %p14 = scmp.eq.s32.totalorder 0, 0
  // Predicated region
  $region14: #{mid_block_forward.16} parent=0 // pred_check
    %p15 = pneg %p14
  $region15: #{mid_block_forward.16} parent=0 // pred_check_branch
    %17 = sbr.rel (%p15) target = $region17
  $region16: #{mid_block_forward.16} parent=0 // pred_region
    %vm18 = vcmask 91136
    %19 = vst.msk [vmem:[#allocation2] sm:$0x3] %vm18, 0.0
  $region17: #{mid_block_forward.16} parent=0 // pred_fallthru
    _
  %v20 = vld [vmem:[%s0] sm:$0x3]
  %v21 = vxor.u32 %v20, 2147483648
  %v22 = vmul.f32 %v21, 1.442695
  %v23 = vpow.pop %v22
  %v24 = vadd.f32 %v23, 1.0
  %v25 = vrcp.pop %v24
  %v26 = vmul.f32 1.0, %v25
  %v27 = vmul.f32 %v20, %v26
  %v28 = vld [vmem:[#allocation2] sm:$0x3]
  %v29 = vld [vmem:[%s1] sm:$0xff]
  %v30 = vld [vmem:[%s1 + $0x8] sm:$0xff]
  %v31 = vld [vmem:[%s1 + $0x10] sm:$0xff]
  %v32 = vld [vmem:[%s1 + $0x18] sm:$0xff]
  %vm33 = vcmask 261120
  %v35 = vsel %vm33, %v27, 0
  %37 = vmatprep.subr.mxu0 0.0
  %38 = vmatpush1.msra.mxu0 %v29
  %39 = vmatprep.subr.mxu0 0.0
  %40 = vmatpush1.msra.mxu0 %v30
  %41 = vmatprep.subr.mxu0 0.0
  %42 = vmatpush1.msra.mxu0 %v31
  %43 = vmatprep.subr.mxu0 0.0
  %44 = vmatpush1.msra.mxu0 %v32
  %45 = vmatprep.subr.mxu0 0.0
  %46 = vmatpush1.msra.mxu0 0.0
  %47 = vmatprep.subr.mxu0 0.0
  %48 = vmatpush1.msra.mxu0 0.0
  %49 = vmatprep.subr.mxu0 0.0
  %50 = vmatpush1.msra.mxu0 0.0
  %51 = vmatprep.subr.mxu0 0.0
  %52 = vmatpush1.msra.mxu0 0.0
  %53 = vmatprep.subr.mxu0 0.0
  %54 = vmatpush1.msra.mxu0 0.0
  %55 = vmatprep.subr.mxu0 0.0
  %56 = vmatpush1.msra.mxu0 0.0
  %57 = vmatprep.subr.mxu0 0.0
  %58 = vmatpush1.msra.mxu0 0.0
  %59 = vmatprep.subr.mxu0 0.0
  %60 = vmatpush1.msra.mxu0 0.0
  %61 = vmatprep.subr.mxu0 0.0
  %62 = vmatpush1.msra.mxu0 0.0
  %63 = vmatprep.subr.mxu0 0.0
  %64 = vmatpush1.msra.mxu0 0.0
  %65 = vmatprep.subr.mxu0 0.0
  %66 = vmatpush1.msra.mxu0 0.0
  %67 = vmatprep.subr.mxu0 0.0
  %68 = vmatpush1.msra.mxu0 0.0
  %69 = vmatprep.subr.mxu0 0.0
  %70 = vmatpush1.msra.mxu0 0.0
  %71 = vmatprep.subr.mxu0 0.0
  %72 = vmatpush1.msra.mxu0 0.0
  %73 = vmatprep.subr.mxu0 0.0
  %74 = vmatpush1.msra.mxu0 0.0
  %75 = vmatprep.subr.mxu0 0.0
  %76 = vmatpush1.msra.mxu0 0.0
  %77 = vmatprep.subr.mxu0 0.0
  %78 = vmatpush1.msra.mxu0 0.0
  %79 = vmatprep.subr.mxu0 0.0
  %80 = vmatpush1.msra.mxu0 0.0
  %81 = vmatprep.subr.mxu0 0.0
  %82 = vmatpush1.msra.mxu0 0.0
  %83 = vmatprep.subr.mxu0 0.0
  %84 = vmatpush1.msra.mxu0 0.0
  %85 = vmatprep.subr.mxu0 0.0
  %86 = vmatpush1.msra.mxu0 0.0
  %87 = vmatprep.subr.mxu0 0.0
  %88 = vmatpush1.msra.mxu0 0.0
  %89 = vmatprep.subr.mxu0 0.0
  %90 = vmatpush1.msra.mxu0 0.0
  %91 = vmatprep.subr.mxu0 0.0
  %92 = vmatpush1.msra.mxu0 0.0
  %93 = vmatprep.subr.mxu0 0.0
  %94 = vmatpush1.msra.mxu0 0.0
  %95 = vmatprep.subr.mxu0 0.0
  %96 = vmatpush1.msra.mxu0 0.0
  %97 = vmatprep.subr.mxu0 0.0
  %98 = vmatpush1.msra.mxu0 0.0
  %99 = vmatprep.subr.mxu0 0.0
  %100 = vmatpush1.msra.mxu0 0.0
  %101 = vmatprep.mubr.f32.mxu0 0.0
  %102 = vmatmul.mubr.f32.gmra.mrb[0].mxu0 %v35
  %v103 = vpop.f32.mrb[0].mxu0
  %v104 = vadd.f32 0.0, %v103
  %v105 = vpop.f32.mrb[0].mxu0
  %106 = vdwg.mxu0
  %v107 = vadd.f32 %v28, %v104
  %vm108 = vcmask 91136
  %109 = vst.msk [vmem:[#allocation2] sm:$0x3] %vm108, %v107
  // Predicated region
  $region18: #{mid_block_forward.16} parent=0 // pred_check
    %p110 = pneg %p14
  $region19: #{mid_block_forward.16} parent=0 // pred_check_branch
    %112 = sbr.rel (%p110) target = $region21
  $region20: #{mid_block_forward.16} parent=0 // pred_region
    %v113 = vld [vmem:[#allocation2] sm:$0x3]
    %v114 = vld [vmem:[%s2] sm:$0x1]
    %v116 = vlaneseq
    %v117 = vshrl.u32 %v116, 7
    %v118 = vsub.s32 0, %v117
    %v119 = vrot.slane %v114, %v118
    %v121 = vadd.f32 %v113, %v119
    %122 = vst.msk [vmem:[%s3] sm:$0x3] %vm108, %v121
  $region21: #{mid_block_forward.16} parent=0 // pred_fallthru
    _
  // Predicated region
  $region22: #{mid_block_forward.16} parent=0 // pred_check
    _
  $region23: #{mid_block_forward.16} parent=0 // pred_check_branch
    %124 = sbr.rel (0) target = $region25
  $region24: #{mid_block_forward.16} parent=0 // pred_region
    _
  $region25: #{mid_block_forward.16} parent=0 // pred_fallthru
    _
  // Predicated region
  $region26: #{mid_block_forward.16} parent=0 // pred_check
    _
  $region27: #{mid_block_forward.16} parent=0 // pred_check_branch
    %126 = sbr.rel (0) target = $region29
  $region28: #{mid_block_forward.16} parent=0 // pred_region
    _
  $region29: #{mid_block_forward.16} parent=0 // pred_fallthru
    _

// kernel: mid_block_forward.15
$region0: #{mid_block_forward.15}
  #allocation0 [shape = 'u32[]', space=smem, size = 0x4, offset = 0x4, fixed_abs, tag = 'smem constant byte address 0x4 - core index']
  #allocation1 [shape = 'u32[144,128]{1,0:T(1,128)}', space=vmem, size = 0x12000, scoped, tag = 'internal scratch']
  #allocation2 [shape = 'f32[12,256]{1,0:T(8,128)}', space=vmem, size = 0x4000, scoped, tag = 'scratch operand']
  %s0 = inlined_call_operand.vmem [shape: f32[12,54], index: 0, kind: input, shape index: {}]
  %s1 = inlined_call_operand.vmem [shape: f32[2,54,256], index: 1, kind: input, shape index: {}]
  %s2 = inlined_call_operand.vmem [shape: f32[12,1], index: 2, kind: input, shape index: {}]
  %s3 = inlined_call_operand.vmem [shape: f32[2,12,256], index: 3, kind: output, shape index: {}]
  %s4 = sld [smem:[#allocation0]]
  $region53: #{mid_block_forward.15} parent=0
    _
  %s6 = ssub.s32 1, %s4
  %s7 = scalar_select 0, %s6, %s4
  loop: start=0, step=1, limit=4
  $region2: #{mid_block_forward.15} parent=0 // loop_pre_header
    _
  $region3: #{mid_block_forward.15} parent=0 // loop_header
    %s9 = sphi 0, %s13
    %p10 = scmp.ge.s32.totalorder %s9, 4
    %s16 = sphi 0, %s35
    %s17 = sphi 0, %s31
    %s18 = sphi 0, %s27
    %s19 = sphi 0, %s16
    %s20 = sphi 0, %s17
    %s21 = sphi 0, %s18
    %s22 = sphi 0, %s19
    %s23 = sphi 0, %s20
    %s24 = sphi 0, %s21
    %s38 = sphi 0, %s40
    %s41 = sphi 0, %s38
    %s42 = sphi 0, %s41
    %s58 = sphi 0, %s42
    %s68 = sphi 0, %s70
    %s71 = sphi 0, %s68
    %s72 = sphi 0, %s71
    %s88 = sphi 0, %s72
    %s92 = sphi 0, %s92
    %s94 = sphi 0, %s92
    %s95 = sphi 0, %s94
    %s109 = sphi 0, %s95
    %s117 = sphi 0, %s119
    %s120 = sphi 0, %s117
    %s121 = sphi 0, %s120
    %s137 = sphi 0, %s121
  $region4: #{mid_block_forward.15} parent=0 // loop_header_branch
    %12 = sbr.rel (%p10) target = $region8
  $region5: #{mid_block_forward.15} parent=0 // loop_body
    %s14 = ssub.s32 %s9, 1
    %s15 = ssub.s32 %s9, 2
    %s25 = sadd.s32 1, %s18
    %p26 = scmp.ge.s32.totalorder %s25, 1
    %s27 = scalar_select %p26, 0, %s25
    %s28 = sadd.s32 1, %s17
    %s29 = scalar_select %p26, %s28, %s17
    %p30 = scmp.ge.s32.totalorder %s29, 1
    %s31 = scalar_select %p30, 0, %s29
    %s32 = sadd.s32 1, %s16
    %s33 = scalar_select %p30, %s32, %s16
    %p34 = scmp.ge.s32.totalorder %s33, 2
    %s35 = scalar_select %p34, 0, %s33
    %s36 = ssub.s32 %s18, %s27
    %p37 = scmp.eq.s32.totalorder %s36, 0
    %s39 = sadd.s32 %s38, 1
    %s40 = scalar_select %p37, %s38, %s39
    %p43 = pneg %p37
    %p44 = scmp.eq.s32.totalorder %s9, 1
    %p45 = por %p43, %p44
    %p46 = scmp.ne.s32.totalorder %s38, %s41
    %p47 = scmp.eq.s32.totalorder %s9, 0
    %p48 = por %p46, %p47
    %p49 = scmp.ne.s32.totalorder %s38, %s41
    %p50 = scmp.eq.s32.totalorder %s14, 1
    %p51 = por %p49, %p50
    %p52 = scmp.ne.s32.totalorder %s41, %s42
    %p53 = scmp.eq.s32.totalorder %s14, 0
    %p54 = por %p52, %p53
    %p55 = scmp.ne.s32.totalorder %s41, %s42
    %p56 = scmp.eq.s32.totalorder %s15, 1
    %p57 = por %p55, %p56
    %p59 = scmp.ne.s32.totalorder %s42, %s58
    %p60 = scmp.eq.s32.totalorder %s15, 0
    %p61 = por %p59, %p60
    %s62 = ssub.s32 %s16, %s35
    %s63 = ssub.s32 %s18, %s27
    %s64 = sor.u32 %s62, %s63
    %s65 = ssub.s32 %s17, %s31
    %s66 = sor.u32 %s64, %s65
    %p67 = scmp.eq.s32.totalorder %s66, 0
    %s69 = sadd.s32 %s68, 1
    %s70 = scalar_select %p67, %s68, %s69
    %p73 = pneg %p67
    %p74 = scmp.eq.s32.totalorder %s9, 1
    %p75 = por %p73, %p74
    %p76 = scmp.ne.s32.totalorder %s68, %s71
    %p77 = scmp.eq.s32.totalorder %s9, 0
    %p78 = por %p76, %p77
    %p79 = scmp.ne.s32.totalorder %s68, %s71
    %p80 = scmp.eq.s32.totalorder %s14, 1
    %p81 = por %p79, %p80
    %p82 = scmp.ne.s32.totalorder %s71, %s72
    %p83 = scmp.eq.s32.totalorder %s14, 0
    %p84 = por %p82, %p83
    %p85 = scmp.ne.s32.totalorder %s71, %s72
    %p86 = scmp.eq.s32.totalorder %s15, 1
    %p87 = por %p85, %p86
    %p89 = scmp.ne.s32.totalorder %s72, %s88
    %p90 = scmp.eq.s32.totalorder %s15, 0
    %p91 = por %p89, %p90
    %s93 = sadd.s32 %s92, 1
    %p96 = scmp.eq.s32.totalorder %s9, 1
    %p97 = scmp.ne.s32.totalorder %s92, %s94
    %p98 = scmp.eq.s32.totalorder %s9, 0
    %p99 = por %p97, %p98
    %p100 = scmp.ne.s32.totalorder %s92, %s94
    %p101 = scmp.eq.s32.totalorder %s14, 1
    %p102 = por %p100, %p101
    %p103 = scmp.ne.s32.totalorder %s94, %s95
    %p104 = scmp.eq.s32.totalorder %s14, 0
    %p105 = por %p103, %p104
    %p106 = scmp.ne.s32.totalorder %s94, %s95
    %p107 = scmp.eq.s32.totalorder %s15, 1
    %p108 = por %p106, %p107
    %p110 = scmp.ne.s32.totalorder %s95, %s109
    %p111 = scmp.eq.s32.totalorder %s15, 0
    %p112 = por %p110, %p111
    %s113 = ssub.s32 %s16, %s35
    %s114 = ssub.s32 %s17, %s31
    %s115 = sor.u32 %s113, %s114
    %p116 = scmp.eq.s32.totalorder %s115, 0
    %s118 = sadd.s32 %s117, 1
    %s119 = scalar_select %p116, %s117, %s118
    %p122 = pneg %p116
    %p123 = scmp.eq.s32.totalorder %s9, 1
    %p124 = por %p122, %p123
    %p125 = scmp.ne.s32.totalorder %s117, %s120
    %p126 = scmp.eq.s32.totalorder %s9, 0
    %p127 = por %p125, %p126
    %p128 = scmp.ne.s32.totalorder %s117, %s120
    %p129 = scmp.eq.s32.totalorder %s14, 1
    %p130 = por %p128, %p129
    %p131 = scmp.ne.s32.totalorder %s120, %s121
    %p132 = scmp.eq.s32.totalorder %s14, 0
    %p133 = por %p131, %p132
    %p134 = scmp.ne.s32.totalorder %s120, %s121
    %p135 = scmp.eq.s32.totalorder %s15, 1
    %p136 = por %p134, %p135
    %p138 = scmp.ne.s32.totalorder %s121, %s137
    %p139 = scmp.eq.s32.totalorder %s15, 0
    %p140 = por %p138, %p139
    %p141 = scmp.le.s32.totalorder 1, %s9
    %p142 = scmp.lt.s32.totalorder %s9, 3
    %p143 = pnand %p141, %p142
    %p144 = pneg %p143
    // Predicated region
    $region9: #{mid_block_forward.15} parent=5 // pred_check
      _
    $region10: #{mid_block_forward.15} parent=5 // pred_check_branch
      %146 = sbr.rel (%p143) target = $region12
    $region11: #{mid_block_forward.15} parent=5 // pred_region
      %s147 = ssub.s32 %s9, 1
      // Predicated region
      $region13: #{mid_block_forward.15} parent=11 // pred_check
        %p148 = pneg %p54
      $region14: #{mid_block_forward.15} parent=11 // pred_check_branch
        %150 = sbr.rel (%p148) target = $region16
      $region15: #{mid_block_forward.15} parent=11 // pred_region
        %p151 = scmp.lt.s32.totalorder %s21, 0
        %s152 = scalar_select %p151, %s21, 0
        %s153 = smul.addr %s152, 8
        %s154 = scalar_lea.vmem %s0, %s153
      $region16: #{mid_block_forward.15} parent=11 // pred_fallthru
        _
      // Predicated region
      $region17: #{mid_block_forward.15} parent=11 // pred_check
        %p155 = pneg %p105
      $region18: #{mid_block_forward.15} parent=11 // pred_check_branch
        %157 = sbr.rel (%p155) target = $region20
      $region19: #{mid_block_forward.15} parent=11 // pred_region
        _
      $region20: #{mid_block_forward.15} parent=11 // pred_fallthru
        _
    $region12: #{mid_block_forward.15} parent=5 // pred_fallthru
      _
    %p158 = scmp.lt.s32.totalorder %s9, 2
    // Predicated region
    $region21: #{mid_block_forward.15} parent=5 // pred_check
      %p159 = pneg %p158
    $region22: #{mid_block_forward.15} parent=5 // pred_check_branch
      %161 = sbr.rel (%p159) target = $region24
    $region23: #{mid_block_forward.15} parent=5 // pred_region
      // Predicated region
      $region25: #{mid_block_forward.15} parent=23 // pred_check
        %p162 = pneg %p78
      $region26: #{mid_block_forward.15} parent=23 // pred_check_branch
        %164 = sbr.rel (%p162) target = $region28
      $region27: #{mid_block_forward.15} parent=23 // pred_region
        %s165 = smul.u32 7, %s18
        %s166 = smul.u32 2, %s17
        %p167 = scmp.lt.s32.totalorder %s16, 1
        %s168 = scalar_select %p167, %s16, 1
        %p169 = scmp.lt.s32.totalorder %s165, 6
        %s170 = scalar_select %p169, %s165, 6
        %p171 = scmp.lt.s32.totalorder %s166, 1
        %s172 = scalar_select %p171, %s166, 1
        %s173 = smul.addr %s170, 2
        %s174 = sadd.s32 %s172, %s173
        %s175 = smul.addr %s168, 14
        %s176 = sadd.s32 %s174, %s175
        %s177 = smul.addr %s176, 8
        %s178 = scalar_lea.vmem %s1, %s177
        %s179 = smul.u32 7, %s18
        %s180 = smul.u32 2, %s17
      $region28: #{mid_block_forward.15} parent=23 // pred_fallthru
        _
    $region24: #{mid_block_forward.15} parent=5 // pred_fallthru
      _
    %p181 = scmp.le.s32.totalorder 1, %s9
    %p182 = scmp.lt.s32.totalorder %s9, 3
    %p183 = pnand %p181, %p182
    %p184 = pneg %p183
    // Predicated region
    $region29: #{mid_block_forward.15} parent=5 // pred_check
      _
    $region30: #{mid_block_forward.15} parent=5 // pred_check_branch
      %186 = sbr.rel (%p183) target = $region32
    $region31: #{mid_block_forward.15} parent=5 // pred_region
      %s187 = ssub.s32 %s9, 1
      %p188 = scmp.lt.s32.totalorder %s21, 0
      %s189 = scalar_select %p188, %s21, 0
      %s190 = smul.addr %s189, 8
      %s191 = scalar_lea.vmem %s0, %s190
      %p192 = pneg %p54
      %p193 = pneg %p51
      %s194 = smul.u32 7, %s21
      %s195 = smul.u32 2, %s20
      %p196 = scmp.lt.s32.totalorder %s19, 1
      %s197 = scalar_select %p196, %s19, 1
      %p198 = scmp.lt.s32.totalorder %s194, 6
      %s199 = scalar_select %p198, %s194, 6
      %p200 = scmp.lt.s32.totalorder %s195, 1
      %s201 = scalar_select %p200, %s195, 1
      %s202 = smul.addr %s199, 2
      %s203 = sadd.s32 %s201, %s202
      %s204 = smul.addr %s197, 14
      %s205 = sadd.s32 %s203, %s204
      %s206 = smul.addr %s205, 8
      %s207 = scalar_lea.vmem %s1, %s206
      %p208 = pneg %p84
      %p209 = pneg %p81
      %p210 = pneg %p105
      %p211 = pneg %p102
      %p212 = pneg %p133
      %p213 = pneg %p130
      %s214 = smul.u32 2, %s20
      %p215 = scmp.lt.s32.totalorder %s19, 1
      %s216 = scalar_select %p215, %s19, 1
      %p217 = scmp.lt.s32.totalorder %s214, 1
      %s218 = scalar_select %p217, %s214, 1
      %s219 = smul.addr %s216, 4
      %s220 = sadd.s32 %s218, %s219
      %s221 = smul.addr %s220, 8
      %s222 = scalar_lea.vmem %s3, %s221
      %p223 = scmp.lt.s32.totalorder %s21, 0
      %s224 = scalar_select %p223, %s21, 0
      %s225 = smul.addr %s224, 8
      %s226 = scalar_lea.vmem %s0, %s225
      %s227 = smul.u32 7, %s21
      %s228 = smul.u32 2, %s20
      %p229 = scmp.lt.s32.totalorder %s19, 1
      %s230 = scalar_select %p229, %s19, 1
      %p231 = scmp.lt.s32.totalorder %s227, 6
      %s232 = scalar_select %p231, %s227, 6
      %p233 = scmp.lt.s32.totalorder %s228, 1
      %s234 = scalar_select %p233, %s228, 1
      %s235 = smul.addr %s232, 2
      %s236 = sadd.s32 %s234, %s235
      %s237 = smul.addr %s230, 14
      %s238 = sadd.s32 %s236, %s237
      %s239 = smul.addr %s238, 8
      %s240 = scalar_lea.vmem %s1, %s239
      %s241 = smul.u32 7, %s21
      %s242 = smul.u32 2, %s20
      %s243 = smul.u32 2, %s20
      %p244 = scmp.lt.s32.totalorder %s19, 1
      %s245 = scalar_select %p244, %s19, 1
      %p246 = scmp.lt.s32.totalorder %s243, 1
      %s247 = scalar_select %p246, %s243, 1
      %s248 = smul.addr %s245, 4
      %s249 = sadd.s32 %s247, %s248
      %s250 = smul.addr %s249, 8
      %s251 = scalar_lea.vmem %s3, %s250
      %s252 = smul.u32 2, %s20
      %p253 = scmp.eq.s32.totalorder %s21, 0
      // Predicated region
      $region33: #{mid_block_forward.15} parent=31 // pred_check
        %p254 = pneg %p253
      $region34: #{mid_block_forward.15} parent=31 // pred_check_branch
        %256 = sbr.rel (%p254) target = $region36
      $region35: #{mid_block_forward.15} parent=31 // pred_region
        %257 = vst [vmem:[#allocation2] sm:$0xff] 0.0
        %258 = vst [vmem:[#allocation2 + $0x8] sm:$0xff] 0.0
        %259 = vst [vmem:[#allocation2 + $0x10] sm:$0xf] 0.0
        %260 = vst [vmem:[#allocation2 + $0x18] sm:$0xf] 0.0
      $region36: #{mid_block_forward.15} parent=31 // pred_fallthru
        _
      %v261 = vld [vmem:[#allocation2] sm:$0xff]
      %v262 = vld [vmem:[#allocation2 + $0x8] sm:$0xff]
      %v263 = vld [vmem:[#allocation2 + $0x10] sm:$0xf]
      %v264 = vld [vmem:[#allocation2 + $0x18] sm:$0xf]
      %v265 = vld [vmem:[%s226] sm:$0xff]
      %v266 = vld [vmem:[%s226 + $0x8] sm:$0xf]
      %v267 = vld [vmem:[%s240] sm:$0xff]
      %v268 = vld [vmem:[%s240 + $0x8] sm:$0xff]
      %v269 = vld [vmem:[%s240 + $0x10] sm:$0xff]
      %v270 = vld [vmem:[%s240 + $0x18] sm:$0xff]
      %v271 = vld [vmem:[%s240 + $0x20] sm:$0xff]
      %v272 = vld [vmem:[%s240 + $0x28] sm:$0xff]
      %v273 = vld [vmem:[%s240 + $0x30] sm:$0xff]
      %v274 = vld [vmem:[%s240 + $0x38] sm:$0xff]
      %v275 = vld [vmem:[%s240 + $0x40] sm:$0xff]
      %v276 = vld [vmem:[%s240 + $0x48] sm:$0xff]
      %v277 = vld [vmem:[%s240 + $0x50] sm:$0xff]
      %v278 = vld [vmem:[%s240 + $0x58] sm:$0xff]
      %v279 = vld [vmem:[%s240 + $0x60] sm:$0x3f]
      %v280 = vld [vmem:[%s240 + $0x68] sm:$0x3f]
      %vm281 = vcmask 441344
      %v283 = vsel %vm281, %v265, 0
      %v286 = vsel %vm281, %v266, 0
      %vm288 = vcmask 1045504
      %v290 = vsel %vm288, %v279, 0
      %v293 = vsel %vm288, %v280, 0
      %295 = vmatprep.subr.mxu0 %v268
      %296 = vmatpush1.msra.mxu0 %v267
      %297 = vmatprep.subr.mxu0 %v270
      %298 = vmatpush1.msra.mxu0 %v269
      %299 = vmatprep.subr.mxu0 %v272
      %300 = vmatpush1.msra.mxu0 %v271
      %301 = vmatprep.subr.mxu0 %v274
      %302 = vmatpush1.msra.mxu0 %v273
      %303 = vmatprep.subr.mxu0 %v276
      %304 = vmatpush1.msra.mxu0 %v275
      %305 = vmatprep.subr.mxu0 %v278
      %306 = vmatpush1.msra.mxu0 %v277
      %307 = vmatprep.subr.mxu0 %v293
      %308 = vmatpush1.msra.mxu0 %v290
      %309 = vmatprep.subr.mxu0 0.0
      %310 = vmatpush1.msra.mxu0 0.0
      %311 = vmatprep.subr.mxu0 0.0
      %312 = vmatpush1.msra.mxu0 0.0
      %313 = vmatprep.subr.mxu0 0.0
      %314 = vmatpush1.msra.mxu0 0.0
      %315 = vmatprep.subr.mxu0 0.0
      %316 = vmatpush1.msra.mxu0 0.0
      %317 = vmatprep.subr.mxu0 0.0
      %318 = vmatpush1.msra.mxu0 0.0
      %319 = vmatprep.subr.mxu0 0.0
      %320 = vmatpush1.msra.mxu0 0.0
      %321 = vmatprep.subr.mxu0 0.0
      %322 = vmatpush1.msra.mxu0 0.0
      %323 = vmatprep.subr.mxu0 0.0
      %324 = vmatpush1.msra.mxu0 0.0
      %325 = vmatprep.subr.mxu0 0.0
      %326 = vmatpush1.msra.mxu0 0.0
      %327 = vmatprep.subr.mxu0 0.0
      %328 = vmatpush1.msra.mxu0 0.0
      %329 = vmatprep.subr.mxu0 0.0
      %330 = vmatpush1.msra.mxu0 0.0
      %331 = vmatprep.subr.mxu0 0.0
      %332 = vmatpush1.msra.mxu0 0.0
      %333 = vmatprep.subr.mxu0 0.0
      %334 = vmatpush1.msra.mxu0 0.0
      %335 = vmatprep.subr.mxu0 0.0
      %336 = vmatpush1.msra.mxu0 0.0
      %337 = vmatprep.subr.mxu0 0.0
      %338 = vmatpush1.msra.mxu0 0.0
      %339 = vmatprep.subr.mxu0 0.0
      %340 = vmatpush1.msra.mxu0 0.0
      %341 = vmatprep.subr.mxu0 0.0
      %342 = vmatpush1.msra.mxu0 0.0
      %343 = vmatprep.subr.mxu0 0.0
      %344 = vmatpush1.msra.mxu0 0.0
      %345 = vmatprep.subr.mxu0 0.0
      %346 = vmatpush1.msra.mxu0 0.0
      %347 = vmatprep.subr.mxu0 0.0
      %348 = vmatpush1.msra.mxu0 0.0
      %349 = vmatprep.subr.mxu0 0.0
      %350 = vmatpush1.msra.mxu0 0.0
      %351 = vmatprep.subr.mxu0 0.0
      %352 = vmatpush1.msra.mxu0 0.0
      %353 = vmatprep.subr.mxu0 0.0
      %354 = vmatpush1.msra.mxu0 0.0
      %355 = vmatprep.subr.mxu0 0.0
      %356 = vmatpush1.msra.mxu0 0.0
      %357 = vmatprep.subr.mxu0 0.0
      %358 = vmatpush1.msra.mxu0 0.0
      %359 = vmatprep.mubr.f32.mxu0 0.0
      %360 = vmatmul.mubr.f32.gmra.mrb[0].mxu0 %v283
      %v361 = vpop.f32.mrb[0].mxu0
      %v362 = vadd.f32 0.0, %v361
      %v363 = vpop.f32.mrb[0].mxu0
      %v364 = vadd.f32 0.0, %v363
      %365 = vmatprep.mubr.f32.mxu0 0.0
      %366 = vmatmul.mubr.f32.gmra.mrb[0].mxu0 %v286
      %v367 = vpop.f32.mrb[0].mxu0
      %v368 = vadd.f32 0.0, %v367
      %v369 = vpop.f32.mrb[0].mxu0
      %v370 = vadd.f32 0.0, %v369
      %371 = vdwg.mxu0
      %v372 = vadd.f32 %v261, %v362
      %v373 = vadd.f32 %v262, %v364
      %v374 = vadd.f32 %v263, %v368
      %v375 = vadd.f32 %v264, %v370
      %376 = vst [vmem:[#allocation2] sm:$0xff] %v372
      %377 = vst [vmem:[#allocation2 + $0x8] sm:$0xff] %v373
      %378 = vst [vmem:[#allocation2 + $0x10] sm:$0xf] %v374
      %379 = vst [vmem:[#allocation2 + $0x18] sm:$0xf] %v375
      // Predicated region
      $region37: #{mid_block_forward.15} parent=31 // pred_check
        %p380 = pneg %p253
      $region38: #{mid_block_forward.15} parent=31 // pred_check_branch
        %382 = sbr.rel (%p380) target = $region40
      $region39: #{mid_block_forward.15} parent=31 // pred_region
        %v383 = vld [vmem:[#allocation2] sm:$0xff]
        %v384 = vld [vmem:[#allocation2 + $0x8] sm:$0xff]
        %v385 = vld [vmem:[#allocation2 + $0x10] sm:$0xf]
        %v386 = vld [vmem:[#allocation2 + $0x18] sm:$0xf]
        %v387 = vld [vmem:[%s2] sm:$0xff]
        %v388 = vld [vmem:[%s2 + $0x8] sm:$0xf]
        %390 = vset.pattern.permute.xlu0 0
        %391 = vperm.xlu0 %390, %v387
        %v392 = vpop.permute.xlu0 %391
        %395 = vset.pattern.permute.xlu0 0
        %396 = vperm.xlu0 %395, %v388
        %v397 = vpop.permute.xlu0 %396
        %v399 = vadd.f32 %v383, %v392
        %v400 = vadd.f32 %v384, %v392
        %v401 = vadd.f32 %v385, %v397
        %v402 = vadd.f32 %v386, %v397
        %403 = vst [vmem:[%s251] sm:$0xff] %v399
        %404 = vst [vmem:[%s251 + $0x8] sm:$0xff] %v400
        %405 = vst [vmem:[%s251 + $0x10] sm:$0xf] %v401
        %406 = vst [vmem:[%s251 + $0x18] sm:$0xf] %v402
      $region40: #{mid_block_forward.15} parent=31 // pred_fallthru
        _
      %s407 = smul.u32 2, %s20
      %p408 = scmp.lt.s32.totalorder %s19, 1
      %s409 = scalar_select %p408, %s19, 1
      %p410 = scmp.lt.s32.totalorder %s407, 1
      %s411 = scalar_select %p410, %s407, 1
      %s412 = smul.addr %s409, 4
      %s413 = sadd.s32 %s411, %s412
      %s414 = smul.addr %s413, 8
      %s415 = scalar_lea.vmem %s3, %s414
      // Predicated region
      $region41: #{mid_block_forward.15} parent=31 // pred_check
        %p416 = pneg %p130
      $region42: #{mid_block_forward.15} parent=31 // pred_check_branch
        %418 = sbr.rel (%p416) target = $region44
      $region43: #{mid_block_forward.15} parent=31 // pred_region
        %s419 = smul.u32 2, %s20
      $region44: #{mid_block_forward.15} parent=31 // pred_fallthru
        _
    $region32: #{mid_block_forward.15} parent=5 // pred_fallthru
      _
    %p420 = scmp.le.s32.totalorder 2, %s9
    // Predicated region
    $region45: #{mid_block_forward.15} parent=5 // pred_check
      %p421 = pneg %p420
    $region46: #{mid_block_forward.15} parent=5 // pred_check_branch
      %423 = sbr.rel (%p421) target = $region48
    $region47: #{mid_block_forward.15} parent=5 // pred_region
      %s424 = ssub.s32 %s9, 2
      // Predicated region
      $region49: #{mid_block_forward.15} parent=47 // pred_check
        %p425 = pneg %p136
      $region50: #{mid_block_forward.15} parent=47 // pred_check_branch
        %427 = sbr.rel (%p425) target = $region52
      $region51: #{mid_block_forward.15} parent=47 // pred_region
        %s428 = smul.u32 2, %s23
        %p429 = scmp.lt.s32.totalorder %s22, 1
        %s430 = scalar_select %p429, %s22, 1
        %p431 = scmp.lt.s32.totalorder %s428, 1
        %s432 = scalar_select %p431, %s428, 1
        %s433 = smul.addr %s430, 4
        %s434 = sadd.s32 %s432, %s433
        %s435 = smul.addr %s434, 8
        %s436 = scalar_lea.vmem %s3, %s435
      $region52: #{mid_block_forward.15} parent=47 // pred_fallthru
        _
    $region48: #{mid_block_forward.15} parent=5 // pred_fallthru
      _
  $region6: #{mid_block_forward.15} parent=0 // loop_footer
    %s13 = sadd.s32 1, %s9
  $region7: #{mid_block_forward.15} parent=0 // loop_footer_branch
    %8 = sbr.rel target = $region3
  $region8: #{mid_block_forward.15} parent=0 // loop_exit
    _

// kernel: mid_block_forward.17
$region0: #{mid_block_forward.17}
  #allocation0 [shape = 'u32[]', space=smem, size = 0x4, offset = 0x4, fixed_abs, tag = 'smem constant byte address 0x4 - core index']
  #allocation1 [shape = 'u32[144,128]{1,0:T(1,128)}', space=vmem, size = 0x12000, scoped, tag = 'internal scratch']
  %s0 = inlined_call_operand.vmem [shape: f32[2,12,256], index: 0, kind: input, shape index: {}]
  %s1 = inlined_call_operand.vmem [shape: f32[12,1], index: 1, kind: input, shape index: {}]
  %s2 = inlined_call_operand.vmem [shape: f32[12,1], index: 2, kind: input, shape index: {}]
  %s3 = inlined_call_operand.vmem [shape: f32[2,12,1], index: 3, kind: input, shape index: {}]
  %s4 = inlined_call_operand.vmem [shape: f32[2,12,256], index: 4, kind: output, shape index: {}]
  %s5 = sld [smem:[#allocation0]]
  $region49: #{mid_block_forward.17} parent=0
    _
  %s7 = ssub.s32 1, %s5
  %s8 = scalar_select 0, %s7, %s5
  loop: start=0, step=1, limit=4
  $region2: #{mid_block_forward.17} parent=0 // loop_pre_header
    _
  $region3: #{mid_block_forward.17} parent=0 // loop_header
    %s10 = sphi 0, %s14
    %p11 = scmp.ge.s32.totalorder %s10, 4
    %s20 = sphi 0, %s22
    %s23 = sphi 0, %s20
    %s24 = sphi 0, %s23
    %s40 = sphi 0, %s24
    %s44 = sphi 0, %s44
    %s46 = sphi 0, %s44
    %s47 = sphi 0, %s46
    %s61 = sphi 0, %s47
    %s65 = sphi 0, %s65
    %s67 = sphi 0, %s65
    %s68 = sphi 0, %s67
    %s82 = sphi 0, %s68
    %s88 = sphi 0, %s90
    %s91 = sphi 0, %s88
    %s92 = sphi 0, %s91
    %s108 = sphi 0, %s92
    %s114 = sphi 0, %s116
    %s117 = sphi 0, %s114
    %s118 = sphi 0, %s117
    %s134 = sphi 0, %s118
  $region4: #{mid_block_forward.17} parent=0 // loop_header_branch
    %13 = sbr.rel (%p11) target = $region8
  $region5: #{mid_block_forward.17} parent=0 // loop_body
    %s15 = ssub.s32 %s10, 1
    %s16 = ssub.s32 %s10, 2
    %s17 = sadd.s32 %s10, 1
    %s18 = ssub.s32 %s10, %s17
    %p19 = scmp.eq.s32.totalorder %s18, 0
    %s21 = sadd.s32 %s20, 1
    %s22 = scalar_select %p19, %s20, %s21
    %p25 = pneg %p19
    %p26 = scmp.eq.s32.totalorder %s10, 1
    %p27 = por %p25, %p26
    %p28 = scmp.ne.s32.totalorder %s20, %s23
    %p29 = scmp.eq.s32.totalorder %s10, 0
    %p30 = por %p28, %p29
    %p31 = scmp.ne.s32.totalorder %s20, %s23
    %p32 = scmp.eq.s32.totalorder %s15, 1
    %p33 = por %p31, %p32
    %p34 = scmp.ne.s32.totalorder %s23, %s24
    %p35 = scmp.eq.s32.totalorder %s15, 0
    %p36 = por %p34, %p35
    %p37 = scmp.ne.s32.totalorder %s23, %s24
    %p38 = scmp.eq.s32.totalorder %s16, 1
    %p39 = por %p37, %p38
    %p41 = scmp.ne.s32.totalorder %s24, %s40
    %p42 = scmp.eq.s32.totalorder %s16, 0
    %p43 = por %p41, %p42
    %s45 = sadd.s32 %s44, 1
    %p48 = scmp.eq.s32.totalorder %s10, 1
    %p49 = scmp.ne.s32.totalorder %s44, %s46
    %p50 = scmp.eq.s32.totalorder %s10, 0
    %p51 = por %p49, %p50
    %p52 = scmp.ne.s32.totalorder %s44, %s46
    %p53 = scmp.eq.s32.totalorder %s15, 1
    %p54 = por %p52, %p53
    %p55 = scmp.ne.s32.totalorder %s46, %s47
    %p56 = scmp.eq.s32.totalorder %s15, 0
    %p57 = por %p55, %p56
    %p58 = scmp.ne.s32.totalorder %s46, %s47
    %p59 = scmp.eq.s32.totalorder %s16, 1
    %p60 = por %p58, %p59
    %p62 = scmp.ne.s32.totalorder %s47, %s61
    %p63 = scmp.eq.s32.totalorder %s16, 0
    %p64 = por %p62, %p63
    %s66 = sadd.s32 %s65, 1
    %p69 = scmp.eq.s32.totalorder %s10, 1
    %p70 = scmp.ne.s32.totalorder %s65, %s67
    %p71 = scmp.eq.s32.totalorder %s10, 0
    %p72 = por %p70, %p71
    %p73 = scmp.ne.s32.totalorder %s65, %s67
    %p74 = scmp.eq.s32.totalorder %s15, 1
    %p75 = por %p73, %p74
    %p76 = scmp.ne.s32.totalorder %s67, %s68
    %p77 = scmp.eq.s32.totalorder %s15, 0
    %p78 = por %p76, %p77
    %p79 = scmp.ne.s32.totalorder %s67, %s68
    %p80 = scmp.eq.s32.totalorder %s16, 1
    %p81 = por %p79, %p80
    %p83 = scmp.ne.s32.totalorder %s68, %s82
    %p84 = scmp.eq.s32.totalorder %s16, 0
    %p85 = por %p83, %p84
    %s86 = ssub.s32 %s10, %s17
    %p87 = scmp.eq.s32.totalorder %s86, 0
    %s89 = sadd.s32 %s88, 1
    %s90 = scalar_select %p87, %s88, %s89
    %p93 = pneg %p87
    %p94 = scmp.eq.s32.totalorder %s10, 1
    %p95 = por %p93, %p94
    %p96 = scmp.ne.s32.totalorder %s88, %s91
    %p97 = scmp.eq.s32.totalorder %s10, 0
    %p98 = por %p96, %p97
    %p99 = scmp.ne.s32.totalorder %s88, %s91
    %p100 = scmp.eq.s32.totalorder %s15, 1
    %p101 = por %p99, %p100
    %p102 = scmp.ne.s32.totalorder %s91, %s92
    %p103 = scmp.eq.s32.totalorder %s15, 0
    %p104 = por %p102, %p103
    %p105 = scmp.ne.s32.totalorder %s91, %s92
    %p106 = scmp.eq.s32.totalorder %s16, 1
    %p107 = por %p105, %p106
    %p109 = scmp.ne.s32.totalorder %s92, %s108
    %p110 = scmp.eq.s32.totalorder %s16, 0
    %p111 = por %p109, %p110
    %s112 = ssub.s32 %s10, %s17
    %p113 = scmp.eq.s32.totalorder %s112, 0
    %s115 = sadd.s32 %s114, 1
    %s116 = scalar_select %p113, %s114, %s115
    %p119 = pneg %p113
    %p120 = scmp.eq.s32.totalorder %s10, 1
    %p121 = por %p119, %p120
    %p122 = scmp.ne.s32.totalorder %s114, %s117
    %p123 = scmp.eq.s32.totalorder %s10, 0
    %p124 = por %p122, %p123
    %p125 = scmp.ne.s32.totalorder %s114, %s117
    %p126 = scmp.eq.s32.totalorder %s15, 1
    %p127 = por %p125, %p126
    %p128 = scmp.ne.s32.totalorder %s117, %s118
    %p129 = scmp.eq.s32.totalorder %s15, 0
    %p130 = por %p128, %p129
    %p131 = scmp.ne.s32.totalorder %s117, %s118
    %p132 = scmp.eq.s32.totalorder %s16, 1
    %p133 = por %p131, %p132
    %p135 = scmp.ne.s32.totalorder %s118, %s134
    %p136 = scmp.eq.s32.totalorder %s16, 0
    %p137 = por %p135, %p136
    %p138 = scmp.le.s32.totalorder 1, %s10
    %p139 = scmp.lt.s32.totalorder %s10, 3
    %p140 = pnand %p138, %p139
    %p141 = pneg %p140
    // Predicated region
    $region9: #{mid_block_forward.17} parent=5 // pred_check
      _
    $region10: #{mid_block_forward.17} parent=5 // pred_check_branch
      %143 = sbr.rel (%p140) target = $region12
    $region11: #{mid_block_forward.17} parent=5 // pred_region
      %s144 = ssub.s32 %s10, 1
      // Predicated region
      $region13: #{mid_block_forward.17} parent=11 // pred_check
        %p145 = pneg %p57
      $region14: #{mid_block_forward.17} parent=11 // pred_check_branch
        %147 = sbr.rel (%p145) target = $region16
      $region15: #{mid_block_forward.17} parent=11 // pred_region
        _
      $region16: #{mid_block_forward.17} parent=11 // pred_fallthru
        _
      // Predicated region
      $region17: #{mid_block_forward.17} parent=11 // pred_check
        %p148 = pneg %p78
      $region18: #{mid_block_forward.17} parent=11 // pred_check_branch
        %150 = sbr.rel (%p148) target = $region20
      $region19: #{mid_block_forward.17} parent=11 // pred_region
        _
      $region20: #{mid_block_forward.17} parent=11 // pred_fallthru
        _
    $region12: #{mid_block_forward.17} parent=5 // pred_fallthru
      _
    %p151 = scmp.lt.s32.totalorder %s10, 2
    // Predicated region
    $region21: #{mid_block_forward.17} parent=5 // pred_check
      %p152 = pneg %p151
    $region22: #{mid_block_forward.17} parent=5 // pred_check_branch
      %154 = sbr.rel (%p152) target = $region24
    $region23: #{mid_block_forward.17} parent=5 // pred_region
      // Predicated region
      $region25: #{mid_block_forward.17} parent=23 // pred_check
        %p155 = pneg %p30
      $region26: #{mid_block_forward.17} parent=23 // pred_check_branch
        %157 = sbr.rel (%p155) target = $region28
      $region27: #{mid_block_forward.17} parent=23 // pred_region
        %p158 = scmp.lt.s32.totalorder %s10, 1
        %s159 = scalar_select %p158, %s10, 1
        %s160 = smul.addr %s159, 4
        %s161 = smul.addr %s160, 8
        %s162 = scalar_lea.vmem %s0, %s161
      $region28: #{mid_block_forward.17} parent=23 // pred_fallthru
        _
      // Predicated region
      $region29: #{mid_block_forward.17} parent=23 // pred_check
        %p163 = pneg %p98
      $region30: #{mid_block_forward.17} parent=23 // pred_check_branch
        %165 = sbr.rel (%p163) target = $region32
      $region31: #{mid_block_forward.17} parent=23 // pred_region
        %p166 = scmp.lt.s32.totalorder %s10, 1
        %s167 = scalar_select %p166, %s10, 1
        %s168 = smul.addr %s167, 2
        %s169 = smul.addr %s168, 8
        %s170 = scalar_lea.vmem %s3, %s169
      $region32: #{mid_block_forward.17} parent=23 // pred_fallthru
        _
    $region24: #{mid_block_forward.17} parent=5 // pred_fallthru
      _
    %p171 = scmp.le.s32.totalorder 1, %s10
    %p172 = scmp.lt.s32.totalorder %s10, 3
    %p173 = pnand %p171, %p172
    %p174 = pneg %p173
    // Predicated region
    $region33: #{mid_block_forward.17} parent=5 // pred_check
      _
    $region34: #{mid_block_forward.17} parent=5 // pred_check_branch
      %176 = sbr.rel (%p173) target = $region36
    $region35: #{mid_block_forward.17} parent=5 // pred_region
      %s177 = ssub.s32 %s10, 1
      %p178 = scmp.lt.s32.totalorder %s15, 1
      %s179 = scalar_select %p178, %s15, 1
      %s180 = smul.addr %s179, 4
      %s181 = smul.addr %s180, 8
      %s182 = scalar_lea.vmem %s0, %s181
      %p183 = pneg %p36
      %p184 = pneg %p33
      %p185 = pneg %p57
      %p186 = pneg %p54
      %p187 = pneg %p78
      %p188 = pneg %p75
      %p189 = scmp.lt.s32.totalorder %s15, 1
      %s190 = scalar_select %p189, %s15, 1
      %s191 = smul.addr %s190, 2
      %s192 = smul.addr %s191, 8
      %s193 = scalar_lea.vmem %s3, %s192
      %p194 = pneg %p104
      %p195 = pneg %p101
      %p196 = pneg %p130
      %p197 = pneg %p127
      %p198 = scmp.lt.s32.totalorder %s15, 1
      %s199 = scalar_select %p198, %s15, 1
      %s200 = smul.addr %s199, 4
      %s201 = smul.addr %s200, 8
      %s202 = scalar_lea.vmem %s4, %s201
      %p203 = scmp.lt.s32.totalorder %s15, 1
      %s204 = scalar_select %p203, %s15, 1
      %s205 = smul.addr %s204, 4
      %s206 = smul.addr %s205, 8
      %s207 = scalar_lea.vmem %s0, %s206
      %p208 = scmp.lt.s32.totalorder %s15, 1
      %s209 = scalar_select %p208, %s15, 1
      %s210 = smul.addr %s209, 2
      %s211 = smul.addr %s210, 8
      %s212 = scalar_lea.vmem %s3, %s211
      %p213 = scmp.lt.s32.totalorder %s15, 1
      %s214 = scalar_select %p213, %s15, 1
      %s215 = smul.addr %s214, 4
      %s216 = smul.addr %s215, 8
      %s217 = scalar_lea.vmem %s4, %s216
      %v218 = vld [vmem:[%s207] sm:$0xff]
      %v219 = vld [vmem:[%s207 + $0x8] sm:$0xff]
      %v220 = vld [vmem:[%s207 + $0x10] sm:$0xf]
      %v221 = vld [vmem:[%s207 + $0x18] sm:$0xf]
      %v222 = vld [vmem:[%s212] sm:$0xff]
      %v223 = vld [vmem:[%s212 + $0x8] sm:$0xf]
      %225 = vset.pattern.permute.xlu0 0
      %226 = vperm.xlu0 %225, %v222
      %v227 = vpop.permute.xlu0 %226
      %230 = vset.pattern.permute.xlu0 0
      %231 = vperm.xlu0 %230, %v223
      %v232 = vpop.permute.xlu0 %231
      %v234 = vadd.f32 %v218, %v227
      %v235 = vadd.f32 %v219, %v227
      %v236 = vadd.f32 %v220, %v232
      %v237 = vadd.f32 %v221, %v232
      %v238 = vld [vmem:[%s1] sm:$0xff]
      %v239 = vld [vmem:[%s1 + $0x8] sm:$0xf]
      %v240 = vld [vmem:[%s2] sm:$0xff]
      %v241 = vld [vmem:[%s2 + $0x8] sm:$0xf]
      %vm242 = vcmask 1043456
      %v243 = vsel %vm242, %v234, 0.0
      %v244 = vsel %vm242, %v235, 0.0
      %v245 = vadd.f32 %v243, %v244
      %246 = vadd.xlane.f32.xlu0 %v245
      %v247 = vpop.xlane.xlu0 %246
      %v248 = vrot.slane %v247, 4
      %v249 = vadd.f32 %v247, %v248
      %v250 = vrot.slane %v249, 2
      %v251 = vadd.f32 %v249, %v250
      %v252 = vrot.slane %v251, 1
      %v253 = vadd.f32 %v251, %v252
      %s254 = vtos %v253
      %v255 = vstv %s254
      %v256 = vrcp.pop 1024.0
      %v257 = vmul.f32 %v255, %v256
      %v258 = vsub.f32 %v234, %v257
      %v259 = vsub.f32 %v235, %v257
      %v260 = vmul.f32 %v258, %v258
      %v261 = vmul.f32 %v259, %v259
      %v262 = vsel %vm242, %v260, 0.0
      %v263 = vsel %vm242, %v261, 0.0
      %v264 = vadd.f32 %v262, %v263
      %265 = vadd.xlane.f32.xlu0 %v264
      %v266 = vpop.xlane.xlu0 %265
      %v267 = vrot.slane %v266, 4
      %v268 = vadd.f32 %v266, %v267
      %v269 = vrot.slane %v268, 2
      %v270 = vadd.f32 %v268, %v269
      %v271 = vrot.slane %v270, 1
      %v272 = vadd.f32 %v270, %v271
      %s273 = vtos %v272
      %v274 = vstv %s273
      %v275 = vmul.f32 %v274, %v256
      %v276 = vadd.f32 %v275, 1e-05
      %v277 = vrsqrt.pop %v276
      %v278 = vmul.f32 %v258, %v277
      %v279 = vmul.f32 %v259, %v277
      %281 = vset.pattern.permute.xlu0 0
      %282 = vperm.xlu0 %281, %v238
      %v283 = vpop.permute.xlu0 %282
      %v285 = vmul.f32 %v278, %v283
      %v286 = vmul.f32 %v279, %v283
      %288 = vset.pattern.permute.xlu0 0
      %289 = vperm.xlu0 %288, %v240
      %v290 = vpop.permute.xlu0 %289
      %v292 = vadd.f32 %v285, %v290
      %v293 = vadd.f32 %v286, %v290
      %v294 = vxor.u32 %v292, 2147483648
      %v295 = vxor.u32 %v293, 2147483648
      %v296 = vmul.f32 %v294, 1.442695
      %v297 = vpow.pop %v296
      %v298 = vmul.f32 %v295, 1.442695
      %v299 = vpow.pop %v298
      %v300 = vadd.f32 %v297, 1.0
      %v301 = vadd.f32 %v299, 1.0
      %v302 = vrcp.pop %v300
      %v303 = vmul.f32 1.0, %v302
      %v304 = vrcp.pop %v301
      %v305 = vmul.f32 1.0, %v304
      %v306 = vmul.f32 %v292, %v303
      %v307 = vmul.f32 %v293, %v305
      %308 = vst [vmem:[%s217] sm:$0xf] %v306
      %309 = vst [vmem:[%s217 + $0x8] sm:$0xf] %v307
      %v312 = vrot.slane %v234, 4
      %v313 = vrot.slane %v235, 4
      %v316 = vsel %vm242, %v312, 0.0
      %v317 = vsel %vm242, %v313, 0.0
      %v318 = vadd.f32 %v316, %v317
      %319 = vadd.xlane.f32.xlu0 %v318
      %v320 = vpop.xlane.xlu0 %319
      %v321 = vrot.slane %v320, 4
      %v322 = vadd.f32 %v320, %v321
      %v323 = vrot.slane %v322, 2
      %v324 = vadd.f32 %v322, %v323
      %v325 = vrot.slane %v324, 1
      %v326 = vadd.f32 %v324, %v325
      %s327 = vtos %v326
      %v328 = vstv %s327
      %v329 = vmul.f32 %v328, %v256
      %v330 = vsub.f32 %v234, %v329
      %v331 = vsub.f32 %v235, %v329
      %v332 = vmul.f32 %v330, %v330
      %v333 = vmul.f32 %v331, %v331
      %v336 = vrot.slane %v332, 4
      %v337 = vrot.slane %v333, 4
      %v340 = vsel %vm242, %v336, 0.0
      %v341 = vsel %vm242, %v337, 0.0
      %v342 = vadd.f32 %v340, %v341
      %343 = vadd.xlane.f32.xlu0 %v342
      %v344 = vpop.xlane.xlu0 %343
      %v345 = vrot.slane %v344, 4
      %v346 = vadd.f32 %v344, %v345
      %v347 = vrot.slane %v346, 2
      %v348 = vadd.f32 %v346, %v347
      %v349 = vrot.slane %v348, 1
      %v350 = vadd.f32 %v348, %v349
      %s351 = vtos %v350
      %v352 = vstv %s351
      %v353 = vmul.f32 %v352, %v256
      %v354 = vadd.f32 %v353, 1e-05
      %v355 = vrsqrt.pop %v354
      %v356 = vmul.f32 %v330, %v355
      %v357 = vmul.f32 %v331, %v355
      %v358 = vmul.f32 %v356, %v283
      %v359 = vmul.f32 %v357, %v283
      %v360 = vadd.f32 %v358, %v290
      %v361 = vadd.f32 %v359, %v290
      %v362 = vxor.u32 %v360, 2147483648
      %v363 = vxor.u32 %v361, 2147483648
      %v364 = vmul.f32 %v362, 1.442695
      %v365 = vpow.pop %v364
      %v366 = vmul.f32 %v363, 1.442695
      %v367 = vpow.pop %v366
      %v368 = vadd.f32 %v365, 1.0
      %v369 = vadd.f32 %v367, 1.0
      %v370 = vrcp.pop %v368
      %v371 = vmul.f32 1.0, %v370
      %v372 = vrcp.pop %v369
      %v373 = vmul.f32 1.0, %v372
      %v374 = vmul.f32 %v360, %v371
      %v375 = vmul.f32 %v361, %v373
      %376 = vst [vmem:[%s217] sm:$0xf0] %v374
      %377 = vst [vmem:[%s217 + $0x8] sm:$0xf0] %v375
      %v378 = vsel %vm242, %v236, 0.0
      %v379 = vsel %vm242, %v237, 0.0
      %v380 = vadd.f32 %v378, %v379
      %381 = vadd.xlane.f32.xlu0 %v380
      %v382 = vpop.xlane.xlu0 %381
      %v383 = vrot.slane %v382, 4
      %v384 = vadd.f32 %v382, %v383
      %v385 = vrot.slane %v384, 2
      %v386 = vadd.f32 %v384, %v385
      %v387 = vrot.slane %v386, 1
      %v388 = vadd.f32 %v386, %v387
      %s389 = vtos %v388
      %v390 = vstv %s389
      %v391 = vmul.f32 %v390, %v256
      %v392 = vsub.f32 %v236, %v391
      %v393 = vsub.f32 %v237, %v391
      %v394 = vmul.f32 %v392, %v392
      %v395 = vmul.f32 %v393, %v393
      %v396 = vsel %vm242, %v394, 0.0
      %v397 = vsel %vm242, %v395, 0.0
      %v398 = vadd.f32 %v396, %v397
      %399 = vadd.xlane.f32.xlu0 %v398
      %v400 = vpop.xlane.xlu0 %399
      %v401 = vrot.slane %v400, 4
      %v402 = vadd.f32 %v400, %v401
      %v403 = vrot.slane %v402, 2
      %v404 = vadd.f32 %v402, %v403
      %v405 = vrot.slane %v404, 1
      %v406 = vadd.f32 %v404, %v405
      %s407 = vtos %v406
      %v408 = vstv %s407
      %v409 = vmul.f32 %v408, %v256
      %v410 = vadd.f32 %v409, 1e-05
      %v411 = vrsqrt.pop %v410
      %v412 = vmul.f32 %v392, %v411
      %v413 = vmul.f32 %v393, %v411
      %415 = vset.pattern.permute.xlu0 0
      %416 = vperm.xlu0 %415, %v239
      %v417 = vpop.permute.xlu0 %416
      %v419 = vmul.f32 %v412, %v417
      %v420 = vmul.f32 %v413, %v417
      %422 = vset.pattern.permute.xlu0 0
      %423 = vperm.xlu0 %422, %v241
      %v424 = vpop.permute.xlu0 %423
      %v426 = vadd.f32 %v419, %v424
      %v427 = vadd.f32 %v420, %v424
      %v428 = vxor.u32 %v426, 2147483648
      %v429 = vxor.u32 %v427, 2147483648
      %v430 = vmul.f32 %v428, 1.442695
      %v431 = vpow.pop %v430
      %v432 = vmul.f32 %v429, 1.442695
      %v433 = vpow.pop %v432
      %v434 = vadd.f32 %v431, 1.0
      %v435 = vadd.f32 %v433, 1.0
      %v436 = vrcp.pop %v434
      %v437 = vmul.f32 1.0, %v436
      %v438 = vrcp.pop %v435
      %v439 = vmul.f32 1.0, %v438
      %v440 = vmul.f32 %v426, %v437
      %v441 = vmul.f32 %v427, %v439
      %442 = vst [vmem:[%s217 + $0x10] sm:$0xf] %v440
      %443 = vst [vmem:[%s217 + $0x18] sm:$0xf] %v441
      %p444 = scmp.lt.s32.totalorder %s15, 1
      %s445 = scalar_select %p444, %s15, 1
      %s446 = smul.addr %s445, 4
      %s447 = smul.addr %s446, 8
      %s448 = scalar_lea.vmem %s4, %s447
      // Predicated region
      $region37: #{mid_block_forward.17} parent=35 // pred_check
        %p449 = pneg %p127
      $region38: #{mid_block_forward.17} parent=35 // pred_check_branch
        %451 = sbr.rel (%p449) target = $region40
      $region39: #{mid_block_forward.17} parent=35 // pred_region
        _
      $region40: #{mid_block_forward.17} parent=35 // pred_fallthru
        _
    $region36: #{mid_block_forward.17} parent=5 // pred_fallthru
      _
    %p452 = scmp.le.s32.totalorder 2, %s10
    // Predicated region
    $region41: #{mid_block_forward.17} parent=5 // pred_check
      %p453 = pneg %p452
    $region42: #{mid_block_forward.17} parent=5 // pred_check_branch
      %455 = sbr.rel (%p453) target = $region44
    $region43: #{mid_block_forward.17} parent=5 // pred_region
      %s456 = ssub.s32 %s10, 2
      // Predicated region
      $region45: #{mid_block_forward.17} parent=43 // pred_check
        %p457 = pneg %p133
      $region46: #{mid_block_forward.17} parent=43 // pred_check_branch
        %459 = sbr.rel (%p457) target = $region48
      $region47: #{mid_block_forward.17} parent=43 // pred_region
        %p460 = scmp.lt.s32.totalorder %s16, 1
        %s461 = scalar_select %p460, %s16, 1
        %s462 = smul.addr %s461, 4
        %s463 = smul.addr %s462, 8
        %s464 = scalar_lea.vmem %s4, %s463
      $region48: #{mid_block_forward.17} parent=43 // pred_fallthru
        _
    $region44: #{mid_block_forward.17} parent=5 // pred_fallthru
      _
  $region6: #{mid_block_forward.17} parent=0 // loop_footer
    %s14 = sadd.s32 1, %s10
  $region7: #{mid_block_forward.17} parent=0 // loop_footer_branch
    %9 = sbr.rel target = $region3
  $region8: #{mid_block_forward.17} parent=0 // loop_exit
    _

// kernel: mid_block_forward.18
$region0: #{mid_block_forward.18}
  #allocation0 [shape = 'u32[]', space=smem, size = 0x4, offset = 0x4, fixed_abs, tag = 'smem constant byte address 0x4 - core index']
  #allocation1 [shape = 'u32[144,128]{1,0:T(1,128)}', space=vmem, size = 0x12000, scoped, tag = 'internal scratch']
  #allocation2 [shape = 'f32[12,256]{1,0:T(8,128)}', space=vmem, size = 0x4000, scoped, tag = 'scratch operand']
  %s0 = inlined_call_operand.vmem [shape: f32[12,114], index: 0, kind: input, shape index: {}]
  %s1 = inlined_call_operand.vmem [shape: f32[2,114,256], index: 1, kind: input, shape index: {}]
  %s2 = inlined_call_operand.vmem [shape: f32[12,1], index: 2, kind: input, shape index: {}]
  %s3 = inlined_call_operand.vmem [shape: f32[2,12,256], index: 3, kind: output, shape index: {}]
  %s4 = sld [smem:[#allocation0]]
  $region53: #{mid_block_forward.18} parent=0
    _
  %s6 = ssub.s32 1, %s4
  %s7 = scalar_select 0, %s6, %s4
  loop: start=0, step=1, limit=4
  $region2: #{mid_block_forward.18} parent=0 // loop_pre_header
    _
  $region3: #{mid_block_forward.18} parent=0 // loop_header
    %s9 = sphi 0, %s13
    %p10 = scmp.ge.s32.totalorder %s9, 4
    %s16 = sphi 0, %s35
    %s17 = sphi 0, %s31
    %s18 = sphi 0, %s27
    %s19 = sphi 0, %s16
    %s20 = sphi 0, %s17
    %s21 = sphi 0, %s18
    %s22 = sphi 0, %s19
    %s23 = sphi 0, %s20
    %s24 = sphi 0, %s21
    %s38 = sphi 0, %s40
    %s41 = sphi 0, %s38
    %s42 = sphi 0, %s41
    %s58 = sphi 0, %s42
    %s68 = sphi 0, %s70
    %s71 = sphi 0, %s68
    %s72 = sphi 0, %s71
    %s88 = sphi 0, %s72
    %s92 = sphi 0, %s92
    %s94 = sphi 0, %s92
    %s95 = sphi 0, %s94
    %s109 = sphi 0, %s95
    %s117 = sphi 0, %s119
    %s120 = sphi 0, %s117
    %s121 = sphi 0, %s120
    %s137 = sphi 0, %s121
  $region4: #{mid_block_forward.18} parent=0 // loop_header_branch
    %12 = sbr.rel (%p10) target = $region8
  $region5: #{mid_block_forward.18} parent=0 // loop_body
    %s14 = ssub.s32 %s9, 1
    %s15 = ssub.s32 %s9, 2
    %s25 = sadd.s32 1, %s18
    %p26 = scmp.ge.s32.totalorder %s25, 1
    %s27 = scalar_select %p26, 0, %s25
    %s28 = sadd.s32 1, %s17
    %s29 = scalar_select %p26, %s28, %s17
    %p30 = scmp.ge.s32.totalorder %s29, 1
    %s31 = scalar_select %p30, 0, %s29
    %s32 = sadd.s32 1, %s16
    %s33 = scalar_select %p30, %s32, %s16
    %p34 = scmp.ge.s32.totalorder %s33, 2
    %s35 = scalar_select %p34, 0, %s33
    %s36 = ssub.s32 %s18, %s27
    %p37 = scmp.eq.s32.totalorder %s36, 0
    %s39 = sadd.s32 %s38, 1
    %s40 = scalar_select %p37, %s38, %s39
    %p43 = pneg %p37
    %p44 = scmp.eq.s32.totalorder %s9, 1
    %p45 = por %p43, %p44
    %p46 = scmp.ne.s32.totalorder %s38, %s41
    %p47 = scmp.eq.s32.totalorder %s9, 0
    %p48 = por %p46, %p47
    %p49 = scmp.ne.s32.totalorder %s38, %s41
    %p50 = scmp.eq.s32.totalorder %s14, 1
    %p51 = por %p49, %p50
    %p52 = scmp.ne.s32.totalorder %s41, %s42
    %p53 = scmp.eq.s32.totalorder %s14, 0
    %p54 = por %p52, %p53
    %p55 = scmp.ne.s32.totalorder %s41, %s42
    %p56 = scmp.eq.s32.totalorder %s15, 1
    %p57 = por %p55, %p56
    %p59 = scmp.ne.s32.totalorder %s42, %s58
    %p60 = scmp.eq.s32.totalorder %s15, 0
    %p61 = por %p59, %p60
    %s62 = ssub.s32 %s16, %s35
    %s63 = ssub.s32 %s18, %s27
    %s64 = sor.u32 %s62, %s63
    %s65 = ssub.s32 %s17, %s31
    %s66 = sor.u32 %s64, %s65
    %p67 = scmp.eq.s32.totalorder %s66, 0
    %s69 = sadd.s32 %s68, 1
    %s70 = scalar_select %p67, %s68, %s69
    %p73 = pneg %p67
    %p74 = scmp.eq.s32.totalorder %s9, 1
    %p75 = por %p73, %p74
    %p76 = scmp.ne.s32.totalorder %s68, %s71
    %p77 = scmp.eq.s32.totalorder %s9, 0
    %p78 = por %p76, %p77
    %p79 = scmp.ne.s32.totalorder %s68, %s71
    %p80 = scmp.eq.s32.totalorder %s14, 1
    %p81 = por %p79, %p80
    %p82 = scmp.ne.s32.totalorder %s71, %s72
    %p83 = scmp.eq.s32.totalorder %s14, 0
    %p84 = por %p82, %p83
    %p85 = scmp.ne.s32.totalorder %s71, %s72
    %p86 = scmp.eq.s32.totalorder %s15, 1
    %p87 = por %p85, %p86
    %p89 = scmp.ne.s32.totalorder %s72, %s88
    %p90 = scmp.eq.s32.totalorder %s15, 0
    %p91 = por %p89, %p90
    %s93 = sadd.s32 %s92, 1
    %p96 = scmp.eq.s32.totalorder %s9, 1
    %p97 = scmp.ne.s32.totalorder %s92, %s94
    %p98 = scmp.eq.s32.totalorder %s9, 0
    %p99 = por %p97, %p98
    %p100 = scmp.ne.s32.totalorder %s92, %s94
    %p101 = scmp.eq.s32.totalorder %s14, 1
    %p102 = por %p100, %p101
    %p103 = scmp.ne.s32.totalorder %s94, %s95
    %p104 = scmp.eq.s32.totalorder %s14, 0
    %p105 = por %p103, %p104
    %p106 = scmp.ne.s32.totalorder %s94, %s95
    %p107 = scmp.eq.s32.totalorder %s15, 1
    %p108 = por %p106, %p107
    %p110 = scmp.ne.s32.totalorder %s95, %s109
    %p111 = scmp.eq.s32.totalorder %s15, 0
    %p112 = por %p110, %p111
    %s113 = ssub.s32 %s16, %s35
    %s114 = ssub.s32 %s17, %s31
    %s115 = sor.u32 %s113, %s114
    %p116 = scmp.eq.s32.totalorder %s115, 0
    %s118 = sadd.s32 %s117, 1
    %s119 = scalar_select %p116, %s117, %s118
    %p122 = pneg %p116
    %p123 = scmp.eq.s32.totalorder %s9, 1
    %p124 = por %p122, %p123
    %p125 = scmp.ne.s32.totalorder %s117, %s120
    %p126 = scmp.eq.s32.totalorder %s9, 0
    %p127 = por %p125, %p126
    %p128 = scmp.ne.s32.totalorder %s117, %s120
    %p129 = scmp.eq.s32.totalorder %s14, 1
    %p130 = por %p128, %p129
    %p131 = scmp.ne.s32.totalorder %s120, %s121
    %p132 = scmp.eq.s32.totalorder %s14, 0
    %p133 = por %p131, %p132
    %p134 = scmp.ne.s32.totalorder %s120, %s121
    %p135 = scmp.eq.s32.totalorder %s15, 1
    %p136 = por %p134, %p135
    %p138 = scmp.ne.s32.totalorder %s121, %s137
    %p139 = scmp.eq.s32.totalorder %s15, 0
    %p140 = por %p138, %p139
    %p141 = scmp.le.s32.totalorder 1, %s9
    %p142 = scmp.lt.s32.totalorder %s9, 3
    %p143 = pnand %p141, %p142
    %p144 = pneg %p143
    // Predicated region
    $region9: #{mid_block_forward.18} parent=5 // pred_check
      _
    $region10: #{mid_block_forward.18} parent=5 // pred_check_branch
      %146 = sbr.rel (%p143) target = $region12
    $region11: #{mid_block_forward.18} parent=5 // pred_region
      %s147 = ssub.s32 %s9, 1
      // Predicated region
      $region13: #{mid_block_forward.18} parent=11 // pred_check
        %p148 = pneg %p54
      $region14: #{mid_block_forward.18} parent=11 // pred_check_branch
        %150 = sbr.rel (%p148) target = $region16
      $region15: #{mid_block_forward.18} parent=11 // pred_region
        %p151 = scmp.lt.s32.totalorder %s21, 0
        %s152 = scalar_select %p151, %s21, 0
        %s153 = smul.addr %s152, 8
        %s154 = scalar_lea.vmem %s0, %s153
      $region16: #{mid_block_forward.18} parent=11 // pred_fallthru
        _
      // Predicated region
      $region17: #{mid_block_forward.18} parent=11 // pred_check
        %p155 = pneg %p105
      $region18: #{mid_block_forward.18} parent=11 // pred_check_branch
        %157 = sbr.rel (%p155) target = $region20
      $region19: #{mid_block_forward.18} parent=11 // pred_region
        _
      $region20: #{mid_block_forward.18} parent=11 // pred_fallthru
        _
    $region12: #{mid_block_forward.18} parent=5 // pred_fallthru
      _
    %p158 = scmp.lt.s32.totalorder %s9, 2
    // Predicated region
    $region21: #{mid_block_forward.18} parent=5 // pred_check
      %p159 = pneg %p158
    $region22: #{mid_block_forward.18} parent=5 // pred_check_branch
      %161 = sbr.rel (%p159) target = $region24
    $region23: #{mid_block_forward.18} parent=5 // pred_region
      // Predicated region
      $region25: #{mid_block_forward.18} parent=23 // pred_check
        %p162 = pneg %p78
      $region26: #{mid_block_forward.18} parent=23 // pred_check_branch
        %164 = sbr.rel (%p162) target = $region28
      $region27: #{mid_block_forward.18} parent=23 // pred_region
        %s165 = smul.u32 15, %s18
        %s166 = smul.u32 2, %s17
        %p167 = scmp.lt.s32.totalorder %s16, 1
        %s168 = scalar_select %p167, %s16, 1
        %p169 = scmp.lt.s32.totalorder %s165, 14
        %s170 = scalar_select %p169, %s165, 14
        %p171 = scmp.lt.s32.totalorder %s166, 1
        %s172 = scalar_select %p171, %s166, 1
        %s173 = smul.addr %s170, 2
        %s174 = sadd.s32 %s172, %s173
        %s175 = smul.addr %s168, 30
        %s176 = sadd.s32 %s174, %s175
        %s177 = smul.addr %s176, 8
        %s178 = scalar_lea.vmem %s1, %s177
        %s179 = smul.u32 15, %s18
        %s180 = smul.u32 2, %s17
      $region28: #{mid_block_forward.18} parent=23 // pred_fallthru
        _
    $region24: #{mid_block_forward.18} parent=5 // pred_fallthru
      _
    %p181 = scmp.le.s32.totalorder 1, %s9
    %p182 = scmp.lt.s32.totalorder %s9, 3
    %p183 = pnand %p181, %p182
    %p184 = pneg %p183
    // Predicated region
    $region29: #{mid_block_forward.18} parent=5 // pred_check
      _
    $region30: #{mid_block_forward.18} parent=5 // pred_check_branch
      %186 = sbr.rel (%p183) target = $region32
    $region31: #{mid_block_forward.18} parent=5 // pred_region
      %s187 = ssub.s32 %s9, 1
      %p188 = scmp.lt.s32.totalorder %s21, 0
      %s189 = scalar_select %p188, %s21, 0
      %s190 = smul.addr %s189, 8
      %s191 = scalar_lea.vmem %s0, %s190
      %p192 = pneg %p54
      %p193 = pneg %p51
      %s194 = smul.u32 15, %s21
      %s195 = smul.u32 2, %s20
      %p196 = scmp.lt.s32.totalorder %s19, 1
      %s197 = scalar_select %p196, %s19, 1
      %p198 = scmp.lt.s32.totalorder %s194, 14
      %s199 = scalar_select %p198, %s194, 14
      %p200 = scmp.lt.s32.totalorder %s195, 1
      %s201 = scalar_select %p200, %s195, 1
      %s202 = smul.addr %s199, 2
      %s203 = sadd.s32 %s201, %s202
      %s204 = smul.addr %s197, 30
      %s205 = sadd.s32 %s203, %s204
      %s206 = smul.addr %s205, 8
      %s207 = scalar_lea.vmem %s1, %s206
      %p208 = pneg %p84
      %p209 = pneg %p81
      %p210 = pneg %p105
      %p211 = pneg %p102
      %p212 = pneg %p133
      %p213 = pneg %p130
      %s214 = smul.u32 2, %s20
      %p215 = scmp.lt.s32.totalorder %s19, 1
      %s216 = scalar_select %p215, %s19, 1
      %p217 = scmp.lt.s32.totalorder %s214, 1
      %s218 = scalar_select %p217, %s214, 1
      %s219 = smul.addr %s216, 4
      %s220 = sadd.s32 %s218, %s219
      %s221 = smul.addr %s220, 8
      %s222 = scalar_lea.vmem %s3, %s221
      %p223 = scmp.lt.s32.totalorder %s21, 0
      %s224 = scalar_select %p223, %s21, 0
      %s225 = smul.addr %s224, 8
      %s226 = scalar_lea.vmem %s0, %s225
      %s227 = smul.u32 15, %s21
      %s228 = smul.u32 2, %s20
      %p229 = scmp.lt.s32.totalorder %s19, 1
      %s230 = scalar_select %p229, %s19, 1
      %p231 = scmp.lt.s32.totalorder %s227, 14
      %s232 = scalar_select %p231, %s227, 14
      %p233 = scmp.lt.s32.totalorder %s228, 1
      %s234 = scalar_select %p233, %s228, 1
      %s235 = smul.addr %s232, 2
      %s236 = sadd.s32 %s234, %s235
      %s237 = smul.addr %s230, 30
      %s238 = sadd.s32 %s236, %s237
      %s239 = smul.addr %s238, 8
      %s240 = scalar_lea.vmem %s1, %s239
      %s241 = smul.u32 15, %s21
      %s242 = smul.u32 2, %s20
      %s243 = smul.u32 2, %s20
      %p244 = scmp.lt.s32.totalorder %s19, 1
      %s245 = scalar_select %p244, %s19, 1
      %p246 = scmp.lt.s32.totalorder %s243, 1
      %s247 = scalar_select %p246, %s243, 1
      %s248 = smul.addr %s245, 4
      %s249 = sadd.s32 %s247, %s248
      %s250 = smul.addr %s249, 8
      %s251 = scalar_lea.vmem %s3, %s250
      %s252 = smul.u32 2, %s20
      %p253 = scmp.eq.s32.totalorder %s21, 0
      // Predicated region
      $region33: #{mid_block_forward.18} parent=31 // pred_check
        %p254 = pneg %p253
      $region34: #{mid_block_forward.18} parent=31 // pred_check_branch
        %256 = sbr.rel (%p254) target = $region36
      $region35: #{mid_block_forward.18} parent=31 // pred_region
        %257 = vst [vmem:[#allocation2] sm:$0xff] 0.0
        %258 = vst [vmem:[#allocation2 + $0x8] sm:$0xff] 0.0
        %259 = vst [vmem:[#allocation2 + $0x10] sm:$0xf] 0.0
        %260 = vst [vmem:[#allocation2 + $0x18] sm:$0xf] 0.0
      $region36: #{mid_block_forward.18} parent=31 // pred_fallthru
        _
      %v261 = vld [vmem:[#allocation2] sm:$0xff]
      %v262 = vld [vmem:[#allocation2 + $0x8] sm:$0xff]
      %v263 = vld [vmem:[#allocation2 + $0x10] sm:$0xf]
      %v264 = vld [vmem:[#allocation2 + $0x18] sm:$0xf]
      %v265 = vld [vmem:[%s226] sm:$0xff]
      %v266 = vld [vmem:[%s226 + $0x8] sm:$0xf]
      %v267 = vld [vmem:[%s240] sm:$0xff]
      %v268 = vld [vmem:[%s240 + $0x8] sm:$0xff]
      %v269 = vld [vmem:[%s240 + $0x10] sm:$0xff]
      %v270 = vld [vmem:[%s240 + $0x18] sm:$0xff]
      %v271 = vld [vmem:[%s240 + $0x20] sm:$0xff]
      %v272 = vld [vmem:[%s240 + $0x28] sm:$0xff]
      %v273 = vld [vmem:[%s240 + $0x30] sm:$0xff]
      %v274 = vld [vmem:[%s240 + $0x38] sm:$0xff]
      %v275 = vld [vmem:[%s240 + $0x40] sm:$0xff]
      %v276 = vld [vmem:[%s240 + $0x48] sm:$0xff]
      %v277 = vld [vmem:[%s240 + $0x50] sm:$0xff]
      %v278 = vld [vmem:[%s240 + $0x58] sm:$0xff]
      %v279 = vld [vmem:[%s240 + $0x60] sm:$0xff]
      %v280 = vld [vmem:[%s240 + $0x68] sm:$0xff]
      %v281 = vld [vmem:[%s240 + $0x70] sm:$0xff]
      %v282 = vld [vmem:[%s240 + $0x78] sm:$0xff]
      %v283 = vld [vmem:[%s240 + $0x80] sm:$0xff]
      %v284 = vld [vmem:[%s240 + $0x88] sm:$0xff]
      %v285 = vld [vmem:[%s240 + $0x90] sm:$0xff]
      %v286 = vld [vmem:[%s240 + $0x98] sm:$0xff]
      %v287 = vld [vmem:[%s240 + $0xa0] sm:$0xff]
      %v288 = vld [vmem:[%s240 + $0xa8] sm:$0xff]
      %v289 = vld [vmem:[%s240 + $0xb0] sm:$0xff]
      %v290 = vld [vmem:[%s240 + $0xb8] sm:$0xff]
      %v291 = vld [vmem:[%s240 + $0xc0] sm:$0xff]
      %v292 = vld [vmem:[%s240 + $0xc8] sm:$0xff]
      %v293 = vld [vmem:[%s240 + $0xd0] sm:$0xff]
      %v294 = vld [vmem:[%s240 + $0xd8] sm:$0xff]
      %v295 = vld [vmem:[%s240 + $0xe0] sm:$0x3]
      %v296 = vld [vmem:[%s240 + $0xe8] sm:$0x3]
      %vm297 = vcmask 932864
      %v299 = vsel %vm297, %v265, 0
      %v302 = vsel %vm297, %v266, 0
      %vm304 = vcmask 1041408
      %v306 = vsel %vm304, %v295, 0
      %v309 = vsel %vm304, %v296, 0
      %311 = vmatprep.subr.mxu0 %v268
      %312 = vmatpush1.msra.mxu0 %v267
      %313 = vmatprep.subr.mxu0 %v270
      %314 = vmatpush1.msra.mxu0 %v269
      %315 = vmatprep.subr.mxu0 %v272
      %316 = vmatpush1.msra.mxu0 %v271
      %317 = vmatprep.subr.mxu0 %v274
      %318 = vmatpush1.msra.mxu0 %v273
      %319 = vmatprep.subr.mxu0 %v276
      %320 = vmatpush1.msra.mxu0 %v275
      %321 = vmatprep.subr.mxu0 %v278
      %322 = vmatpush1.msra.mxu0 %v277
      %323 = vmatprep.subr.mxu0 %v280
      %324 = vmatpush1.msra.mxu0 %v279
      %325 = vmatprep.subr.mxu0 %v282
      %326 = vmatpush1.msra.mxu0 %v281
      %327 = vmatprep.subr.mxu0 %v284
      %328 = vmatpush1.msra.mxu0 %v283
      %329 = vmatprep.subr.mxu0 %v286
      %330 = vmatpush1.msra.mxu0 %v285
      %331 = vmatprep.subr.mxu0 %v288
      %332 = vmatpush1.msra.mxu0 %v287
      %333 = vmatprep.subr.mxu0 %v290
      %334 = vmatpush1.msra.mxu0 %v289
      %335 = vmatprep.subr.mxu0 %v292
      %336 = vmatpush1.msra.mxu0 %v291
      %337 = vmatprep.subr.mxu0 %v294
      %338 = vmatpush1.msra.mxu0 %v293
      %339 = vmatprep.subr.mxu0 %v309
      %340 = vmatpush1.msra.mxu0 %v306
      %341 = vmatprep.subr.mxu0 0.0
      %342 = vmatpush1.msra.mxu0 0.0
      %343 = vmatprep.subr.mxu0 0.0
      %344 = vmatpush1.msra.mxu0 0.0
      %345 = vmatprep.subr.mxu0 0.0
      %346 = vmatpush1.msra.mxu0 0.0
      %347 = vmatprep.subr.mxu0 0.0
      %348 = vmatpush1.msra.mxu0 0.0
      %349 = vmatprep.subr.mxu0 0.0
      %350 = vmatpush1.msra.mxu0 0.0
      %351 = vmatprep.subr.mxu0 0.0
      %352 = vmatpush1.msra.mxu0 0.0
      %353 = vmatprep.subr.mxu0 0.0
      %354 = vmatpush1.msra.mxu0 0.0
      %355 = vmatprep.subr.mxu0 0.0
      %356 = vmatpush1.msra.mxu0 0.0
      %357 = vmatprep.subr.mxu0 0.0
      %358 = vmatpush1.msra.mxu0 0.0
      %359 = vmatprep.subr.mxu0 0.0
      %360 = vmatpush1.msra.mxu0 0.0
      %361 = vmatprep.subr.mxu0 0.0
      %362 = vmatpush1.msra.mxu0 0.0
      %363 = vmatprep.subr.mxu0 0.0
      %364 = vmatpush1.msra.mxu0 0.0
      %365 = vmatprep.subr.mxu0 0.0
      %366 = vmatpush1.msra.mxu0 0.0
      %367 = vmatprep.subr.mxu0 0.0
      %368 = vmatpush1.msra.mxu0 0.0
      %369 = vmatprep.subr.mxu0 0.0
      %370 = vmatpush1.msra.mxu0 0.0
      %371 = vmatprep.subr.mxu0 0.0
      %372 = vmatpush1.msra.mxu0 0.0
      %373 = vmatprep.subr.mxu0 0.0
      %374 = vmatpush1.msra.mxu0 0.0
      %375 = vmatprep.mubr.f32.mxu0 0.0
      %376 = vmatmul.mubr.f32.gmra.mrb[0].mxu0 %v299
      %v377 = vpop.f32.mrb[0].mxu0
      %v378 = vadd.f32 0.0, %v377
      %v379 = vpop.f32.mrb[0].mxu0
      %v380 = vadd.f32 0.0, %v379
      %381 = vmatprep.mubr.f32.mxu0 0.0
      %382 = vmatmul.mubr.f32.gmra.mrb[0].mxu0 %v302
      %v383 = vpop.f32.mrb[0].mxu0
      %v384 = vadd.f32 0.0, %v383
      %v385 = vpop.f32.mrb[0].mxu0
      %v386 = vadd.f32 0.0, %v385
      %387 = vdwg.mxu0
      %v388 = vadd.f32 %v261, %v378
      %v389 = vadd.f32 %v262, %v380
      %v390 = vadd.f32 %v263, %v384
      %v391 = vadd.f32 %v264, %v386
      %392 = vst [vmem:[#allocation2] sm:$0xff] %v388
      %393 = vst [vmem:[#allocation2 + $0x8] sm:$0xff] %v389
      %394 = vst [vmem:[#allocation2 + $0x10] sm:$0xf] %v390
      %395 = vst [vmem:[#allocation2 + $0x18] sm:$0xf] %v391
      // Predicated region
      $region37: #{mid_block_forward.18} parent=31 // pred_check
        %p396 = pneg %p253
      $region38: #{mid_block_forward.18} parent=31 // pred_check_branch
        %398 = sbr.rel (%p396) target = $region40
      $region39: #{mid_block_forward.18} parent=31 // pred_region
        %v399 = vld [vmem:[#allocation2] sm:$0xff]
        %v400 = vld [vmem:[#allocation2 + $0x8] sm:$0xff]
        %v401 = vld [vmem:[#allocation2 + $0x10] sm:$0xf]
        %v402 = vld [vmem:[#allocation2 + $0x18] sm:$0xf]
        %v403 = vld [vmem:[%s2] sm:$0xff]
        %v404 = vld [vmem:[%s2 + $0x8] sm:$0xf]
        %406 = vset.pattern.permute.xlu0 0
        %407 = vperm.xlu0 %406, %v403
        %v408 = vpop.permute.xlu0 %407
        %411 = vset.pattern.permute.xlu0 0
        %412 = vperm.xlu0 %411, %v404
        %v413 = vpop.permute.xlu0 %412
        %v415 = vadd.f32 %v399, %v408
        %v416 = vadd.f32 %v400, %v408
        %v417 = vadd.f32 %v401, %v413
        %v418 = vadd.f32 %v402, %v413
        %419 = vst [vmem:[%s251] sm:$0xff] %v415
        %420 = vst [vmem:[%s251 + $0x8] sm:$0xff] %v416
        %421 = vst [vmem:[%s251 + $0x10] sm:$0xf] %v417
        %422 = vst [vmem:[%s251 + $0x18] sm:$0xf] %v418
      $region40: #{mid_block_forward.18} parent=31 // pred_fallthru
        _
      %s423 = smul.u32 2, %s20
      %p424 = scmp.lt.s32.totalorder %s19, 1
      %s425 = scalar_select %p424, %s19, 1
      %p426 = scmp.lt.s32.totalorder %s423, 1
      %s427 = scalar_select %p426, %s423, 1
      %s428 = smul.addr %s425, 4
      %s429 = sadd.s32 %s427, %s428
      %s430 = smul.addr %s429, 8
      %s431 = scalar_lea.vmem %s3, %s430
      // Predicated region
      $region41: #{mid_block_forward.18} parent=31 // pred_check
        %p432 = pneg %p130
      $region42: #{mid_block_forward.18} parent=31 // pred_check_branch
        %434 = sbr.rel (%p432) target = $region44
      $region43: #{mid_block_forward.18} parent=31 // pred_region
        %s435 = smul.u32 2, %s20
      $region44: #{mid_block_forward.18} parent=31 // pred_fallthru
        _
    $region32: #{mid_block_forward.18} parent=5 // pred_fallthru
      _
    %p436 = scmp.le.s32.totalorder 2, %s9
    // Predicated region
    $region45: #{mid_block_forward.18} parent=5 // pred_check
      %p437 = pneg %p436
    $region46: #{mid_block_forward.18} parent=5 // pred_check_branch
      %439 = sbr.rel (%p437) target = $region48
    $region47: #{mid_block_forward.18} parent=5 // pred_region
      %s440 = ssub.s32 %s9, 2
      // Predicated region
      $region49: #{mid_block_forward.18} parent=47 // pred_check
        %p441 = pneg %p136
      $region50: #{mid_block_forward.18} parent=47 // pred_check_branch
        %443 = sbr.rel (%p441) target = $region52
      $region51: #{mid_block_forward.18} parent=47 // pred_region
        %s444 = smul.u32 2, %s23
        %p445 = scmp.lt.s32.totalorder %s22, 1
        %s446 = scalar_select %p445, %s22, 1
        %p447 = scmp.lt.s32.totalorder %s444, 1
        %s448 = scalar_select %p447, %s444, 1
        %s449 = smul.addr %s446, 4
        %s450 = sadd.s32 %s448, %s449
        %s451 = smul.addr %s450, 8
        %s452 = scalar_lea.vmem %s3, %s451
      $region52: #{mid_block_forward.18} parent=47 // pred_fallthru
        _
    $region48: #{mid_block_forward.18} parent=5 // pred_fallthru
      _
  $region6: #{mid_block_forward.18} parent=0 // loop_footer
    %s13 = sadd.s32 1, %s9
  $region7: #{mid_block_forward.18} parent=0 // loop_footer_branch
    %8 = sbr.rel target = $region3
  $region8: #{mid_block_forward.18} parent=0 // loop_exit
    _

// kernel: mid_block_forward.19
$region0: #{mid_block_forward.19}
  #allocation0 [shape = 'u32[]', space=smem, size = 0x4, offset = 0x4, fixed_abs, tag = 'smem constant byte address 0x4 - core index']
  #allocation1 [shape = 'u32[144,128]{1,0:T(1,128)}', space=vmem, size = 0x12000, scoped, tag = 'internal scratch']
  %s0 = inlined_call_operand.vmem [shape: f32[2,12,256], index: 0, kind: input, shape index: {}]
  %s1 = inlined_call_operand.vmem [shape: f32[12,1], index: 1, kind: input, shape index: {}]
  %s2 = inlined_call_operand.vmem [shape: f32[12,1], index: 2, kind: input, shape index: {}]
  %s3 = inlined_call_operand.vmem [shape: f32[2,12,256], index: 3, kind: output, shape index: {}]
  %s4 = sld [smem:[#allocation0]]
  $region45: #{mid_block_forward.19} parent=0
    _
  %s6 = ssub.s32 1, %s4
  %s7 = scalar_select 0, %s6, %s4
  loop: start=0, step=1, limit=4
  $region2: #{mid_block_forward.19} parent=0 // loop_pre_header
    _
  $region3: #{mid_block_forward.19} parent=0 // loop_header
    %s9 = sphi 0, %s13
    %p10 = scmp.ge.s32.totalorder %s9, 4
    %s19 = sphi 0, %s21
    %s22 = sphi 0, %s19
    %s23 = sphi 0, %s22
    %s39 = sphi 0, %s23
    %s43 = sphi 0, %s43
    %s45 = sphi 0, %s43
    %s46 = sphi 0, %s45
    %s60 = sphi 0, %s46
    %s64 = sphi 0, %s64
    %s66 = sphi 0, %s64
    %s67 = sphi 0, %s66
    %s81 = sphi 0, %s67
    %s87 = sphi 0, %s89
    %s90 = sphi 0, %s87
    %s91 = sphi 0, %s90
    %s107 = sphi 0, %s91
  $region4: #{mid_block_forward.19} parent=0 // loop_header_branch
    %12 = sbr.rel (%p10) target = $region8
  $region5: #{mid_block_forward.19} parent=0 // loop_body
    %s14 = ssub.s32 %s9, 1
    %s15 = ssub.s32 %s9, 2
    %s16 = sadd.s32 %s9, 1
    %s17 = ssub.s32 %s9, %s16
    %p18 = scmp.eq.s32.totalorder %s17, 0
    %s20 = sadd.s32 %s19, 1
    %s21 = scalar_select %p18, %s19, %s20
    %p24 = pneg %p18
    %p25 = scmp.eq.s32.totalorder %s9, 1
    %p26 = por %p24, %p25
    %p27 = scmp.ne.s32.totalorder %s19, %s22
    %p28 = scmp.eq.s32.totalorder %s9, 0
    %p29 = por %p27, %p28
    %p30 = scmp.ne.s32.totalorder %s19, %s22
    %p31 = scmp.eq.s32.totalorder %s14, 1
    %p32 = por %p30, %p31
    %p33 = scmp.ne.s32.totalorder %s22, %s23
    %p34 = scmp.eq.s32.totalorder %s14, 0
    %p35 = por %p33, %p34
    %p36 = scmp.ne.s32.totalorder %s22, %s23
    %p37 = scmp.eq.s32.totalorder %s15, 1
    %p38 = por %p36, %p37
    %p40 = scmp.ne.s32.totalorder %s23, %s39
    %p41 = scmp.eq.s32.totalorder %s15, 0
    %p42 = por %p40, %p41
    %s44 = sadd.s32 %s43, 1
    %p47 = scmp.eq.s32.totalorder %s9, 1
    %p48 = scmp.ne.s32.totalorder %s43, %s45
    %p49 = scmp.eq.s32.totalorder %s9, 0
    %p50 = por %p48, %p49
    %p51 = scmp.ne.s32.totalorder %s43, %s45
    %p52 = scmp.eq.s32.totalorder %s14, 1
    %p53 = por %p51, %p52
    %p54 = scmp.ne.s32.totalorder %s45, %s46
    %p55 = scmp.eq.s32.totalorder %s14, 0
    %p56 = por %p54, %p55
    %p57 = scmp.ne.s32.totalorder %s45, %s46
    %p58 = scmp.eq.s32.totalorder %s15, 1
    %p59 = por %p57, %p58
    %p61 = scmp.ne.s32.totalorder %s46, %s60
    %p62 = scmp.eq.s32.totalorder %s15, 0
    %p63 = por %p61, %p62
    %s65 = sadd.s32 %s64, 1
    %p68 = scmp.eq.s32.totalorder %s9, 1
    %p69 = scmp.ne.s32.totalorder %s64, %s66
    %p70 = scmp.eq.s32.totalorder %s9, 0
    %p71 = por %p69, %p70
    %p72 = scmp.ne.s32.totalorder %s64, %s66
    %p73 = scmp.eq.s32.totalorder %s14, 1
    %p74 = por %p72, %p73
    %p75 = scmp.ne.s32.totalorder %s66, %s67
    %p76 = scmp.eq.s32.totalorder %s14, 0
    %p77 = por %p75, %p76
    %p78 = scmp.ne.s32.totalorder %s66, %s67
    %p79 = scmp.eq.s32.totalorder %s15, 1
    %p80 = por %p78, %p79
    %p82 = scmp.ne.s32.totalorder %s67, %s81
    %p83 = scmp.eq.s32.totalorder %s15, 0
    %p84 = por %p82, %p83
    %s85 = ssub.s32 %s9, %s16
    %p86 = scmp.eq.s32.totalorder %s85, 0
    %s88 = sadd.s32 %s87, 1
    %s89 = scalar_select %p86, %s87, %s88
    %p92 = pneg %p86
    %p93 = scmp.eq.s32.totalorder %s9, 1
    %p94 = por %p92, %p93
    %p95 = scmp.ne.s32.totalorder %s87, %s90
    %p96 = scmp.eq.s32.totalorder %s9, 0
    %p97 = por %p95, %p96
    %p98 = scmp.ne.s32.totalorder %s87, %s90
    %p99 = scmp.eq.s32.totalorder %s14, 1
    %p100 = por %p98, %p99
    %p101 = scmp.ne.s32.totalorder %s90, %s91
    %p102 = scmp.eq.s32.totalorder %s14, 0
    %p103 = por %p101, %p102
    %p104 = scmp.ne.s32.totalorder %s90, %s91
    %p105 = scmp.eq.s32.totalorder %s15, 1
    %p106 = por %p104, %p105
    %p108 = scmp.ne.s32.totalorder %s91, %s107
    %p109 = scmp.eq.s32.totalorder %s15, 0
    %p110 = por %p108, %p109
    %p111 = scmp.le.s32.totalorder 1, %s9
    %p112 = scmp.lt.s32.totalorder %s9, 3
    %p113 = pnand %p111, %p112
    %p114 = pneg %p113
    // Predicated region
    $region9: #{mid_block_forward.19} parent=5 // pred_check
      _
    $region10: #{mid_block_forward.19} parent=5 // pred_check_branch
      %116 = sbr.rel (%p113) target = $region12
    $region11: #{mid_block_forward.19} parent=5 // pred_region
      %s117 = ssub.s32 %s9, 1
      // Predicated region
      $region13: #{mid_block_forward.19} parent=11 // pred_check
        %p118 = pneg %p56
      $region14: #{mid_block_forward.19} parent=11 // pred_check_branch
        %120 = sbr.rel (%p118) target = $region16
      $region15: #{mid_block_forward.19} parent=11 // pred_region
        _
      $region16: #{mid_block_forward.19} parent=11 // pred_fallthru
        _
      // Predicated region
      $region17: #{mid_block_forward.19} parent=11 // pred_check
        %p121 = pneg %p77
      $region18: #{mid_block_forward.19} parent=11 // pred_check_branch
        %123 = sbr.rel (%p121) target = $region20
      $region19: #{mid_block_forward.19} parent=11 // pred_region
        _
      $region20: #{mid_block_forward.19} parent=11 // pred_fallthru
        _
    $region12: #{mid_block_forward.19} parent=5 // pred_fallthru
      _
    %p124 = scmp.lt.s32.totalorder %s9, 2
    // Predicated region
    $region21: #{mid_block_forward.19} parent=5 // pred_check
      %p125 = pneg %p124
    $region22: #{mid_block_forward.19} parent=5 // pred_check_branch
      %127 = sbr.rel (%p125) target = $region24
    $region23: #{mid_block_forward.19} parent=5 // pred_region
      // Predicated region
      $region25: #{mid_block_forward.19} parent=23 // pred_check
        %p128 = pneg %p29
      $region26: #{mid_block_forward.19} parent=23 // pred_check_branch
        %130 = sbr.rel (%p128) target = $region28
      $region27: #{mid_block_forward.19} parent=23 // pred_region
        %p131 = scmp.lt.s32.totalorder %s9, 1
        %s132 = scalar_select %p131, %s9, 1
        %s133 = smul.addr %s132, 4
        %s134 = smul.addr %s133, 8
        %s135 = scalar_lea.vmem %s0, %s134
      $region28: #{mid_block_forward.19} parent=23 // pred_fallthru
        _
    $region24: #{mid_block_forward.19} parent=5 // pred_fallthru
      _
    %p136 = scmp.le.s32.totalorder 1, %s9
    %p137 = scmp.lt.s32.totalorder %s9, 3
    %p138 = pnand %p136, %p137
    %p139 = pneg %p138
    // Predicated region
    $region29: #{mid_block_forward.19} parent=5 // pred_check
      _
    $region30: #{mid_block_forward.19} parent=5 // pred_check_branch
      %141 = sbr.rel (%p138) target = $region32
    $region31: #{mid_block_forward.19} parent=5 // pred_region
      %s142 = ssub.s32 %s9, 1
      %p143 = scmp.lt.s32.totalorder %s14, 1
      %s144 = scalar_select %p143, %s14, 1
      %s145 = smul.addr %s144, 4
      %s146 = smul.addr %s145, 8
      %s147 = scalar_lea.vmem %s0, %s146
      %p148 = pneg %p35
      %p149 = pneg %p32
      %p150 = pneg %p56
      %p151 = pneg %p53
      %p152 = pneg %p77
      %p153 = pneg %p74
      %p154 = pneg %p103
      %p155 = pneg %p100
      %p156 = scmp.lt.s32.totalorder %s14, 1
      %s157 = scalar_select %p156, %s14, 1
      %s158 = smul.addr %s157, 4
      %s159 = smul.addr %s158, 8
      %s160 = scalar_lea.vmem %s3, %s159
      %p161 = scmp.lt.s32.totalorder %s14, 1
      %s162 = scalar_select %p161, %s14, 1
      %s163 = smul.addr %s162, 4
      %s164 = smul.addr %s163, 8
      %s165 = scalar_lea.vmem %s0, %s164
      %p166 = scmp.lt.s32.totalorder %s14, 1
      %s167 = scalar_select %p166, %s14, 1
      %s168 = smul.addr %s167, 4
      %s169 = smul.addr %s168, 8
      %s170 = scalar_lea.vmem %s3, %s169
      %v171 = vld [vmem:[%s165] sm:$0xff]
      %v172 = vld [vmem:[%s165 + $0x8] sm:$0xff]
      %v173 = vld [vmem:[%s165 + $0x10] sm:$0xf]
      %v174 = vld [vmem:[%s165 + $0x18] sm:$0xf]
      %v175 = vld [vmem:[%s1] sm:$0xff]
      %v176 = vld [vmem:[%s1 + $0x8] sm:$0xf]
      %v177 = vld [vmem:[%s2] sm:$0xff]
      %v178 = vld [vmem:[%s2 + $0x8] sm:$0xf]
      %vm179 = vcmask 1043456
      %v180 = vsel %vm179, %v171, 0.0
      %v181 = vsel %vm179, %v172, 0.0
      %v182 = vadd.f32 %v180, %v181
      %183 = vadd.xlane.f32.xlu0 %v182
      %v184 = vpop.xlane.xlu0 %183
      %v185 = vrot.slane %v184, 4
      %v186 = vadd.f32 %v184, %v185
      %v187 = vrot.slane %v186, 2
      %v188 = vadd.f32 %v186, %v187
      %v189 = vrot.slane %v188, 1
      %v190 = vadd.f32 %v188, %v189
      %s191 = vtos %v190
      %v192 = vstv %s191
      %v193 = vrcp.pop 1024.0
      %v194 = vmul.f32 %v192, %v193
      %v195 = vsub.f32 %v171, %v194
      %v196 = vsub.f32 %v172, %v194
      %v197 = vmul.f32 %v195, %v195
      %v198 = vmul.f32 %v196, %v196
      %v199 = vsel %vm179, %v197, 0.0
      %v200 = vsel %vm179, %v198, 0.0
      %v201 = vadd.f32 %v199, %v200
      %202 = vadd.xlane.f32.xlu0 %v201
      %v203 = vpop.xlane.xlu0 %202
      %v204 = vrot.slane %v203, 4
      %v205 = vadd.f32 %v203, %v204
      %v206 = vrot.slane %v205, 2
      %v207 = vadd.f32 %v205, %v206
      %v208 = vrot.slane %v207, 1
      %v209 = vadd.f32 %v207, %v208
      %s210 = vtos %v209
      %v211 = vstv %s210
      %v212 = vmul.f32 %v211, %v193
      %v213 = vadd.f32 %v212, 1e-05
      %v214 = vrsqrt.pop %v213
      %v215 = vmul.f32 %v195, %v214
      %v216 = vmul.f32 %v196, %v214
      %218 = vset.pattern.permute.xlu0 0
      %219 = vperm.xlu0 %218, %v175
      %v220 = vpop.permute.xlu0 %219
      %v222 = vmul.f32 %v215, %v220
      %v223 = vmul.f32 %v216, %v220
      %225 = vset.pattern.permute.xlu0 0
      %226 = vperm.xlu0 %225, %v177
      %v227 = vpop.permute.xlu0 %226
      %v229 = vadd.f32 %v222, %v227
      %v230 = vadd.f32 %v223, %v227
      %231 = vst [vmem:[%s170] sm:$0xf] %v229
      %232 = vst [vmem:[%s170 + $0x8] sm:$0xf] %v230
      %v235 = vrot.slane %v171, 4
      %v236 = vrot.slane %v172, 4
      %v239 = vsel %vm179, %v235, 0.0
      %v240 = vsel %vm179, %v236, 0.0
      %v241 = vadd.f32 %v239, %v240
      %242 = vadd.xlane.f32.xlu0 %v241
      %v243 = vpop.xlane.xlu0 %242
      %v244 = vrot.slane %v243, 4
      %v245 = vadd.f32 %v243, %v244
      %v246 = vrot.slane %v245, 2
      %v247 = vadd.f32 %v245, %v246
      %v248 = vrot.slane %v247, 1
      %v249 = vadd.f32 %v247, %v248
      %s250 = vtos %v249
      %v251 = vstv %s250
      %v252 = vmul.f32 %v251, %v193
      %v253 = vsub.f32 %v171, %v252
      %v254 = vsub.f32 %v172, %v252
      %v255 = vmul.f32 %v253, %v253
      %v256 = vmul.f32 %v254, %v254
      %v259 = vrot.slane %v255, 4
      %v260 = vrot.slane %v256, 4
      %v263 = vsel %vm179, %v259, 0.0
      %v264 = vsel %vm179, %v260, 0.0
      %v265 = vadd.f32 %v263, %v264
      %266 = vadd.xlane.f32.xlu0 %v265
      %v267 = vpop.xlane.xlu0 %266
      %v268 = vrot.slane %v267, 4
      %v269 = vadd.f32 %v267, %v268
      %v270 = vrot.slane %v269, 2
      %v271 = vadd.f32 %v269, %v270
      %v272 = vrot.slane %v271, 1
      %v273 = vadd.f32 %v271, %v272
      %s274 = vtos %v273
      %v275 = vstv %s274
      %v276 = vmul.f32 %v275, %v193
      %v277 = vadd.f32 %v276, 1e-05
      %v278 = vrsqrt.pop %v277
      %v279 = vmul.f32 %v253, %v278
      %v280 = vmul.f32 %v254, %v278
      %v281 = vmul.f32 %v279, %v220
      %v282 = vmul.f32 %v280, %v220
      %v283 = vadd.f32 %v281, %v227
      %v284 = vadd.f32 %v282, %v227
      %285 = vst [vmem:[%s170] sm:$0xf0] %v283
      %286 = vst [vmem:[%s170 + $0x8] sm:$0xf0] %v284
      %v287 = vsel %vm179, %v173, 0.0
      %v288 = vsel %vm179, %v174, 0.0
      %v289 = vadd.f32 %v287, %v288
      %290 = vadd.xlane.f32.xlu0 %v289
      %v291 = vpop.xlane.xlu0 %290
      %v292 = vrot.slane %v291, 4
      %v293 = vadd.f32 %v291, %v292
      %v294 = vrot.slane %v293, 2
      %v295 = vadd.f32 %v293, %v294
      %v296 = vrot.slane %v295, 1
      %v297 = vadd.f32 %v295, %v296
      %s298 = vtos %v297
      %v299 = vstv %s298
      %v300 = vmul.f32 %v299, %v193
      %v301 = vsub.f32 %v173, %v300
      %v302 = vsub.f32 %v174, %v300
      %v303 = vmul.f32 %v301, %v301
      %v304 = vmul.f32 %v302, %v302
      %v305 = vsel %vm179, %v303, 0.0
      %v306 = vsel %vm179, %v304, 0.0
      %v307 = vadd.f32 %v305, %v306
      %308 = vadd.xlane.f32.xlu0 %v307
      %v309 = vpop.xlane.xlu0 %308
      %v310 = vrot.slane %v309, 4
      %v311 = vadd.f32 %v309, %v310
      %v312 = vrot.slane %v311, 2
      %v313 = vadd.f32 %v311, %v312
      %v314 = vrot.slane %v313, 1
      %v315 = vadd.f32 %v313, %v314
      %s316 = vtos %v315
      %v317 = vstv %s316
      %v318 = vmul.f32 %v317, %v193
      %v319 = vadd.f32 %v318, 1e-05
      %v320 = vrsqrt.pop %v319
      %v321 = vmul.f32 %v301, %v320
      %v322 = vmul.f32 %v302, %v320
      %324 = vset.pattern.permute.xlu0 0
      %325 = vperm.xlu0 %324, %v176
      %v326 = vpop.permute.xlu0 %325
      %v328 = vmul.f32 %v321, %v326
      %v329 = vmul.f32 %v322, %v326
      %331 = vset.pattern.permute.xlu0 0
      %332 = vperm.xlu0 %331, %v178
      %v333 = vpop.permute.xlu0 %332
      %v335 = vadd.f32 %v328, %v333
      %v336 = vadd.f32 %v329, %v333
      %337 = vst [vmem:[%s170 + $0x10] sm:$0xf] %v335
      %338 = vst [vmem:[%s170 + $0x18] sm:$0xf] %v336
      %p339 = scmp.lt.s32.totalorder %s14, 1
      %s340 = scalar_select %p339, %s14, 1
      %s341 = smul.addr %s340, 4
      %s342 = smul.addr %s341, 8
      %s343 = scalar_lea.vmem %s3, %s342
      // Predicated region
      $region33: #{mid_block_forward.19} parent=31 // pred_check
        %p344 = pneg %p100
      $region34: #{mid_block_forward.19} parent=31 // pred_check_branch
        %346 = sbr.rel (%p344) target = $region36
      $region35: #{mid_block_forward.19} parent=31 // pred_region
        _
      $region36: #{mid_block_forward.19} parent=31 // pred_fallthru
        _
    $region32: #{mid_block_forward.19} parent=5 // pred_fallthru
      _
    %p347 = scmp.le.s32.totalorder 2, %s9
    // Predicated region
    $region37: #{mid_block_forward.19} parent=5 // pred_check
      %p348 = pneg %p347
    $region38: #{mid_block_forward.19} parent=5 // pred_check_branch
      %350 = sbr.rel (%p348) target = $region40
    $region39: #{mid_block_forward.19} parent=5 // pred_region
      %s351 = ssub.s32 %s9, 2
      // Predicated region
      $region41: #{mid_block_forward.19} parent=39 // pred_check
        %p352 = pneg %p106
      $region42: #{mid_block_forward.19} parent=39 // pred_check_branch
        %354 = sbr.rel (%p352) target = $region44
      $region43: #{mid_block_forward.19} parent=39 // pred_region
        %p355 = scmp.lt.s32.totalorder %s15, 1
        %s356 = scalar_select %p355, %s15, 1
        %s357 = smul.addr %s356, 4
        %s358 = smul.addr %s357, 8
        %s359 = scalar_lea.vmem %s3, %s358
      $region44: #{mid_block_forward.19} parent=39 // pred_fallthru
        _
    $region40: #{mid_block_forward.19} parent=5 // pred_fallthru
      _
  $region6: #{mid_block_forward.19} parent=0 // loop_footer
    %s13 = sadd.s32 1, %s9
  $region7: #{mid_block_forward.19} parent=0 // loop_footer_branch
    %8 = sbr.rel target = $region3
  $region8: #{mid_block_forward.19} parent=0 // loop_exit
    _

// kernel: mid_block_forward.20
$region0: #{mid_block_forward.20}
  #allocation0 [shape = 'u32[]', space=smem, size = 0x4, offset = 0x4, fixed_abs, tag = 'smem constant byte address 0x4 - core index']
  #allocation1 [shape = 'u32[144,128]{1,0:T(1,128)}', space=vmem, size = 0x12000, scoped, tag = 'internal scratch']
  #allocation2 [shape = 'f32[32,576]{1,0:T(8,128)}', space=vmem, size = 0x14000, scoped, tag = 'scratch operand']
  %s0 = inlined_call_operand.vmem [shape: f32[32,192], index: 0, kind: input, shape index: {}]
  %s1 = inlined_call_operand.vmem [shape: f32[192,576], index: 1, kind: input, shape index: {}]
  %s2 = inlined_call_operand.vmem [shape: f32[1,576], index: 2, kind: input, shape index: {}]
  %s3 = inlined_call_operand.vmem [shape: f32[32,576], index: 3, kind: output, shape index: {}]
  %s4 = sld [smem:[#allocation0]]
  $region30: #{mid_block_forward.20} parent=0
    _
  %s6 = ssub.s32 1, %s4
  %s7 = scalar_select 0, %s6, %s4
  // Predicated region
  $region2: #{mid_block_forward.20} parent=0 // pred_check
    _
  $region3: #{mid_block_forward.20} parent=0 // pred_check_branch
    %9 = sbr.rel (0) target = $region5
  $region4: #{mid_block_forward.20} parent=0 // pred_region
    _
  $region5: #{mid_block_forward.20} parent=0 // pred_fallthru
    _
  // Predicated region
  $region6: #{mid_block_forward.20} parent=0 // pred_check
    _
  $region7: #{mid_block_forward.20} parent=0 // pred_check_branch
    %11 = sbr.rel (0) target = $region9
  $region8: #{mid_block_forward.20} parent=0 // pred_region
    _
  $region9: #{mid_block_forward.20} parent=0 // pred_fallthru
    _
  // Predicated region
  $region10: #{mid_block_forward.20} parent=0 // pred_check
    _
  $region11: #{mid_block_forward.20} parent=0 // pred_check_branch
    %13 = sbr.rel (0) target = $region13
  $region12: #{mid_block_forward.20} parent=0 // pred_region
    _
  $region13: #{mid_block_forward.20} parent=0 // pred_fallthru
    _
  %p14 = scmp.eq.s32.totalorder 0, 0
  // Predicated region
  $region14: #{mid_block_forward.20} parent=0 // pred_check
    %p15 = pneg %p14
  $region15: #{mid_block_forward.20} parent=0 // pred_check_branch
    %17 = sbr.rel (%p15) target = $region17
  $region16: #{mid_block_forward.20} parent=0 // pred_region
    %18 = vst [vmem:[#allocation2] sm:$0xff] 0.0
    %19 = vst [vmem:[#allocation2 + $0x8] sm:$0xff] 0.0
    %20 = vst [vmem:[#allocation2 + $0x10] sm:$0xff] 0.0
    %21 = vst [vmem:[#allocation2 + $0x18] sm:$0xff] 0.0
    %vm22 = vcmask 523264
    %23 = vst.msk [vmem:[#allocation2 + $0x20] sm:$0xff] %vm22, 0.0
    %24 = vst [vmem:[#allocation2 + $0x28] sm:$0xff] 0.0
    %25 = vst [vmem:[#allocation2 + $0x30] sm:$0xff] 0.0
    %26 = vst [vmem:[#allocation2 + $0x38] sm:$0xff] 0.0
    %27 = vst [vmem:[#allocation2 + $0x40] sm:$0xff] 0.0
    %28 = vst.msk [vmem:[#allocation2 + $0x48] sm:$0xff] %vm22, 0.0
    %29 = vst [vmem:[#allocation2 + $0x50] sm:$0xff] 0.0
    %30 = vst [vmem:[#allocation2 + $0x58] sm:$0xff] 0.0
    %31 = vst [vmem:[#allocation2 + $0x60] sm:$0xff] 0.0
    %32 = vst [vmem:[#allocation2 + $0x68] sm:$0xff] 0.0
    %33 = vst.msk [vmem:[#allocation2 + $0x70] sm:$0xff] %vm22, 0.0
    %34 = vst [vmem:[#allocation2 + $0x78] sm:$0xff] 0.0
    %35 = vst [vmem:[#allocation2 + $0x80] sm:$0xff] 0.0
    %36 = vst [vmem:[#allocation2 + $0x88] sm:$0xff] 0.0
    %37 = vst [vmem:[#allocation2 + $0x90] sm:$0xff] 0.0
    %38 = vst.msk [vmem:[#allocation2 + $0x98] sm:$0xff] %vm22, 0.0
  $region17: #{mid_block_forward.20} parent=0 // pred_fallthru
    _
  %v39 = vld [vmem:[%s0] sm:$0xff]
  %v40 = vld [vmem:[%s0 + $0x8] sm:$0xff]
  %v41 = vld [vmem:[%s0 + $0x10] sm:$0xff]
  %v42 = vld [vmem:[%s0 + $0x18] sm:$0xff]
  %v43 = vld [vmem:[%s0 + $0x20] sm:$0xff]
  %v44 = vld [vmem:[%s0 + $0x28] sm:$0xff]
  %v45 = vld [vmem:[%s0 + $0x30] sm:$0xff]
  %v46 = vld [vmem:[%s0 + $0x38] sm:$0xff]
  %v47 = vld [vmem:[#allocation2] sm:$0xff]
  %v48 = vld [vmem:[#allocation2 + $0x8] sm:$0xff]
  %v49 = vld [vmem:[#allocation2 + $0x10] sm:$0xff]
  %v50 = vld [vmem:[#allocation2 + $0x18] sm:$0xff]
  %v51 = vld [vmem:[#allocation2 + $0x20] sm:$0xff]
  %v52 = vld [vmem:[#allocation2 + $0x28] sm:$0xff]
  %v53 = vld [vmem:[#allocation2 + $0x30] sm:$0xff]
  %v54 = vld [vmem:[#allocation2 + $0x38] sm:$0xff]
  %v55 = vld [vmem:[#allocation2 + $0x40] sm:$0xff]
  %v56 = vld [vmem:[#allocation2 + $0x48] sm:$0xff]
  %v57 = vld [vmem:[#allocation2 + $0x50] sm:$0xff]
  %v58 = vld [vmem:[#allocation2 + $0x58] sm:$0xff]
  %v59 = vld [vmem:[#allocation2 + $0x60] sm:$0xff]
  %v60 = vld [vmem:[#allocation2 + $0x68] sm:$0xff]
  %v61 = vld [vmem:[#allocation2 + $0x70] sm:$0xff]
  %v62 = vld [vmem:[#allocation2 + $0x78] sm:$0xff]
  %v63 = vld [vmem:[#allocation2 + $0x80] sm:$0xff]
  %v64 = vld [vmem:[#allocation2 + $0x88] sm:$0xff]
  %v65 = vld [vmem:[#allocation2 + $0x90] sm:$0xff]
  %v66 = vld [vmem:[#allocation2 + $0x98] sm:$0xff]
  %v67 = vld [vmem:[%s1] sm:$0xff]
  %v68 = vld [vmem:[%s1 + $0x8] sm:$0xff]
  %v69 = vld [vmem:[%s1 + $0x10] sm:$0xff]
  %v70 = vld [vmem:[%s1 + $0x18] sm:$0xff]
  %v71 = vld [vmem:[%s1 + $0x20] sm:$0xff]
  %v72 = vld [vmem:[%s1 + $0x28] sm:$0xff]
  %v73 = vld [vmem:[%s1 + $0x30] sm:$0xff]
  %v74 = vld [vmem:[%s1 + $0x38] sm:$0xff]
  %v75 = vld [vmem:[%s1 + $0x40] sm:$0xff]
  %v76 = vld [vmem:[%s1 + $0x48] sm:$0xff]
  %v77 = vld [vmem:[%s1 + $0x50] sm:$0xff]
  %v78 = vld [vmem:[%s1 + $0x58] sm:$0xff]
  %v79 = vld [vmem:[%s1 + $0x60] sm:$0xff]
  %v80 = vld [vmem:[%s1 + $0x68] sm:$0xff]
  %v81 = vld [vmem:[%s1 + $0x70] sm:$0xff]
  %v82 = vld [vmem:[%s1 + $0x78] sm:$0xff]
  %v83 = vld [vmem:[%s1 + $0x80] sm:$0xff]
  %v84 = vld [vmem:[%s1 + $0x88] sm:$0xff]
  %v85 = vld [vmem:[%s1 + $0x90] sm:$0xff]
  %v86 = vld [vmem:[%s1 + $0x98] sm:$0xff]
  %v87 = vld [vmem:[%s1 + $0xa0] sm:$0xff]
  %v88 = vld [vmem:[%s1 + $0xa8] sm:$0xff]
  %v89 = vld [vmem:[%s1 + $0xb0] sm:$0xff]
  %v90 = vld [vmem:[%s1 + $0xb8] sm:$0xff]
  %v91 = vld [vmem:[%s1 + $0xc0] sm:$0xff]
  %v92 = vld [vmem:[%s1 + $0xc8] sm:$0xff]
  %v93 = vld [vmem:[%s1 + $0xd0] sm:$0xff]
  %v94 = vld [vmem:[%s1 + $0xd8] sm:$0xff]
  %v95 = vld [vmem:[%s1 + $0xe0] sm:$0xff]
  %v96 = vld [vmem:[%s1 + $0xe8] sm:$0xff]
  %v97 = vld [vmem:[%s1 + $0xf0] sm:$0xff]
  %v98 = vld [vmem:[%s1 + $0xf8] sm:$0xff]
  %v99 = vld [vmem:[%s1 + $0x100] sm:$0xff]
  %v100 = vld [vmem:[%s1 + $0x108] sm:$0xff]
  %v101 = vld [vmem:[%s1 + $0x110] sm:$0xff]
  %v102 = vld [vmem:[%s1 + $0x118] sm:$0xff]
  %v103 = vld [vmem:[%s1 + $0x120] sm:$0xff]
  %v104 = vld [vmem:[%s1 + $0x128] sm:$0xff]
  %v105 = vld [vmem:[%s1 + $0x130] sm:$0xff]
  %v106 = vld [vmem:[%s1 + $0x138] sm:$0xff]
  %v107 = vld [vmem:[%s1 + $0x140] sm:$0xff]
  %v108 = vld [vmem:[%s1 + $0x148] sm:$0xff]
  %v109 = vld [vmem:[%s1 + $0x150] sm:$0xff]
  %v110 = vld [vmem:[%s1 + $0x158] sm:$0xff]
  %v111 = vld [vmem:[%s1 + $0x160] sm:$0xff]
  %v112 = vld [vmem:[%s1 + $0x168] sm:$0xff]
  %v113 = vld [vmem:[%s1 + $0x170] sm:$0xff]
  %v114 = vld [vmem:[%s1 + $0x178] sm:$0xff]
  %v115 = vld [vmem:[%s1 + $0x180] sm:$0xff]
  %v116 = vld [vmem:[%s1 + $0x188] sm:$0xff]
  %v117 = vld [vmem:[%s1 + $0x190] sm:$0xff]
  %v118 = vld [vmem:[%s1 + $0x198] sm:$0xff]
  %v119 = vld [vmem:[%s1 + $0x1a0] sm:$0xff]
  %v120 = vld [vmem:[%s1 + $0x1a8] sm:$0xff]
  %v121 = vld [vmem:[%s1 + $0x1b0] sm:$0xff]
  %v122 = vld [vmem:[%s1 + $0x1b8] sm:$0xff]
  %v123 = vld [vmem:[%s1 + $0x1c0] sm:$0xff]
  %v124 = vld [vmem:[%s1 + $0x1c8] sm:$0xff]
  %v125 = vld [vmem:[%s1 + $0x1d0] sm:$0xff]
  %v126 = vld [vmem:[%s1 + $0x1d8] sm:$0xff]
  %v127 = vld [vmem:[%s1 + $0x1e0] sm:$0xff]
  %v128 = vld [vmem:[%s1 + $0x1e8] sm:$0xff]
  %v129 = vld [vmem:[%s1 + $0x1f0] sm:$0xff]
  %v130 = vld [vmem:[%s1 + $0x1f8] sm:$0xff]
  %v131 = vld [vmem:[%s1 + $0x200] sm:$0xff]
  %v132 = vld [vmem:[%s1 + $0x208] sm:$0xff]
  %v133 = vld [vmem:[%s1 + $0x210] sm:$0xff]
  %v134 = vld [vmem:[%s1 + $0x218] sm:$0xff]
  %v135 = vld [vmem:[%s1 + $0x220] sm:$0xff]
  %v136 = vld [vmem:[%s1 + $0x228] sm:$0xff]
  %v137 = vld [vmem:[%s1 + $0x230] sm:$0xff]
  %v138 = vld [vmem:[%s1 + $0x238] sm:$0xff]
  %v139 = vld [vmem:[%s1 + $0x240] sm:$0xff]
  %v140 = vld [vmem:[%s1 + $0x248] sm:$0xff]
  %v141 = vld [vmem:[%s1 + $0x250] sm:$0xff]
  %v142 = vld [vmem:[%s1 + $0x258] sm:$0xff]
  %v143 = vld [vmem:[%s1 + $0x260] sm:$0xff]
  %v144 = vld [vmem:[%s1 + $0x268] sm:$0xff]
  %v145 = vld [vmem:[%s1 + $0x270] sm:$0xff]
  %v146 = vld [vmem:[%s1 + $0x278] sm:$0xff]
  %v147 = vld [vmem:[%s1 + $0x280] sm:$0xff]
  %v148 = vld [vmem:[%s1 + $0x288] sm:$0xff]
  %v149 = vld [vmem:[%s1 + $0x290] sm:$0xff]
  %v150 = vld [vmem:[%s1 + $0x298] sm:$0xff]
  %v151 = vld [vmem:[%s1 + $0x2a0] sm:$0xff]
  %v152 = vld [vmem:[%s1 + $0x2a8] sm:$0xff]
  %v153 = vld [vmem:[%s1 + $0x2b0] sm:$0xff]
  %v154 = vld [vmem:[%s1 + $0x2b8] sm:$0xff]
  %v155 = vld [vmem:[%s1 + $0x2c0] sm:$0xff]
  %v156 = vld [vmem:[%s1 + $0x2c8] sm:$0xff]
  %v157 = vld [vmem:[%s1 + $0x2d0] sm:$0xff]
  %v158 = vld [vmem:[%s1 + $0x2d8] sm:$0xff]
  %v159 = vld [vmem:[%s1 + $0x2e0] sm:$0xff]
  %v160 = vld [vmem:[%s1 + $0x2e8] sm:$0xff]
  %v161 = vld [vmem:[%s1 + $0x2f0] sm:$0xff]
  %v162 = vld [vmem:[%s1 + $0x2f8] sm:$0xff]
  %v163 = vld [vmem:[%s1 + $0x300] sm:$0xff]
  %v164 = vld [vmem:[%s1 + $0x308] sm:$0xff]
  %v165 = vld [vmem:[%s1 + $0x310] sm:$0xff]
  %v166 = vld [vmem:[%s1 + $0x318] sm:$0xff]
  %v167 = vld [vmem:[%s1 + $0x320] sm:$0xff]
  %v168 = vld [vmem:[%s1 + $0x328] sm:$0xff]
  %v169 = vld [vmem:[%s1 + $0x330] sm:$0xff]
  %v170 = vld [vmem:[%s1 + $0x338] sm:$0xff]
  %v171 = vld [vmem:[%s1 + $0x340] sm:$0xff]
  %v172 = vld [vmem:[%s1 + $0x348] sm:$0xff]
  %v173 = vld [vmem:[%s1 + $0x350] sm:$0xff]
  %v174 = vld [vmem:[%s1 + $0x358] sm:$0xff]
  %v175 = vld [vmem:[%s1 + $0x360] sm:$0xff]
  %v176 = vld [vmem:[%s1 + $0x368] sm:$0xff]
  %v177 = vld [vmem:[%s1 + $0x370] sm:$0xff]
  %v178 = vld [vmem:[%s1 + $0x378] sm:$0xff]
  %v179 = vld [vmem:[%s1 + $0x380] sm:$0xff]
  %v180 = vld [vmem:[%s1 + $0x388] sm:$0xff]
  %v181 = vld [vmem:[%s1 + $0x390] sm:$0xff]
  %v182 = vld [vmem:[%s1 + $0x398] sm:$0xff]
  %v183 = vld [vmem:[%s1 + $0x3a0] sm:$0xff]
  %v184 = vld [vmem:[%s1 + $0x3a8] sm:$0xff]
  %v185 = vld [vmem:[%s1 + $0x3b0] sm:$0xff]
  %v186 = vld [vmem:[%s1 + $0x3b8] sm:$0xff]
  %vm187 = vcmask 523264
  %v189 = vsel %vm187, %v40, 0
  %v192 = vsel %vm187, %v42, 0
  %v195 = vsel %vm187, %v44, 0
  %v198 = vsel %vm187, %v46, 0
  %200 = vmatprep.subr.mxu0 %v68
  %201 = vmatpush1.msra.mxu0 %v67
  %202 = vmatprep.subr.mxu0 %v73
  %203 = vmatpush1.msra.mxu0 %v72
  %204 = vmatprep.subr.mxu0 %v78
  %205 = vmatpush1.msra.mxu0 %v77
  %206 = vmatprep.subr.mxu0 %v83
  %207 = vmatpush1.msra.mxu0 %v82
  %208 = vmatprep.subr.mxu0 %v88
  %209 = vmatpush1.msra.mxu0 %v87
  %210 = vmatprep.subr.mxu0 %v93
  %211 = vmatpush1.msra.mxu0 %v92
  %212 = vmatprep.subr.mxu0 %v98
  %213 = vmatpush1.msra.mxu0 %v97
  %214 = vmatprep.subr.mxu0 %v103
  %215 = vmatpush1.msra.mxu0 %v102
  %216 = vmatprep.subr.mxu0 %v108
  %217 = vmatpush1.msra.mxu0 %v107
  %218 = vmatprep.subr.mxu0 %v113
  %219 = vmatpush1.msra.mxu0 %v112
  %220 = vmatprep.subr.mxu0 %v118
  %221 = vmatpush1.msra.mxu0 %v117
  %222 = vmatprep.subr.mxu0 %v123
  %223 = vmatpush1.msra.mxu0 %v122
  %224 = vmatprep.subr.mxu0 %v128
  %225 = vmatpush1.msra.mxu0 %v127
  %226 = vmatprep.subr.mxu0 %v133
  %227 = vmatpush1.msra.mxu0 %v132
  %228 = vmatprep.subr.mxu0 %v138
  %229 = vmatpush1.msra.mxu0 %v137
  %230 = vmatprep.subr.mxu0 %v143
  %231 = vmatpush1.msra.mxu0 %v142
  %232 = vmatprep.subr.mxu0 %v148
  %233 = vmatpush1.msra.mxu0 %v147
  %234 = vmatprep.subr.mxu0 %v153
  %235 = vmatpush1.msra.mxu0 %v152
  %236 = vmatprep.subr.mxu0 %v158
  %237 = vmatpush1.msra.mxu0 %v157
  %238 = vmatprep.subr.mxu0 %v163
  %239 = vmatpush1.msra.mxu0 %v162
  %240 = vmatprep.subr.mxu0 %v168
  %241 = vmatpush1.msra.mxu0 %v167
  %242 = vmatprep.subr.mxu0 %v173
  %243 = vmatpush1.msra.mxu0 %v172
  %244 = vmatprep.subr.mxu0 %v178
  %245 = vmatpush1.msra.mxu0 %v177
  %246 = vmatprep.subr.mxu0 %v183
  %247 = vmatpush1.msra.mxu0 %v182
  %248 = vmatprep.subr.mxu0 0.0
  %249 = vmatpush1.msra.mxu0 0.0
  %250 = vmatprep.subr.mxu0 0.0
  %251 = vmatpush1.msra.mxu0 0.0
  %252 = vmatprep.subr.mxu0 0.0
  %253 = vmatpush1.msra.mxu0 0.0
  %254 = vmatprep.subr.mxu0 0.0
  %255 = vmatpush1.msra.mxu0 0.0
  %256 = vmatprep.subr.mxu0 0.0
  %257 = vmatpush1.msra.mxu0 0.0
  %258 = vmatprep.subr.mxu0 0.0
  %259 = vmatpush1.msra.mxu0 0.0
  %260 = vmatprep.subr.mxu0 0.0
  %261 = vmatpush1.msra.mxu0 0.0
  %262 = vmatprep.subr.mxu0 0.0
  %263 = vmatpush1.msra.mxu0 0.0
  %264 = vmatprep.mubr.f32.mxu0 %v189
  %265 = vmatmul.mubr.f32.gmra.mrb[0].mxu0 %v39
  %v266 = vpop.f32.mrb[0].mxu0
  %v267 = vadd.f32 0.0, %v266
  %v268 = vpop.f32.mrb[0].mxu0
  %v269 = vadd.f32 0.0, %v268
  %270 = vmatprep.mubr.f32.mxu0 %v192
  %271 = vmatmul.mubr.f32.gmra.mrb[0].mxu0 %v41
  %v272 = vpop.f32.mrb[0].mxu0
  %v273 = vadd.f32 0.0, %v272
  %v274 = vpop.f32.mrb[0].mxu0
  %v275 = vadd.f32 0.0, %v274
  %276 = vmatprep.mubr.f32.mxu0 %v195
  %277 = vmatmul.mubr.f32.gmra.mrb[0].mxu0 %v43
  %v278 = vpop.f32.mrb[0].mxu0
  %v279 = vadd.f32 0.0, %v278
  %v280 = vpop.f32.mrb[0].mxu0
  %v281 = vadd.f32 0.0, %v280
  %282 = vmatprep.mubr.f32.mxu0 %v198
  %283 = vmatmul.mubr.f32.gmra.mrb[0].mxu0 %v45
  %v284 = vpop.f32.mrb[0].mxu0
  %v285 = vadd.f32 0.0, %v284
  %v286 = vpop.f32.mrb[0].mxu0
  %v287 = vadd.f32 0.0, %v286
  %288 = vdwg.mxu0
  %289 = vmatprep.subr.mxu0 %v70
  %290 = vmatpush1.msra.mxu0 %v69
  %291 = vmatprep.subr.mxu0 %v75
  %292 = vmatpush1.msra.mxu0 %v74
  %293 = vmatprep.subr.mxu0 %v80
  %294 = vmatpush1.msra.mxu0 %v79
  %295 = vmatprep.subr.mxu0 %v85
  %296 = vmatpush1.msra.mxu0 %v84
  %297 = vmatprep.subr.mxu0 %v90
  %298 = vmatpush1.msra.mxu0 %v89
  %299 = vmatprep.subr.mxu0 %v95
  %300 = vmatpush1.msra.mxu0 %v94
  %301 = vmatprep.subr.mxu0 %v100
  %302 = vmatpush1.msra.mxu0 %v99
  %303 = vmatprep.subr.mxu0 %v105
  %304 = vmatpush1.msra.mxu0 %v104
  %305 = vmatprep.subr.mxu0 %v110
  %306 = vmatpush1.msra.mxu0 %v109
  %307 = vmatprep.subr.mxu0 %v115
  %308 = vmatpush1.msra.mxu0 %v114
  %309 = vmatprep.subr.mxu0 %v120
  %310 = vmatpush1.msra.mxu0 %v119
  %311 = vmatprep.subr.mxu0 %v125
  %312 = vmatpush1.msra.mxu0 %v124
  %313 = vmatprep.subr.mxu0 %v130
  %314 = vmatpush1.msra.mxu0 %v129
  %315 = vmatprep.subr.mxu0 %v135
  %316 = vmatpush1.msra.mxu0 %v134
  %317 = vmatprep.subr.mxu0 %v140
  %318 = vmatpush1.msra.mxu0 %v139
  %319 = vmatprep.subr.mxu0 %v145
  %320 = vmatpush1.msra.mxu0 %v144
  %321 = vmatprep.subr.mxu0 %v150
  %322 = vmatpush1.msra.mxu0 %v149
  %323 = vmatprep.subr.mxu0 %v155
  %324 = vmatpush1.msra.mxu0 %v154
  %325 = vmatprep.subr.mxu0 %v160
  %326 = vmatpush1.msra.mxu0 %v159
  %327 = vmatprep.subr.mxu0 %v165
  %328 = vmatpush1.msra.mxu0 %v164
  %329 = vmatprep.subr.mxu0 %v170
  %330 = vmatpush1.msra.mxu0 %v169
  %331 = vmatprep.subr.mxu0 %v175
  %332 = vmatpush1.msra.mxu0 %v174
  %333 = vmatprep.subr.mxu0 %v180
  %334 = vmatpush1.msra.mxu0 %v179
  %335 = vmatprep.subr.mxu0 %v185
  %336 = vmatpush1.msra.mxu0 %v184
  %337 = vmatprep.subr.mxu0 0.0
  %338 = vmatpush1.msra.mxu0 0.0
  %339 = vmatprep.subr.mxu0 0.0
  %340 = vmatpush1.msra.mxu0 0.0
  %341 = vmatprep.subr.mxu0 0.0
  %342 = vmatpush1.msra.mxu0 0.0
  %343 = vmatprep.subr.mxu0 0.0
  %344 = vmatpush1.msra.mxu0 0.0
  %345 = vmatprep.subr.mxu0 0.0
  %346 = vmatpush1.msra.mxu0 0.0
  %347 = vmatprep.subr.mxu0 0.0
  %348 = vmatpush1.msra.mxu0 0.0
  %349 = vmatprep.subr.mxu0 0.0
  %350 = vmatpush1.msra.mxu0 0.0
  %351 = vmatprep.subr.mxu0 0.0
  %352 = vmatpush1.msra.mxu0 0.0
  %353 = vmatprep.mubr.f32.mxu0 %v189
  %354 = vmatmul.mubr.f32.gmra.mrb[0].mxu0 %v39
  %v355 = vpop.f32.mrb[0].mxu0
  %v356 = vadd.f32 0.0, %v355
  %v357 = vpop.f32.mrb[0].mxu0
  %v358 = vadd.f32 0.0, %v357
  %359 = vmatprep.mubr.f32.mxu0 %v192
  %360 = vmatmul.mubr.f32.gmra.mrb[0].mxu0 %v41
  %v361 = vpop.f32.mrb[0].mxu0
  %v362 = vadd.f32 0.0, %v361
  %v363 = vpop.f32.mrb[0].mxu0
  %v364 = vadd.f32 0.0, %v363
  %365 = vmatprep.mubr.f32.mxu0 %v195
  %366 = vmatmul.mubr.f32.gmra.mrb[0].mxu0 %v43
  %v367 = vpop.f32.mrb[0].mxu0
  %v368 = vadd.f32 0.0, %v367
  %v369 = vpop.f32.mrb[0].mxu0
  %v370 = vadd.f32 0.0, %v369
  %371 = vmatprep.mubr.f32.mxu0 %v198
  %372 = vmatmul.mubr.f32.gmra.mrb[0].mxu0 %v45
  %v373 = vpop.f32.mrb[0].mxu0
  %v374 = vadd.f32 0.0, %v373
  %v375 = vpop.f32.mrb[0].mxu0
  %v376 = vadd.f32 0.0, %v375
  %377 = vdwg.mxu0
  %378 = vmatprep.subr.mxu0 0.0
  %379 = vmatpush1.msra.mxu0 %v71
  %380 = vmatprep.subr.mxu0 0.0
  %381 = vmatpush1.msra.mxu0 %v76
  %382 = vmatprep.subr.mxu0 0.0
  %383 = vmatpush1.msra.mxu0 %v81
  %384 = vmatprep.subr.mxu0 0.0
  %385 = vmatpush1.msra.mxu0 %v86
  %386 = vmatprep.subr.mxu0 0.0
  %387 = vmatpush1.msra.mxu0 %v91
  %388 = vmatprep.subr.mxu0 0.0
  %389 = vmatpush1.msra.mxu0 %v96
  %390 = vmatprep.subr.mxu0 0.0
  %391 = vmatpush1.msra.mxu0 %v101
  %392 = vmatprep.subr.mxu0 0.0
  %393 = vmatpush1.msra.mxu0 %v106
  %394 = vmatprep.subr.mxu0 0.0
  %395 = vmatpush1.msra.mxu0 %v111
  %396 = vmatprep.subr.mxu0 0.0
  %397 = vmatpush1.msra.mxu0 %v116
  %398 = vmatprep.subr.mxu0 0.0
  %399 = vmatpush1.msra.mxu0 %v121
  %400 = vmatprep.subr.mxu0 0.0
  %401 = vmatpush1.msra.mxu0 %v126
  %402 = vmatprep.subr.mxu0 0.0
  %403 = vmatpush1.msra.mxu0 %v131
  %404 = vmatprep.subr.mxu0 0.0
  %405 = vmatpush1.msra.mxu0 %v136
  %406 = vmatprep.subr.mxu0 0.0
  %407 = vmatpush1.msra.mxu0 %v141
  %408 = vmatprep.subr.mxu0 0.0
  %409 = vmatpush1.msra.mxu0 %v146
  %410 = vmatprep.subr.mxu0 0.0
  %411 = vmatpush1.msra.mxu0 %v151
  %412 = vmatprep.subr.mxu0 0.0
  %413 = vmatpush1.msra.mxu0 %v156
  %414 = vmatprep.subr.mxu0 0.0
  %415 = vmatpush1.msra.mxu0 %v161
  %416 = vmatprep.subr.mxu0 0.0
  %417 = vmatpush1.msra.mxu0 %v166
  %418 = vmatprep.subr.mxu0 0.0
  %419 = vmatpush1.msra.mxu0 %v171
  %420 = vmatprep.subr.mxu0 0.0
  %421 = vmatpush1.msra.mxu0 %v176
  %422 = vmatprep.subr.mxu0 0.0
  %423 = vmatpush1.msra.mxu0 %v181
  %424 = vmatprep.subr.mxu0 0.0
  %425 = vmatpush1.msra.mxu0 %v186
  %426 = vmatprep.subr.mxu0 0.0
  %427 = vmatpush1.msra.mxu0 0.0
  %428 = vmatprep.subr.mxu0 0.0
  %429 = vmatpush1.msra.mxu0 0.0
  %430 = vmatprep.subr.mxu0 0.0
  %431 = vmatpush1.msra.mxu0 0.0
  %432 = vmatprep.subr.mxu0 0.0
  %433 = vmatpush1.msra.mxu0 0.0
  %434 = vmatprep.subr.mxu0 0.0
  %435 = vmatpush1.msra.mxu0 0.0
  %436 = vmatprep.subr.mxu0 0.0
  %437 = vmatpush1.msra.mxu0 0.0
  %438 = vmatprep.subr.mxu0 0.0
  %439 = vmatpush1.msra.mxu0 0.0
  %440 = vmatprep.subr.mxu0 0.0
  %441 = vmatpush1.msra.mxu0 0.0
  %442 = vmatprep.mubr.f32.mxu0 %v189
  %443 = vmatmul.mubr.f32.gmra.mrb[0].mxu0 %v39
  %v444 = vpop.f32.mrb[0].mxu0
  %v445 = vadd.f32 0.0, %v444
  %v446 = vpop.f32.mrb[0].mxu0
  %447 = vmatprep.mubr.f32.mxu0 %v192
  %448 = vmatmul.mubr.f32.gmra.mrb[0].mxu0 %v41
  %v449 = vpop.f32.mrb[0].mxu0
  %v450 = vadd.f32 0.0, %v449
  %v451 = vpop.f32.mrb[0].mxu0
  %452 = vmatprep.mubr.f32.mxu0 %v195
  %453 = vmatmul.mubr.f32.gmra.mrb[0].mxu0 %v43
  %v454 = vpop.f32.mrb[0].mxu0
  %v455 = vadd.f32 0.0, %v454
  %v456 = vpop.f32.mrb[0].mxu0
  %457 = vmatprep.mubr.f32.mxu0 %v198
  %458 = vmatmul.mubr.f32.gmra.mrb[0].mxu0 %v45
  %v459 = vpop.f32.mrb[0].mxu0
  %v460 = vadd.f32 0.0, %v459
  %v461 = vpop.f32.mrb[0].mxu0
  %462 = vdwg.mxu0
  %v463 = vadd.f32 %v47, %v267
  %v464 = vadd.f32 %v48, %v269
  %v465 = vadd.f32 %v49, %v356
  %v466 = vadd.f32 %v50, %v358
  %v467 = vadd.f32 %v51, %v445
  %v468 = vadd.f32 %v52, %v273
  %v469 = vadd.f32 %v53, %v275
  %v470 = vadd.f32 %v54, %v362
  %v471 = vadd.f32 %v55, %v364
  %v472 = vadd.f32 %v56, %v450
  %v473 = vadd.f32 %v57, %v279
  %v474 = vadd.f32 %v58, %v281
  %v475 = vadd.f32 %v59, %v368
  %v476 = vadd.f32 %v60, %v370
  %v477 = vadd.f32 %v61, %v455
  %v478 = vadd.f32 %v62, %v285
  %v479 = vadd.f32 %v63, %v287
  %v480 = vadd.f32 %v64, %v374
  %v481 = vadd.f32 %v65, %v376
  %v482 = vadd.f32 %v66, %v460
  %483 = vst [vmem:[#allocation2] sm:$0xff] %v463
  %484 = vst [vmem:[#allocation2 + $0x8] sm:$0xff] %v464
  %485 = vst [vmem:[#allocation2 + $0x10] sm:$0xff] %v465
  %486 = vst [vmem:[#allocation2 + $0x18] sm:$0xff] %v466
  %487 = vst.msk [vmem:[#allocation2 + $0x20] sm:$0xff] %vm187, %v467
  %488 = vst [vmem:[#allocation2 + $0x28] sm:$0xff] %v468
  %489 = vst [vmem:[#allocation2 + $0x30] sm:$0xff] %v469
  %490 = vst [vmem:[#allocation2 + $0x38] sm:$0xff] %v470
  %491 = vst [vmem:[#allocation2 + $0x40] sm:$0xff] %v471
  %492 = vst.msk [vmem:[#allocation2 + $0x48] sm:$0xff] %vm187, %v472
  %493 = vst [vmem:[#allocation2 + $0x50] sm:$0xff] %v473
  %494 = vst [vmem:[#allocation2 + $0x58] sm:$0xff] %v474
  %495 = vst [vmem:[#allocation2 + $0x60] sm:$0xff] %v475
  %496 = vst [vmem:[#allocation2 + $0x68] sm:$0xff] %v476
  %497 = vst.msk [vmem:[#allocation2 + $0x70] sm:$0xff] %vm187, %v477
  %498 = vst [vmem:[#allocation2 + $0x78] sm:$0xff] %v478
  %499 = vst [vmem:[#allocation2 + $0x80] sm:$0xff] %v479
  %500 = vst [vmem:[#allocation2 + $0x88] sm:$0xff] %v480
  %501 = vst [vmem:[#allocation2 + $0x90] sm:$0xff] %v481
  %502 = vst.msk [vmem:[#allocation2 + $0x98] sm:$0xff] %vm187, %v482
  // Predicated region
  $region18: #{mid_block_forward.20} parent=0 // pred_check
    %p503 = pneg %p14
  $region19: #{mid_block_forward.20} parent=0 // pred_check_branch
    %505 = sbr.rel (%p503) target = $region21
  $region20: #{mid_block_forward.20} parent=0 // pred_region
    %v506 = vld [vmem:[#allocation2] sm:$0xff]
    %v507 = vld [vmem:[#allocation2 + $0x8] sm:$0xff]
    %v508 = vld [vmem:[#allocation2 + $0x10] sm:$0xff]
    %v509 = vld [vmem:[#allocation2 + $0x18] sm:$0xff]
    %v510 = vld [vmem:[#allocation2 + $0x20] sm:$0xff]
    %v511 = vld [vmem:[#allocation2 + $0x28] sm:$0xff]
    %v512 = vld [vmem:[#allocation2 + $0x30] sm:$0xff]
    %v513 = vld [vmem:[#allocation2 + $0x38] sm:$0xff]
    %v514 = vld [vmem:[#allocation2 + $0x40] sm:$0xff]
    %v515 = vld [vmem:[#allocation2 + $0x48] sm:$0xff]
    %v516 = vld [vmem:[#allocation2 + $0x50] sm:$0xff]
    %v517 = vld [vmem:[#allocation2 + $0x58] sm:$0xff]
    %v518 = vld [vmem:[#allocation2 + $0x60] sm:$0xff]
    %v519 = vld [vmem:[#allocation2 + $0x68] sm:$0xff]
    %v520 = vld [vmem:[#allocation2 + $0x70] sm:$0xff]
    %v521 = vld [vmem:[#allocation2 + $0x78] sm:$0xff]
    %v522 = vld [vmem:[#allocation2 + $0x80] sm:$0xff]
    %v523 = vld [vmem:[#allocation2 + $0x88] sm:$0xff]
    %v524 = vld [vmem:[#allocation2 + $0x90] sm:$0xff]
    %v525 = vld [vmem:[#allocation2 + $0x98] sm:$0xff]
    %v526 = vld [vmem:[%s2] sm:$0x1f]
    %v528 = vlaneseq
    %v529 = vshrl.u32 %v528, 7
    %v530 = vsub.s32 0, %v529
    %v531 = vrot.slane %v526, %v530
    %v532 = vlaneseq
    %v533 = vshrl.u32 %v532, 7
    %v534 = vsub.s32 1, %v533
    %v535 = vrot.slane %v526, %v534
    %v536 = vlaneseq
    %v537 = vshrl.u32 %v536, 7
    %v538 = vsub.s32 2, %v537
    %v539 = vrot.slane %v526, %v538
    %v540 = vlaneseq
    %v541 = vshrl.u32 %v540, 7
    %v542 = vsub.s32 3, %v541
    %v543 = vrot.slane %v526, %v542
    %v544 = vlaneseq
    %v545 = vshrl.u32 %v544, 7
    %v546 = vsub.s32 4, %v545
    %v547 = vrot.slane %v526, %v546
    %v553 = vadd.f32 %v506, %v531
    %v554 = vadd.f32 %v507, %v535
    %v555 = vadd.f32 %v508, %v539
    %v556 = vadd.f32 %v509, %v543
    %v557 = vadd.f32 %v510, %v547
    %v558 = vadd.f32 %v511, %v531
    %v559 = vadd.f32 %v512, %v535
    %v560 = vadd.f32 %v513, %v539
    %v561 = vadd.f32 %v514, %v543
    %v562 = vadd.f32 %v515, %v547
    %v563 = vadd.f32 %v516, %v531
    %v564 = vadd.f32 %v517, %v535
    %v565 = vadd.f32 %v518, %v539
    %v566 = vadd.f32 %v519, %v543
    %v567 = vadd.f32 %v520, %v547
    %v568 = vadd.f32 %v521, %v531
    %v569 = vadd.f32 %v522, %v535
    %v570 = vadd.f32 %v523, %v539
    %v571 = vadd.f32 %v524, %v543
    %v572 = vadd.f32 %v525, %v547
    %573 = vst [vmem:[%s3] sm:$0xff] %v553
    %574 = vst [vmem:[%s3 + $0x8] sm:$0xff] %v554
    %575 = vst [vmem:[%s3 + $0x10] sm:$0xff] %v555
    %576 = vst [vmem:[%s3 + $0x18] sm:$0xff] %v556
    %577 = vst.msk [vmem:[%s3 + $0x20] sm:$0xff] %vm187, %v557
    %578 = vst [vmem:[%s3 + $0x28] sm:$0xff] %v558
    %579 = vst [vmem:[%s3 + $0x30] sm:$0xff] %v559
    %580 = vst [vmem:[%s3 + $0x38] sm:$0xff] %v560
    %581 = vst [vmem:[%s3 + $0x40] sm:$0xff] %v561
    %582 = vst.msk [vmem:[%s3 + $0x48] sm:$0xff] %vm187, %v562
    %583 = vst [vmem:[%s3 + $0x50] sm:$0xff] %v563
    %584 = vst [vmem:[%s3 + $0x58] sm:$0xff] %v564
    %585 = vst [vmem:[%s3 + $0x60] sm:$0xff] %v565
    %586 = vst [vmem:[%s3 + $0x68] sm:$0xff] %v566
    %587 = vst.msk [vmem:[%s3 + $0x70] sm:$0xff] %vm187, %v567
    %588 = vst [vmem:[%s3 + $0x78] sm:$0xff] %v568
    %589 = vst [vmem:[%s3 + $0x80] sm:$0xff] %v569
    %590 = vst [vmem:[%s3 + $0x88] sm:$0xff] %v570
    %591 = vst [vmem:[%s3 + $0x90] sm:$0xff] %v571
    %592 = vst.msk [vmem:[%s3 + $0x98] sm:$0xff] %vm187, %v572
  $region21: #{mid_block_forward.20} parent=0 // pred_fallthru
    _
  // Predicated region
  $region22: #{mid_block_forward.20} parent=0 // pred_check
    _
  $region23: #{mid_block_forward.20} parent=0 // pred_check_branch
    %594 = sbr.rel (0) target = $region25
  $region24: #{mid_block_forward.20} parent=0 // pred_region
    _
  $region25: #{mid_block_forward.20} parent=0 // pred_fallthru
    _
  // Predicated region
  $region26: #{mid_block_forward.20} parent=0 // pred_check
    _
  $region27: #{mid_block_forward.20} parent=0 // pred_check_branch
    %596 = sbr.rel (0) target = $region29
  $region28: #{mid_block_forward.20} parent=0 // pred_region
    _
  $region29: #{mid_block_forward.20} parent=0 // pred_fallthru
    _

// kernel: mid_block_forward.21
$region0: #{mid_block_forward.21}
  #allocation0 [shape = 'u32[]', space=smem, size = 0x4, offset = 0x4, fixed_abs, tag = 'smem constant byte address 0x4 - core index']
  #allocation1 [shape = 'u32[144,128]{1,0:T(1,128)}', space=vmem, size = 0x12000, scoped, tag = 'internal scratch']
  %s0 = inlined_call_operand.vmem [shape: f32[2,4,16,48], index: 0, kind: input, shape index: {}]
  %s1 = inlined_call_operand.vmem [shape: f32[2,4,16,48], index: 1, kind: input, shape index: {}]
  %s2 = inlined_call_operand.vmem [shape: f32[2,4,16,48], index: 2, kind: input, shape index: {}]
  %s3 = inlined_call_operand.vmem [shape: f32[2,4,16,48], index: 3, kind: output, shape index: {}]
  %s4 = sld [smem:[#allocation0]]
  $region45: #{mid_block_forward.21} parent=0
    _
  %s6 = ssub.s32 1, %s4
  %s7 = scalar_select 0, %s6, %s4
  loop: start=0, step=1, limit=4
  $region2: #{mid_block_forward.21} parent=0 // loop_pre_header
    _
  $region3: #{mid_block_forward.21} parent=0 // loop_header
    %s9 = sphi 0, %s13
    %p10 = scmp.ge.s32.totalorder %s9, 4
    %s19 = sphi 0, %s21
    %s22 = sphi 0, %s19
    %s23 = sphi 0, %s22
    %s39 = sphi 0, %s23
    %s45 = sphi 0, %s47
    %s48 = sphi 0, %s45
    %s49 = sphi 0, %s48
    %s65 = sphi 0, %s49
    %s71 = sphi 0, %s73
    %s74 = sphi 0, %s71
    %s75 = sphi 0, %s74
    %s91 = sphi 0, %s75
    %s97 = sphi 0, %s99
    %s100 = sphi 0, %s97
    %s101 = sphi 0, %s100
    %s117 = sphi 0, %s101
  $region4: #{mid_block_forward.21} parent=0 // loop_header_branch
    %12 = sbr.rel (%p10) target = $region8
  $region5: #{mid_block_forward.21} parent=0 // loop_body
    %s14 = ssub.s32 %s9, 1
    %s15 = ssub.s32 %s9, 2
    %s16 = sadd.s32 %s9, 1
    %s17 = ssub.s32 %s9, %s16
    %p18 = scmp.eq.s32.totalorder %s17, 0
    %s20 = sadd.s32 %s19, 1
    %s21 = scalar_select %p18, %s19, %s20
    %p24 = pneg %p18
    %p25 = scmp.eq.s32.totalorder %s9, 1
    %p26 = por %p24, %p25
    %p27 = scmp.ne.s32.totalorder %s19, %s22
    %p28 = scmp.eq.s32.totalorder %s9, 0
    %p29 = por %p27, %p28
    %p30 = scmp.ne.s32.totalorder %s19, %s22
    %p31 = scmp.eq.s32.totalorder %s14, 1
    %p32 = por %p30, %p31
    %p33 = scmp.ne.s32.totalorder %s22, %s23
    %p34 = scmp.eq.s32.totalorder %s14, 0
    %p35 = por %p33, %p34
    %p36 = scmp.ne.s32.totalorder %s22, %s23
    %p37 = scmp.eq.s32.totalorder %s15, 1
    %p38 = por %p36, %p37
    %p40 = scmp.ne.s32.totalorder %s23, %s39
    %p41 = scmp.eq.s32.totalorder %s15, 0
    %p42 = por %p40, %p41
    %s43 = ssub.s32 %s9, %s16
    %p44 = scmp.eq.s32.totalorder %s43, 0
    %s46 = sadd.s32 %s45, 1
    %s47 = scalar_select %p44, %s45, %s46
    %p50 = pneg %p44
    %p51 = scmp.eq.s32.totalorder %s9, 1
    %p52 = por %p50, %p51
    %p53 = scmp.ne.s32.totalorder %s45, %s48
    %p54 = scmp.eq.s32.totalorder %s9, 0
    %p55 = por %p53, %p54
    %p56 = scmp.ne.s32.totalorder %s45, %s48
    %p57 = scmp.eq.s32.totalorder %s14, 1
    %p58 = por %p56, %p57
    %p59 = scmp.ne.s32.totalorder %s48, %s49
    %p60 = scmp.eq.s32.totalorder %s14, 0
    %p61 = por %p59, %p60
    %p62 = scmp.ne.s32.totalorder %s48, %s49
    %p63 = scmp.eq.s32.totalorder %s15, 1
    %p64 = por %p62, %p63
    %p66 = scmp.ne.s32.totalorder %s49, %s65
    %p67 = scmp.eq.s32.totalorder %s15, 0
    %p68 = por %p66, %p67
    %s69 = ssub.s32 %s9, %s16
    %p70 = scmp.eq.s32.totalorder %s69, 0
    %s72 = sadd.s32 %s71, 1
    %s73 = scalar_select %p70, %s71, %s72
    %p76 = pneg %p70
    %p77 = scmp.eq.s32.totalorder %s9, 1
    %p78 = por %p76, %p77
    %p79 = scmp.ne.s32.totalorder %s71, %s74
    %p80 = scmp.eq.s32.totalorder %s9, 0
    %p81 = por %p79, %p80
    %p82 = scmp.ne.s32.totalorder %s71, %s74
    %p83 = scmp.eq.s32.totalorder %s14, 1
    %p84 = por %p82, %p83
    %p85 = scmp.ne.s32.totalorder %s74, %s75
    %p86 = scmp.eq.s32.totalorder %s14, 0
    %p87 = por %p85, %p86
    %p88 = scmp.ne.s32.totalorder %s74, %s75
    %p89 = scmp.eq.s32.totalorder %s15, 1
    %p90 = por %p88, %p89
    %p92 = scmp.ne.s32.totalorder %s75, %s91
    %p93 = scmp.eq.s32.totalorder %s15, 0
    %p94 = por %p92, %p93
    %s95 = ssub.s32 %s9, %s16
    %p96 = scmp.eq.s32.totalorder %s95, 0
    %s98 = sadd.s32 %s97, 1
    %s99 = scalar_select %p96, %s97, %s98
    %p102 = pneg %p96
    %p103 = scmp.eq.s32.totalorder %s9, 1
    %p104 = por %p102, %p103
    %p105 = scmp.ne.s32.totalorder %s97, %s100
    %p106 = scmp.eq.s32.totalorder %s9, 0
    %p107 = por %p105, %p106
    %p108 = scmp.ne.s32.totalorder %s97, %s100
    %p109 = scmp.eq.s32.totalorder %s14, 1
    %p110 = por %p108, %p109
    %p111 = scmp.ne.s32.totalorder %s100, %s101
    %p112 = scmp.eq.s32.totalorder %s14, 0
    %p113 = por %p111, %p112
    %p114 = scmp.ne.s32.totalorder %s100, %s101
    %p115 = scmp.eq.s32.totalorder %s15, 1
    %p116 = por %p114, %p115
    %p118 = scmp.ne.s32.totalorder %s101, %s117
    %p119 = scmp.eq.s32.totalorder %s15, 0
    %p120 = por %p118, %p119
    %p121 = scmp.le.s32.totalorder 1, %s9
    %p122 = scmp.lt.s32.totalorder %s9, 3
    %p123 = pnand %p121, %p122
    %p124 = pneg %p123
    // Predicated region
    $region9: #{mid_block_forward.21} parent=5 // pred_check
      _
    $region10: #{mid_block_forward.21} parent=5 // pred_check_branch
      %126 = sbr.rel (%p123) target = $region12
    $region11: #{mid_block_forward.21} parent=5 // pred_region
      %s127 = ssub.s32 %s9, 1
    $region12: #{mid_block_forward.21} parent=5 // pred_fallthru
      _
    %p128 = scmp.lt.s32.totalorder %s9, 2
    // Predicated region
    $region13: #{mid_block_forward.21} parent=5 // pred_check
      %p129 = pneg %p128
    $region14: #{mid_block_forward.21} parent=5 // pred_check_branch
      %131 = sbr.rel (%p129) target = $region16
    $region15: #{mid_block_forward.21} parent=5 // pred_region
      // Predicated region
      $region17: #{mid_block_forward.21} parent=15 // pred_check
        %p132 = pneg %p29
      $region18: #{mid_block_forward.21} parent=15 // pred_check_branch
        %134 = sbr.rel (%p132) target = $region20
      $region19: #{mid_block_forward.21} parent=15 // pred_region
        %p135 = scmp.lt.s32.totalorder %s9, 1
        %s136 = scalar_select %p135, %s9, 1
        %s137 = smul.addr %s136, 8
        %s138 = smul.addr %s137, 8
        %s139 = scalar_lea.vmem %s0, %s138
      $region20: #{mid_block_forward.21} parent=15 // pred_fallthru
        _
      // Predicated region
      $region21: #{mid_block_forward.21} parent=15 // pred_check
        %p140 = pneg %p55
      $region22: #{mid_block_forward.21} parent=15 // pred_check_branch
        %142 = sbr.rel (%p140) target = $region24
      $region23: #{mid_block_forward.21} parent=15 // pred_region
        %p143 = scmp.lt.s32.totalorder %s9, 1
        %s144 = scalar_select %p143, %s9, 1
        %s145 = smul.addr %s144, 8
        %s146 = smul.addr %s145, 8
        %s147 = scalar_lea.vmem %s1, %s146
      $region24: #{mid_block_forward.21} parent=15 // pred_fallthru
        _
      // Predicated region
      $region25: #{mid_block_forward.21} parent=15 // pred_check
        %p148 = pneg %p81
      $region26: #{mid_block_forward.21} parent=15 // pred_check_branch
        %150 = sbr.rel (%p148) target = $region28
      $region27: #{mid_block_forward.21} parent=15 // pred_region
        %p151 = scmp.lt.s32.totalorder %s9, 1
        %s152 = scalar_select %p151, %s9, 1
        %s153 = smul.addr %s152, 8
        %s154 = smul.addr %s153, 8
        %s155 = scalar_lea.vmem %s2, %s154
      $region28: #{mid_block_forward.21} parent=15 // pred_fallthru
        _
    $region16: #{mid_block_forward.21} parent=5 // pred_fallthru
      _
    %p156 = scmp.le.s32.totalorder 1, %s9
    %p157 = scmp.lt.s32.totalorder %s9, 3
    %p158 = pnand %p156, %p157
    %p159 = pneg %p158
    // Predicated region
    $region29: #{mid_block_forward.21} parent=5 // pred_check
      _
    $region30: #{mid_block_forward.21} parent=5 // pred_check_branch
      %161 = sbr.rel (%p158) target = $region32
    $region31: #{mid_block_forward.21} parent=5 // pred_region
      %s162 = ssub.s32 %s9, 1
      %p163 = scmp.lt.s32.totalorder %s14, 1
      %s164 = scalar_select %p163, %s14, 1
      %s165 = smul.addr %s164, 8
      %s166 = smul.addr %s165, 8
      %s167 = scalar_lea.vmem %s0, %s166
      %p168 = pneg %p35
      %p169 = pneg %p32
      %p170 = scmp.lt.s32.totalorder %s14, 1
      %s171 = scalar_select %p170, %s14, 1
      %s172 = smul.addr %s171, 8
      %s173 = smul.addr %s172, 8
      %s174 = scalar_lea.vmem %s1, %s173
      %p175 = pneg %p61
      %p176 = pneg %p58
      %p177 = scmp.lt.s32.totalorder %s14, 1
      %s178 = scalar_select %p177, %s14, 1
      %s179 = smul.addr %s178, 8
      %s180 = smul.addr %s179, 8
      %s181 = scalar_lea.vmem %s2, %s180
      %p182 = pneg %p87
      %p183 = pneg %p84
      %p184 = pneg %p113
      %p185 = pneg %p110
      %p186 = scmp.lt.s32.totalorder %s14, 1
      %s187 = scalar_select %p186, %s14, 1
      %s188 = smul.addr %s187, 8
      %s189 = smul.addr %s188, 8
      %s190 = scalar_lea.vmem %s3, %s189
      %p191 = scmp.lt.s32.totalorder %s14, 1
      %s192 = scalar_select %p191, %s14, 1
      %s193 = smul.addr %s192, 8
      %s194 = smul.addr %s193, 8
      %s195 = scalar_lea.vmem %s0, %s194
      %p196 = scmp.lt.s32.totalorder %s14, 1
      %s197 = scalar_select %p196, %s14, 1
      %s198 = smul.addr %s197, 8
      %s199 = smul.addr %s198, 8
      %s200 = scalar_lea.vmem %s1, %s199
      %p201 = scmp.lt.s32.totalorder %s14, 1
      %s202 = scalar_select %p201, %s14, 1
      %s203 = smul.addr %s202, 8
      %s204 = smul.addr %s203, 8
      %s205 = scalar_lea.vmem %s2, %s204
      %p206 = scmp.lt.s32.totalorder %s14, 1
      %s207 = scalar_select %p206, %s14, 1
      %s208 = smul.addr %s207, 8
      %s209 = smul.addr %s208, 8
      %s210 = scalar_lea.vmem %s3, %s209
      %v211 = vld [vmem:[%s195] sm:$0xff]
      %v212 = vld [vmem:[%s195 + $0x8] sm:$0xff]
      %v213 = vld [vmem:[%s195 + $0x10] sm:$0xff]
      %v214 = vld [vmem:[%s195 + $0x18] sm:$0xff]
      %v215 = vld [vmem:[%s195 + $0x20] sm:$0xff]
      %v216 = vld [vmem:[%s195 + $0x28] sm:$0xff]
      %v217 = vld [vmem:[%s195 + $0x30] sm:$0xff]
      %v218 = vld [vmem:[%s195 + $0x38] sm:$0xff]
      %v219 = vmul.f32 %v211, 0.14433756
      %v220 = vmul.f32 %v212, 0.14433756
      %v221 = vmul.f32 %v213, 0.14433756
      %v222 = vmul.f32 %v214, 0.14433756
      %v223 = vmul.f32 %v215, 0.14433756
      %v224 = vmul.f32 %v216, 0.14433756
      %v225 = vmul.f32 %v217, 0.14433756
      %v226 = vmul.f32 %v218, 0.14433756
      %v227 = vld [vmem:[%s200] sm:$0xff]
      %v228 = vld [vmem:[%s200 + $0x8] sm:$0xff]
      %v229 = vld [vmem:[%s200 + $0x10] sm:$0xff]
      %v230 = vld [vmem:[%s200 + $0x18] sm:$0xff]
      %v231 = vld [vmem:[%s200 + $0x20] sm:$0xff]
      %v232 = vld [vmem:[%s200 + $0x28] sm:$0xff]
      %v233 = vld [vmem:[%s200 + $0x30] sm:$0xff]
      %v234 = vld [vmem:[%s200 + $0x38] sm:$0xff]
      %v235 = vld [vmem:[%s205] sm:$0xff]
      %v236 = vld [vmem:[%s205 + $0x8] sm:$0xff]
      %v237 = vld [vmem:[%s205 + $0x10] sm:$0xff]
      %v238 = vld [vmem:[%s205 + $0x18] sm:$0xff]
      %v239 = vld [vmem:[%s205 + $0x20] sm:$0xff]
      %v240 = vld [vmem:[%s205 + $0x28] sm:$0xff]
      %v241 = vld [vmem:[%s205 + $0x30] sm:$0xff]
      %v242 = vld [vmem:[%s205 + $0x38] sm:$0xff]
      %vm243 = vcmask 392192
      %v245 = vsel %vm243, %v219, 0
      %v248 = vsel %vm243, %v220, 0
      %v251 = vsel %vm243, %v227, 0
      %v254 = vsel %vm243, %v228, 0
      %256 = vmatprep.subr.mxu0 0.0
      %257 = vmatpush1.xpose.msra.mxu0 %v251
      %258 = vmatprep.subr.mxu0 0.0
      %259 = vmatpush1.xpose.msra.mxu0 %v254
      %260 = vmatprep.subr.mxu0 0.0
      %261 = vmatpush1.xpose.msra.mxu0 0.0
      %262 = vmatprep.subr.mxu0 0.0
      %263 = vmatpush1.xpose.msra.mxu0 0.0
      %264 = vmatprep.subr.mxu0 0.0
      %265 = vmatpush1.xpose.msra.mxu0 0.0
      %266 = vmatprep.subr.mxu0 0.0
      %267 = vmatpush1.xpose.msra.mxu0 0.0
      %268 = vmatprep.subr.mxu0 0.0
      %269 = vmatpush1.xpose.msra.mxu0 0.0
      %270 = vmatprep.subr.mxu0 0.0
      %271 = vmatpush1.xpose.msra.mxu0 0.0
      %272 = vmatprep.subr.mxu0 0.0
      %273 = vmatpush1.xpose.msra.mxu0 0.0
      %274 = vmatprep.subr.mxu0 0.0
      %275 = vmatpush1.xpose.msra.mxu0 0.0
      %276 = vmatprep.subr.mxu0 0.0
      %277 = vmatpush1.xpose.msra.mxu0 0.0
      %278 = vmatprep.subr.mxu0 0.0
      %279 = vmatpush1.xpose.msra.mxu0 0.0
      %280 = vmatprep.subr.mxu0 0.0
      %281 = vmatpush1.xpose.msra.mxu0 0.0
      %282 = vmatprep.subr.mxu0 0.0
      %283 = vmatpush1.xpose.msra.mxu0 0.0
      %284 = vmatprep.subr.mxu0 0.0
      %285 = vmatpush1.xpose.msra.mxu0 0.0
      %286 = vmatprep.subr.mxu0 0.0
      %287 = vmatpush1.xpose.msra.mxu0 0.0
      %288 = vmatprep.subr.mxu0 0.0
      %289 = vmatpush1.xpose.msra.mxu0 0.0
      %290 = vmatprep.subr.mxu0 0.0
      %291 = vmatpush1.xpose.msra.mxu0 0.0
      %292 = vmatprep.subr.mxu0 0.0
      %293 = vmatpush1.xpose.msra.mxu0 0.0
      %294 = vmatprep.subr.mxu0 0.0
      %295 = vmatpush1.xpose.msra.mxu0 0.0
      %296 = vmatprep.subr.mxu0 0.0
      %297 = vmatpush1.xpose.msra.mxu0 0.0
      %298 = vmatprep.subr.mxu0 0.0
      %299 = vmatpush1.xpose.msra.mxu0 0.0
      %300 = vmatprep.subr.mxu0 0.0
      %301 = vmatpush1.xpose.msra.mxu0 0.0
      %302 = vmatprep.subr.mxu0 0.0
      %303 = vmatpush1.xpose.msra.mxu0 0.0
      %304 = vmatprep.subr.mxu0 0.0
      %305 = vmatpush1.xpose.msra.mxu0 0.0
      %306 = vmatprep.subr.mxu0 0.0
      %307 = vmatpush1.xpose.msra.mxu0 0.0
      %308 = vmatprep.subr.mxu0 0.0
      %309 = vmatpush1.xpose.msra.mxu0 0.0
      %310 = vmatprep.subr.mxu0 0.0
      %311 = vmatpush1.xpose.msra.mxu0 0.0
      %312 = vmatprep.subr.mxu0 0.0
      %313 = vmatpush1.xpose.msra.mxu0 0.0
      %314 = vmatprep.subr.mxu0 0.0
      %315 = vmatpush1.xpose.msra.mxu0 0.0
      %316 = vmatprep.subr.mxu0 0.0
      %317 = vmatpush1.xpose.msra.mxu0 0.0
      %318 = vmatprep.subr.mxu0 0.0
      %319 = vmatpush1.xpose.msra.mxu0 0.0
      %320 = vmatprep.mubr.f32.mxu0 0.0
      %321 = vmatmul.mubr.f32.gmra.mrb[0].mxu0 %v245
      %v322 = vpop.f32.mrb[0].mxu0
      %v323 = vadd.f32 0.0, %v322
      %v324 = vpop.f32.mrb[0].mxu0
      %325 = vmatprep.mubr.f32.mxu0 0.0
      %326 = vmatmul.mubr.f32.gmra.mrb[0].mxu0 %v248
      %v327 = vpop.f32.mrb[0].mxu0
      %v328 = vadd.f32 0.0, %v327
      %v329 = vpop.f32.mrb[0].mxu0
      %330 = vdwg.mxu0
      %v332 = vsel %vm243, %v221, 0
      %v335 = vsel %vm243, %v222, 0
      %v338 = vsel %vm243, %v229, 0
      %v341 = vsel %vm243, %v230, 0
      %343 = vmatprep.subr.mxu0 0.0
      %344 = vmatpush1.xpose.msra.mxu0 %v338
      %345 = vmatprep.subr.mxu0 0.0
      %346 = vmatpush1.xpose.msra.mxu0 %v341
      %347 = vmatprep.subr.mxu0 0.0
      %348 = vmatpush1.xpose.msra.mxu0 0.0
      %349 = vmatprep.subr.mxu0 0.0
      %350 = vmatpush1.xpose.msra.mxu0 0.0
      %351 = vmatprep.subr.mxu0 0.0
      %352 = vmatpush1.xpose.msra.mxu0 0.0
      %353 = vmatprep.subr.mxu0 0.0
      %354 = vmatpush1.xpose.msra.mxu0 0.0
      %355 = vmatprep.subr.mxu0 0.0
      %356 = vmatpush1.xpose.msra.mxu0 0.0
      %357 = vmatprep.subr.mxu0 0.0
      %358 = vmatpush1.xpose.msra.mxu0 0.0
      %359 = vmatprep.subr.mxu0 0.0
      %360 = vmatpush1.xpose.msra.mxu0 0.0
      %361 = vmatprep.subr.mxu0 0.0
      %362 = vmatpush1.xpose.msra.mxu0 0.0
      %363 = vmatprep.subr.mxu0 0.0
      %364 = vmatpush1.xpose.msra.mxu0 0.0
      %365 = vmatprep.subr.mxu0 0.0
      %366 = vmatpush1.xpose.msra.mxu0 0.0
      %367 = vmatprep.subr.mxu0 0.0
      %368 = vmatpush1.xpose.msra.mxu0 0.0
      %369 = vmatprep.subr.mxu0 0.0
      %370 = vmatpush1.xpose.msra.mxu0 0.0
      %371 = vmatprep.subr.mxu0 0.0
      %372 = vmatpush1.xpose.msra.mxu0 0.0
      %373 = vmatprep.subr.mxu0 0.0
      %374 = vmatpush1.xpose.msra.mxu0 0.0
      %375 = vmatprep.subr.mxu0 0.0
      %376 = vmatpush1.xpose.msra.mxu0 0.0
      %377 = vmatprep.subr.mxu0 0.0
      %378 = vmatpush1.xpose.msra.mxu0 0.0
      %379 = vmatprep.subr.mxu0 0.0
      %380 = vmatpush1.xpose.msra.mxu0 0.0
      %381 = vmatprep.subr.mxu0 0.0
      %382 = vmatpush1.xpose.msra.mxu0 0.0
      %383 = vmatprep.subr.mxu0 0.0
      %384 = vmatpush1.xpose.msra.mxu0 0.0
      %385 = vmatprep.subr.mxu0 0.0
      %386 = vmatpush1.xpose.msra.mxu0 0.0
      %387 = vmatprep.subr.mxu0 0.0
      %388 = vmatpush1.xpose.msra.mxu0 0.0
      %389 = vmatprep.subr.mxu0 0.0
      %390 = vmatpush1.xpose.msra.mxu0 0.0
      %391 = vmatprep.subr.mxu0 0.0
      %392 = vmatpush1.xpose.msra.mxu0 0.0
      %393 = vmatprep.subr.mxu0 0.0
      %394 = vmatpush1.xpose.msra.mxu0 0.0
      %395 = vmatprep.subr.mxu0 0.0
      %396 = vmatpush1.xpose.msra.mxu0 0.0
      %397 = vmatprep.subr.mxu0 0.0
      %398 = vmatpush1.xpose.msra.mxu0 0.0
      %399 = vmatprep.subr.mxu0 0.0
      %400 = vmatpush1.xpose.msra.mxu0 0.0
      %401 = vmatprep.subr.mxu0 0.0
      %402 = vmatpush1.xpose.msra.mxu0 0.0
      %403 = vmatprep.subr.mxu0 0.0
      %404 = vmatpush1.xpose.msra.mxu0 0.0
      %405 = vmatprep.subr.mxu0 0.0
      %406 = vmatpush1.xpose.msra.mxu0 0.0
      %407 = vmatprep.mubr.f32.mxu0 0.0
      %408 = vmatmul.mubr.f32.gmra.mrb[0].mxu0 %v332
      %v409 = vpop.f32.mrb[0].mxu0
      %v410 = vadd.f32 0.0, %v409
      %v411 = vpop.f32.mrb[0].mxu0
      %412 = vmatprep.mubr.f32.mxu0 0.0
      %413 = vmatmul.mubr.f32.gmra.mrb[0].mxu0 %v335
      %v414 = vpop.f32.mrb[0].mxu0
      %v415 = vadd.f32 0.0, %v414
      %v416 = vpop.f32.mrb[0].mxu0
      %417 = vdwg.mxu0
      %v419 = vsel %vm243, %v223, 0
      %v422 = vsel %vm243, %v224, 0
      %v425 = vsel %vm243, %v231, 0
      %v428 = vsel %vm243, %v232, 0
      %430 = vmatprep.subr.mxu0 0.0
      %431 = vmatpush1.xpose.msra.mxu0 %v425
      %432 = vmatprep.subr.mxu0 0.0
      %433 = vmatpush1.xpose.msra.mxu0 %v428
      %434 = vmatprep.subr.mxu0 0.0
      %435 = vmatpush1.xpose.msra.mxu0 0.0
      %436 = vmatprep.subr.mxu0 0.0
      %437 = vmatpush1.xpose.msra.mxu0 0.0
      %438 = vmatprep.subr.mxu0 0.0
      %439 = vmatpush1.xpose.msra.mxu0 0.0
      %440 = vmatprep.subr.mxu0 0.0
      %441 = vmatpush1.xpose.msra.mxu0 0.0
      %442 = vmatprep.subr.mxu0 0.0
      %443 = vmatpush1.xpose.msra.mxu0 0.0
      %444 = vmatprep.subr.mxu0 0.0
      %445 = vmatpush1.xpose.msra.mxu0 0.0
      %446 = vmatprep.subr.mxu0 0.0
      %447 = vmatpush1.xpose.msra.mxu0 0.0
      %448 = vmatprep.subr.mxu0 0.0
      %449 = vmatpush1.xpose.msra.mxu0 0.0
      %450 = vmatprep.subr.mxu0 0.0
      %451 = vmatpush1.xpose.msra.mxu0 0.0
      %452 = vmatprep.subr.mxu0 0.0
      %453 = vmatpush1.xpose.msra.mxu0 0.0
      %454 = vmatprep.subr.mxu0 0.0
      %455 = vmatpush1.xpose.msra.mxu0 0.0
      %456 = vmatprep.subr.mxu0 0.0
      %457 = vmatpush1.xpose.msra.mxu0 0.0
      %458 = vmatprep.subr.mxu0 0.0
      %459 = vmatpush1.xpose.msra.mxu0 0.0
      %460 = vmatprep.subr.mxu0 0.0
      %461 = vmatpush1.xpose.msra.mxu0 0.0
      %462 = vmatprep.subr.mxu0 0.0
      %463 = vmatpush1.xpose.msra.mxu0 0.0
      %464 = vmatprep.subr.mxu0 0.0
      %465 = vmatpush1.xpose.msra.mxu0 0.0
      %466 = vmatprep.subr.mxu0 0.0
      %467 = vmatpush1.xpose.msra.mxu0 0.0
      %468 = vmatprep.subr.mxu0 0.0
      %469 = vmatpush1.xpose.msra.mxu0 0.0
      %470 = vmatprep.subr.mxu0 0.0
      %471 = vmatpush1.xpose.msra.mxu0 0.0
      %472 = vmatprep.subr.mxu0 0.0
      %473 = vmatpush1.xpose.msra.mxu0 0.0
      %474 = vmatprep.subr.mxu0 0.0
      %475 = vmatpush1.xpose.msra.mxu0 0.0
      %476 = vmatprep.subr.mxu0 0.0
      %477 = vmatpush1.xpose.msra.mxu0 0.0
      %478 = vmatprep.subr.mxu0 0.0
      %479 = vmatpush1.xpose.msra.mxu0 0.0
      %480 = vmatprep.subr.mxu0 0.0
      %481 = vmatpush1.xpose.msra.mxu0 0.0
      %482 = vmatprep.subr.mxu0 0.0
      %483 = vmatpush1.xpose.msra.mxu0 0.0
      %484 = vmatprep.subr.mxu0 0.0
      %485 = vmatpush1.xpose.msra.mxu0 0.0
      %486 = vmatprep.subr.mxu0 0.0
      %487 = vmatpush1.xpose.msra.mxu0 0.0
      %488 = vmatprep.subr.mxu0 0.0
      %489 = vmatpush1.xpose.msra.mxu0 0.0
      %490 = vmatprep.subr.mxu0 0.0
      %491 = vmatpush1.xpose.msra.mxu0 0.0
      %492 = vmatprep.subr.mxu0 0.0
      %493 = vmatpush1.xpose.msra.mxu0 0.0
      %494 = vmatprep.mubr.f32.mxu0 0.0
      %495 = vmatmul.mubr.f32.gmra.mrb[0].mxu0 %v419
      %v496 = vpop.f32.mrb[0].mxu0
      %v497 = vadd.f32 0.0, %v496
      %v498 = vpop.f32.mrb[0].mxu0
      %499 = vmatprep.mubr.f32.mxu0 0.0
      %500 = vmatmul.mubr.f32.gmra.mrb[0].mxu0 %v422
      %v501 = vpop.f32.mrb[0].mxu0
      %v502 = vadd.f32 0.0, %v501
      %v503 = vpop.f32.mrb[0].mxu0
      %504 = vdwg.mxu0
      %v506 = vsel %vm243, %v225, 0
      %v509 = vsel %vm243, %v226, 0
      %v512 = vsel %vm243, %v233, 0
      %v515 = vsel %vm243, %v234, 0
      %517 = vmatprep.subr.mxu0 0.0
      %518 = vmatpush1.xpose.msra.mxu0 %v512
      %519 = vmatprep.subr.mxu0 0.0
      %520 = vmatpush1.xpose.msra.mxu0 %v515
      %521 = vmatprep.subr.mxu0 0.0
      %522 = vmatpush1.xpose.msra.mxu0 0.0
      %523 = vmatprep.subr.mxu0 0.0
      %524 = vmatpush1.xpose.msra.mxu0 0.0
      %525 = vmatprep.subr.mxu0 0.0
      %526 = vmatpush1.xpose.msra.mxu0 0.0
      %527 = vmatprep.subr.mxu0 0.0
      %528 = vmatpush1.xpose.msra.mxu0 0.0
      %529 = vmatprep.subr.mxu0 0.0
      %530 = vmatpush1.xpose.msra.mxu0 0.0
      %531 = vmatprep.subr.mxu0 0.0
      %532 = vmatpush1.xpose.msra.mxu0 0.0
      %533 = vmatprep.subr.mxu0 0.0
      %534 = vmatpush1.xpose.msra.mxu0 0.0
      %535 = vmatprep.subr.mxu0 0.0
      %536 = vmatpush1.xpose.msra.mxu0 0.0
      %537 = vmatprep.subr.mxu0 0.0
      %538 = vmatpush1.xpose.msra.mxu0 0.0
      %539 = vmatprep.subr.mxu0 0.0
      %540 = vmatpush1.xpose.msra.mxu0 0.0
      %541 = vmatprep.subr.mxu0 0.0
      %542 = vmatpush1.xpose.msra.mxu0 0.0
      %543 = vmatprep.subr.mxu0 0.0
      %544 = vmatpush1.xpose.msra.mxu0 0.0
      %545 = vmatprep.subr.mxu0 0.0
      %546 = vmatpush1.xpose.msra.mxu0 0.0
      %547 = vmatprep.subr.mxu0 0.0
      %548 = vmatpush1.xpose.msra.mxu0 0.0
      %549 = vmatprep.subr.mxu0 0.0
      %550 = vmatpush1.xpose.msra.mxu0 0.0
      %551 = vmatprep.subr.mxu0 0.0
      %552 = vmatpush1.xpose.msra.mxu0 0.0
      %553 = vmatprep.subr.mxu0 0.0
      %554 = vmatpush1.xpose.msra.mxu0 0.0
      %555 = vmatprep.subr.mxu0 0.0
      %556 = vmatpush1.xpose.msra.mxu0 0.0
      %557 = vmatprep.subr.mxu0 0.0
      %558 = vmatpush1.xpose.msra.mxu0 0.0
      %559 = vmatprep.subr.mxu0 0.0
      %560 = vmatpush1.xpose.msra.mxu0 0.0
      %561 = vmatprep.subr.mxu0 0.0
      %562 = vmatpush1.xpose.msra.mxu0 0.0
      %563 = vmatprep.subr.mxu0 0.0
      %564 = vmatpush1.xpose.msra.mxu0 0.0
      %565 = vmatprep.subr.mxu0 0.0
      %566 = vmatpush1.xpose.msra.mxu0 0.0
      %567 = vmatprep.subr.mxu0 0.0
      %568 = vmatpush1.xpose.msra.mxu0 0.0
      %569 = vmatprep.subr.mxu0 0.0
      %570 = vmatpush1.xpose.msra.mxu0 0.0
      %571 = vmatprep.subr.mxu0 0.0
      %572 = vmatpush1.xpose.msra.mxu0 0.0
      %573 = vmatprep.subr.mxu0 0.0
      %574 = vmatpush1.xpose.msra.mxu0 0.0
      %575 = vmatprep.subr.mxu0 0.0
      %576 = vmatpush1.xpose.msra.mxu0 0.0
      %577 = vmatprep.subr.mxu0 0.0
      %578 = vmatpush1.xpose.msra.mxu0 0.0
      %579 = vmatprep.subr.mxu0 0.0
      %580 = vmatpush1.xpose.msra.mxu0 0.0
      %581 = vmatprep.mubr.f32.mxu0 0.0
      %582 = vmatmul.mubr.f32.gmra.mrb[0].mxu0 %v506
      %v583 = vpop.f32.mrb[0].mxu0
      %v584 = vadd.f32 0.0, %v583
      %v585 = vpop.f32.mrb[0].mxu0
      %586 = vmatprep.mubr.f32.mxu0 0.0
      %587 = vmatmul.mubr.f32.gmra.mrb[0].mxu0 %v509
      %v588 = vpop.f32.mrb[0].mxu0
      %v589 = vadd.f32 0.0, %v588
      %v590 = vpop.f32.mrb[0].mxu0
      %591 = vdwg.mxu0
      %vm592 = vcmask 130048
      %v593 = vsel %vm592, %v323, -inf
      %594 = vmax.xlane.f32.xlu0 %v593
      %v595 = vpop.xlane.xlu0 %594
      %v596 = vsel %vm592, %v328, -inf
      %597 = vmax.xlane.f32.xlu0 %v596
      %v598 = vpop.xlane.xlu0 %597
      %v599 = vsel %vm592, %v410, -inf
      %600 = vmax.xlane.f32.xlu0 %v599
      %v601 = vpop.xlane.xlu0 %600
      %v602 = vsel %vm592, %v415, -inf
      %603 = vmax.xlane.f32.xlu0 %v602
      %v604 = vpop.xlane.xlu0 %603
      %v605 = vsel %vm592, %v497, -inf
      %606 = vmax.xlane.f32.xlu0 %v605
      %v607 = vpop.xlane.xlu0 %606
      %v608 = vsel %vm592, %v502, -inf
      %609 = vmax.xlane.f32.xlu0 %v608
      %v610 = vpop.xlane.xlu0 %609
      %v611 = vsel %vm592, %v584, -inf
      %612 = vmax.xlane.f32.xlu0 %v611
      %v613 = vpop.xlane.xlu0 %612
      %v614 = vsel %vm592, %v589, -inf
      %615 = vmax.xlane.f32.xlu0 %v614
      %v616 = vpop.xlane.xlu0 %615
      %v617 = vsub.f32 %v323, %v595
      %v618 = vsub.f32 %v328, %v598
      %v619 = vsub.f32 %v410, %v601
      %v620 = vsub.f32 %v415, %v604
      %v621 = vsub.f32 %v497, %v607
      %v622 = vsub.f32 %v502, %v610
      %v623 = vsub.f32 %v584, %v613
      %v624 = vsub.f32 %v589, %v616
      %v625 = vmul.f32 %v617, 1.442695
      %v626 = vpow.pop %v625
      %v627 = vmul.f32 %v618, 1.442695
      %v628 = vpow.pop %v627
      %v629 = vmul.f32 %v619, 1.442695
      %v630 = vpow.pop %v629
      %v631 = vmul.f32 %v620, 1.442695
      %v632 = vpow.pop %v631
      %v633 = vmul.f32 %v621, 1.442695
      %v634 = vpow.pop %v633
      %v635 = vmul.f32 %v622, 1.442695
      %v636 = vpow.pop %v635
      %v637 = vmul.f32 %v623, 1.442695
      %v638 = vpow.pop %v637
      %v639 = vmul.f32 %v624, 1.442695
      %v640 = vpow.pop %v639
      %v641 = vsel %vm592, %v626, 0.0
      %642 = vadd.xlane.f32.xlu0 %v641
      %v643 = vpop.xlane.xlu0 %642
      %v644 = vsel %vm592, %v628, 0.0
      %645 = vadd.xlane.f32.xlu0 %v644
      %v646 = vpop.xlane.xlu0 %645
      %v647 = vsel %vm592, %v630, 0.0
      %648 = vadd.xlane.f32.xlu0 %v647
      %v649 = vpop.xlane.xlu0 %648
      %v650 = vsel %vm592, %v632, 0.0
      %651 = vadd.xlane.f32.xlu0 %v650
      %v652 = vpop.xlane.xlu0 %651
      %v653 = vsel %vm592, %v634, 0.0
      %654 = vadd.xlane.f32.xlu0 %v653
      %v655 = vpop.xlane.xlu0 %654
      %v656 = vsel %vm592, %v636, 0.0
      %657 = vadd.xlane.f32.xlu0 %v656
      %v658 = vpop.xlane.xlu0 %657
      %v659 = vsel %vm592, %v638, 0.0
      %660 = vadd.xlane.f32.xlu0 %v659
      %v661 = vpop.xlane.xlu0 %660
      %v662 = vsel %vm592, %v640, 0.0
      %663 = vadd.xlane.f32.xlu0 %v662
      %v664 = vpop.xlane.xlu0 %663
      %v665 = vrcp.pop %v643
      %v666 = vrcp.pop %v646
      %v667 = vrcp.pop %v649
      %v668 = vrcp.pop %v652
      %v669 = vrcp.pop %v655
      %v670 = vrcp.pop %v658
      %v671 = vrcp.pop %v661
      %v672 = vrcp.pop %v664
      %v673 = vmul.f32 %v626, %v665
      %v674 = vmul.f32 %v628, %v666
      %v675 = vmul.f32 %v630, %v667
      %v676 = vmul.f32 %v632, %v668
      %v677 = vmul.f32 %v634, %v669
      %v678 = vmul.f32 %v636, %v670
      %v679 = vmul.f32 %v638, %v671
      %v680 = vmul.f32 %v640, %v672
      %v682 = vsel %vm592, %v673, 0
      %v685 = vsel %vm592, %v674, 0
      %687 = vmatprep.subr.mxu0 0.0
      %688 = vmatpush1.msra.mxu0 %v235
      %689 = vmatprep.subr.mxu0 0.0
      %690 = vmatpush1.msra.mxu0 %v236
      %691 = vmatprep.subr.mxu0 0.0
      %692 = vmatpush1.msra.mxu0 0.0
      %693 = vmatprep.subr.mxu0 0.0
      %694 = vmatpush1.msra.mxu0 0.0
      %695 = vmatprep.subr.mxu0 0.0
      %696 = vmatpush1.msra.mxu0 0.0
      %697 = vmatprep.subr.mxu0 0.0
      %698 = vmatpush1.msra.mxu0 0.0
      %699 = vmatprep.subr.mxu0 0.0
      %700 = vmatpush1.msra.mxu0 0.0
      %701 = vmatprep.subr.mxu0 0.0
      %702 = vmatpush1.msra.mxu0 0.0
      %703 = vmatprep.subr.mxu0 0.0
      %704 = vmatpush1.msra.mxu0 0.0
      %705 = vmatprep.subr.mxu0 0.0
      %706 = vmatpush1.msra.mxu0 0.0
      %707 = vmatprep.subr.mxu0 0.0
      %708 = vmatpush1.msra.mxu0 0.0
      %709 = vmatprep.subr.mxu0 0.0
      %710 = vmatpush1.msra.mxu0 0.0
      %711 = vmatprep.subr.mxu0 0.0
      %712 = vmatpush1.msra.mxu0 0.0
      %713 = vmatprep.subr.mxu0 0.0
      %714 = vmatpush1.msra.mxu0 0.0
      %715 = vmatprep.subr.mxu0 0.0
      %716 = vmatpush1.msra.mxu0 0.0
      %717 = vmatprep.subr.mxu0 0.0
      %718 = vmatpush1.msra.mxu0 0.0
      %719 = vmatprep.subr.mxu0 0.0
      %720 = vmatpush1.msra.mxu0 0.0
      %721 = vmatprep.subr.mxu0 0.0
      %722 = vmatpush1.msra.mxu0 0.0
      %723 = vmatprep.subr.mxu0 0.0
      %724 = vmatpush1.msra.mxu0 0.0
      %725 = vmatprep.subr.mxu0 0.0
      %726 = vmatpush1.msra.mxu0 0.0
      %727 = vmatprep.subr.mxu0 0.0
      %728 = vmatpush1.msra.mxu0 0.0
      %729 = vmatprep.subr.mxu0 0.0
      %730 = vmatpush1.msra.mxu0 0.0
      %731 = vmatprep.subr.mxu0 0.0
      %732 = vmatpush1.msra.mxu0 0.0
      %733 = vmatprep.subr.mxu0 0.0
      %734 = vmatpush1.msra.mxu0 0.0
      %735 = vmatprep.subr.mxu0 0.0
      %736 = vmatpush1.msra.mxu0 0.0
      %737 = vmatprep.subr.mxu0 0.0
      %738 = vmatpush1.msra.mxu0 0.0
      %739 = vmatprep.subr.mxu0 0.0
      %740 = vmatpush1.msra.mxu0 0.0
      %741 = vmatprep.subr.mxu0 0.0
      %742 = vmatpush1.msra.mxu0 0.0
      %743 = vmatprep.subr.mxu0 0.0
      %744 = vmatpush1.msra.mxu0 0.0
      %745 = vmatprep.subr.mxu0 0.0
      %746 = vmatpush1.msra.mxu0 0.0
      %747 = vmatprep.subr.mxu0 0.0
      %748 = vmatpush1.msra.mxu0 0.0
      %749 = vmatprep.subr.mxu0 0.0
      %750 = vmatpush1.msra.mxu0 0.0
      %751 = vmatprep.mubr.f32.mxu0 0.0
      %752 = vmatmul.mubr.f32.gmra.mrb[0].mxu0 %v682
      %v753 = vpop.f32.mrb[0].mxu0
      %v754 = vadd.f32 0.0, %v753
      %v755 = vpop.f32.mrb[0].mxu0
      %756 = vmatprep.mubr.f32.mxu0 0.0
      %757 = vmatmul.mubr.f32.gmra.mrb[0].mxu0 %v685
      %v758 = vpop.f32.mrb[0].mxu0
      %v759 = vadd.f32 0.0, %v758
      %v760 = vpop.f32.mrb[0].mxu0
      %761 = vdwg.mxu0
      %v763 = vsel %vm592, %v675, 0
      %v766 = vsel %vm592, %v676, 0
      %768 = vmatprep.subr.mxu0 0.0
      %769 = vmatpush1.msra.mxu0 %v237
      %770 = vmatprep.subr.mxu0 0.0
      %771 = vmatpush1.msra.mxu0 %v238
      %772 = vmatprep.subr.mxu0 0.0
      %773 = vmatpush1.msra.mxu0 0.0
      %774 = vmatprep.subr.mxu0 0.0
      %775 = vmatpush1.msra.mxu0 0.0
      %776 = vmatprep.subr.mxu0 0.0
      %777 = vmatpush1.msra.mxu0 0.0
      %778 = vmatprep.subr.mxu0 0.0
      %779 = vmatpush1.msra.mxu0 0.0
      %780 = vmatprep.subr.mxu0 0.0
      %781 = vmatpush1.msra.mxu0 0.0
      %782 = vmatprep.subr.mxu0 0.0
      %783 = vmatpush1.msra.mxu0 0.0
      %784 = vmatprep.subr.mxu0 0.0
      %785 = vmatpush1.msra.mxu0 0.0
      %786 = vmatprep.subr.mxu0 0.0
      %787 = vmatpush1.msra.mxu0 0.0
      %788 = vmatprep.subr.mxu0 0.0
      %789 = vmatpush1.msra.mxu0 0.0
      %790 = vmatprep.subr.mxu0 0.0
      %791 = vmatpush1.msra.mxu0 0.0
      %792 = vmatprep.subr.mxu0 0.0
      %793 = vmatpush1.msra.mxu0 0.0
      %794 = vmatprep.subr.mxu0 0.0
      %795 = vmatpush1.msra.mxu0 0.0
      %796 = vmatprep.subr.mxu0 0.0
      %797 = vmatpush1.msra.mxu0 0.0
      %798 = vmatprep.subr.mxu0 0.0
      %799 = vmatpush1.msra.mxu0 0.0
      %800 = vmatprep.subr.mxu0 0.0
      %801 = vmatpush1.msra.mxu0 0.0
      %802 = vmatprep.subr.mxu0 0.0
      %803 = vmatpush1.msra.mxu0 0.0
      %804 = vmatprep.subr.mxu0 0.0
      %805 = vmatpush1.msra.mxu0 0.0
      %806 = vmatprep.subr.mxu0 0.0
      %807 = vmatpush1.msra.mxu0 0.0
      %808 = vmatprep.subr.mxu0 0.0
      %809 = vmatpush1.msra.mxu0 0.0
      %810 = vmatprep.subr.mxu0 0.0
      %811 = vmatpush1.msra.mxu0 0.0
      %812 = vmatprep.subr.mxu0 0.0
      %813 = vmatpush1.msra.mxu0 0.0
      %814 = vmatprep.subr.mxu0 0.0
      %815 = vmatpush1.msra.mxu0 0.0
      %816 = vmatprep.subr.mxu0 0.0
      %817 = vmatpush1.msra.mxu0 0.0
      %818 = vmatprep.subr.mxu0 0.0
      %819 = vmatpush1.msra.mxu0 0.0
      %820 = vmatprep.subr.mxu0 0.0
      %821 = vmatpush1.msra.mxu0 0.0
      %822 = vmatprep.subr.mxu0 0.0
      %823 = vmatpush1.msra.mxu0 0.0
      %824 = vmatprep.subr.mxu0 0.0
      %825 = vmatpush1.msra.mxu0 0.0
      %826 = vmatprep.subr.mxu0 0.0
      %827 = vmatpush1.msra.mxu0 0.0
      %828 = vmatprep.subr.mxu0 0.0
      %829 = vmatpush1.msra.mxu0 0.0
      %830 = vmatprep.subr.mxu0 0.0
      %831 = vmatpush1.msra.mxu0 0.0
      %832 = vmatprep.mubr.f32.mxu0 0.0
      %833 = vmatmul.mubr.f32.gmra.mrb[0].mxu0 %v763
      %v834 = vpop.f32.mrb[0].mxu0
      %v835 = vadd.f32 0.0, %v834
      %v836 = vpop.f32.mrb[0].mxu0
      %837 = vmatprep.mubr.f32.mxu0 0.0
      %838 = vmatmul.mubr.f32.gmra.mrb[0].mxu0 %v766
      %v839 = vpop.f32.mrb[0].mxu0
      %v840 = vadd.f32 0.0, %v839
      %v841 = vpop.f32.mrb[0].mxu0
      %842 = vdwg.mxu0
      %v844 = vsel %vm592, %v677, 0
      %v847 = vsel %vm592, %v678, 0
      %849 = vmatprep.subr.mxu0 0.0
      %850 = vmatpush1.msra.mxu0 %v239
      %851 = vmatprep.subr.mxu0 0.0
      %852 = vmatpush1.msra.mxu0 %v240
      %853 = vmatprep.subr.mxu0 0.0
      %854 = vmatpush1.msra.mxu0 0.0
      %855 = vmatprep.subr.mxu0 0.0
      %856 = vmatpush1.msra.mxu0 0.0
      %857 = vmatprep.subr.mxu0 0.0
      %858 = vmatpush1.msra.mxu0 0.0
      %859 = vmatprep.subr.mxu0 0.0
      %860 = vmatpush1.msra.mxu0 0.0
      %861 = vmatprep.subr.mxu0 0.0
      %862 = vmatpush1.msra.mxu0 0.0
      %863 = vmatprep.subr.mxu0 0.0
      %864 = vmatpush1.msra.mxu0 0.0
      %865 = vmatprep.subr.mxu0 0.0
      %866 = vmatpush1.msra.mxu0 0.0
      %867 = vmatprep.subr.mxu0 0.0
      %868 = vmatpush1.msra.mxu0 0.0
      %869 = vmatprep.subr.mxu0 0.0
      %870 = vmatpush1.msra.mxu0 0.0
      %871 = vmatprep.subr.mxu0 0.0
      %872 = vmatpush1.msra.mxu0 0.0
      %873 = vmatprep.subr.mxu0 0.0
      %874 = vmatpush1.msra.mxu0 0.0
      %875 = vmatprep.subr.mxu0 0.0
      %876 = vmatpush1.msra.mxu0 0.0
      %877 = vmatprep.subr.mxu0 0.0
      %878 = vmatpush1.msra.mxu0 0.0
      %879 = vmatprep.subr.mxu0 0.0
      %880 = vmatpush1.msra.mxu0 0.0
      %881 = vmatprep.subr.mxu0 0.0
      %882 = vmatpush1.msra.mxu0 0.0
      %883 = vmatprep.subr.mxu0 0.0
      %884 = vmatpush1.msra.mxu0 0.0
      %885 = vmatprep.subr.mxu0 0.0
      %886 = vmatpush1.msra.mxu0 0.0
      %887 = vmatprep.subr.mxu0 0.0
      %888 = vmatpush1.msra.mxu0 0.0
      %889 = vmatprep.subr.mxu0 0.0
      %890 = vmatpush1.msra.mxu0 0.0
      %891 = vmatprep.subr.mxu0 0.0
      %892 = vmatpush1.msra.mxu0 0.0
      %893 = vmatprep.subr.mxu0 0.0
      %894 = vmatpush1.msra.mxu0 0.0
      %895 = vmatprep.subr.mxu0 0.0
      %896 = vmatpush1.msra.mxu0 0.0
      %897 = vmatprep.subr.mxu0 0.0
      %898 = vmatpush1.msra.mxu0 0.0
      %899 = vmatprep.subr.mxu0 0.0
      %900 = vmatpush1.msra.mxu0 0.0
      %901 = vmatprep.subr.mxu0 0.0
      %902 = vmatpush1.msra.mxu0 0.0
      %903 = vmatprep.subr.mxu0 0.0
      %904 = vmatpush1.msra.mxu0 0.0
      %905 = vmatprep.subr.mxu0 0.0
      %906 = vmatpush1.msra.mxu0 0.0
      %907 = vmatprep.subr.mxu0 0.0
      %908 = vmatpush1.msra.mxu0 0.0
      %909 = vmatprep.subr.mxu0 0.0
      %910 = vmatpush1.msra.mxu0 0.0
      %911 = vmatprep.subr.mxu0 0.0
      %912 = vmatpush1.msra.mxu0 0.0
      %913 = vmatprep.mubr.f32.mxu0 0.0
      %914 = vmatmul.mubr.f32.gmra.mrb[0].mxu0 %v844
      %v915 = vpop.f32.mrb[0].mxu0
      %v916 = vadd.f32 0.0, %v915
      %v917 = vpop.f32.mrb[0].mxu0
      %918 = vmatprep.mubr.f32.mxu0 0.0
      %919 = vmatmul.mubr.f32.gmra.mrb[0].mxu0 %v847
      %v920 = vpop.f32.mrb[0].mxu0
      %v921 = vadd.f32 0.0, %v920
      %v922 = vpop.f32.mrb[0].mxu0
      %923 = vdwg.mxu0
      %v925 = vsel %vm592, %v679, 0
      %v928 = vsel %vm592, %v680, 0
      %930 = vmatprep.subr.mxu0 0.0
      %931 = vmatpush1.msra.mxu0 %v241
      %932 = vmatprep.subr.mxu0 0.0
      %933 = vmatpush1.msra.mxu0 %v242
      %934 = vmatprep.subr.mxu0 0.0
      %935 = vmatpush1.msra.mxu0 0.0
      %936 = vmatprep.subr.mxu0 0.0
      %937 = vmatpush1.msra.mxu0 0.0
      %938 = vmatprep.subr.mxu0 0.0
      %939 = vmatpush1.msra.mxu0 0.0
      %940 = vmatprep.subr.mxu0 0.0
      %941 = vmatpush1.msra.mxu0 0.0
      %942 = vmatprep.subr.mxu0 0.0
      %943 = vmatpush1.msra.mxu0 0.0
      %944 = vmatprep.subr.mxu0 0.0
      %945 = vmatpush1.msra.mxu0 0.0
      %946 = vmatprep.subr.mxu0 0.0
      %947 = vmatpush1.msra.mxu0 0.0
      %948 = vmatprep.subr.mxu0 0.0
      %949 = vmatpush1.msra.mxu0 0.0
      %950 = vmatprep.subr.mxu0 0.0
      %951 = vmatpush1.msra.mxu0 0.0
      %952 = vmatprep.subr.mxu0 0.0
      %953 = vmatpush1.msra.mxu0 0.0
      %954 = vmatprep.subr.mxu0 0.0
      %955 = vmatpush1.msra.mxu0 0.0
      %956 = vmatprep.subr.mxu0 0.0
      %957 = vmatpush1.msra.mxu0 0.0
      %958 = vmatprep.subr.mxu0 0.0
      %959 = vmatpush1.msra.mxu0 0.0
      %960 = vmatprep.subr.mxu0 0.0
      %961 = vmatpush1.msra.mxu0 0.0
      %962 = vmatprep.subr.mxu0 0.0
      %963 = vmatpush1.msra.mxu0 0.0
      %964 = vmatprep.subr.mxu0 0.0
      %965 = vmatpush1.msra.mxu0 0.0
      %966 = vmatprep.subr.mxu0 0.0
      %967 = vmatpush1.msra.mxu0 0.0
      %968 = vmatprep.subr.mxu0 0.0
      %969 = vmatpush1.msra.mxu0 0.0
      %970 = vmatprep.subr.mxu0 0.0
      %971 = vmatpush1.msra.mxu0 0.0
      %972 = vmatprep.subr.mxu0 0.0
      %973 = vmatpush1.msra.mxu0 0.0
      %974 = vmatprep.subr.mxu0 0.0
      %975 = vmatpush1.msra.mxu0 0.0
      %976 = vmatprep.subr.mxu0 0.0
      %977 = vmatpush1.msra.mxu0 0.0
      %978 = vmatprep.subr.mxu0 0.0
      %979 = vmatpush1.msra.mxu0 0.0
      %980 = vmatprep.subr.mxu0 0.0
      %981 = vmatpush1.msra.mxu0 0.0
      %982 = vmatprep.subr.mxu0 0.0
      %983 = vmatpush1.msra.mxu0 0.0
      %984 = vmatprep.subr.mxu0 0.0
      %985 = vmatpush1.msra.mxu0 0.0
      %986 = vmatprep.subr.mxu0 0.0
      %987 = vmatpush1.msra.mxu0 0.0
      %988 = vmatprep.subr.mxu0 0.0
      %989 = vmatpush1.msra.mxu0 0.0
      %990 = vmatprep.subr.mxu0 0.0
      %991 = vmatpush1.msra.mxu0 0.0
      %992 = vmatprep.subr.mxu0 0.0
      %993 = vmatpush1.msra.mxu0 0.0
      %994 = vmatprep.mubr.f32.mxu0 0.0
      %995 = vmatmul.mubr.f32.gmra.mrb[0].mxu0 %v925
      %v996 = vpop.f32.mrb[0].mxu0
      %v997 = vadd.f32 0.0, %v996
      %v998 = vpop.f32.mrb[0].mxu0
      %999 = vmatprep.mubr.f32.mxu0 0.0
      %1000 = vmatmul.mubr.f32.gmra.mrb[0].mxu0 %v928
      %v1001 = vpop.f32.mrb[0].mxu0
      %v1002 = vadd.f32 0.0, %v1001
      %v1003 = vpop.f32.mrb[0].mxu0
      %1004 = vdwg.mxu0
      %1005 = vst.msk [vmem:[%s210] sm:$0xff] %vm243, %v754
      %1006 = vst.msk [vmem:[%s210 + $0x8] sm:$0xff] %vm243, %v759
      %1007 = vst.msk [vmem:[%s210 + $0x10] sm:$0xff] %vm243, %v835
      %1008 = vst.msk [vmem:[%s210 + $0x18] sm:$0xff] %vm243, %v840
      %1009 = vst.msk [vmem:[%s210 + $0x20] sm:$0xff] %vm243, %v916
      %1010 = vst.msk [vmem:[%s210 + $0x28] sm:$0xff] %vm243, %v921
      %1011 = vst.msk [vmem:[%s210 + $0x30] sm:$0xff] %vm243, %v997
      %1012 = vst.msk [vmem:[%s210 + $0x38] sm:$0xff] %vm243, %v1002
      %p1013 = scmp.lt.s32.totalorder %s14, 1
      %s1014 = scalar_select %p1013, %s14, 1
      %s1015 = smul.addr %s1014, 8
      %s1016 = smul.addr %s1015, 8
      %s1017 = scalar_lea.vmem %s3, %s1016
      // Predicated region
      $region33: #{mid_block_forward.21} parent=31 // pred_check
        %p1018 = pneg %p110
      $region34: #{mid_block_forward.21} parent=31 // pred_check_branch
        %1020 = sbr.rel (%p1018) target = $region36
      $region35: #{mid_block_forward.21} parent=31 // pred_region
        _
      $region36: #{mid_block_forward.21} parent=31 // pred_fallthru
        _
    $region32: #{mid_block_forward.21} parent=5 // pred_fallthru
      _
    %p1021 = scmp.le.s32.totalorder 2, %s9
    // Predicated region
    $region37: #{mid_block_forward.21} parent=5 // pred_check
      %p1022 = pneg %p1021
    $region38: #{mid_block_forward.21} parent=5 // pred_check_branch
      %1024 = sbr.rel (%p1022) target = $region40
    $region39: #{mid_block_forward.21} parent=5 // pred_region
      %s1025 = ssub.s32 %s9, 2
      // Predicated region
      $region41: #{mid_block_forward.21} parent=39 // pred_check
        %p1026 = pneg %p116
      $region42: #{mid_block_forward.21} parent=39 // pred_check_branch
        %1028 = sbr.rel (%p1026) target = $region44
      $region43: #{mid_block_forward.21} parent=39 // pred_region
        %p1029 = scmp.lt.s32.totalorder %s15, 1
        %s1030 = scalar_select %p1029, %s15, 1
        %s1031 = smul.addr %s1030, 8
        %s1032 = smul.addr %s1031, 8
        %s1033 = scalar_lea.vmem %s3, %s1032
      $region44: #{mid_block_forward.21} parent=39 // pred_fallthru
        _
    $region40: #{mid_block_forward.21} parent=5 // pred_fallthru
      _
  $region6: #{mid_block_forward.21} parent=0 // loop_footer
    %s13 = sadd.s32 1, %s9
  $region7: #{mid_block_forward.21} parent=0 // loop_footer_branch
    %8 = sbr.rel target = $region3
  $region8: #{mid_block_forward.21} parent=0 // loop_exit
    _

// kernel: mid_block_forward.22
$region0: #{mid_block_forward.22}
  #allocation0 [shape = 'u32[]', space=smem, size = 0x4, offset = 0x4, fixed_abs, tag = 'smem constant byte address 0x4 - core index']
  #allocation1 [shape = 'u32[144,128]{1,0:T(1,128)}', space=vmem, size = 0x12000, scoped, tag = 'internal scratch']
  #allocation2 [shape = 'f32[32,192]{1,0:T(8,128)}', space=vmem, size = 0x8000, scoped, tag = 'scratch operand']
  %s0 = inlined_call_operand.vmem [shape: f32[32,192], index: 0, kind: input, shape index: {}]
  %s1 = inlined_call_operand.vmem [shape: f32[192,192], index: 1, kind: input, shape index: {}]
  %s2 = inlined_call_operand.vmem [shape: f32[1,192], index: 2, kind: input, shape index: {}]
  %s3 = inlined_call_operand.vmem [shape: f32[32,192], index: 3, kind: output, shape index: {}]
  %s4 = sld [smem:[#allocation0]]
  $region30: #{mid_block_forward.22} parent=0
    _
  %s6 = ssub.s32 1, %s4
  %s7 = scalar_select 0, %s6, %s4
  // Predicated region
  $region2: #{mid_block_forward.22} parent=0 // pred_check
    _
  $region3: #{mid_block_forward.22} parent=0 // pred_check_branch
    %9 = sbr.rel (0) target = $region5
  $region4: #{mid_block_forward.22} parent=0 // pred_region
    _
  $region5: #{mid_block_forward.22} parent=0 // pred_fallthru
    _
  // Predicated region
  $region6: #{mid_block_forward.22} parent=0 // pred_check
    _
  $region7: #{mid_block_forward.22} parent=0 // pred_check_branch
    %11 = sbr.rel (0) target = $region9
  $region8: #{mid_block_forward.22} parent=0 // pred_region
    _
  $region9: #{mid_block_forward.22} parent=0 // pred_fallthru
    _
  // Predicated region
  $region10: #{mid_block_forward.22} parent=0 // pred_check
    _
  $region11: #{mid_block_forward.22} parent=0 // pred_check_branch
    %13 = sbr.rel (0) target = $region13
  $region12: #{mid_block_forward.22} parent=0 // pred_region
    _
  $region13: #{mid_block_forward.22} parent=0 // pred_fallthru
    _
  %p14 = scmp.eq.s32.totalorder 0, 0
  // Predicated region
  $region14: #{mid_block_forward.22} parent=0 // pred_check
    %p15 = pneg %p14
  $region15: #{mid_block_forward.22} parent=0 // pred_check_branch
    %17 = sbr.rel (%p15) target = $region17
  $region16: #{mid_block_forward.22} parent=0 // pred_region
    %18 = vst [vmem:[#allocation2] sm:$0xff] 0.0
    %vm19 = vcmask 523264
    %20 = vst.msk [vmem:[#allocation2 + $0x8] sm:$0xff] %vm19, 0.0
    %21 = vst [vmem:[#allocation2 + $0x10] sm:$0xff] 0.0
    %22 = vst.msk [vmem:[#allocation2 + $0x18] sm:$0xff] %vm19, 0.0
    %23 = vst [vmem:[#allocation2 + $0x20] sm:$0xff] 0.0
    %24 = vst.msk [vmem:[#allocation2 + $0x28] sm:$0xff] %vm19, 0.0
    %25 = vst [vmem:[#allocation2 + $0x30] sm:$0xff] 0.0
    %26 = vst.msk [vmem:[#allocation2 + $0x38] sm:$0xff] %vm19, 0.0
  $region17: #{mid_block_forward.22} parent=0 // pred_fallthru
    _
  %v27 = vld [vmem:[%s0] sm:$0xff]
  %v28 = vld [vmem:[%s0 + $0x8] sm:$0xff]
  %v29 = vld [vmem:[%s0 + $0x10] sm:$0xff]
  %v30 = vld [vmem:[%s0 + $0x18] sm:$0xff]
  %v31 = vld [vmem:[%s0 + $0x20] sm:$0xff]
  %v32 = vld [vmem:[%s0 + $0x28] sm:$0xff]
  %v33 = vld [vmem:[%s0 + $0x30] sm:$0xff]
  %v34 = vld [vmem:[%s0 + $0x38] sm:$0xff]
  %v35 = vld [vmem:[#allocation2] sm:$0xff]
  %v36 = vld [vmem:[#allocation2 + $0x8] sm:$0xff]
  %v37 = vld [vmem:[#allocation2 + $0x10] sm:$0xff]
  %v38 = vld [vmem:[#allocation2 + $0x18] sm:$0xff]
  %v39 = vld [vmem:[#allocation2 + $0x20] sm:$0xff]
  %v40 = vld [vmem:[#allocation2 + $0x28] sm:$0xff]
  %v41 = vld [vmem:[#allocation2 + $0x30] sm:$0xff]
  %v42 = vld [vmem:[#allocation2 + $0x38] sm:$0xff]
  %v43 = vld [vmem:[%s1] sm:$0xff]
  %v44 = vld [vmem:[%s1 + $0x8] sm:$0xff]
  %v45 = vld [vmem:[%s1 + $0x10] sm:$0xff]
  %v46 = vld [vmem:[%s1 + $0x18] sm:$0xff]
  %v47 = vld [vmem:[%s1 + $0x20] sm:$0xff]
  %v48 = vld [vmem:[%s1 + $0x28] sm:$0xff]
  %v49 = vld [vmem:[%s1 + $0x30] sm:$0xff]
  %v50 = vld [vmem:[%s1 + $0x38] sm:$0xff]
  %v51 = vld [vmem:[%s1 + $0x40] sm:$0xff]
  %v52 = vld [vmem:[%s1 + $0x48] sm:$0xff]
  %v53 = vld [vmem:[%s1 + $0x50] sm:$0xff]
  %v54 = vld [vmem:[%s1 + $0x58] sm:$0xff]
  %v55 = vld [vmem:[%s1 + $0x60] sm:$0xff]
  %v56 = vld [vmem:[%s1 + $0x68] sm:$0xff]
  %v57 = vld [vmem:[%s1 + $0x70] sm:$0xff]
  %v58 = vld [vmem:[%s1 + $0x78] sm:$0xff]
  %v59 = vld [vmem:[%s1 + $0x80] sm:$0xff]
  %v60 = vld [vmem:[%s1 + $0x88] sm:$0xff]
  %v61 = vld [vmem:[%s1 + $0x90] sm:$0xff]
  %v62 = vld [vmem:[%s1 + $0x98] sm:$0xff]
  %v63 = vld [vmem:[%s1 + $0xa0] sm:$0xff]
  %v64 = vld [vmem:[%s1 + $0xa8] sm:$0xff]
  %v65 = vld [vmem:[%s1 + $0xb0] sm:$0xff]
  %v66 = vld [vmem:[%s1 + $0xb8] sm:$0xff]
  %v67 = vld [vmem:[%s1 + $0xc0] sm:$0xff]
  %v68 = vld [vmem:[%s1 + $0xc8] sm:$0xff]
  %v69 = vld [vmem:[%s1 + $0xd0] sm:$0xff]
  %v70 = vld [vmem:[%s1 + $0xd8] sm:$0xff]
  %v71 = vld [vmem:[%s1 + $0xe0] sm:$0xff]
  %v72 = vld [vmem:[%s1 + $0xe8] sm:$0xff]
  %v73 = vld [vmem:[%s1 + $0xf0] sm:$0xff]
  %v74 = vld [vmem:[%s1 + $0xf8] sm:$0xff]
  %v75 = vld [vmem:[%s1 + $0x100] sm:$0xff]
  %v76 = vld [vmem:[%s1 + $0x108] sm:$0xff]
  %v77 = vld [vmem:[%s1 + $0x110] sm:$0xff]
  %v78 = vld [vmem:[%s1 + $0x118] sm:$0xff]
  %v79 = vld [vmem:[%s1 + $0x120] sm:$0xff]
  %v80 = vld [vmem:[%s1 + $0x128] sm:$0xff]
  %v81 = vld [vmem:[%s1 + $0x130] sm:$0xff]
  %v82 = vld [vmem:[%s1 + $0x138] sm:$0xff]
  %v83 = vld [vmem:[%s1 + $0x140] sm:$0xff]
  %v84 = vld [vmem:[%s1 + $0x148] sm:$0xff]
  %v85 = vld [vmem:[%s1 + $0x150] sm:$0xff]
  %v86 = vld [vmem:[%s1 + $0x158] sm:$0xff]
  %v87 = vld [vmem:[%s1 + $0x160] sm:$0xff]
  %v88 = vld [vmem:[%s1 + $0x168] sm:$0xff]
  %v89 = vld [vmem:[%s1 + $0x170] sm:$0xff]
  %v90 = vld [vmem:[%s1 + $0x178] sm:$0xff]
  %vm91 = vcmask 523264
  %v93 = vsel %vm91, %v28, 0
  %v96 = vsel %vm91, %v30, 0
  %v99 = vsel %vm91, %v32, 0
  %v102 = vsel %vm91, %v34, 0
  %104 = vmatprep.subr.mxu0 %v44
  %105 = vmatpush1.msra.mxu0 %v43
  %106 = vmatprep.subr.mxu0 %v46
  %107 = vmatpush1.msra.mxu0 %v45
  %108 = vmatprep.subr.mxu0 %v48
  %109 = vmatpush1.msra.mxu0 %v47
  %110 = vmatprep.subr.mxu0 %v50
  %111 = vmatpush1.msra.mxu0 %v49
  %112 = vmatprep.subr.mxu0 %v52
  %113 = vmatpush1.msra.mxu0 %v51
  %114 = vmatprep.subr.mxu0 %v54
  %115 = vmatpush1.msra.mxu0 %v53
  %116 = vmatprep.subr.mxu0 %v56
  %117 = vmatpush1.msra.mxu0 %v55
  %118 = vmatprep.subr.mxu0 %v58
  %119 = vmatpush1.msra.mxu0 %v57
  %120 = vmatprep.subr.mxu0 %v60
  %121 = vmatpush1.msra.mxu0 %v59
  %122 = vmatprep.subr.mxu0 %v62
  %123 = vmatpush1.msra.mxu0 %v61
  %124 = vmatprep.subr.mxu0 %v64
  %125 = vmatpush1.msra.mxu0 %v63
  %126 = vmatprep.subr.mxu0 %v66
  %127 = vmatpush1.msra.mxu0 %v65
  %128 = vmatprep.subr.mxu0 %v68
  %129 = vmatpush1.msra.mxu0 %v67
  %130 = vmatprep.subr.mxu0 %v70
  %131 = vmatpush1.msra.mxu0 %v69
  %132 = vmatprep.subr.mxu0 %v72
  %133 = vmatpush1.msra.mxu0 %v71
  %134 = vmatprep.subr.mxu0 %v74
  %135 = vmatpush1.msra.mxu0 %v73
  %136 = vmatprep.subr.mxu0 %v76
  %137 = vmatpush1.msra.mxu0 %v75
  %138 = vmatprep.subr.mxu0 %v78
  %139 = vmatpush1.msra.mxu0 %v77
  %140 = vmatprep.subr.mxu0 %v80
  %141 = vmatpush1.msra.mxu0 %v79
  %142 = vmatprep.subr.mxu0 %v82
  %143 = vmatpush1.msra.mxu0 %v81
  %144 = vmatprep.subr.mxu0 %v84
  %145 = vmatpush1.msra.mxu0 %v83
  %146 = vmatprep.subr.mxu0 %v86
  %147 = vmatpush1.msra.mxu0 %v85
  %148 = vmatprep.subr.mxu0 %v88
  %149 = vmatpush1.msra.mxu0 %v87
  %150 = vmatprep.subr.mxu0 %v90
  %151 = vmatpush1.msra.mxu0 %v89
  %152 = vmatprep.subr.mxu0 0.0
  %153 = vmatpush1.msra.mxu0 0.0
  %154 = vmatprep.subr.mxu0 0.0
  %155 = vmatpush1.msra.mxu0 0.0
  %156 = vmatprep.subr.mxu0 0.0
  %157 = vmatpush1.msra.mxu0 0.0
  %158 = vmatprep.subr.mxu0 0.0
  %159 = vmatpush1.msra.mxu0 0.0
  %160 = vmatprep.subr.mxu0 0.0
  %161 = vmatpush1.msra.mxu0 0.0
  %162 = vmatprep.subr.mxu0 0.0
  %163 = vmatpush1.msra.mxu0 0.0
  %164 = vmatprep.subr.mxu0 0.0
  %165 = vmatpush1.msra.mxu0 0.0
  %166 = vmatprep.subr.mxu0 0.0
  %167 = vmatpush1.msra.mxu0 0.0
  %168 = vmatprep.mubr.f32.mxu0 %v93
  %169 = vmatmul.mubr.f32.gmra.mrb[0].mxu0 %v27
  %v170 = vpop.f32.mrb[0].mxu0
  %v171 = vadd.f32 0.0, %v170
  %v172 = vpop.f32.mrb[0].mxu0
  %v173 = vadd.f32 0.0, %v172
  %174 = vmatprep.mubr.f32.mxu0 %v96
  %175 = vmatmul.mubr.f32.gmra.mrb[0].mxu0 %v29
  %v176 = vpop.f32.mrb[0].mxu0
  %v177 = vadd.f32 0.0, %v176
  %v178 = vpop.f32.mrb[0].mxu0
  %v179 = vadd.f32 0.0, %v178
  %180 = vmatprep.mubr.f32.mxu0 %v99
  %181 = vmatmul.mubr.f32.gmra.mrb[0].mxu0 %v31
  %v182 = vpop.f32.mrb[0].mxu0
  %v183 = vadd.f32 0.0, %v182
  %v184 = vpop.f32.mrb[0].mxu0
  %v185 = vadd.f32 0.0, %v184
  %186 = vmatprep.mubr.f32.mxu0 %v102
  %187 = vmatmul.mubr.f32.gmra.mrb[0].mxu0 %v33
  %v188 = vpop.f32.mrb[0].mxu0
  %v189 = vadd.f32 0.0, %v188
  %v190 = vpop.f32.mrb[0].mxu0
  %v191 = vadd.f32 0.0, %v190
  %192 = vdwg.mxu0
  %v193 = vadd.f32 %v35, %v171
  %v194 = vadd.f32 %v36, %v173
  %v195 = vadd.f32 %v37, %v177
  %v196 = vadd.f32 %v38, %v179
  %v197 = vadd.f32 %v39, %v183
  %v198 = vadd.f32 %v40, %v185
  %v199 = vadd.f32 %v41, %v189
  %v200 = vadd.f32 %v42, %v191
  %201 = vst [vmem:[#allocation2] sm:$0xff] %v193
  %202 = vst.msk [vmem:[#allocation2 + $0x8] sm:$0xff] %vm91, %v194
  %203 = vst [vmem:[#allocation2 + $0x10] sm:$0xff] %v195
  %204 = vst.msk [vmem:[#allocation2 + $0x18] sm:$0xff] %vm91, %v196
  %205 = vst [vmem:[#allocation2 + $0x20] sm:$0xff] %v197
  %206 = vst.msk [vmem:[#allocation2 + $0x28] sm:$0xff] %vm91, %v198
  %207 = vst [vmem:[#allocation2 + $0x30] sm:$0xff] %v199
  %208 = vst.msk [vmem:[#allocation2 + $0x38] sm:$0xff] %vm91, %v200
  // Predicated region
  $region18: #{mid_block_forward.22} parent=0 // pred_check
    %p209 = pneg %p14
  $region19: #{mid_block_forward.22} parent=0 // pred_check_branch
    %211 = sbr.rel (%p209) target = $region21
  $region20: #{mid_block_forward.22} parent=0 // pred_region
    %v212 = vld [vmem:[#allocation2] sm:$0xff]
    %v213 = vld [vmem:[#allocation2 + $0x8] sm:$0xff]
    %v214 = vld [vmem:[#allocation2 + $0x10] sm:$0xff]
    %v215 = vld [vmem:[#allocation2 + $0x18] sm:$0xff]
    %v216 = vld [vmem:[#allocation2 + $0x20] sm:$0xff]
    %v217 = vld [vmem:[#allocation2 + $0x28] sm:$0xff]
    %v218 = vld [vmem:[#allocation2 + $0x30] sm:$0xff]
    %v219 = vld [vmem:[#allocation2 + $0x38] sm:$0xff]
    %v220 = vld [vmem:[%s2] sm:$0x3]
    %v222 = vlaneseq
    %v223 = vshrl.u32 %v222, 7
    %v224 = vsub.s32 0, %v223
    %v225 = vrot.slane %v220, %v224
    %v226 = vlaneseq
    %v227 = vshrl.u32 %v226, 7
    %v228 = vsub.s32 1, %v227
    %v229 = vrot.slane %v220, %v228
    %v232 = vadd.f32 %v212, %v225
    %v233 = vadd.f32 %v213, %v229
    %v234 = vadd.f32 %v214, %v225
    %v235 = vadd.f32 %v215, %v229
    %v236 = vadd.f32 %v216, %v225
    %v237 = vadd.f32 %v217, %v229
    %v238 = vadd.f32 %v218, %v225
    %v239 = vadd.f32 %v219, %v229
    %240 = vst [vmem:[%s3] sm:$0xff] %v232
    %241 = vst.msk [vmem:[%s3 + $0x8] sm:$0xff] %vm91, %v233
    %242 = vst [vmem:[%s3 + $0x10] sm:$0xff] %v234
    %243 = vst.msk [vmem:[%s3 + $0x18] sm:$0xff] %vm91, %v235
    %244 = vst [vmem:[%s3 + $0x20] sm:$0xff] %v236
    %245 = vst.msk [vmem:[%s3 + $0x28] sm:$0xff] %vm91, %v237
    %246 = vst [vmem:[%s3 + $0x30] sm:$0xff] %v238
    %247 = vst.msk [vmem:[%s3 + $0x38] sm:$0xff] %vm91, %v239
  $region21: #{mid_block_forward.22} parent=0 // pred_fallthru
    _
  // Predicated region
  $region22: #{mid_block_forward.22} parent=0 // pred_check
    _
  $region23: #{mid_block_forward.22} parent=0 // pred_check_branch
    %249 = sbr.rel (0) target = $region25
  $region24: #{mid_block_forward.22} parent=0 // pred_region
    _
  $region25: #{mid_block_forward.22} parent=0 // pred_fallthru
    _
  // Predicated region
  $region26: #{mid_block_forward.22} parent=0 // pred_check
    _
  $region27: #{mid_block_forward.22} parent=0 // pred_check_branch
    %251 = sbr.rel (0) target = $region29
  $region28: #{mid_block_forward.22} parent=0 // pred_region
    _
  $region29: #{mid_block_forward.22} parent=0 // pred_fallthru
    _

// kernel: mid_block_forward.23
$region0: #{mid_block_forward.23}
  #allocation0 [shape = 'u32[]', space=smem, size = 0x4, offset = 0x4, fixed_abs, tag = 'smem constant byte address 0x4 - core index']
  #allocation1 [shape = 'u32[144,128]{1,0:T(1,128)}', space=vmem, size = 0x12000, scoped, tag = 'internal scratch']
  %s0 = inlined_call_operand.vmem [shape: f32[2,12,256], index: 0, kind: input, shape index: {}]
  %s1 = inlined_call_operand.vmem [shape: f32[12,1], index: 1, kind: input, shape index: {}]
  %s2 = inlined_call_operand.vmem [shape: f32[12,1], index: 2, kind: input, shape index: {}]
  %s3 = inlined_call_operand.vmem [shape: f32[2,12,256], index: 3, kind: output, shape index: {}]
  %s4 = sld [smem:[#allocation0]]
  $region45: #{mid_block_forward.23} parent=0
    _
  %s6 = ssub.s32 1, %s4
  %s7 = scalar_select 0, %s6, %s4
  loop: start=0, step=1, limit=4
  $region2: #{mid_block_forward.23} parent=0 // loop_pre_header
    _
  $region3: #{mid_block_forward.23} parent=0 // loop_header
    %s9 = sphi 0, %s13
    %p10 = scmp.ge.s32.totalorder %s9, 4
    %s19 = sphi 0, %s21
    %s22 = sphi 0, %s19
    %s23 = sphi 0, %s22
    %s39 = sphi 0, %s23
    %s43 = sphi 0, %s43
    %s45 = sphi 0, %s43
    %s46 = sphi 0, %s45
    %s60 = sphi 0, %s46
    %s64 = sphi 0, %s64
    %s66 = sphi 0, %s64
    %s67 = sphi 0, %s66
    %s81 = sphi 0, %s67
    %s87 = sphi 0, %s89
    %s90 = sphi 0, %s87
    %s91 = sphi 0, %s90
    %s107 = sphi 0, %s91
  $region4: #{mid_block_forward.23} parent=0 // loop_header_branch
    %12 = sbr.rel (%p10) target = $region8
  $region5: #{mid_block_forward.23} parent=0 // loop_body
    %s14 = ssub.s32 %s9, 1
    %s15 = ssub.s32 %s9, 2
    %s16 = sadd.s32 %s9, 1
    %s17 = ssub.s32 %s9, %s16
    %p18 = scmp.eq.s32.totalorder %s17, 0
    %s20 = sadd.s32 %s19, 1
    %s21 = scalar_select %p18, %s19, %s20
    %p24 = pneg %p18
    %p25 = scmp.eq.s32.totalorder %s9, 1
    %p26 = por %p24, %p25
    %p27 = scmp.ne.s32.totalorder %s19, %s22
    %p28 = scmp.eq.s32.totalorder %s9, 0
    %p29 = por %p27, %p28
    %p30 = scmp.ne.s32.totalorder %s19, %s22
    %p31 = scmp.eq.s32.totalorder %s14, 1
    %p32 = por %p30, %p31
    %p33 = scmp.ne.s32.totalorder %s22, %s23
    %p34 = scmp.eq.s32.totalorder %s14, 0
    %p35 = por %p33, %p34
    %p36 = scmp.ne.s32.totalorder %s22, %s23
    %p37 = scmp.eq.s32.totalorder %s15, 1
    %p38 = por %p36, %p37
    %p40 = scmp.ne.s32.totalorder %s23, %s39
    %p41 = scmp.eq.s32.totalorder %s15, 0
    %p42 = por %p40, %p41
    %s44 = sadd.s32 %s43, 1
    %p47 = scmp.eq.s32.totalorder %s9, 1
    %p48 = scmp.ne.s32.totalorder %s43, %s45
    %p49 = scmp.eq.s32.totalorder %s9, 0
    %p50 = por %p48, %p49
    %p51 = scmp.ne.s32.totalorder %s43, %s45
    %p52 = scmp.eq.s32.totalorder %s14, 1
    %p53 = por %p51, %p52
    %p54 = scmp.ne.s32.totalorder %s45, %s46
    %p55 = scmp.eq.s32.totalorder %s14, 0
    %p56 = por %p54, %p55
    %p57 = scmp.ne.s32.totalorder %s45, %s46
    %p58 = scmp.eq.s32.totalorder %s15, 1
    %p59 = por %p57, %p58
    %p61 = scmp.ne.s32.totalorder %s46, %s60
    %p62 = scmp.eq.s32.totalorder %s15, 0
    %p63 = por %p61, %p62
    %s65 = sadd.s32 %s64, 1
    %p68 = scmp.eq.s32.totalorder %s9, 1
    %p69 = scmp.ne.s32.totalorder %s64, %s66
    %p70 = scmp.eq.s32.totalorder %s9, 0
    %p71 = por %p69, %p70
    %p72 = scmp.ne.s32.totalorder %s64, %s66
    %p73 = scmp.eq.s32.totalorder %s14, 1
    %p74 = por %p72, %p73
    %p75 = scmp.ne.s32.totalorder %s66, %s67
    %p76 = scmp.eq.s32.totalorder %s14, 0
    %p77 = por %p75, %p76
    %p78 = scmp.ne.s32.totalorder %s66, %s67
    %p79 = scmp.eq.s32.totalorder %s15, 1
    %p80 = por %p78, %p79
    %p82 = scmp.ne.s32.totalorder %s67, %s81
    %p83 = scmp.eq.s32.totalorder %s15, 0
    %p84 = por %p82, %p83
    %s85 = ssub.s32 %s9, %s16
    %p86 = scmp.eq.s32.totalorder %s85, 0
    %s88 = sadd.s32 %s87, 1
    %s89 = scalar_select %p86, %s87, %s88
    %p92 = pneg %p86
    %p93 = scmp.eq.s32.totalorder %s9, 1
    %p94 = por %p92, %p93
    %p95 = scmp.ne.s32.totalorder %s87, %s90
    %p96 = scmp.eq.s32.totalorder %s9, 0
    %p97 = por %p95, %p96
    %p98 = scmp.ne.s32.totalorder %s87, %s90
    %p99 = scmp.eq.s32.totalorder %s14, 1
    %p100 = por %p98, %p99
    %p101 = scmp.ne.s32.totalorder %s90, %s91
    %p102 = scmp.eq.s32.totalorder %s14, 0
    %p103 = por %p101, %p102
    %p104 = scmp.ne.s32.totalorder %s90, %s91
    %p105 = scmp.eq.s32.totalorder %s15, 1
    %p106 = por %p104, %p105
    %p108 = scmp.ne.s32.totalorder %s91, %s107
    %p109 = scmp.eq.s32.totalorder %s15, 0
    %p110 = por %p108, %p109
    %p111 = scmp.le.s32.totalorder 1, %s9
    %p112 = scmp.lt.s32.totalorder %s9, 3
    %p113 = pnand %p111, %p112
    %p114 = pneg %p113
    // Predicated region
    $region9: #{mid_block_forward.23} parent=5 // pred_check
      _
    $region10: #{mid_block_forward.23} parent=5 // pred_check_branch
      %116 = sbr.rel (%p113) target = $region12
    $region11: #{mid_block_forward.23} parent=5 // pred_region
      %s117 = ssub.s32 %s9, 1
      // Predicated region
      $region13: #{mid_block_forward.23} parent=11 // pred_check
        %p118 = pneg %p56
      $region14: #{mid_block_forward.23} parent=11 // pred_check_branch
        %120 = sbr.rel (%p118) target = $region16
      $region15: #{mid_block_forward.23} parent=11 // pred_region
        _
      $region16: #{mid_block_forward.23} parent=11 // pred_fallthru
        _
      // Predicated region
      $region17: #{mid_block_forward.23} parent=11 // pred_check
        %p121 = pneg %p77
      $region18: #{mid_block_forward.23} parent=11 // pred_check_branch
        %123 = sbr.rel (%p121) target = $region20
      $region19: #{mid_block_forward.23} parent=11 // pred_region
        _
      $region20: #{mid_block_forward.23} parent=11 // pred_fallthru
        _
    $region12: #{mid_block_forward.23} parent=5 // pred_fallthru
      _
    %p124 = scmp.lt.s32.totalorder %s9, 2
    // Predicated region
    $region21: #{mid_block_forward.23} parent=5 // pred_check
      %p125 = pneg %p124
    $region22: #{mid_block_forward.23} parent=5 // pred_check_branch
      %127 = sbr.rel (%p125) target = $region24
    $region23: #{mid_block_forward.23} parent=5 // pred_region
      // Predicated region
      $region25: #{mid_block_forward.23} parent=23 // pred_check
        %p128 = pneg %p29
      $region26: #{mid_block_forward.23} parent=23 // pred_check_branch
        %130 = sbr.rel (%p128) target = $region28
      $region27: #{mid_block_forward.23} parent=23 // pred_region
        %p131 = scmp.lt.s32.totalorder %s9, 1
        %s132 = scalar_select %p131, %s9, 1
        %s133 = smul.addr %s132, 4
        %s134 = smul.addr %s133, 8
        %s135 = scalar_lea.vmem %s0, %s134
      $region28: #{mid_block_forward.23} parent=23 // pred_fallthru
        _
    $region24: #{mid_block_forward.23} parent=5 // pred_fallthru
      _
    %p136 = scmp.le.s32.totalorder 1, %s9
    %p137 = scmp.lt.s32.totalorder %s9, 3
    %p138 = pnand %p136, %p137
    %p139 = pneg %p138
    // Predicated region
    $region29: #{mid_block_forward.23} parent=5 // pred_check
      _
    $region30: #{mid_block_forward.23} parent=5 // pred_check_branch
      %141 = sbr.rel (%p138) target = $region32
    $region31: #{mid_block_forward.23} parent=5 // pred_region
      %s142 = ssub.s32 %s9, 1
      %p143 = scmp.lt.s32.totalorder %s14, 1
      %s144 = scalar_select %p143, %s14, 1
      %s145 = smul.addr %s144, 4
      %s146 = smul.addr %s145, 8
      %s147 = scalar_lea.vmem %s0, %s146
      %p148 = pneg %p35
      %p149 = pneg %p32
      %p150 = pneg %p56
      %p151 = pneg %p53
      %p152 = pneg %p77
      %p153 = pneg %p74
      %p154 = pneg %p103
      %p155 = pneg %p100
      %p156 = scmp.lt.s32.totalorder %s14, 1
      %s157 = scalar_select %p156, %s14, 1
      %s158 = smul.addr %s157, 4
      %s159 = smul.addr %s158, 8
      %s160 = scalar_lea.vmem %s3, %s159
      %p161 = scmp.lt.s32.totalorder %s14, 1
      %s162 = scalar_select %p161, %s14, 1
      %s163 = smul.addr %s162, 4
      %s164 = smul.addr %s163, 8
      %s165 = scalar_lea.vmem %s0, %s164
      %p166 = scmp.lt.s32.totalorder %s14, 1
      %s167 = scalar_select %p166, %s14, 1
      %s168 = smul.addr %s167, 4
      %s169 = smul.addr %s168, 8
      %s170 = scalar_lea.vmem %s3, %s169
      %v171 = vld [vmem:[%s165] sm:$0xff]
      %v172 = vld [vmem:[%s165 + $0x8] sm:$0xff]
      %v173 = vld [vmem:[%s165 + $0x10] sm:$0xf]
      %v174 = vld [vmem:[%s165 + $0x18] sm:$0xf]
      %v175 = vld [vmem:[%s1] sm:$0xff]
      %v176 = vld [vmem:[%s1 + $0x8] sm:$0xf]
      %v177 = vld [vmem:[%s2] sm:$0xff]
      %v178 = vld [vmem:[%s2 + $0x8] sm:$0xf]
      %vm179 = vcmask 1043456
      %v180 = vsel %vm179, %v171, 0.0
      %v181 = vsel %vm179, %v172, 0.0
      %v182 = vadd.f32 %v180, %v181
      %183 = vadd.xlane.f32.xlu0 %v182
      %v184 = vpop.xlane.xlu0 %183
      %v185 = vrot.slane %v184, 4
      %v186 = vadd.f32 %v184, %v185
      %v187 = vrot.slane %v186, 2
      %v188 = vadd.f32 %v186, %v187
      %v189 = vrot.slane %v188, 1
      %v190 = vadd.f32 %v188, %v189
      %s191 = vtos %v190
      %v192 = vstv %s191
      %v193 = vrcp.pop 1024.0
      %v194 = vmul.f32 %v192, %v193
      %v195 = vsub.f32 %v171, %v194
      %v196 = vsub.f32 %v172, %v194
      %v197 = vmul.f32 %v195, %v195
      %v198 = vmul.f32 %v196, %v196
      %v199 = vsel %vm179, %v197, 0.0
      %v200 = vsel %vm179, %v198, 0.0
      %v201 = vadd.f32 %v199, %v200
      %202 = vadd.xlane.f32.xlu0 %v201
      %v203 = vpop.xlane.xlu0 %202
      %v204 = vrot.slane %v203, 4
      %v205 = vadd.f32 %v203, %v204
      %v206 = vrot.slane %v205, 2
      %v207 = vadd.f32 %v205, %v206
      %v208 = vrot.slane %v207, 1
      %v209 = vadd.f32 %v207, %v208
      %s210 = vtos %v209
      %v211 = vstv %s210
      %v212 = vmul.f32 %v211, %v193
      %v213 = vadd.f32 %v212, 1e-05
      %v214 = vrsqrt.pop %v213
      %v215 = vmul.f32 %v195, %v214
      %v216 = vmul.f32 %v196, %v214
      %218 = vset.pattern.permute.xlu0 0
      %219 = vperm.xlu0 %218, %v175
      %v220 = vpop.permute.xlu0 %219
      %v222 = vmul.f32 %v215, %v220
      %v223 = vmul.f32 %v216, %v220
      %225 = vset.pattern.permute.xlu0 0
      %226 = vperm.xlu0 %225, %v177
      %v227 = vpop.permute.xlu0 %226
      %v229 = vadd.f32 %v222, %v227
      %v230 = vadd.f32 %v223, %v227
      %v231 = vxor.u32 %v229, 2147483648
      %v232 = vxor.u32 %v230, 2147483648
      %v233 = vmul.f32 %v231, 1.442695
      %v234 = vpow.pop %v233
      %v235 = vmul.f32 %v232, 1.442695
      %v236 = vpow.pop %v235
      %v237 = vadd.f32 %v234, 1.0
      %v238 = vadd.f32 %v236, 1.0
      %v239 = vrcp.pop %v237
      %v240 = vmul.f32 1.0, %v239
      %v241 = vrcp.pop %v238
      %v242 = vmul.f32 1.0, %v241
      %v243 = vmul.f32 %v229, %v240
      %v244 = vmul.f32 %v230, %v242
      %245 = vst [vmem:[%s170] sm:$0xf] %v243
      %246 = vst [vmem:[%s170 + $0x8] sm:$0xf] %v244
      %v249 = vrot.slane %v171, 4
      %v250 = vrot.slane %v172, 4
      %v253 = vsel %vm179, %v249, 0.0
      %v254 = vsel %vm179, %v250, 0.0
      %v255 = vadd.f32 %v253, %v254
      %256 = vadd.xlane.f32.xlu0 %v255
      %v257 = vpop.xlane.xlu0 %256
      %v258 = vrot.slane %v257, 4
      %v259 = vadd.f32 %v257, %v258
      %v260 = vrot.slane %v259, 2
      %v261 = vadd.f32 %v259, %v260
      %v262 = vrot.slane %v261, 1
      %v263 = vadd.f32 %v261, %v262
      %s264 = vtos %v263
      %v265 = vstv %s264
      %v266 = vmul.f32 %v265, %v193
      %v267 = vsub.f32 %v171, %v266
      %v268 = vsub.f32 %v172, %v266
      %v269 = vmul.f32 %v267, %v267
      %v270 = vmul.f32 %v268, %v268
      %v273 = vrot.slane %v269, 4
      %v274 = vrot.slane %v270, 4
      %v277 = vsel %vm179, %v273, 0.0
      %v278 = vsel %vm179, %v274, 0.0
      %v279 = vadd.f32 %v277, %v278
      %280 = vadd.xlane.f32.xlu0 %v279
      %v281 = vpop.xlane.xlu0 %280
      %v282 = vrot.slane %v281, 4
      %v283 = vadd.f32 %v281, %v282
      %v284 = vrot.slane %v283, 2
      %v285 = vadd.f32 %v283, %v284
      %v286 = vrot.slane %v285, 1
      %v287 = vadd.f32 %v285, %v286
      %s288 = vtos %v287
      %v289 = vstv %s288
      %v290 = vmul.f32 %v289, %v193
      %v291 = vadd.f32 %v290, 1e-05
      %v292 = vrsqrt.pop %v291
      %v293 = vmul.f32 %v267, %v292
      %v294 = vmul.f32 %v268, %v292
      %v295 = vmul.f32 %v293, %v220
      %v296 = vmul.f32 %v294, %v220
      %v297 = vadd.f32 %v295, %v227
      %v298 = vadd.f32 %v296, %v227
      %v299 = vxor.u32 %v297, 2147483648
      %v300 = vxor.u32 %v298, 2147483648
      %v301 = vmul.f32 %v299, 1.442695
      %v302 = vpow.pop %v301
      %v303 = vmul.f32 %v300, 1.442695
      %v304 = vpow.pop %v303
      %v305 = vadd.f32 %v302, 1.0
      %v306 = vadd.f32 %v304, 1.0
      %v307 = vrcp.pop %v305
      %v308 = vmul.f32 1.0, %v307
      %v309 = vrcp.pop %v306
      %v310 = vmul.f32 1.0, %v309
      %v311 = vmul.f32 %v297, %v308
      %v312 = vmul.f32 %v298, %v310
      %313 = vst [vmem:[%s170] sm:$0xf0] %v311
      %314 = vst [vmem:[%s170 + $0x8] sm:$0xf0] %v312
      %v315 = vsel %vm179, %v173, 0.0
      %v316 = vsel %vm179, %v174, 0.0
      %v317 = vadd.f32 %v315, %v316
      %318 = vadd.xlane.f32.xlu0 %v317
      %v319 = vpop.xlane.xlu0 %318
      %v320 = vrot.slane %v319, 4
      %v321 = vadd.f32 %v319, %v320
      %v322 = vrot.slane %v321, 2
      %v323 = vadd.f32 %v321, %v322
      %v324 = vrot.slane %v323, 1
      %v325 = vadd.f32 %v323, %v324
      %s326 = vtos %v325
      %v327 = vstv %s326
      %v328 = vmul.f32 %v327, %v193
      %v329 = vsub.f32 %v173, %v328
      %v330 = vsub.f32 %v174, %v328
      %v331 = vmul.f32 %v329, %v329
      %v332 = vmul.f32 %v330, %v330
      %v333 = vsel %vm179, %v331, 0.0
      %v334 = vsel %vm179, %v332, 0.0
      %v335 = vadd.f32 %v333, %v334
      %336 = vadd.xlane.f32.xlu0 %v335
      %v337 = vpop.xlane.xlu0 %336
      %v338 = vrot.slane %v337, 4
      %v339 = vadd.f32 %v337, %v338
      %v340 = vrot.slane %v339, 2
      %v341 = vadd.f32 %v339, %v340
      %v342 = vrot.slane %v341, 1
      %v343 = vadd.f32 %v341, %v342
      %s344 = vtos %v343
      %v345 = vstv %s344
      %v346 = vmul.f32 %v345, %v193
      %v347 = vadd.f32 %v346, 1e-05
      %v348 = vrsqrt.pop %v347
      %v349 = vmul.f32 %v329, %v348
      %v350 = vmul.f32 %v330, %v348
      %352 = vset.pattern.permute.xlu0 0
      %353 = vperm.xlu0 %352, %v176
      %v354 = vpop.permute.xlu0 %353
      %v356 = vmul.f32 %v349, %v354
      %v357 = vmul.f32 %v350, %v354
      %359 = vset.pattern.permute.xlu0 0
      %360 = vperm.xlu0 %359, %v178
      %v361 = vpop.permute.xlu0 %360
      %v363 = vadd.f32 %v356, %v361
      %v364 = vadd.f32 %v357, %v361
      %v365 = vxor.u32 %v363, 2147483648
      %v366 = vxor.u32 %v364, 2147483648
      %v367 = vmul.f32 %v365, 1.442695
      %v368 = vpow.pop %v367
      %v369 = vmul.f32 %v366, 1.442695
      %v370 = vpow.pop %v369
      %v371 = vadd.f32 %v368, 1.0
      %v372 = vadd.f32 %v370, 1.0
      %v373 = vrcp.pop %v371
      %v374 = vmul.f32 1.0, %v373
      %v375 = vrcp.pop %v372
      %v376 = vmul.f32 1.0, %v375
      %v377 = vmul.f32 %v363, %v374
      %v378 = vmul.f32 %v364, %v376
      %379 = vst [vmem:[%s170 + $0x10] sm:$0xf] %v377
      %380 = vst [vmem:[%s170 + $0x18] sm:$0xf] %v378
      %p381 = scmp.lt.s32.totalorder %s14, 1
      %s382 = scalar_select %p381, %s14, 1
      %s383 = smul.addr %s382, 4
      %s384 = smul.addr %s383, 8
      %s385 = scalar_lea.vmem %s3, %s384
      // Predicated region
      $region33: #{mid_block_forward.23} parent=31 // pred_check
        %p386 = pneg %p100
      $region34: #{mid_block_forward.23} parent=31 // pred_check_branch
        %388 = sbr.rel (%p386) target = $region36
      $region35: #{mid_block_forward.23} parent=31 // pred_region
        _
      $region36: #{mid_block_forward.23} parent=31 // pred_fallthru
        _
    $region32: #{mid_block_forward.23} parent=5 // pred_fallthru
      _
    %p389 = scmp.le.s32.totalorder 2, %s9
    // Predicated region
    $region37: #{mid_block_forward.23} parent=5 // pred_check
      %p390 = pneg %p389
    $region38: #{mid_block_forward.23} parent=5 // pred_check_branch
      %392 = sbr.rel (%p390) target = $region40
    $region39: #{mid_block_forward.23} parent=5 // pred_region
      %s393 = ssub.s32 %s9, 2
      // Predicated region
      $region41: #{mid_block_forward.23} parent=39 // pred_check
        %p394 = pneg %p106
      $region42: #{mid_block_forward.23} parent=39 // pred_check_branch
        %396 = sbr.rel (%p394) target = $region44
      $region43: #{mid_block_forward.23} parent=39 // pred_region
        %p397 = scmp.lt.s32.totalorder %s15, 1
        %s398 = scalar_select %p397, %s15, 1
        %s399 = smul.addr %s398, 4
        %s400 = smul.addr %s399, 8
        %s401 = scalar_lea.vmem %s3, %s400
      $region44: #{mid_block_forward.23} parent=39 // pred_fallthru
        _
    $region40: #{mid_block_forward.23} parent=5 // pred_fallthru
      _
  $region6: #{mid_block_forward.23} parent=0 // loop_footer
    %s13 = sadd.s32 1, %s9
  $region7: #{mid_block_forward.23} parent=0 // loop_footer_branch
    %8 = sbr.rel target = $region3
  $region8: #{mid_block_forward.23} parent=0 // loop_exit
    _

// kernel: mid_block_forward.24
$region0: #{mid_block_forward.24}
  #allocation0 [shape = 'u32[]', space=smem, size = 0x4, offset = 0x4, fixed_abs, tag = 'smem constant byte address 0x4 - core index']
  #allocation1 [shape = 'u32[144,128]{1,0:T(1,128)}', space=vmem, size = 0x12000, scoped, tag = 'internal scratch']
  #allocation2 [shape = 'f32[12,256]{1,0:T(8,128)}', space=vmem, size = 0x4000, scoped, tag = 'scratch operand']
  %s0 = inlined_call_operand.vmem [shape: f32[12,108], index: 0, kind: input, shape index: {}]
  %s1 = inlined_call_operand.vmem [shape: f32[2,108,256], index: 1, kind: input, shape index: {}]
  %s2 = inlined_call_operand.vmem [shape: f32[12,1], index: 2, kind: input, shape index: {}]
  %s3 = inlined_call_operand.vmem [shape: f32[2,12,256], index: 3, kind: output, shape index: {}]
  %s4 = sld [smem:[#allocation0]]
  $region53: #{mid_block_forward.24} parent=0
    _
  %s6 = ssub.s32 1, %s4
  %s7 = scalar_select 0, %s6, %s4
  loop: start=0, step=1, limit=4
  $region2: #{mid_block_forward.24} parent=0 // loop_pre_header
    _
  $region3: #{mid_block_forward.24} parent=0 // loop_header
    %s9 = sphi 0, %s13
    %p10 = scmp.ge.s32.totalorder %s9, 4
    %s16 = sphi 0, %s35
    %s17 = sphi 0, %s31
    %s18 = sphi 0, %s27
    %s19 = sphi 0, %s16
    %s20 = sphi 0, %s17
    %s21 = sphi 0, %s18
    %s22 = sphi 0, %s19
    %s23 = sphi 0, %s20
    %s24 = sphi 0, %s21
    %s38 = sphi 0, %s40
    %s41 = sphi 0, %s38
    %s42 = sphi 0, %s41
    %s58 = sphi 0, %s42
    %s68 = sphi 0, %s70
    %s71 = sphi 0, %s68
    %s72 = sphi 0, %s71
    %s88 = sphi 0, %s72
    %s92 = sphi 0, %s92
    %s94 = sphi 0, %s92
    %s95 = sphi 0, %s94
    %s109 = sphi 0, %s95
    %s117 = sphi 0, %s119
    %s120 = sphi 0, %s117
    %s121 = sphi 0, %s120
    %s137 = sphi 0, %s121
  $region4: #{mid_block_forward.24} parent=0 // loop_header_branch
    %12 = sbr.rel (%p10) target = $region8
  $region5: #{mid_block_forward.24} parent=0 // loop_body
    %s14 = ssub.s32 %s9, 1
    %s15 = ssub.s32 %s9, 2
    %s25 = sadd.s32 1, %s18
    %p26 = scmp.ge.s32.totalorder %s25, 1
    %s27 = scalar_select %p26, 0, %s25
    %s28 = sadd.s32 1, %s17
    %s29 = scalar_select %p26, %s28, %s17
    %p30 = scmp.ge.s32.totalorder %s29, 1
    %s31 = scalar_select %p30, 0, %s29
    %s32 = sadd.s32 1, %s16
    %s33 = scalar_select %p30, %s32, %s16
    %p34 = scmp.ge.s32.totalorder %s33, 2
    %s35 = scalar_select %p34, 0, %s33
    %s36 = ssub.s32 %s18, %s27
    %p37 = scmp.eq.s32.totalorder %s36, 0
    %s39 = sadd.s32 %s38, 1
    %s40 = scalar_select %p37, %s38, %s39
    %p43 = pneg %p37
    %p44 = scmp.eq.s32.totalorder %s9, 1
    %p45 = por %p43, %p44
    %p46 = scmp.ne.s32.totalorder %s38, %s41
    %p47 = scmp.eq.s32.totalorder %s9, 0
    %p48 = por %p46, %p47
    %p49 = scmp.ne.s32.totalorder %s38, %s41
    %p50 = scmp.eq.s32.totalorder %s14, 1
    %p51 = por %p49, %p50
    %p52 = scmp.ne.s32.totalorder %s41, %s42
    %p53 = scmp.eq.s32.totalorder %s14, 0
    %p54 = por %p52, %p53
    %p55 = scmp.ne.s32.totalorder %s41, %s42
    %p56 = scmp.eq.s32.totalorder %s15, 1
    %p57 = por %p55, %p56
    %p59 = scmp.ne.s32.totalorder %s42, %s58
    %p60 = scmp.eq.s32.totalorder %s15, 0
    %p61 = por %p59, %p60
    %s62 = ssub.s32 %s16, %s35
    %s63 = ssub.s32 %s18, %s27
    %s64 = sor.u32 %s62, %s63
    %s65 = ssub.s32 %s17, %s31
    %s66 = sor.u32 %s64, %s65
    %p67 = scmp.eq.s32.totalorder %s66, 0
    %s69 = sadd.s32 %s68, 1
    %s70 = scalar_select %p67, %s68, %s69
    %p73 = pneg %p67
    %p74 = scmp.eq.s32.totalorder %s9, 1
    %p75 = por %p73, %p74
    %p76 = scmp.ne.s32.totalorder %s68, %s71
    %p77 = scmp.eq.s32.totalorder %s9, 0
    %p78 = por %p76, %p77
    %p79 = scmp.ne.s32.totalorder %s68, %s71
    %p80 = scmp.eq.s32.totalorder %s14, 1
    %p81 = por %p79, %p80
    %p82 = scmp.ne.s32.totalorder %s71, %s72
    %p83 = scmp.eq.s32.totalorder %s14, 0
    %p84 = por %p82, %p83
    %p85 = scmp.ne.s32.totalorder %s71, %s72
    %p86 = scmp.eq.s32.totalorder %s15, 1
    %p87 = por %p85, %p86
    %p89 = scmp.ne.s32.totalorder %s72, %s88
    %p90 = scmp.eq.s32.totalorder %s15, 0
    %p91 = por %p89, %p90
    %s93 = sadd.s32 %s92, 1
    %p96 = scmp.eq.s32.totalorder %s9, 1
    %p97 = scmp.ne.s32.totalorder %s92, %s94
    %p98 = scmp.eq.s32.totalorder %s9, 0
    %p99 = por %p97, %p98
    %p100 = scmp.ne.s32.totalorder %s92, %s94
    %p101 = scmp.eq.s32.totalorder %s14, 1
    %p102 = por %p100, %p101
    %p103 = scmp.ne.s32.totalorder %s94, %s95
    %p104 = scmp.eq.s32.totalorder %s14, 0
    %p105 = por %p103, %p104
    %p106 = scmp.ne.s32.totalorder %s94, %s95
    %p107 = scmp.eq.s32.totalorder %s15, 1
    %p108 = por %p106, %p107
    %p110 = scmp.ne.s32.totalorder %s95, %s109
    %p111 = scmp.eq.s32.totalorder %s15, 0
    %p112 = por %p110, %p111
    %s113 = ssub.s32 %s16, %s35
    %s114 = ssub.s32 %s17, %s31
    %s115 = sor.u32 %s113, %s114
    %p116 = scmp.eq.s32.totalorder %s115, 0
    %s118 = sadd.s32 %s117, 1
    %s119 = scalar_select %p116, %s117, %s118
    %p122 = pneg %p116
    %p123 = scmp.eq.s32.totalorder %s9, 1
    %p124 = por %p122, %p123
    %p125 = scmp.ne.s32.totalorder %s117, %s120
    %p126 = scmp.eq.s32.totalorder %s9, 0
    %p127 = por %p125, %p126
    %p128 = scmp.ne.s32.totalorder %s117, %s120
    %p129 = scmp.eq.s32.totalorder %s14, 1
    %p130 = por %p128, %p129
    %p131 = scmp.ne.s32.totalorder %s120, %s121
    %p132 = scmp.eq.s32.totalorder %s14, 0
    %p133 = por %p131, %p132
    %p134 = scmp.ne.s32.totalorder %s120, %s121
    %p135 = scmp.eq.s32.totalorder %s15, 1
    %p136 = por %p134, %p135
    %p138 = scmp.ne.s32.totalorder %s121, %s137
    %p139 = scmp.eq.s32.totalorder %s15, 0
    %p140 = por %p138, %p139
    %p141 = scmp.le.s32.totalorder 1, %s9
    %p142 = scmp.lt.s32.totalorder %s9, 3
    %p143 = pnand %p141, %p142
    %p144 = pneg %p143
    // Predicated region
    $region9: #{mid_block_forward.24} parent=5 // pred_check
      _
    $region10: #{mid_block_forward.24} parent=5 // pred_check_branch
      %146 = sbr.rel (%p143) target = $region12
    $region11: #{mid_block_forward.24} parent=5 // pred_region
      %s147 = ssub.s32 %s9, 1
      // Predicated region
      $region13: #{mid_block_forward.24} parent=11 // pred_check
        %p148 = pneg %p54
      $region14: #{mid_block_forward.24} parent=11 // pred_check_branch
        %150 = sbr.rel (%p148) target = $region16
      $region15: #{mid_block_forward.24} parent=11 // pred_region
        %p151 = scmp.lt.s32.totalorder %s21, 0
        %s152 = scalar_select %p151, %s21, 0
        %s153 = smul.addr %s152, 8
        %s154 = scalar_lea.vmem %s0, %s153
      $region16: #{mid_block_forward.24} parent=11 // pred_fallthru
        _
      // Predicated region
      $region17: #{mid_block_forward.24} parent=11 // pred_check
        %p155 = pneg %p105
      $region18: #{mid_block_forward.24} parent=11 // pred_check_branch
        %157 = sbr.rel (%p155) target = $region20
      $region19: #{mid_block_forward.24} parent=11 // pred_region
        _
      $region20: #{mid_block_forward.24} parent=11 // pred_fallthru
        _
    $region12: #{mid_block_forward.24} parent=5 // pred_fallthru
      _
    %p158 = scmp.lt.s32.totalorder %s9, 2
    // Predicated region
    $region21: #{mid_block_forward.24} parent=5 // pred_check
      %p159 = pneg %p158
    $region22: #{mid_block_forward.24} parent=5 // pred_check_branch
      %161 = sbr.rel (%p159) target = $region24
    $region23: #{mid_block_forward.24} parent=5 // pred_region
      // Predicated region
      $region25: #{mid_block_forward.24} parent=23 // pred_check
        %p162 = pneg %p78
      $region26: #{mid_block_forward.24} parent=23 // pred_check_branch
        %164 = sbr.rel (%p162) target = $region28
      $region27: #{mid_block_forward.24} parent=23 // pred_region
        %s165 = smul.u32 14, %s18
        %s166 = smul.u32 2, %s17
        %p167 = scmp.lt.s32.totalorder %s16, 1
        %s168 = scalar_select %p167, %s16, 1
        %p169 = scmp.lt.s32.totalorder %s165, 13
        %s170 = scalar_select %p169, %s165, 13
        %p171 = scmp.lt.s32.totalorder %s166, 1
        %s172 = scalar_select %p171, %s166, 1
        %s173 = smul.addr %s170, 2
        %s174 = sadd.s32 %s172, %s173
        %s175 = smul.addr %s168, 28
        %s176 = sadd.s32 %s174, %s175
        %s177 = smul.addr %s176, 8
        %s178 = scalar_lea.vmem %s1, %s177
        %s179 = smul.u32 14, %s18
        %s180 = smul.u32 2, %s17
      $region28: #{mid_block_forward.24} parent=23 // pred_fallthru
        _
    $region24: #{mid_block_forward.24} parent=5 // pred_fallthru
      _
    %p181 = scmp.le.s32.totalorder 1, %s9
    %p182 = scmp.lt.s32.totalorder %s9, 3
    %p183 = pnand %p181, %p182
    %p184 = pneg %p183
    // Predicated region
    $region29: #{mid_block_forward.24} parent=5 // pred_check
      _
    $region30: #{mid_block_forward.24} parent=5 // pred_check_branch
      %186 = sbr.rel (%p183) target = $region32
    $region31: #{mid_block_forward.24} parent=5 // pred_region
      %s187 = ssub.s32 %s9, 1
      %p188 = scmp.lt.s32.totalorder %s21, 0
      %s189 = scalar_select %p188, %s21, 0
      %s190 = smul.addr %s189, 8
      %s191 = scalar_lea.vmem %s0, %s190
      %p192 = pneg %p54
      %p193 = pneg %p51
      %s194 = smul.u32 14, %s21
      %s195 = smul.u32 2, %s20
      %p196 = scmp.lt.s32.totalorder %s19, 1
      %s197 = scalar_select %p196, %s19, 1
      %p198 = scmp.lt.s32.totalorder %s194, 13
      %s199 = scalar_select %p198, %s194, 13
      %p200 = scmp.lt.s32.totalorder %s195, 1
      %s201 = scalar_select %p200, %s195, 1
      %s202 = smul.addr %s199, 2
      %s203 = sadd.s32 %s201, %s202
      %s204 = smul.addr %s197, 28
      %s205 = sadd.s32 %s203, %s204
      %s206 = smul.addr %s205, 8
      %s207 = scalar_lea.vmem %s1, %s206
      %p208 = pneg %p84
      %p209 = pneg %p81
      %p210 = pneg %p105
      %p211 = pneg %p102
      %p212 = pneg %p133
      %p213 = pneg %p130
      %s214 = smul.u32 2, %s20
      %p215 = scmp.lt.s32.totalorder %s19, 1
      %s216 = scalar_select %p215, %s19, 1
      %p217 = scmp.lt.s32.totalorder %s214, 1
      %s218 = scalar_select %p217, %s214, 1
      %s219 = smul.addr %s216, 4
      %s220 = sadd.s32 %s218, %s219
      %s221 = smul.addr %s220, 8
      %s222 = scalar_lea.vmem %s3, %s221
      %p223 = scmp.lt.s32.totalorder %s21, 0
      %s224 = scalar_select %p223, %s21, 0
      %s225 = smul.addr %s224, 8
      %s226 = scalar_lea.vmem %s0, %s225
      %s227 = smul.u32 14, %s21
      %s228 = smul.u32 2, %s20
      %p229 = scmp.lt.s32.totalorder %s19, 1
      %s230 = scalar_select %p229, %s19, 1
      %p231 = scmp.lt.s32.totalorder %s227, 13
      %s232 = scalar_select %p231, %s227, 13
      %p233 = scmp.lt.s32.totalorder %s228, 1
      %s234 = scalar_select %p233, %s228, 1
      %s235 = smul.addr %s232, 2
      %s236 = sadd.s32 %s234, %s235
      %s237 = smul.addr %s230, 28
      %s238 = sadd.s32 %s236, %s237
      %s239 = smul.addr %s238, 8
      %s240 = scalar_lea.vmem %s1, %s239
      %s241 = smul.u32 14, %s21
      %s242 = smul.u32 2, %s20
      %s243 = smul.u32 2, %s20
      %p244 = scmp.lt.s32.totalorder %s19, 1
      %s245 = scalar_select %p244, %s19, 1
      %p246 = scmp.lt.s32.totalorder %s243, 1
      %s247 = scalar_select %p246, %s243, 1
      %s248 = smul.addr %s245, 4
      %s249 = sadd.s32 %s247, %s248
      %s250 = smul.addr %s249, 8
      %s251 = scalar_lea.vmem %s3, %s250
      %s252 = smul.u32 2, %s20
      %p253 = scmp.eq.s32.totalorder %s21, 0
      // Predicated region
      $region33: #{mid_block_forward.24} parent=31 // pred_check
        %p254 = pneg %p253
      $region34: #{mid_block_forward.24} parent=31 // pred_check_branch
        %256 = sbr.rel (%p254) target = $region36
      $region35: #{mid_block_forward.24} parent=31 // pred_region
        %257 = vst [vmem:[#allocation2] sm:$0xff] 0.0
        %258 = vst [vmem:[#allocation2 + $0x8] sm:$0xff] 0.0
        %259 = vst [vmem:[#allocation2 + $0x10] sm:$0xf] 0.0
        %260 = vst [vmem:[#allocation2 + $0x18] sm:$0xf] 0.0
      $region36: #{mid_block_forward.24} parent=31 // pred_fallthru
        _
      %v261 = vld [vmem:[#allocation2] sm:$0xff]
      %v262 = vld [vmem:[#allocation2 + $0x8] sm:$0xff]
      %v263 = vld [vmem:[#allocation2 + $0x10] sm:$0xf]
      %v264 = vld [vmem:[#allocation2 + $0x18] sm:$0xf]
      %v265 = vld [vmem:[%s226] sm:$0xff]
      %v266 = vld [vmem:[%s226 + $0x8] sm:$0xf]
      %v267 = vld [vmem:[%s240] sm:$0xff]
      %v268 = vld [vmem:[%s240 + $0x8] sm:$0xff]
      %v269 = vld [vmem:[%s240 + $0x10] sm:$0xff]
      %v270 = vld [vmem:[%s240 + $0x18] sm:$0xff]
      %v271 = vld [vmem:[%s240 + $0x20] sm:$0xff]
      %v272 = vld [vmem:[%s240 + $0x28] sm:$0xff]
      %v273 = vld [vmem:[%s240 + $0x30] sm:$0xff]
      %v274 = vld [vmem:[%s240 + $0x38] sm:$0xff]
      %v275 = vld [vmem:[%s240 + $0x40] sm:$0xff]
      %v276 = vld [vmem:[%s240 + $0x48] sm:$0xff]
      %v277 = vld [vmem:[%s240 + $0x50] sm:$0xff]
      %v278 = vld [vmem:[%s240 + $0x58] sm:$0xff]
      %v279 = vld [vmem:[%s240 + $0x60] sm:$0xff]
      %v280 = vld [vmem:[%s240 + $0x68] sm:$0xff]
      %v281 = vld [vmem:[%s240 + $0x70] sm:$0xff]
      %v282 = vld [vmem:[%s240 + $0x78] sm:$0xff]
      %v283 = vld [vmem:[%s240 + $0x80] sm:$0xff]
      %v284 = vld [vmem:[%s240 + $0x88] sm:$0xff]
      %v285 = vld [vmem:[%s240 + $0x90] sm:$0xff]
      %v286 = vld [vmem:[%s240 + $0x98] sm:$0xff]
      %v287 = vld [vmem:[%s240 + $0xa0] sm:$0xff]
      %v288 = vld [vmem:[%s240 + $0xa8] sm:$0xff]
      %v289 = vld [vmem:[%s240 + $0xb0] sm:$0xff]
      %v290 = vld [vmem:[%s240 + $0xb8] sm:$0xff]
      %v291 = vld [vmem:[%s240 + $0xc0] sm:$0xff]
      %v292 = vld [vmem:[%s240 + $0xc8] sm:$0xff]
      %v293 = vld [vmem:[%s240 + $0xd0] sm:$0xf]
      %v294 = vld [vmem:[%s240 + $0xd8] sm:$0xf]
      %vm295 = vcmask 883712
      %v297 = vsel %vm295, %v265, 0
      %v300 = vsel %vm295, %v266, 0
      %vm302 = vcmask 1043456
      %v304 = vsel %vm302, %v293, 0
      %v307 = vsel %vm302, %v294, 0
      %309 = vmatprep.subr.mxu0 %v268
      %310 = vmatpush1.msra.mxu0 %v267
      %311 = vmatprep.subr.mxu0 %v270
      %312 = vmatpush1.msra.mxu0 %v269
      %313 = vmatprep.subr.mxu0 %v272
      %314 = vmatpush1.msra.mxu0 %v271
      %315 = vmatprep.subr.mxu0 %v274
      %316 = vmatpush1.msra.mxu0 %v273
      %317 = vmatprep.subr.mxu0 %v276
      %318 = vmatpush1.msra.mxu0 %v275
      %319 = vmatprep.subr.mxu0 %v278
      %320 = vmatpush1.msra.mxu0 %v277
      %321 = vmatprep.subr.mxu0 %v280
      %322 = vmatpush1.msra.mxu0 %v279
      %323 = vmatprep.subr.mxu0 %v282
      %324 = vmatpush1.msra.mxu0 %v281
      %325 = vmatprep.subr.mxu0 %v284
      %326 = vmatpush1.msra.mxu0 %v283
      %327 = vmatprep.subr.mxu0 %v286
      %328 = vmatpush1.msra.mxu0 %v285
      %329 = vmatprep.subr.mxu0 %v288
      %330 = vmatpush1.msra.mxu0 %v287
      %331 = vmatprep.subr.mxu0 %v290
      %332 = vmatpush1.msra.mxu0 %v289
      %333 = vmatprep.subr.mxu0 %v292
      %334 = vmatpush1.msra.mxu0 %v291
      %335 = vmatprep.subr.mxu0 %v307
      %336 = vmatpush1.msra.mxu0 %v304
      %337 = vmatprep.subr.mxu0 0.0
      %338 = vmatpush1.msra.mxu0 0.0
      %339 = vmatprep.subr.mxu0 0.0
      %340 = vmatpush1.msra.mxu0 0.0
      %341 = vmatprep.subr.mxu0 0.0
      %342 = vmatpush1.msra.mxu0 0.0
      %343 = vmatprep.subr.mxu0 0.0
      %344 = vmatpush1.msra.mxu0 0.0
      %345 = vmatprep.subr.mxu0 0.0
      %346 = vmatpush1.msra.mxu0 0.0
      %347 = vmatprep.subr.mxu0 0.0
      %348 = vmatpush1.msra.mxu0 0.0
      %349 = vmatprep.subr.mxu0 0.0
      %350 = vmatpush1.msra.mxu0 0.0
      %351 = vmatprep.subr.mxu0 0.0
      %352 = vmatpush1.msra.mxu0 0.0
      %353 = vmatprep.subr.mxu0 0.0
      %354 = vmatpush1.msra.mxu0 0.0
      %355 = vmatprep.subr.mxu0 0.0
      %356 = vmatpush1.msra.mxu0 0.0
      %357 = vmatprep.subr.mxu0 0.0
      %358 = vmatpush1.msra.mxu0 0.0
      %359 = vmatprep.subr.mxu0 0.0
      %360 = vmatpush1.msra.mxu0 0.0
      %361 = vmatprep.subr.mxu0 0.0
      %362 = vmatpush1.msra.mxu0 0.0
      %363 = vmatprep.subr.mxu0 0.0
      %364 = vmatpush1.msra.mxu0 0.0
      %365 = vmatprep.subr.mxu0 0.0
      %366 = vmatpush1.msra.mxu0 0.0
      %367 = vmatprep.subr.mxu0 0.0
      %368 = vmatpush1.msra.mxu0 0.0
      %369 = vmatprep.subr.mxu0 0.0
      %370 = vmatpush1.msra.mxu0 0.0
      %371 = vmatprep.subr.mxu0 0.0
      %372 = vmatpush1.msra.mxu0 0.0
      %373 = vmatprep.mubr.f32.mxu0 0.0
      %374 = vmatmul.mubr.f32.gmra.mrb[0].mxu0 %v297
      %v375 = vpop.f32.mrb[0].mxu0
      %v376 = vadd.f32 0.0, %v375
      %v377 = vpop.f32.mrb[0].mxu0
      %v378 = vadd.f32 0.0, %v377
      %379 = vmatprep.mubr.f32.mxu0 0.0
      %380 = vmatmul.mubr.f32.gmra.mrb[0].mxu0 %v300
      %v381 = vpop.f32.mrb[0].mxu0
      %v382 = vadd.f32 0.0, %v381
      %v383 = vpop.f32.mrb[0].mxu0
      %v384 = vadd.f32 0.0, %v383
      %385 = vdwg.mxu0
      %v386 = vadd.f32 %v261, %v376
      %v387 = vadd.f32 %v262, %v378
      %v388 = vadd.f32 %v263, %v382
      %v389 = vadd.f32 %v264, %v384
      %390 = vst [vmem:[#allocation2] sm:$0xff] %v386
      %391 = vst [vmem:[#allocation2 + $0x8] sm:$0xff] %v387
      %392 = vst [vmem:[#allocation2 + $0x10] sm:$0xf] %v388
      %393 = vst [vmem:[#allocation2 + $0x18] sm:$0xf] %v389
      // Predicated region
      $region37: #{mid_block_forward.24} parent=31 // pred_check
        %p394 = pneg %p253
      $region38: #{mid_block_forward.24} parent=31 // pred_check_branch
        %396 = sbr.rel (%p394) target = $region40
      $region39: #{mid_block_forward.24} parent=31 // pred_region
        %v397 = vld [vmem:[#allocation2] sm:$0xff]
        %v398 = vld [vmem:[#allocation2 + $0x8] sm:$0xff]
        %v399 = vld [vmem:[#allocation2 + $0x10] sm:$0xf]
        %v400 = vld [vmem:[#allocation2 + $0x18] sm:$0xf]
        %v401 = vld [vmem:[%s2] sm:$0xff]
        %v402 = vld [vmem:[%s2 + $0x8] sm:$0xf]
        %404 = vset.pattern.permute.xlu0 0
        %405 = vperm.xlu0 %404, %v401
        %v406 = vpop.permute.xlu0 %405
        %409 = vset.pattern.permute.xlu0 0
        %410 = vperm.xlu0 %409, %v402
        %v411 = vpop.permute.xlu0 %410
        %v413 = vadd.f32 %v397, %v406
        %v414 = vadd.f32 %v398, %v406
        %v415 = vadd.f32 %v399, %v411
        %v416 = vadd.f32 %v400, %v411
        %417 = vst [vmem:[%s251] sm:$0xff] %v413
        %418 = vst [vmem:[%s251 + $0x8] sm:$0xff] %v414
        %419 = vst [vmem:[%s251 + $0x10] sm:$0xf] %v415
        %420 = vst [vmem:[%s251 + $0x18] sm:$0xf] %v416
      $region40: #{mid_block_forward.24} parent=31 // pred_fallthru
        _
      %s421 = smul.u32 2, %s20
      %p422 = scmp.lt.s32.totalorder %s19, 1
      %s423 = scalar_select %p422, %s19, 1
      %p424 = scmp.lt.s32.totalorder %s421, 1
      %s425 = scalar_select %p424, %s421, 1
      %s426 = smul.addr %s423, 4
      %s427 = sadd.s32 %s425, %s426
      %s428 = smul.addr %s427, 8
      %s429 = scalar_lea.vmem %s3, %s428
      // Predicated region
      $region41: #{mid_block_forward.24} parent=31 // pred_check
        %p430 = pneg %p130
      $region42: #{mid_block_forward.24} parent=31 // pred_check_branch
        %432 = sbr.rel (%p430) target = $region44
      $region43: #{mid_block_forward.24} parent=31 // pred_region
        %s433 = smul.u32 2, %s20
      $region44: #{mid_block_forward.24} parent=31 // pred_fallthru
        _
    $region32: #{mid_block_forward.24} parent=5 // pred_fallthru
      _
    %p434 = scmp.le.s32.totalorder 2, %s9
    // Predicated region
    $region45: #{mid_block_forward.24} parent=5 // pred_check
      %p435 = pneg %p434
    $region46: #{mid_block_forward.24} parent=5 // pred_check_branch
      %437 = sbr.rel (%p435) target = $region48
    $region47: #{mid_block_forward.24} parent=5 // pred_region
      %s438 = ssub.s32 %s9, 2
      // Predicated region
      $region49: #{mid_block_forward.24} parent=47 // pred_check
        %p439 = pneg %p136
      $region50: #{mid_block_forward.24} parent=47 // pred_check_branch
        %441 = sbr.rel (%p439) target = $region52
      $region51: #{mid_block_forward.24} parent=47 // pred_region
        %s442 = smul.u32 2, %s23
        %p443 = scmp.lt.s32.totalorder %s22, 1
        %s444 = scalar_select %p443, %s22, 1
        %p445 = scmp.lt.s32.totalorder %s442, 1
        %s446 = scalar_select %p445, %s442, 1
        %s447 = smul.addr %s444, 4
        %s448 = sadd.s32 %s446, %s447
        %s449 = smul.addr %s448, 8
        %s450 = scalar_lea.vmem %s3, %s449
      $region52: #{mid_block_forward.24} parent=47 // pred_fallthru
        _
    $region48: #{mid_block_forward.24} parent=5 // pred_fallthru
      _
  $region6: #{mid_block_forward.24} parent=0 // loop_footer
    %s13 = sadd.s32 1, %s9
  $region7: #{mid_block_forward.24} parent=0 // loop_footer_branch
    %8 = sbr.rel target = $region3
  $region8: #{mid_block_forward.24} parent=0 // loop_exit
    _

// kernel: mid_block_forward.27
$region0: #{mid_block_forward.27}
  #allocation0 [shape = 'u32[]', space=smem, size = 0x4, offset = 0x4, fixed_abs, tag = 'smem constant byte address 0x4 - core index']
  #allocation1 [shape = 'u32[144,128]{1,0:T(1,128)}', space=vmem, size = 0x12000, scoped, tag = 'internal scratch']
  #allocation2 [shape = 'f32[12,256]{1,0:T(8,128)}', space=vmem, size = 0x4000, scoped, tag = 'scratch operand']
  %s0 = inlined_call_operand.vmem [shape: f32[12,120], index: 0, kind: input, shape index: {}]
  %s1 = inlined_call_operand.vmem [shape: f32[2,120,256], index: 1, kind: input, shape index: {}]
  %s2 = inlined_call_operand.vmem [shape: f32[12,1], index: 2, kind: input, shape index: {}]
  %s3 = inlined_call_operand.vmem [shape: f32[2,12,256], index: 3, kind: output, shape index: {}]
  %s4 = sld [smem:[#allocation0]]
  $region53: #{mid_block_forward.27} parent=0
    _
  %s6 = ssub.s32 1, %s4
  %s7 = scalar_select 0, %s6, %s4
  loop: start=0, step=1, limit=4
  $region2: #{mid_block_forward.27} parent=0 // loop_pre_header
    _
  $region3: #{mid_block_forward.27} parent=0 // loop_header
    %s9 = sphi 0, %s13
    %p10 = scmp.ge.s32.totalorder %s9, 4
    %s16 = sphi 0, %s35
    %s17 = sphi 0, %s31
    %s18 = sphi 0, %s27
    %s19 = sphi 0, %s16
    %s20 = sphi 0, %s17
    %s21 = sphi 0, %s18
    %s22 = sphi 0, %s19
    %s23 = sphi 0, %s20
    %s24 = sphi 0, %s21
    %s38 = sphi 0, %s40
    %s41 = sphi 0, %s38
    %s42 = sphi 0, %s41
    %s58 = sphi 0, %s42
    %s68 = sphi 0, %s70
    %s71 = sphi 0, %s68
    %s72 = sphi 0, %s71
    %s88 = sphi 0, %s72
    %s92 = sphi 0, %s92
    %s94 = sphi 0, %s92
    %s95 = sphi 0, %s94
    %s109 = sphi 0, %s95
    %s117 = sphi 0, %s119
    %s120 = sphi 0, %s117
    %s121 = sphi 0, %s120
    %s137 = sphi 0, %s121
  $region4: #{mid_block_forward.27} parent=0 // loop_header_branch
    %12 = sbr.rel (%p10) target = $region8
  $region5: #{mid_block_forward.27} parent=0 // loop_body
    %s14 = ssub.s32 %s9, 1
    %s15 = ssub.s32 %s9, 2
    %s25 = sadd.s32 1, %s18
    %p26 = scmp.ge.s32.totalorder %s25, 1
    %s27 = scalar_select %p26, 0, %s25
    %s28 = sadd.s32 1, %s17
    %s29 = scalar_select %p26, %s28, %s17
    %p30 = scmp.ge.s32.totalorder %s29, 1
    %s31 = scalar_select %p30, 0, %s29
    %s32 = sadd.s32 1, %s16
    %s33 = scalar_select %p30, %s32, %s16
    %p34 = scmp.ge.s32.totalorder %s33, 2
    %s35 = scalar_select %p34, 0, %s33
    %s36 = ssub.s32 %s18, %s27
    %p37 = scmp.eq.s32.totalorder %s36, 0
    %s39 = sadd.s32 %s38, 1
    %s40 = scalar_select %p37, %s38, %s39
    %p43 = pneg %p37
    %p44 = scmp.eq.s32.totalorder %s9, 1
    %p45 = por %p43, %p44
    %p46 = scmp.ne.s32.totalorder %s38, %s41
    %p47 = scmp.eq.s32.totalorder %s9, 0
    %p48 = por %p46, %p47
    %p49 = scmp.ne.s32.totalorder %s38, %s41
    %p50 = scmp.eq.s32.totalorder %s14, 1
    %p51 = por %p49, %p50
    %p52 = scmp.ne.s32.totalorder %s41, %s42
    %p53 = scmp.eq.s32.totalorder %s14, 0
    %p54 = por %p52, %p53
    %p55 = scmp.ne.s32.totalorder %s41, %s42
    %p56 = scmp.eq.s32.totalorder %s15, 1
    %p57 = por %p55, %p56
    %p59 = scmp.ne.s32.totalorder %s42, %s58
    %p60 = scmp.eq.s32.totalorder %s15, 0
    %p61 = por %p59, %p60
    %s62 = ssub.s32 %s16, %s35
    %s63 = ssub.s32 %s18, %s27
    %s64 = sor.u32 %s62, %s63
    %s65 = ssub.s32 %s17, %s31
    %s66 = sor.u32 %s64, %s65
    %p67 = scmp.eq.s32.totalorder %s66, 0
    %s69 = sadd.s32 %s68, 1
    %s70 = scalar_select %p67, %s68, %s69
    %p73 = pneg %p67
    %p74 = scmp.eq.s32.totalorder %s9, 1
    %p75 = por %p73, %p74
    %p76 = scmp.ne.s32.totalorder %s68, %s71
    %p77 = scmp.eq.s32.totalorder %s9, 0
    %p78 = por %p76, %p77
    %p79 = scmp.ne.s32.totalorder %s68, %s71
    %p80 = scmp.eq.s32.totalorder %s14, 1
    %p81 = por %p79, %p80
    %p82 = scmp.ne.s32.totalorder %s71, %s72
    %p83 = scmp.eq.s32.totalorder %s14, 0
    %p84 = por %p82, %p83
    %p85 = scmp.ne.s32.totalorder %s71, %s72
    %p86 = scmp.eq.s32.totalorder %s15, 1
    %p87 = por %p85, %p86
    %p89 = scmp.ne.s32.totalorder %s72, %s88
    %p90 = scmp.eq.s32.totalorder %s15, 0
    %p91 = por %p89, %p90
    %s93 = sadd.s32 %s92, 1
    %p96 = scmp.eq.s32.totalorder %s9, 1
    %p97 = scmp.ne.s32.totalorder %s92, %s94
    %p98 = scmp.eq.s32.totalorder %s9, 0
    %p99 = por %p97, %p98
    %p100 = scmp.ne.s32.totalorder %s92, %s94
    %p101 = scmp.eq.s32.totalorder %s14, 1
    %p102 = por %p100, %p101
    %p103 = scmp.ne.s32.totalorder %s94, %s95
    %p104 = scmp.eq.s32.totalorder %s14, 0
    %p105 = por %p103, %p104
    %p106 = scmp.ne.s32.totalorder %s94, %s95
    %p107 = scmp.eq.s32.totalorder %s15, 1
    %p108 = por %p106, %p107
    %p110 = scmp.ne.s32.totalorder %s95, %s109
    %p111 = scmp.eq.s32.totalorder %s15, 0
    %p112 = por %p110, %p111
    %s113 = ssub.s32 %s16, %s35
    %s114 = ssub.s32 %s17, %s31
    %s115 = sor.u32 %s113, %s114
    %p116 = scmp.eq.s32.totalorder %s115, 0
    %s118 = sadd.s32 %s117, 1
    %s119 = scalar_select %p116, %s117, %s118
    %p122 = pneg %p116
    %p123 = scmp.eq.s32.totalorder %s9, 1
    %p124 = por %p122, %p123
    %p125 = scmp.ne.s32.totalorder %s117, %s120
    %p126 = scmp.eq.s32.totalorder %s9, 0
    %p127 = por %p125, %p126
    %p128 = scmp.ne.s32.totalorder %s117, %s120
    %p129 = scmp.eq.s32.totalorder %s14, 1
    %p130 = por %p128, %p129
    %p131 = scmp.ne.s32.totalorder %s120, %s121
    %p132 = scmp.eq.s32.totalorder %s14, 0
    %p133 = por %p131, %p132
    %p134 = scmp.ne.s32.totalorder %s120, %s121
    %p135 = scmp.eq.s32.totalorder %s15, 1
    %p136 = por %p134, %p135
    %p138 = scmp.ne.s32.totalorder %s121, %s137
    %p139 = scmp.eq.s32.totalorder %s15, 0
    %p140 = por %p138, %p139
    %p141 = scmp.le.s32.totalorder 1, %s9
    %p142 = scmp.lt.s32.totalorder %s9, 3
    %p143 = pnand %p141, %p142
    %p144 = pneg %p143
    // Predicated region
    $region9: #{mid_block_forward.27} parent=5 // pred_check
      _
    $region10: #{mid_block_forward.27} parent=5 // pred_check_branch
      %146 = sbr.rel (%p143) target = $region12
    $region11: #{mid_block_forward.27} parent=5 // pred_region
      %s147 = ssub.s32 %s9, 1
      // Predicated region
      $region13: #{mid_block_forward.27} parent=11 // pred_check
        %p148 = pneg %p54
      $region14: #{mid_block_forward.27} parent=11 // pred_check_branch
        %150 = sbr.rel (%p148) target = $region16
      $region15: #{mid_block_forward.27} parent=11 // pred_region
        %p151 = scmp.lt.s32.totalorder %s21, 0
        %s152 = scalar_select %p151, %s21, 0
        %s153 = smul.addr %s152, 8
        %s154 = scalar_lea.vmem %s0, %s153
      $region16: #{mid_block_forward.27} parent=11 // pred_fallthru
        _
      // Predicated region
      $region17: #{mid_block_forward.27} parent=11 // pred_check
        %p155 = pneg %p105
      $region18: #{mid_block_forward.27} parent=11 // pred_check_branch
        %157 = sbr.rel (%p155) target = $region20
      $region19: #{mid_block_forward.27} parent=11 // pred_region
        _
      $region20: #{mid_block_forward.27} parent=11 // pred_fallthru
        _
    $region12: #{mid_block_forward.27} parent=5 // pred_fallthru
      _
    %p158 = scmp.lt.s32.totalorder %s9, 2
    // Predicated region
    $region21: #{mid_block_forward.27} parent=5 // pred_check
      %p159 = pneg %p158
    $region22: #{mid_block_forward.27} parent=5 // pred_check_branch
      %161 = sbr.rel (%p159) target = $region24
    $region23: #{mid_block_forward.27} parent=5 // pred_region
      // Predicated region
      $region25: #{mid_block_forward.27} parent=23 // pred_check
        %p162 = pneg %p78
      $region26: #{mid_block_forward.27} parent=23 // pred_check_branch
        %164 = sbr.rel (%p162) target = $region28
      $region27: #{mid_block_forward.27} parent=23 // pred_region
        %s165 = smul.u32 15, %s18
        %s166 = smul.u32 2, %s17
        %p167 = scmp.lt.s32.totalorder %s16, 1
        %s168 = scalar_select %p167, %s16, 1
        %p169 = scmp.lt.s32.totalorder %s165, 14
        %s170 = scalar_select %p169, %s165, 14
        %p171 = scmp.lt.s32.totalorder %s166, 1
        %s172 = scalar_select %p171, %s166, 1
        %s173 = smul.addr %s170, 2
        %s174 = sadd.s32 %s172, %s173
        %s175 = smul.addr %s168, 30
        %s176 = sadd.s32 %s174, %s175
        %s177 = smul.addr %s176, 8
        %s178 = scalar_lea.vmem %s1, %s177
        %s179 = smul.u32 15, %s18
        %s180 = smul.u32 2, %s17
      $region28: #{mid_block_forward.27} parent=23 // pred_fallthru
        _
    $region24: #{mid_block_forward.27} parent=5 // pred_fallthru
      _
    %p181 = scmp.le.s32.totalorder 1, %s9
    %p182 = scmp.lt.s32.totalorder %s9, 3
    %p183 = pnand %p181, %p182
    %p184 = pneg %p183
    // Predicated region
    $region29: #{mid_block_forward.27} parent=5 // pred_check
      _
    $region30: #{mid_block_forward.27} parent=5 // pred_check_branch
      %186 = sbr.rel (%p183) target = $region32
    $region31: #{mid_block_forward.27} parent=5 // pred_region
      %s187 = ssub.s32 %s9, 1
      %p188 = scmp.lt.s32.totalorder %s21, 0
      %s189 = scalar_select %p188, %s21, 0
      %s190 = smul.addr %s189, 8
      %s191 = scalar_lea.vmem %s0, %s190
      %p192 = pneg %p54
      %p193 = pneg %p51
      %s194 = smul.u32 15, %s21
      %s195 = smul.u32 2, %s20
      %p196 = scmp.lt.s32.totalorder %s19, 1
      %s197 = scalar_select %p196, %s19, 1
      %p198 = scmp.lt.s32.totalorder %s194, 14
      %s199 = scalar_select %p198, %s194, 14
      %p200 = scmp.lt.s32.totalorder %s195, 1
      %s201 = scalar_select %p200, %s195, 1
      %s202 = smul.addr %s199, 2
      %s203 = sadd.s32 %s201, %s202
      %s204 = smul.addr %s197, 30
      %s205 = sadd.s32 %s203, %s204
      %s206 = smul.addr %s205, 8
      %s207 = scalar_lea.vmem %s1, %s206
      %p208 = pneg %p84
      %p209 = pneg %p81
      %p210 = pneg %p105
      %p211 = pneg %p102
      %p212 = pneg %p133
      %p213 = pneg %p130
      %s214 = smul.u32 2, %s20
      %p215 = scmp.lt.s32.totalorder %s19, 1
      %s216 = scalar_select %p215, %s19, 1
      %p217 = scmp.lt.s32.totalorder %s214, 1
      %s218 = scalar_select %p217, %s214, 1
      %s219 = smul.addr %s216, 4
      %s220 = sadd.s32 %s218, %s219
      %s221 = smul.addr %s220, 8
      %s222 = scalar_lea.vmem %s3, %s221
      %p223 = scmp.lt.s32.totalorder %s21, 0
      %s224 = scalar_select %p223, %s21, 0
      %s225 = smul.addr %s224, 8
      %s226 = scalar_lea.vmem %s0, %s225
      %s227 = smul.u32 15, %s21
      %s228 = smul.u32 2, %s20
      %p229 = scmp.lt.s32.totalorder %s19, 1
      %s230 = scalar_select %p229, %s19, 1
      %p231 = scmp.lt.s32.totalorder %s227, 14
      %s232 = scalar_select %p231, %s227, 14
      %p233 = scmp.lt.s32.totalorder %s228, 1
      %s234 = scalar_select %p233, %s228, 1
      %s235 = smul.addr %s232, 2
      %s236 = sadd.s32 %s234, %s235
      %s237 = smul.addr %s230, 30
      %s238 = sadd.s32 %s236, %s237
      %s239 = smul.addr %s238, 8
      %s240 = scalar_lea.vmem %s1, %s239
      %s241 = smul.u32 15, %s21
      %s242 = smul.u32 2, %s20
      %s243 = smul.u32 2, %s20
      %p244 = scmp.lt.s32.totalorder %s19, 1
      %s245 = scalar_select %p244, %s19, 1
      %p246 = scmp.lt.s32.totalorder %s243, 1
      %s247 = scalar_select %p246, %s243, 1
      %s248 = smul.addr %s245, 4
      %s249 = sadd.s32 %s247, %s248
      %s250 = smul.addr %s249, 8
      %s251 = scalar_lea.vmem %s3, %s250
      %s252 = smul.u32 2, %s20
      %p253 = scmp.eq.s32.totalorder %s21, 0
      // Predicated region
      $region33: #{mid_block_forward.27} parent=31 // pred_check
        %p254 = pneg %p253
      $region34: #{mid_block_forward.27} parent=31 // pred_check_branch
        %256 = sbr.rel (%p254) target = $region36
      $region35: #{mid_block_forward.27} parent=31 // pred_region
        %257 = vst [vmem:[#allocation2] sm:$0xff] 0.0
        %258 = vst [vmem:[#allocation2 + $0x8] sm:$0xff] 0.0
        %259 = vst [vmem:[#allocation2 + $0x10] sm:$0xf] 0.0
        %260 = vst [vmem:[#allocation2 + $0x18] sm:$0xf] 0.0
      $region36: #{mid_block_forward.27} parent=31 // pred_fallthru
        _
      %v261 = vld [vmem:[#allocation2] sm:$0xff]
      %v262 = vld [vmem:[#allocation2 + $0x8] sm:$0xff]
      %v263 = vld [vmem:[#allocation2 + $0x10] sm:$0xf]
      %v264 = vld [vmem:[#allocation2 + $0x18] sm:$0xf]
      %v265 = vld [vmem:[%s226] sm:$0xff]
      %v266 = vld [vmem:[%s226 + $0x8] sm:$0xf]
      %v267 = vld [vmem:[%s240] sm:$0xff]
      %v268 = vld [vmem:[%s240 + $0x8] sm:$0xff]
      %v269 = vld [vmem:[%s240 + $0x10] sm:$0xff]
      %v270 = vld [vmem:[%s240 + $0x18] sm:$0xff]
      %v271 = vld [vmem:[%s240 + $0x20] sm:$0xff]
      %v272 = vld [vmem:[%s240 + $0x28] sm:$0xff]
      %v273 = vld [vmem:[%s240 + $0x30] sm:$0xff]
      %v274 = vld [vmem:[%s240 + $0x38] sm:$0xff]
      %v275 = vld [vmem:[%s240 + $0x40] sm:$0xff]
      %v276 = vld [vmem:[%s240 + $0x48] sm:$0xff]
      %v277 = vld [vmem:[%s240 + $0x50] sm:$0xff]
      %v278 = vld [vmem:[%s240 + $0x58] sm:$0xff]
      %v279 = vld [vmem:[%s240 + $0x60] sm:$0xff]
      %v280 = vld [vmem:[%s240 + $0x68] sm:$0xff]
      %v281 = vld [vmem:[%s240 + $0x70] sm:$0xff]
      %v282 = vld [vmem:[%s240 + $0x78] sm:$0xff]
      %v283 = vld [vmem:[%s240 + $0x80] sm:$0xff]
      %v284 = vld [vmem:[%s240 + $0x88] sm:$0xff]
      %v285 = vld [vmem:[%s240 + $0x90] sm:$0xff]
      %v286 = vld [vmem:[%s240 + $0x98] sm:$0xff]
      %v287 = vld [vmem:[%s240 + $0xa0] sm:$0xff]
      %v288 = vld [vmem:[%s240 + $0xa8] sm:$0xff]
      %v289 = vld [vmem:[%s240 + $0xb0] sm:$0xff]
      %v290 = vld [vmem:[%s240 + $0xb8] sm:$0xff]
      %v291 = vld [vmem:[%s240 + $0xc0] sm:$0xff]
      %v292 = vld [vmem:[%s240 + $0xc8] sm:$0xff]
      %v293 = vld [vmem:[%s240 + $0xd0] sm:$0xff]
      %v294 = vld [vmem:[%s240 + $0xd8] sm:$0xff]
      %v295 = vld [vmem:[%s240 + $0xe0] sm:$0xff]
      %v296 = vld [vmem:[%s240 + $0xe8] sm:$0xff]
      %vm297 = vcmask 982016
      %v299 = vsel %vm297, %v265, 0
      %v302 = vsel %vm297, %v266, 0
      %304 = vmatprep.subr.mxu0 %v268
      %305 = vmatpush1.msra.mxu0 %v267
      %306 = vmatprep.subr.mxu0 %v270
      %307 = vmatpush1.msra.mxu0 %v269
      %308 = vmatprep.subr.mxu0 %v272
      %309 = vmatpush1.msra.mxu0 %v271
      %310 = vmatprep.subr.mxu0 %v274
      %311 = vmatpush1.msra.mxu0 %v273
      %312 = vmatprep.subr.mxu0 %v276
      %313 = vmatpush1.msra.mxu0 %v275
      %314 = vmatprep.subr.mxu0 %v278
      %315 = vmatpush1.msra.mxu0 %v277
      %316 = vmatprep.subr.mxu0 %v280
      %317 = vmatpush1.msra.mxu0 %v279
      %318 = vmatprep.subr.mxu0 %v282
      %319 = vmatpush1.msra.mxu0 %v281
      %320 = vmatprep.subr.mxu0 %v284
      %321 = vmatpush1.msra.mxu0 %v283
      %322 = vmatprep.subr.mxu0 %v286
      %323 = vmatpush1.msra.mxu0 %v285
      %324 = vmatprep.subr.mxu0 %v288
      %325 = vmatpush1.msra.mxu0 %v287
      %326 = vmatprep.subr.mxu0 %v290
      %327 = vmatpush1.msra.mxu0 %v289
      %328 = vmatprep.subr.mxu0 %v292
      %329 = vmatpush1.msra.mxu0 %v291
      %330 = vmatprep.subr.mxu0 %v294
      %331 = vmatpush1.msra.mxu0 %v293
      %332 = vmatprep.subr.mxu0 %v296
      %333 = vmatpush1.msra.mxu0 %v295
      %334 = vmatprep.subr.mxu0 0.0
      %335 = vmatpush1.msra.mxu0 0.0
      %336 = vmatprep.subr.mxu0 0.0
      %337 = vmatpush1.msra.mxu0 0.0
      %338 = vmatprep.subr.mxu0 0.0
      %339 = vmatpush1.msra.mxu0 0.0
      %340 = vmatprep.subr.mxu0 0.0
      %341 = vmatpush1.msra.mxu0 0.0
      %342 = vmatprep.subr.mxu0 0.0
      %343 = vmatpush1.msra.mxu0 0.0
      %344 = vmatprep.subr.mxu0 0.0
      %345 = vmatpush1.msra.mxu0 0.0
      %346 = vmatprep.subr.mxu0 0.0
      %347 = vmatpush1.msra.mxu0 0.0
      %348 = vmatprep.subr.mxu0 0.0
      %349 = vmatpush1.msra.mxu0 0.0
      %350 = vmatprep.subr.mxu0 0.0
      %351 = vmatpush1.msra.mxu0 0.0
      %352 = vmatprep.subr.mxu0 0.0
      %353 = vmatpush1.msra.mxu0 0.0
      %354 = vmatprep.subr.mxu0 0.0
      %355 = vmatpush1.msra.mxu0 0.0
      %356 = vmatprep.subr.mxu0 0.0
      %357 = vmatpush1.msra.mxu0 0.0
      %358 = vmatprep.subr.mxu0 0.0
      %359 = vmatpush1.msra.mxu0 0.0
      %360 = vmatprep.subr.mxu0 0.0
      %361 = vmatpush1.msra.mxu0 0.0
      %362 = vmatprep.subr.mxu0 0.0
      %363 = vmatpush1.msra.mxu0 0.0
      %364 = vmatprep.subr.mxu0 0.0
      %365 = vmatpush1.msra.mxu0 0.0
      %366 = vmatprep.subr.mxu0 0.0
      %367 = vmatpush1.msra.mxu0 0.0
      %368 = vmatprep.mubr.f32.mxu0 0.0
      %369 = vmatmul.mubr.f32.gmra.mrb[0].mxu0 %v299
      %v370 = vpop.f32.mrb[0].mxu0
      %v371 = vadd.f32 0.0, %v370
      %v372 = vpop.f32.mrb[0].mxu0
      %v373 = vadd.f32 0.0, %v372
      %374 = vmatprep.mubr.f32.mxu0 0.0
      %375 = vmatmul.mubr.f32.gmra.mrb[0].mxu0 %v302
      %v376 = vpop.f32.mrb[0].mxu0
      %v377 = vadd.f32 0.0, %v376
      %v378 = vpop.f32.mrb[0].mxu0
      %v379 = vadd.f32 0.0, %v378
      %380 = vdwg.mxu0
      %v381 = vadd.f32 %v261, %v371
      %v382 = vadd.f32 %v262, %v373
      %v383 = vadd.f32 %v263, %v377
      %v384 = vadd.f32 %v264, %v379
      %385 = vst [vmem:[#allocation2] sm:$0xff] %v381
      %386 = vst [vmem:[#allocation2 + $0x8] sm:$0xff] %v382
      %387 = vst [vmem:[#allocation2 + $0x10] sm:$0xf] %v383
      %388 = vst [vmem:[#allocation2 + $0x18] sm:$0xf] %v384
      // Predicated region
      $region37: #{mid_block_forward.27} parent=31 // pred_check
        %p389 = pneg %p253
      $region38: #{mid_block_forward.27} parent=31 // pred_check_branch
        %391 = sbr.rel (%p389) target = $region40
      $region39: #{mid_block_forward.27} parent=31 // pred_region
        %v392 = vld [vmem:[#allocation2] sm:$0xff]
        %v393 = vld [vmem:[#allocation2 + $0x8] sm:$0xff]
        %v394 = vld [vmem:[#allocation2 + $0x10] sm:$0xf]
        %v395 = vld [vmem:[#allocation2 + $0x18] sm:$0xf]
        %v396 = vld [vmem:[%s2] sm:$0xff]
        %v397 = vld [vmem:[%s2 + $0x8] sm:$0xf]
        %399 = vset.pattern.permute.xlu0 0
        %400 = vperm.xlu0 %399, %v396
        %v401 = vpop.permute.xlu0 %400
        %404 = vset.pattern.permute.xlu0 0
        %405 = vperm.xlu0 %404, %v397
        %v406 = vpop.permute.xlu0 %405
        %v408 = vadd.f32 %v392, %v401
        %v409 = vadd.f32 %v393, %v401
        %v410 = vadd.f32 %v394, %v406
        %v411 = vadd.f32 %v395, %v406
        %412 = vst [vmem:[%s251] sm:$0xff] %v408
        %413 = vst [vmem:[%s251 + $0x8] sm:$0xff] %v409
        %414 = vst [vmem:[%s251 + $0x10] sm:$0xf] %v410
        %415 = vst [vmem:[%s251 + $0x18] sm:$0xf] %v411
      $region40: #{mid_block_forward.27} parent=31 // pred_fallthru
        _
      %s416 = smul.u32 2, %s20
      %p417 = scmp.lt.s32.totalorder %s19, 1
      %s418 = scalar_select %p417, %s19, 1
      %p419 = scmp.lt.s32.totalorder %s416, 1
      %s420 = scalar_select %p419, %s416, 1
      %s421 = smul.addr %s418, 4
      %s422 = sadd.s32 %s420, %s421
      %s423 = smul.addr %s422, 8
      %s424 = scalar_lea.vmem %s3, %s423
      // Predicated region
      $region41: #{mid_block_forward.27} parent=31 // pred_check
        %p425 = pneg %p130
      $region42: #{mid_block_forward.27} parent=31 // pred_check_branch
        %427 = sbr.rel (%p425) target = $region44
      $region43: #{mid_block_forward.27} parent=31 // pred_region
        %s428 = smul.u32 2, %s20
      $region44: #{mid_block_forward.27} parent=31 // pred_fallthru
        _
    $region32: #{mid_block_forward.27} parent=5 // pred_fallthru
      _
    %p429 = scmp.le.s32.totalorder 2, %s9
    // Predicated region
    $region45: #{mid_block_forward.27} parent=5 // pred_check
      %p430 = pneg %p429
    $region46: #{mid_block_forward.27} parent=5 // pred_check_branch
      %432 = sbr.rel (%p430) target = $region48
    $region47: #{mid_block_forward.27} parent=5 // pred_region
      %s433 = ssub.s32 %s9, 2
      // Predicated region
      $region49: #{mid_block_forward.27} parent=47 // pred_check
        %p434 = pneg %p136
      $region50: #{mid_block_forward.27} parent=47 // pred_check_branch
        %436 = sbr.rel (%p434) target = $region52
      $region51: #{mid_block_forward.27} parent=47 // pred_region
        %s437 = smul.u32 2, %s23
        %p438 = scmp.lt.s32.totalorder %s22, 1
        %s439 = scalar_select %p438, %s22, 1
        %p440 = scmp.lt.s32.totalorder %s437, 1
        %s441 = scalar_select %p440, %s437, 1
        %s442 = smul.addr %s439, 4
        %s443 = sadd.s32 %s441, %s442
        %s444 = smul.addr %s443, 8
        %s445 = scalar_lea.vmem %s3, %s444
      $region52: #{mid_block_forward.27} parent=47 // pred_fallthru
        _
    $region48: #{mid_block_forward.27} parent=5 // pred_fallthru
      _
  $region6: #{mid_block_forward.27} parent=0 // loop_footer
    %s13 = sadd.s32 1, %s9
  $region7: #{mid_block_forward.27} parent=0 // loop_footer_branch
    %8 = sbr.rel target = $region3
  $region8: #{mid_block_forward.27} parent=0 // loop_exit
    _

</llo_original>
